<compile_context>
chip_gen: v5e
topology: v5e:2x2
jax: 0.10.0
libtpu: 0.0.40
codegen_flags: <defaults>
</compile_context>

<pallas_src>
import functools

import jax
import jax.numpy as jnp
import numpy as np
from jax.experimental import pallas as pl
from jax.experimental.pallas import tpu as pltpu


_VMEM = pl.BlockSpec(memory_space=pltpu.MemorySpace.VMEM)
_BN_EPS = 1e-5          # PyTorch BatchNorm2d default
_LRELU = 0.2            # LeakyReLU(0.2)


def _leaky_relu(x):
    return jnp.where(x >= 0.0, x, _LRELU * x)


# --------------------------------------------------------------------------
# Fully fused kernel: conv0+LReLU, conv1..3+BN(batch stats)+LReLU, fc head.
# --------------------------------------------------------------------------
def _make_fused_kernel(B, c_in, df_dim, H, W, class_num):
    """Builds the fused kernel body for static shapes (B, c_in, H, W)."""
    assert H > 12 and W >= 16 and (W & (W - 1)) == 0, \
        "conv stack needs H > 12 and W a power of two >= 16"
    chans = (c_in, df_dim, df_dim * 2, df_dim * 4, df_dim * 8)
    hs, ws = [H], [W]
    for _ in range(4):            # Conv2d(k=4, stride=(1,2), pad=(0,1), bias=False)
        hs.append(hs[-1] - 3)     # H -> H - 3
        ws.append(ws[-1] // 2)    # W -> W / 2
    n_head = class_num + 1

    def conv_layer(src_ref, t_ref, b, h_out):
        """src_ref: (B, h_in, w_in*c_in) bf16, lanes ordered (w, c_in).
        t_ref: (4, w_in*c_in, w_out*c_out) bf16 banded conv weights.
        Returns the f32 conv output (h_out, w_out*c_out) for batch b."""
        acc = None
        for kh in range(4):
            lhs = src_ref[b, pl.ds(kh, h_out), :]            # (h_out, w_in*c_in)
            p = jnp.dot(lhs, t_ref[kh], preferred_element_type=jnp.float32)
            acc = p if acc is None else acc + p
        return acc

    def bn_scale_shift(acc_list, g_ref, b_ref, cout, w_out):
        """BatchNorm2d training-mode batch stats over (N, H, W).
        acc_list: per-batch f32 (h_out, w_out*cout).  Returns (scale, shift)
        already tiled to the (w, c) lane pattern, each (1, w_out*cout)."""
        n = float(len(acc_list) * acc_list[0].shape[0] * w_out)
        s1 = sum(jnp.sum(a, axis=0, keepdims=True) for a in acc_list)
        s2 = sum(jnp.sum(a * a, axis=0, keepdims=True) for a in acc_list)
        s = jnp.concatenate([s1, s2], axis=0)                # (2, w_out*cout)
        # Fold the per-w lane groups into per-channel sums AND broadcast them
        # back to every group with log2(w_out) circular lane rolls: the lane
        # width is exactly w_out*cout, so rolling by cout*2^k and adding gives
        # every lane the sum over all w positions of its own channel.
        shift = cout
        while shift < w_out * cout:
            s = s + pltpu.roll(s, shift, axis=1)
            shift *= 2
        inv_n = 1.0 / n
        mean = s[0:1, :] * inv_n
        var = jnp.maximum(s[1:2, :] * inv_n - mean * mean, 0.0)
        scale = jax.lax.rsqrt(var + _BN_EPS) * g_ref[...]
        return scale, b_ref[...] - mean * scale

    def kernel(x_ref, t0, t1, g1, b1, t2, g2, b2, t3, g3, b3, wh, bh,
               h3_ref, aux_ref, dis_ref, h0_s, h1_s, h2_s):
        # ---- layer 0: conv + LeakyReLU (no BN) ------------------------------
        for b in range(B):
            y = _leaky_relu(conv_layer(x_ref, t0, b, hs[1]))
            h0_s[b, :, :] = y.astype(jnp.bfloat16)

        # ---- layers 1, 2: conv + BN(batch stats) + LeakyReLU ----------------
        for (src, dst, t, g, bb, li) in ((h0_s, h1_s, t1, g1, b1, 2),
                                         (h1_s, h2_s, t2, g2, b2, 3)):
            accs = [conv_layer(src, t, b, hs[li]) for b in range(B)]
            scale, shift = bn_scale_shift(accs, g, bb, chans[li], ws[li])
            for b in range(B):
                dst[b, :, :] = _leaky_relu(accs[b] * scale + shift
                                           ).astype(jnp.bfloat16)

        # ---- layer 3 + fused classifier head --------------------------------
        accs = [conv_layer(h2_s, t3, b, hs[4]) for b in range(B)]
        scale, shift = bn_scale_shift(accs, g3, b3, chans[4], ws[4])
        heads = []
        for b in range(B):
            y = _leaky_relu(accs[b] * scale + shift)        # (11, 256) f32
            h3_ref[b, :, :] = y                             # lane-dense h3 out
            yb = y.astype(jnp.bfloat16)
            hb = jnp.zeros((1, n_head), jnp.float32)
            # head(flat) == sum_h  h3[b, h, :] @ W_head[h]   (tiny K=256 dots)
            for h in range(hs[4]):
                hb = hb + jnp.dot(yb[h:h + 1, :], wh[h],
                                  preferred_element_type=jnp.float32)
            heads.append(hb)
        head = jnp.concatenate(heads, axis=0) + bh[...]     # (B, class_num+1)
        aux_ref[...] = head[:, :class_num]                  # raw fc_aux logits
        z = head[:, class_num:]
        dis_ref[...] = 1.0 / (1.0 + jnp.exp(-z))            # exact sigmoid

    return kernel, chans, hs, ws


# --------------------------------------------------------------------------
# Weight pre-packing: stride-(1,2) / pad-(0,1) conv as 4 banded GEMM matrices.
# --------------------------------------------------------------------------
def _toeplitz(wconv_np, w_in):
    """wconv_np: (c_out, c_in, 4, 4) numpy conv weight.
    Returns bf16 (4, w_in*c_in, (w_in//2)*c_out) matrices T[kh] such that
      out[h, wo*c_out + co] = sum_kh  inp[h+kh, :] @ T[kh]
    with input lanes ordered (w, c_in) and output lanes ordered (w_out, c_out).
    The W zero-padding is realized by omitting the out-of-range taps."""
    c_out, c_in = wconv_np.shape[0], wconv_np.shape[1]
    w_out = w_in // 2
    t = np.zeros((4, w_in * c_in, w_out * c_out), np.float32)
    for kh in range(4):
        for kw in range(4):
            for wo in range(w_out):
                w = 2 * wo + kw - 1
                if 0 <= w < w_in:
                    t[kh, w * c_in:(w + 1) * c_in,
                      wo * c_out:(wo + 1) * c_out] = wconv_np[:, :, kh, kw].T
    return jnp.asarray(t, jnp.bfloat16)


# --------------------------------------------------------------------------
# Parameters (deterministic, in-script) and forward pass
# --------------------------------------------------------------------------
def init_params(key, z_dim, c_dim, df_dim, class_num, hidden_dim, h_in):
    del z_dim  # unused by the module's forward
    ks = jax.random.split(key, 16)
    c1, c2, c3, c4 = df_dim, df_dim * 2, df_dim * 4, df_dim * 8
    ho4, wo4 = h_in - 12, hidden_dim // 16
    flat = c4 * ho4 * wo4                       # == df_dim*8*11*8 for (23, 128)

    def conv_w(k, cout, cin):                   # PyTorch (C_out, C_in, kh, kw)
        return np.asarray(0.02 * jax.random.normal(k, (cout, cin, 4, 4),
                                                   jnp.float32))

    def bn(kg, kb, c, w_out):                   # gamma/beta tiled to lane = w*c + ci
        g = 1.0 + 0.01 * jax.random.normal(kg, (1, c), jnp.float32)
        b = 0.01 * jax.random.normal(kb, (1, c), jnp.float32)
        return jnp.tile(g, (1, w_out)), jnp.tile(b, (1, w_out))

    g1, b1 = bn(ks[3], ks[4], c2, hidden_dim // 4)
    g2, b2 = bn(ks[6], ks[7], c3, hidden_dim // 8)
    g3, b3 = bn(ks[9], ks[10], c4, hidden_dim // 16)

    # fc_aux / fc_dis generated in PyTorch (out, in) layout with the in-feature
    # axis ordered (c, h, w), then fused and permuted to per-h (w, c)-lane
    # blocks matching the kernel's h3 layout.
    wa = 0.02 * jax.random.normal(ks[11], (class_num, flat), jnp.float32)
    wd = 0.02 * jax.random.normal(ks[12], (1, flat), jnp.float32)
    ba = 0.01 * jax.random.normal(ks[13], (class_num,), jnp.float32)
    bd = 0.01 * jax.random.normal(ks[14], (1,), jnp.float32)
    w_fc = jnp.concatenate([wa, wd], axis=0)                     # (cn+1, flat)
    wh = (w_fc.reshape(class_num + 1, c4, ho4, wo4)
              .transpose(2, 3, 1, 0)                             # (h, w, c, out)
              .reshape(ho4, wo4 * c4, class_num + 1)).astype(jnp.bfloat16)
    bh = jnp.concatenate([ba, bd])[None, :]                      # (1, cn+1)

    return {
        "emb": 0.1 * jax.random.normal(ks[0], (25, hidden_dim), jnp.float32),
        "t0": _toeplitz(conv_w(ks[1], c1, c_dim), hidden_dim),
        "t1": _toeplitz(conv_w(ks[2], c2, c1), hidden_dim // 2),
        "t2": _toeplitz(conv_w(ks[5], c3, c2), hidden_dim // 4),
        "t3": _toeplitz(conv_w(ks[8], c4, c3), hidden_dim // 8),
        "g1": g1, "b1": b1, "g2": g2, "b2": b2, "g3": g3, "b3": b3,
        "wh": wh, "bh": bh,
    }


def discriminator_forward(params, inp, *, use_e, c_dim, df_dim, class_num):
    # Conv/fc matmuls run in bf16 with f32 accumulation (documented precision
    # drop vs. the f32 PyTorch reference, typically ~1e-2 relative).
    if use_e:
        assert c_dim == 1
        x = params["emb"][inp]                      # (B, S, hidden) == NCHW (B,1,S,hidden)
        B, H, W = x.shape
        x = x.astype(jnp.bfloat16)                  # lanes = w (c_in == 1)
    else:
        B, C, H, W = inp.shape
        assert C == c_dim
        # NCHW -> (B, H, W*C), lanes ordered (w, c) to match the packed weights.
        x = jnp.transpose(inp, (0, 2, 3, 1)).reshape(B, H, W * C).astype(jnp.bfloat16)

    kernel, chans, hs, ws = _make_fused_kernel(B, c_dim, df_dim, H, W, class_num)
    c4, h4, w4 = chans[4], hs[4], ws[4]

    h3_lanes, aux, dis = pl.pallas_call(
        kernel,
        out_shape=(jax.ShapeDtypeStruct((B, h4, w4 * c4), jnp.float32),
                   jax.ShapeDtypeStruct((B, class_num), jnp.float32),
                   jax.ShapeDtypeStruct((B, 1), jnp.float32)),
        in_specs=[_VMEM] * 13,
        out_specs=(_VMEM, _VMEM, _VMEM),
        scratch_shapes=[
            pltpu.VMEM((B, hs[1], ws[1] * chans[1]), jnp.bfloat16),
            pltpu.VMEM((B, hs[2], ws[2] * chans[2]), jnp.bfloat16),
            pltpu.VMEM((B, hs[3], ws[3] * chans[3]), jnp.bfloat16),
        ],
    )(x, params["t0"], params["t1"], params["g1"], params["b1"],
      params["t2"], params["g2"], params["b2"],
      params["t3"], params["g3"], params["b3"], params["wh"], params["bh"])

    # Tiny XLA de-interleave of the lane-dense h3 back to NCHW (B, C, 11, 8).
    h3 = h3_lanes.reshape(B, h4, w4, c4).transpose(0, 3, 1, 2)
    realfake = dis[:, 0]                            # .view(-1, 1).squeeze(1)
    # TODO(synk): self.softmax (LogSoftmax) is defined in __init__ but never
    # applied in forward, so `aux` is returned as raw fc_aux logits (as PyTorch).
    return h3, aux, realfake


# --------------------------------------------------------------------------
if __name__ == "__main__":
    # The fc layers require the conv stack to end at (df_dim*8, 11, 8), which
    # pins the input to H=23 (seq) and W=128 (hidden_dim).
    z_dim, c_dim, df_dim, class_num, hidden_dim = 16, 1, 4, 5, 128
    batch, seq = 2, 23

    key = jax.random.PRNGKey(0)
    pkey, dkey = jax.random.split(key)
    params = init_params(pkey, z_dim, c_dim, df_dim, class_num, hidden_dim, seq)

    # use_e=True path: integer tokens -> embedding -> (B, 1, 23, 128)
    tokens = jax.random.randint(dkey, (batch, seq), 0, 25, dtype=jnp.int32)

    fwd = jax.jit(functools.partial(
        discriminator_forward, use_e=True, c_dim=c_dim, df_dim=df_dim,
        class_num=class_num))
    h3, output, realfake = fwd(params, tokens)
    jax.block_until_ready((h3, output, realfake))

    assert h3.shape == (batch, df_dim * 8, 11, 8)
    assert output.shape == (batch, class_num)
    assert realfake.shape == (batch,)
    assert bool(jnp.all(jnp.isfinite(h3)))
    assert bool(jnp.all(jnp.isfinite(output)))
    assert bool(jnp.all((realfake >= 0.0) & (realfake <= 1.0)))
    print("KERNEL_OK")
</pallas_src>

<mosaic_0001>
module attributes {stable_mosaic.version = 11 : i64} {
  func.func @kernel(%arg0: memref<2x23x128xbf16, #tpu.memory_space<vmem>>, %arg1: memref<4x128x256xbf16, #tpu.memory_space<vmem>>, %arg2: memref<4x256x256xbf16, #tpu.memory_space<vmem>>, %arg3: memref<1x256xf32, #tpu.memory_space<vmem>>, %arg4: memref<1x256xf32, #tpu.memory_space<vmem>>, %arg5: memref<4x256x256xbf16, #tpu.memory_space<vmem>>, %arg6: memref<1x256xf32, #tpu.memory_space<vmem>>, %arg7: memref<1x256xf32, #tpu.memory_space<vmem>>, %arg8: memref<4x256x256xbf16, #tpu.memory_space<vmem>>, %arg9: memref<1x256xf32, #tpu.memory_space<vmem>>, %arg10: memref<1x256xf32, #tpu.memory_space<vmem>>, %arg11: memref<11x256x6xbf16, #tpu.memory_space<vmem>>, %arg12: memref<1x6xf32, #tpu.memory_space<vmem>>, %arg13: memref<2x11x256xf32, #tpu.memory_space<vmem>>, %arg14: memref<2x5xf32, #tpu.memory_space<vmem>>, %arg15: memref<2x1xf32, #tpu.memory_space<vmem>>, %arg16: memref<2x20x256xbf16, #tpu.memory_space<vmem>>, %arg17: memref<2x17x256xbf16, #tpu.memory_space<vmem>>, %arg18: memref<2x14x256xbf16, #tpu.memory_space<vmem>>) attributes {dimension_semantics = [], scalar_prefetch = 0 : i64, scratch_operands = 3 : i64, tpu.core_type = #tpu.core_type<tc>} {
    %c0 = arith.constant 0 : index
    %c0_0 = arith.constant 0 : index
    %c0_1 = arith.constant 0 : index
    %0 = vector.load %arg0[%c0, %c0_0, %c0_1] : memref<2x23x128xbf16, #tpu.memory_space<vmem>>, vector<1x20x128xbf16>
    %1 = vector.shape_cast %0 : vector<1x20x128xbf16> to vector<20x128xbf16>
    %c0_2 = arith.constant 0 : index
    %c0_3 = arith.constant 0 : index
    %c0_4 = arith.constant 0 : index
    %2 = vector.load %arg1[%c0_2, %c0_3, %c0_4] : memref<4x128x256xbf16, #tpu.memory_space<vmem>>, vector<1x128x256xbf16>
    %3 = vector.shape_cast %2 : vector<1x128x256xbf16> to vector<128x256xbf16>
    %cst = arith.constant dense<0.000000e+00> : vector<20x256xf32>
    %4 = tpu.matmul %1, %3, %cst {dimension_numbers = #tpu.dot_dimension_numbers<[1], [0], [0], [1], [0, 0, 1, 1], [], []>} : vector<20x128xbf16>, vector<128x256xbf16>, vector<20x256xf32> -> vector<20x256xf32>
    %c0_5 = arith.constant 0 : index
    %c1 = arith.constant 1 : index
    %c0_6 = arith.constant 0 : index
    %5 = vector.load %arg0[%c0_5, %c1, %c0_6] : memref<2x23x128xbf16, #tpu.memory_space<vmem>>, vector<1x20x128xbf16>
    %6 = vector.shape_cast %5 : vector<1x20x128xbf16> to vector<20x128xbf16>
    %c1_7 = arith.constant 1 : index
    %c0_8 = arith.constant 0 : index
    %c0_9 = arith.constant 0 : index
    %7 = vector.load %arg1[%c1_7, %c0_8, %c0_9] : memref<4x128x256xbf16, #tpu.memory_space<vmem>>, vector<1x128x256xbf16>
    %8 = vector.shape_cast %7 : vector<1x128x256xbf16> to vector<128x256xbf16>
    %cst_10 = arith.constant dense<0.000000e+00> : vector<20x256xf32>
    %9 = tpu.matmul %6, %8, %cst_10 {dimension_numbers = #tpu.dot_dimension_numbers<[1], [0], [0], [1], [0, 0, 1, 1], [], []>} : vector<20x128xbf16>, vector<128x256xbf16>, vector<20x256xf32> -> vector<20x256xf32>
    %10 = arith.addf %4, %9 : vector<20x256xf32>
    %c0_11 = arith.constant 0 : index
    %c2 = arith.constant 2 : index
    %c0_12 = arith.constant 0 : index
    %11 = vector.load %arg0[%c0_11, %c2, %c0_12] : memref<2x23x128xbf16, #tpu.memory_space<vmem>>, vector<1x20x128xbf16>
    %12 = vector.shape_cast %11 : vector<1x20x128xbf16> to vector<20x128xbf16>
    %c2_13 = arith.constant 2 : index
    %c0_14 = arith.constant 0 : index
    %c0_15 = arith.constant 0 : index
    %13 = vector.load %arg1[%c2_13, %c0_14, %c0_15] : memref<4x128x256xbf16, #tpu.memory_space<vmem>>, vector<1x128x256xbf16>
    %14 = vector.shape_cast %13 : vector<1x128x256xbf16> to vector<128x256xbf16>
    %cst_16 = arith.constant dense<0.000000e+00> : vector<20x256xf32>
    %15 = tpu.matmul %12, %14, %cst_16 {dimension_numbers = #tpu.dot_dimension_numbers<[1], [0], [0], [1], [0, 0, 1, 1], [], []>} : vector<20x128xbf16>, vector<128x256xbf16>, vector<20x256xf32> -> vector<20x256xf32>
    %16 = arith.addf %10, %15 : vector<20x256xf32>
    %c0_17 = arith.constant 0 : index
    %c3 = arith.constant 3 : index
    %c0_18 = arith.constant 0 : index
    %17 = vector.load %arg0[%c0_17, %c3, %c0_18] : memref<2x23x128xbf16, #tpu.memory_space<vmem>>, vector<1x20x128xbf16>
    %18 = vector.shape_cast %17 : vector<1x20x128xbf16> to vector<20x128xbf16>
    %c3_19 = arith.constant 3 : index
    %c0_20 = arith.constant 0 : index
    %c0_21 = arith.constant 0 : index
    %19 = vector.load %arg1[%c3_19, %c0_20, %c0_21] : memref<4x128x256xbf16, #tpu.memory_space<vmem>>, vector<1x128x256xbf16>
    %20 = vector.shape_cast %19 : vector<1x128x256xbf16> to vector<128x256xbf16>
    %cst_22 = arith.constant dense<0.000000e+00> : vector<20x256xf32>
    %21 = tpu.matmul %18, %20, %cst_22 {dimension_numbers = #tpu.dot_dimension_numbers<[1], [0], [0], [1], [0, 0, 1, 1], [], []>} : vector<20x128xbf16>, vector<128x256xbf16>, vector<20x256xf32> -> vector<20x256xf32>
    %22 = arith.addf %16, %21 : vector<20x256xf32>
    %cst_23 = arith.constant 0.000000e+00 : f32
    %23 = vector.broadcast %cst_23 : f32 to vector<20x256xf32>
    %24 = arith.cmpf oge, %22, %23 : vector<20x256xf32>
    %cst_24 = arith.constant 2.000000e-01 : f32
    %25 = vector.broadcast %cst_24 : f32 to vector<20x256xf32>
    %26 = arith.mulf %25, %22 : vector<20x256xf32>
    %27 = arith.select %24, %22, %26 : vector<20x256xi1>, vector<20x256xf32>
    %28 = arith.truncf %27 : vector<20x256xf32> to vector<20x256xbf16>
    %c0_25 = arith.constant 0 : index
    %c0_26 = arith.constant 0 : index
    %c0_27 = arith.constant 0 : index
    %29 = vector.load %arg16[%c0_25, %c0_26, %c0_27] : memref<2x20x256xbf16, #tpu.memory_space<vmem>>, vector<1x20x256xbf16>
    %30 = vector.shape_cast %29 : vector<1x20x256xbf16> to vector<20x256xbf16>
    %31 = vector.shape_cast %28 : vector<20x256xbf16> to vector<1x20x256xbf16>
    tpu.vector_store %arg16[%c0_25, %c0_26, %c0_27], %31 {strides = array<i32>} : memref<2x20x256xbf16, #tpu.memory_space<vmem>>, vector<1x20x256xbf16>,
    %c1_28 = arith.constant 1 : index
    %c0_29 = arith.constant 0 : index
    %c0_30 = arith.constant 0 : index
    %32 = vector.load %arg0[%c1_28, %c0_29, %c0_30] : memref<2x23x128xbf16, #tpu.memory_space<vmem>>, vector<1x20x128xbf16>
    %33 = vector.shape_cast %32 : vector<1x20x128xbf16> to vector<20x128xbf16>
    %c0_31 = arith.constant 0 : index
    %c0_32 = arith.constant 0 : index
    %c0_33 = arith.constant 0 : index
    %34 = vector.load %arg1[%c0_31, %c0_32, %c0_33] : memref<4x128x256xbf16, #tpu.memory_space<vmem>>, vector<1x128x256xbf16>
    %35 = vector.shape_cast %34 : vector<1x128x256xbf16> to vector<128x256xbf16>
    %cst_34 = arith.constant dense<0.000000e+00> : vector<20x256xf32>
    %36 = tpu.matmul %33, %35, %cst_34 {dimension_numbers = #tpu.dot_dimension_numbers<[1], [0], [0], [1], [0, 0, 1, 1], [], []>} : vector<20x128xbf16>, vector<128x256xbf16>, vector<20x256xf32> -> vector<20x256xf32>
    %c1_35 = arith.constant 1 : index
    %c1_36 = arith.constant 1 : index
    %c0_37 = arith.constant 0 : index
    %37 = vector.load %arg0[%c1_35, %c1_36, %c0_37] : memref<2x23x128xbf16, #tpu.memory_space<vmem>>, vector<1x20x128xbf16>
    %38 = vector.shape_cast %37 : vector<1x20x128xbf16> to vector<20x128xbf16>
    %c1_38 = arith.constant 1 : index
    %c0_39 = arith.constant 0 : index
    %c0_40 = arith.constant 0 : index
    %39 = vector.load %arg1[%c1_38, %c0_39, %c0_40] : memref<4x128x256xbf16, #tpu.memory_space<vmem>>, vector<1x128x256xbf16>
    %40 = vector.shape_cast %39 : vector<1x128x256xbf16> to vector<128x256xbf16>
    %cst_41 = arith.constant dense<0.000000e+00> : vector<20x256xf32>
    %41 = tpu.matmul %38, %40, %cst_41 {dimension_numbers = #tpu.dot_dimension_numbers<[1], [0], [0], [1], [0, 0, 1, 1], [], []>} : vector<20x128xbf16>, vector<128x256xbf16>, vector<20x256xf32> -> vector<20x256xf32>
    %42 = arith.addf %36, %41 : vector<20x256xf32>
    %c1_42 = arith.constant 1 : index
    %c2_43 = arith.constant 2 : index
    %c0_44 = arith.constant 0 : index
    %43 = vector.load %arg0[%c1_42, %c2_43, %c0_44] : memref<2x23x128xbf16, #tpu.memory_space<vmem>>, vector<1x20x128xbf16>
    %44 = vector.shape_cast %43 : vector<1x20x128xbf16> to vector<20x128xbf16>
    %c2_45 = arith.constant 2 : index
    %c0_46 = arith.constant 0 : index
    %c0_47 = arith.constant 0 : index
    %45 = vector.load %arg1[%c2_45, %c0_46, %c0_47] : memref<4x128x256xbf16, #tpu.memory_space<vmem>>, vector<1x128x256xbf16>
    %46 = vector.shape_cast %45 : vector<1x128x256xbf16> to vector<128x256xbf16>
    %cst_48 = arith.constant dense<0.000000e+00> : vector<20x256xf32>
    %47 = tpu.matmul %44, %46, %cst_48 {dimension_numbers = #tpu.dot_dimension_numbers<[1], [0], [0], [1], [0, 0, 1, 1], [], []>} : vector<20x128xbf16>, vector<128x256xbf16>, vector<20x256xf32> -> vector<20x256xf32>
    %48 = arith.addf %42, %47 : vector<20x256xf32>
    %c1_49 = arith.constant 1 : index
    %c3_50 = arith.constant 3 : index
    %c0_51 = arith.constant 0 : index
    %49 = vector.load %arg0[%c1_49, %c3_50, %c0_51] : memref<2x23x128xbf16, #tpu.memory_space<vmem>>, vector<1x20x128xbf16>
    %50 = vector.shape_cast %49 : vector<1x20x128xbf16> to vector<20x128xbf16>
    %c3_52 = arith.constant 3 : index
    %c0_53 = arith.constant 0 : index
    %c0_54 = arith.constant 0 : index
    %51 = vector.load %arg1[%c3_52, %c0_53, %c0_54] : memref<4x128x256xbf16, #tpu.memory_space<vmem>>, vector<1x128x256xbf16>
    %52 = vector.shape_cast %51 : vector<1x128x256xbf16> to vector<128x256xbf16>
    %cst_55 = arith.constant dense<0.000000e+00> : vector<20x256xf32>
    %53 = tpu.matmul %50, %52, %cst_55 {dimension_numbers = #tpu.dot_dimension_numbers<[1], [0], [0], [1], [0, 0, 1, 1], [], []>} : vector<20x128xbf16>, vector<128x256xbf16>, vector<20x256xf32> -> vector<20x256xf32>
    %54 = arith.addf %48, %53 : vector<20x256xf32>
    %cst_56 = arith.constant 0.000000e+00 : f32
    %55 = vector.broadcast %cst_56 : f32 to vector<20x256xf32>
    %56 = arith.cmpf oge, %54, %55 : vector<20x256xf32>
    %cst_57 = arith.constant 2.000000e-01 : f32
    %57 = vector.broadcast %cst_57 : f32 to vector<20x256xf32>
    %58 = arith.mulf %57, %54 : vector<20x256xf32>
    %59 = arith.select %56, %54, %58 : vector<20x256xi1>, vector<20x256xf32>
    %60 = arith.truncf %59 : vector<20x256xf32> to vector<20x256xbf16>
    %c1_58 = arith.constant 1 : index
    %c0_59 = arith.constant 0 : index
    %c0_60 = arith.constant 0 : index
    %61 = vector.load %arg16[%c1_58, %c0_59, %c0_60] : memref<2x20x256xbf16, #tpu.memory_space<vmem>>, vector<1x20x256xbf16>
    %62 = vector.shape_cast %61 : vector<1x20x256xbf16> to vector<20x256xbf16>
    %63 = vector.shape_cast %60 : vector<20x256xbf16> to vector<1x20x256xbf16>
    tpu.vector_store %arg16[%c1_58, %c0_59, %c0_60], %63 {strides = array<i32>} : memref<2x20x256xbf16, #tpu.memory_space<vmem>>, vector<1x20x256xbf16>,
    %c0_61 = arith.constant 0 : index
    %c0_62 = arith.constant 0 : index
    %c0_63 = arith.constant 0 : index
    %64 = vector.load %arg16[%c0_61, %c0_62, %c0_63] : memref<2x20x256xbf16, #tpu.memory_space<vmem>>, vector<1x17x256xbf16>
    %65 = vector.shape_cast %64 : vector<1x17x256xbf16> to vector<17x256xbf16>
    %c0_64 = arith.constant 0 : index
    %c0_65 = arith.constant 0 : index
    %c0_66 = arith.constant 0 : index
    %66 = vector.load %arg2[%c0_64, %c0_65, %c0_66] : memref<4x256x256xbf16, #tpu.memory_space<vmem>>, vector<1x256x256xbf16>
    %67 = vector.shape_cast %66 : vector<1x256x256xbf16> to vector<256x256xbf16>
    %cst_67 = arith.constant dense<0.000000e+00> : vector<17x256xf32>
    %68 = tpu.matmul %65, %67, %cst_67 {dimension_numbers = #tpu.dot_dimension_numbers<[1], [0], [0], [1], [0, 0, 1, 1], [], []>} : vector<17x256xbf16>, vector<256x256xbf16>, vector<17x256xf32> -> vector<17x256xf32>
    %c0_68 = arith.constant 0 : index
    %c1_69 = arith.constant 1 : index
    %c0_70 = arith.constant 0 : index
    %69 = vector.load %arg16[%c0_68, %c1_69, %c0_70] : memref<2x20x256xbf16, #tpu.memory_space<vmem>>, vector<1x17x256xbf16>
    %70 = vector.shape_cast %69 : vector<1x17x256xbf16> to vector<17x256xbf16>
    %c1_71 = arith.constant 1 : index
    %c0_72 = arith.constant 0 : index
    %c0_73 = arith.constant 0 : index
    %71 = vector.load %arg2[%c1_71, %c0_72, %c0_73] : memref<4x256x256xbf16, #tpu.memory_space<vmem>>, vector<1x256x256xbf16>
    %72 = vector.shape_cast %71 : vector<1x256x256xbf16> to vector<256x256xbf16>
    %cst_74 = arith.constant dense<0.000000e+00> : vector<17x256xf32>
    %73 = tpu.matmul %70, %72, %cst_74 {dimension_numbers = #tpu.dot_dimension_numbers<[1], [0], [0], [1], [0, 0, 1, 1], [], []>} : vector<17x256xbf16>, vector<256x256xbf16>, vector<17x256xf32> -> vector<17x256xf32>
    %74 = arith.addf %68, %73 : vector<17x256xf32>
    %c0_75 = arith.constant 0 : index
    %c2_76 = arith.constant 2 : index
    %c0_77 = arith.constant 0 : index
    %75 = vector.load %arg16[%c0_75, %c2_76, %c0_77] : memref<2x20x256xbf16, #tpu.memory_space<vmem>>, vector<1x17x256xbf16>
    %76 = vector.shape_cast %75 : vector<1x17x256xbf16> to vector<17x256xbf16>
    %c2_78 = arith.constant 2 : index
    %c0_79 = arith.constant 0 : index
    %c0_80 = arith.constant 0 : index
    %77 = vector.load %arg2[%c2_78, %c0_79, %c0_80] : memref<4x256x256xbf16, #tpu.memory_space<vmem>>, vector<1x256x256xbf16>
    %78 = vector.shape_cast %77 : vector<1x256x256xbf16> to vector<256x256xbf16>
    %cst_81 = arith.constant dense<0.000000e+00> : vector<17x256xf32>
    %79 = tpu.matmul %76, %78, %cst_81 {dimension_numbers = #tpu.dot_dimension_numbers<[1], [0], [0], [1], [0, 0, 1, 1], [], []>} : vector<17x256xbf16>, vector<256x256xbf16>, vector<17x256xf32> -> vector<17x256xf32>
    %80 = arith.addf %74, %79 : vector<17x256xf32>
    %c0_82 = arith.constant 0 : index
    %c3_83 = arith.constant 3 : index
    %c0_84 = arith.constant 0 : index
    %81 = vector.load %arg16[%c0_82, %c3_83, %c0_84] : memref<2x20x256xbf16, #tpu.memory_space<vmem>>, vector<1x17x256xbf16>
    %82 = vector.shape_cast %81 : vector<1x17x256xbf16> to vector<17x256xbf16>
    %c3_85 = arith.constant 3 : index
    %c0_86 = arith.constant 0 : index
    %c0_87 = arith.constant 0 : index
    %83 = vector.load %arg2[%c3_85, %c0_86, %c0_87] : memref<4x256x256xbf16, #tpu.memory_space<vmem>>, vector<1x256x256xbf16>
    %84 = vector.shape_cast %83 : vector<1x256x256xbf16> to vector<256x256xbf16>
    %cst_88 = arith.constant dense<0.000000e+00> : vector<17x256xf32>
    %85 = tpu.matmul %82, %84, %cst_88 {dimension_numbers = #tpu.dot_dimension_numbers<[1], [0], [0], [1], [0, 0, 1, 1], [], []>} : vector<17x256xbf16>, vector<256x256xbf16>, vector<17x256xf32> -> vector<17x256xf32>
    %86 = arith.addf %80, %85 : vector<17x256xf32>
    %c1_89 = arith.constant 1 : index
    %c0_90 = arith.constant 0 : index
    %c0_91 = arith.constant 0 : index
    %87 = vector.load %arg16[%c1_89, %c0_90, %c0_91] : memref<2x20x256xbf16, #tpu.memory_space<vmem>>, vector<1x17x256xbf16>
    %88 = vector.shape_cast %87 : vector<1x17x256xbf16> to vector<17x256xbf16>
    %c0_92 = arith.constant 0 : index
    %c0_93 = arith.constant 0 : index
    %c0_94 = arith.constant 0 : index
    %89 = vector.load %arg2[%c0_92, %c0_93, %c0_94] : memref<4x256x256xbf16, #tpu.memory_space<vmem>>, vector<1x256x256xbf16>
    %90 = vector.shape_cast %89 : vector<1x256x256xbf16> to vector<256x256xbf16>
    %cst_95 = arith.constant dense<0.000000e+00> : vector<17x256xf32>
    %91 = tpu.matmul %88, %90, %cst_95 {dimension_numbers = #tpu.dot_dimension_numbers<[1], [0], [0], [1], [0, 0, 1, 1], [], []>} : vector<17x256xbf16>, vector<256x256xbf16>, vector<17x256xf32> -> vector<17x256xf32>
    %c1_96 = arith.constant 1 : index
    %c1_97 = arith.constant 1 : index
    %c0_98 = arith.constant 0 : index
    %92 = vector.load %arg16[%c1_96, %c1_97, %c0_98] : memref<2x20x256xbf16, #tpu.memory_space<vmem>>, vector<1x17x256xbf16>
    %93 = vector.shape_cast %92 : vector<1x17x256xbf16> to vector<17x256xbf16>
    %c1_99 = arith.constant 1 : index
    %c0_100 = arith.constant 0 : index
    %c0_101 = arith.constant 0 : index
    %94 = vector.load %arg2[%c1_99, %c0_100, %c0_101] : memref<4x256x256xbf16, #tpu.memory_space<vmem>>, vector<1x256x256xbf16>
    %95 = vector.shape_cast %94 : vector<1x256x256xbf16> to vector<256x256xbf16>
    %cst_102 = arith.constant dense<0.000000e+00> : vector<17x256xf32>
    %96 = tpu.matmul %93, %95, %cst_102 {dimension_numbers = #tpu.dot_dimension_numbers<[1], [0], [0], [1], [0, 0, 1, 1], [], []>} : vector<17x256xbf16>, vector<256x256xbf16>, vector<17x256xf32> -> vector<17x256xf32>
    %97 = arith.addf %91, %96 : vector<17x256xf32>
    %c1_103 = arith.constant 1 : index
    %c2_104 = arith.constant 2 : index
    %c0_105 = arith.constant 0 : index
    %98 = vector.load %arg16[%c1_103, %c2_104, %c0_105] : memref<2x20x256xbf16, #tpu.memory_space<vmem>>, vector<1x17x256xbf16>
    %99 = vector.shape_cast %98 : vector<1x17x256xbf16> to vector<17x256xbf16>
    %c2_106 = arith.constant 2 : index
    %c0_107 = arith.constant 0 : index
    %c0_108 = arith.constant 0 : index
    %100 = vector.load %arg2[%c2_106, %c0_107, %c0_108] : memref<4x256x256xbf16, #tpu.memory_space<vmem>>, vector<1x256x256xbf16>
    %101 = vector.shape_cast %100 : vector<1x256x256xbf16> to vector<256x256xbf16>
    %cst_109 = arith.constant dense<0.000000e+00> : vector<17x256xf32>
    %102 = tpu.matmul %99, %101, %cst_109 {dimension_numbers = #tpu.dot_dimension_numbers<[1], [0], [0], [1], [0, 0, 1, 1], [], []>} : vector<17x256xbf16>, vector<256x256xbf16>, vector<17x256xf32> -> vector<17x256xf32>
    %103 = arith.addf %97, %102 : vector<17x256xf32>
    %c1_110 = arith.constant 1 : index
    %c3_111 = arith.constant 3 : index
    %c0_112 = arith.constant 0 : index
    %104 = vector.load %arg16[%c1_110, %c3_111, %c0_112] : memref<2x20x256xbf16, #tpu.memory_space<vmem>>, vector<1x17x256xbf16>
    %105 = vector.shape_cast %104 : vector<1x17x256xbf16> to vector<17x256xbf16>
    %c3_113 = arith.constant 3 : index
    %c0_114 = arith.constant 0 : index
    %c0_115 = arith.constant 0 : index
    %106 = vector.load %arg2[%c3_113, %c0_114, %c0_115] : memref<4x256x256xbf16, #tpu.memory_space<vmem>>, vector<1x256x256xbf16>
    %107 = vector.shape_cast %106 : vector<1x256x256xbf16> to vector<256x256xbf16>
    %cst_116 = arith.constant dense<0.000000e+00> : vector<17x256xf32>
    %108 = tpu.matmul %105, %107, %cst_116 {dimension_numbers = #tpu.dot_dimension_numbers<[1], [0], [0], [1], [0, 0, 1, 1], [], []>} : vector<17x256xbf16>, vector<256x256xbf16>, vector<17x256xf32> -> vector<17x256xf32>
    %109 = arith.addf %103, %108 : vector<17x256xf32>
    %cst_117 = arith.constant dense<0.000000e+00> : vector<256xf32>
    %110 = vector.multi_reduction <add>, %86, %cst_117 [0] : vector<17x256xf32> to vector<256xf32>
    %111 = vector.shape_cast %110 : vector<256xf32> to vector<1x256xf32>
    %cst_118 = arith.constant 0.000000e+00 : f32
    %112 = vector.broadcast %cst_118 : f32 to vector<1x256xf32>
    %113 = arith.addf %112, %111 : vector<1x256xf32>
    %cst_119 = arith.constant dense<0.000000e+00> : vector<256xf32>
    %114 = vector.multi_reduction <add>, %109, %cst_119 [0] : vector<17x256xf32> to vector<256xf32>
    %115 = vector.shape_cast %114 : vector<256xf32> to vector<1x256xf32>
    %116 = arith.addf %113, %115 : vector<1x256xf32>
    %117 = arith.mulf %86, %86 : vector<17x256xf32>
    %cst_120 = arith.constant dense<0.000000e+00> : vector<256xf32>
    %118 = vector.multi_reduction <add>, %117, %cst_120 [0] : vector<17x256xf32> to vector<256xf32>
    %119 = vector.shape_cast %118 : vector<256xf32> to vector<1x256xf32>
    %cst_121 = arith.constant 0.000000e+00 : f32
    %120 = vector.broadcast %cst_121 : f32 to vector<1x256xf32>
    %121 = arith.addf %120, %119 : vector<1x256xf32>
    %122 = arith.mulf %109, %109 : vector<17x256xf32>
    %cst_122 = arith.constant dense<0.000000e+00> : vector<256xf32>
    %123 = vector.multi_reduction <add>, %122, %cst_122 [0] : vector<17x256xf32> to vector<256xf32>
    %124 = vector.shape_cast %123 : vector<256xf32> to vector<1x256xf32>
    %125 = arith.addf %121, %124 : vector<1x256xf32>
    %126 = tpu.concatenate %116, %125 in 0 : vector<1x256xf32>, vector<1x256xf32> -> vector<2x256xf32>
    %c8_i32 = arith.constant 8 : i32
    %127 = tpu.dynamic_rotate %126 by %c8_i32 dim 1 : vector<2x256xf32>, i32 -> vector<2x256xf32>
    %128 = arith.addf %126, %127 : vector<2x256xf32>
    %c16_i32 = arith.constant 16 : i32
    %129 = tpu.dynamic_rotate %128 by %c16_i32 dim 1 : vector<2x256xf32>, i32 -> vector<2x256xf32>
    %130 = arith.addf %128, %129 : vector<2x256xf32>
    %c32_i32 = arith.constant 32 : i32
    %131 = tpu.dynamic_rotate %130 by %c32_i32 dim 1 : vector<2x256xf32>, i32 -> vector<2x256xf32>
    %132 = arith.addf %130, %131 : vector<2x256xf32>
    %c64_i32 = arith.constant 64 : i32
    %133 = tpu.dynamic_rotate %132 by %c64_i32 dim 1 : vector<2x256xf32>, i32 -> vector<2x256xf32>
    %134 = arith.addf %132, %133 : vector<2x256xf32>
    %c128_i32 = arith.constant 128 : i32
    %135 = tpu.dynamic_rotate %134 by %c128_i32 dim 1 : vector<2x256xf32>, i32 -> vector<2x256xf32>
    %136 = arith.addf %134, %135 : vector<2x256xf32>
    %137 = vector.extract_strided_slice %136 {offsets = [0, 0], sizes = [1, 256], strides = [1, 1]} : vector<2x256xf32> to vector<1x256xf32>
    %cst_123 = arith.constant 9.1911765E-4 : f32
    %138 = vector.broadcast %cst_123 : f32 to vector<1x256xf32>
    %139 = arith.mulf %137, %138 : vector<1x256xf32>
    %140 = vector.extract_strided_slice %136 {offsets = [1, 0], sizes = [1, 256], strides = [1, 1]} : vector<2x256xf32> to vector<1x256xf32>
    %cst_124 = arith.constant 9.1911765E-4 : f32
    %141 = vector.broadcast %cst_124 : f32 to vector<1x256xf32>
    %142 = arith.mulf %140, %141 : vector<1x256xf32>
    %143 = arith.mulf %139, %139 : vector<1x256xf32>
    %144 = arith.subf %142, %143 : vector<1x256xf32>
    %cst_125 = arith.constant 0.000000e+00 : f32
    %145 = vector.broadcast %cst_125 : f32 to vector<1x256xf32>
    %146 = arith.maximumf %144, %145 : vector<1x256xf32>
    %cst_126 = arith.constant 9.99999974E-6 : f32
    %147 = vector.broadcast %cst_126 : f32 to vector<1x256xf32>
    %148 = arith.addf %146, %147 : vector<1x256xf32>
    %149 = math.rsqrt %148 : vector<1x256xf32>
    %c0_127 = arith.constant 0 : index
    %c0_128 = arith.constant 0 : index
    %150 = vector.load %arg3[%c0_127, %c0_128] : memref<1x256xf32, #tpu.memory_space<vmem>>, vector<1x256xf32>
    %151 = arith.mulf %149, %150 : vector<1x256xf32>
    %c0_129 = arith.constant 0 : index
    %c0_130 = arith.constant 0 : index
    %152 = vector.load %arg4[%c0_129, %c0_130] : memref<1x256xf32, #tpu.memory_space<vmem>>, vector<1x256xf32>
    %153 = arith.mulf %139, %151 : vector<1x256xf32>
    %154 = arith.subf %152, %153 : vector<1x256xf32>
    %155 = vector.broadcast %151 : vector<1x256xf32> to vector<17x256xf32>
    %156 = arith.mulf %86, %155 : vector<17x256xf32>
    %157 = vector.broadcast %154 : vector<1x256xf32> to vector<17x256xf32>
    %158 = arith.addf %156, %157 : vector<17x256xf32>
    %cst_131 = arith.constant 0.000000e+00 : f32
    %159 = vector.broadcast %cst_131 : f32 to vector<17x256xf32>
    %160 = arith.cmpf oge, %158, %159 : vector<17x256xf32>
    %cst_132 = arith.constant 2.000000e-01 : f32
    %161 = vector.broadcast %cst_132 : f32 to vector<17x256xf32>
    %162 = arith.mulf %161, %158 : vector<17x256xf32>
    %163 = arith.select %160, %158, %162 : vector<17x256xi1>, vector<17x256xf32>
    %164 = arith.truncf %163 : vector<17x256xf32> to vector<17x256xbf16>
    %c0_133 = arith.constant 0 : index
    %c0_134 = arith.constant 0 : index
    %c0_135 = arith.constant 0 : index
    %165 = vector.load %arg17[%c0_133, %c0_134, %c0_135] : memref<2x17x256xbf16, #tpu.memory_space<vmem>>, vector<1x17x256xbf16>
    %166 = vector.shape_cast %165 : vector<1x17x256xbf16> to vector<17x256xbf16>
    %167 = vector.shape_cast %164 : vector<17x256xbf16> to vector<1x17x256xbf16>
    tpu.vector_store %arg17[%c0_133, %c0_134, %c0_135], %167 {strides = array<i32>} : memref<2x17x256xbf16, #tpu.memory_space<vmem>>, vector<1x17x256xbf16>,
    %168 = vector.broadcast %151 : vector<1x256xf32> to vector<17x256xf32>
    %169 = arith.mulf %109, %168 : vector<17x256xf32>
    %170 = vector.broadcast %154 : vector<1x256xf32> to vector<17x256xf32>
    %171 = arith.addf %169, %170 : vector<17x256xf32>
    %cst_136 = arith.constant 0.000000e+00 : f32
    %172 = vector.broadcast %cst_136 : f32 to vector<17x256xf32>
    %173 = arith.cmpf oge, %171, %172 : vector<17x256xf32>
    %cst_137 = arith.constant 2.000000e-01 : f32
    %174 = vector.broadcast %cst_137 : f32 to vector<17x256xf32>
    %175 = arith.mulf %174, %171 : vector<17x256xf32>
    %176 = arith.select %173, %171, %175 : vector<17x256xi1>, vector<17x256xf32>
    %177 = arith.truncf %176 : vector<17x256xf32> to vector<17x256xbf16>
    %c1_138 = arith.constant 1 : index
    %c0_139 = arith.constant 0 : index
    %c0_140 = arith.constant 0 : index
    %178 = vector.load %arg17[%c1_138, %c0_139, %c0_140] : memref<2x17x256xbf16, #tpu.memory_space<vmem>>, vector<1x17x256xbf16>
    %179 = vector.shape_cast %178 : vector<1x17x256xbf16> to vector<17x256xbf16>
    %180 = vector.shape_cast %177 : vector<17x256xbf16> to vector<1x17x256xbf16>
    tpu.vector_store %arg17[%c1_138, %c0_139, %c0_140], %180 {strides = array<i32>} : memref<2x17x256xbf16, #tpu.memory_space<vmem>>, vector<1x17x256xbf16>,
    %c0_141 = arith.constant 0 : index
    %c0_142 = arith.constant 0 : index
    %c0_143 = arith.constant 0 : index
    %181 = vector.load %arg17[%c0_141, %c0_142, %c0_143] : memref<2x17x256xbf16, #tpu.memory_space<vmem>>, vector<1x14x256xbf16>
    %182 = vector.shape_cast %181 : vector<1x14x256xbf16> to vector<14x256xbf16>
    %c0_144 = arith.constant 0 : index
    %c0_145 = arith.constant 0 : index
    %c0_146 = arith.constant 0 : index
    %183 = vector.load %arg5[%c0_144, %c0_145, %c0_146] : memref<4x256x256xbf16, #tpu.memory_space<vmem>>, vector<1x256x256xbf16>
    %184 = vector.shape_cast %183 : vector<1x256x256xbf16> to vector<256x256xbf16>
    %cst_147 = arith.constant dense<0.000000e+00> : vector<14x256xf32>
    %185 = tpu.matmul %182, %184, %cst_147 {dimension_numbers = #tpu.dot_dimension_numbers<[1], [0], [0], [1], [0, 0, 1, 1], [], []>} : vector<14x256xbf16>, vector<256x256xbf16>, vector<14x256xf32> -> vector<14x256xf32>
    %c0_148 = arith.constant 0 : index
    %c1_149 = arith.constant 1 : index
    %c0_150 = arith.constant 0 : index
    %186 = vector.load %arg17[%c0_148, %c1_149, %c0_150] : memref<2x17x256xbf16, #tpu.memory_space<vmem>>, vector<1x14x256xbf16>
    %187 = vector.shape_cast %186 : vector<1x14x256xbf16> to vector<14x256xbf16>
    %c1_151 = arith.constant 1 : index
    %c0_152 = arith.constant 0 : index
    %c0_153 = arith.constant 0 : index
    %188 = vector.load %arg5[%c1_151, %c0_152, %c0_153] : memref<4x256x256xbf16, #tpu.memory_space<vmem>>, vector<1x256x256xbf16>
    %189 = vector.shape_cast %188 : vector<1x256x256xbf16> to vector<256x256xbf16>
    %cst_154 = arith.constant dense<0.000000e+00> : vector<14x256xf32>
    %190 = tpu.matmul %187, %189, %cst_154 {dimension_numbers = #tpu.dot_dimension_numbers<[1], [0], [0], [1], [0, 0, 1, 1], [], []>} : vector<14x256xbf16>, vector<256x256xbf16>, vector<14x256xf32> -> vector<14x256xf32>
    %191 = arith.addf %185, %190 : vector<14x256xf32>
    %c0_155 = arith.constant 0 : index
    %c2_156 = arith.constant 2 : index
    %c0_157 = arith.constant 0 : index
    %192 = vector.load %arg17[%c0_155, %c2_156, %c0_157] : memref<2x17x256xbf16, #tpu.memory_space<vmem>>, vector<1x14x256xbf16>
    %193 = vector.shape_cast %192 : vector<1x14x256xbf16> to vector<14x256xbf16>
    %c2_158 = arith.constant 2 : index
    %c0_159 = arith.constant 0 : index
    %c0_160 = arith.constant 0 : index
    %194 = vector.load %arg5[%c2_158, %c0_159, %c0_160] : memref<4x256x256xbf16, #tpu.memory_space<vmem>>, vector<1x256x256xbf16>
    %195 = vector.shape_cast %194 : vector<1x256x256xbf16> to vector<256x256xbf16>
    %cst_161 = arith.constant dense<0.000000e+00> : vector<14x256xf32>
    %196 = tpu.matmul %193, %195, %cst_161 {dimension_numbers = #tpu.dot_dimension_numbers<[1], [0], [0], [1], [0, 0, 1, 1], [], []>} : vector<14x256xbf16>, vector<256x256xbf16>, vector<14x256xf32> -> vector<14x256xf32>
    %197 = arith.addf %191, %196 : vector<14x256xf32>
    %c0_162 = arith.constant 0 : index
    %c3_163 = arith.constant 3 : index
    %c0_164 = arith.constant 0 : index
    %198 = vector.load %arg17[%c0_162, %c3_163, %c0_164] : memref<2x17x256xbf16, #tpu.memory_space<vmem>>, vector<1x14x256xbf16>
    %199 = vector.shape_cast %198 : vector<1x14x256xbf16> to vector<14x256xbf16>
    %c3_165 = arith.constant 3 : index
    %c0_166 = arith.constant 0 : index
    %c0_167 = arith.constant 0 : index
    %200 = vector.load %arg5[%c3_165, %c0_166, %c0_167] : memref<4x256x256xbf16, #tpu.memory_space<vmem>>, vector<1x256x256xbf16>
    %201 = vector.shape_cast %200 : vector<1x256x256xbf16> to vector<256x256xbf16>
    %cst_168 = arith.constant dense<0.000000e+00> : vector<14x256xf32>
    %202 = tpu.matmul %199, %201, %cst_168 {dimension_numbers = #tpu.dot_dimension_numbers<[1], [0], [0], [1], [0, 0, 1, 1], [], []>} : vector<14x256xbf16>, vector<256x256xbf16>, vector<14x256xf32> -> vector<14x256xf32>
    %203 = arith.addf %197, %202 : vector<14x256xf32>
    %c1_169 = arith.constant 1 : index
    %c0_170 = arith.constant 0 : index
    %c0_171 = arith.constant 0 : index
    %204 = vector.load %arg17[%c1_169, %c0_170, %c0_171] : memref<2x17x256xbf16, #tpu.memory_space<vmem>>, vector<1x14x256xbf16>
    %205 = vector.shape_cast %204 : vector<1x14x256xbf16> to vector<14x256xbf16>
    %c0_172 = arith.constant 0 : index
    %c0_173 = arith.constant 0 : index
    %c0_174 = arith.constant 0 : index
    %206 = vector.load %arg5[%c0_172, %c0_173, %c0_174] : memref<4x256x256xbf16, #tpu.memory_space<vmem>>, vector<1x256x256xbf16>
    %207 = vector.shape_cast %206 : vector<1x256x256xbf16> to vector<256x256xbf16>
    %cst_175 = arith.constant dense<0.000000e+00> : vector<14x256xf32>
    %208 = tpu.matmul %205, %207, %cst_175 {dimension_numbers = #tpu.dot_dimension_numbers<[1], [0], [0], [1], [0, 0, 1, 1], [], []>} : vector<14x256xbf16>, vector<256x256xbf16>, vector<14x256xf32> -> vector<14x256xf32>
    %c1_176 = arith.constant 1 : index
    %c1_177 = arith.constant 1 : index
    %c0_178 = arith.constant 0 : index
    %209 = vector.load %arg17[%c1_176, %c1_177, %c0_178] : memref<2x17x256xbf16, #tpu.memory_space<vmem>>, vector<1x14x256xbf16>
    %210 = vector.shape_cast %209 : vector<1x14x256xbf16> to vector<14x256xbf16>
    %c1_179 = arith.constant 1 : index
    %c0_180 = arith.constant 0 : index
    %c0_181 = arith.constant 0 : index
    %211 = vector.load %arg5[%c1_179, %c0_180, %c0_181] : memref<4x256x256xbf16, #tpu.memory_space<vmem>>, vector<1x256x256xbf16>
    %212 = vector.shape_cast %211 : vector<1x256x256xbf16> to vector<256x256xbf16>
    %cst_182 = arith.constant dense<0.000000e+00> : vector<14x256xf32>
    %213 = tpu.matmul %210, %212, %cst_182 {dimension_numbers = #tpu.dot_dimension_numbers<[1], [0], [0], [1], [0, 0, 1, 1], [], []>} : vector<14x256xbf16>, vector<256x256xbf16>, vector<14x256xf32> -> vector<14x256xf32>
    %214 = arith.addf %208, %213 : vector<14x256xf32>
    %c1_183 = arith.constant 1 : index
    %c2_184 = arith.constant 2 : index
    %c0_185 = arith.constant 0 : index
    %215 = vector.load %arg17[%c1_183, %c2_184, %c0_185] : memref<2x17x256xbf16, #tpu.memory_space<vmem>>, vector<1x14x256xbf16>
    %216 = vector.shape_cast %215 : vector<1x14x256xbf16> to vector<14x256xbf16>
    %c2_186 = arith.constant 2 : index
    %c0_187 = arith.constant 0 : index
    %c0_188 = arith.constant 0 : index
    %217 = vector.load %arg5[%c2_186, %c0_187, %c0_188] : memref<4x256x256xbf16, #tpu.memory_space<vmem>>, vector<1x256x256xbf16>
    %218 = vector.shape_cast %217 : vector<1x256x256xbf16> to vector<256x256xbf16>
    %cst_189 = arith.constant dense<0.000000e+00> : vector<14x256xf32>
    %219 = tpu.matmul %216, %218, %cst_189 {dimension_numbers = #tpu.dot_dimension_numbers<[1], [0], [0], [1], [0, 0, 1, 1], [], []>} : vector<14x256xbf16>, vector<256x256xbf16>, vector<14x256xf32> -> vector<14x256xf32>
    %220 = arith.addf %214, %219 : vector<14x256xf32>
    %c1_190 = arith.constant 1 : index
    %c3_191 = arith.constant 3 : index
    %c0_192 = arith.constant 0 : index
    %221 = vector.load %arg17[%c1_190, %c3_191, %c0_192] : memref<2x17x256xbf16, #tpu.memory_space<vmem>>, vector<1x14x256xbf16>
    %222 = vector.shape_cast %221 : vector<1x14x256xbf16> to vector<14x256xbf16>
    %c3_193 = arith.constant 3 : index
    %c0_194 = arith.constant 0 : index
    %c0_195 = arith.constant 0 : index
    %223 = vector.load %arg5[%c3_193, %c0_194, %c0_195] : memref<4x256x256xbf16, #tpu.memory_space<vmem>>, vector<1x256x256xbf16>
    %224 = vector.shape_cast %223 : vector<1x256x256xbf16> to vector<256x256xbf16>
    %cst_196 = arith.constant dense<0.000000e+00> : vector<14x256xf32>
    %225 = tpu.matmul %222, %224, %cst_196 {dimension_numbers = #tpu.dot_dimension_numbers<[1], [0], [0], [1], [0, 0, 1, 1], [], []>} : vector<14x256xbf16>, vector<256x256xbf16>, vector<14x256xf32> -> vector<14x256xf32>
    %226 = arith.addf %220, %225 : vector<14x256xf32>
    %cst_197 = arith.constant dense<0.000000e+00> : vector<256xf32>
    %227 = vector.multi_reduction <add>, %203, %cst_197 [0] : vector<14x256xf32> to vector<256xf32>
    %228 = vector.shape_cast %227 : vector<256xf32> to vector<1x256xf32>
    %cst_198 = arith.constant 0.000000e+00 : f32
    %229 = vector.broadcast %cst_198 : f32 to vector<1x256xf32>
    %230 = arith.addf %229, %228 : vector<1x256xf32>
    %cst_199 = arith.constant dense<0.000000e+00> : vector<256xf32>
    %231 = vector.multi_reduction <add>, %226, %cst_199 [0] : vector<14x256xf32> to vector<256xf32>
    %232 = vector.shape_cast %231 : vector<256xf32> to vector<1x256xf32>
    %233 = arith.addf %230, %232 : vector<1x256xf32>
    %234 = arith.mulf %203, %203 : vector<14x256xf32>
    %cst_200 = arith.constant dense<0.000000e+00> : vector<256xf32>
    %235 = vector.multi_reduction <add>, %234, %cst_200 [0] : vector<14x256xf32> to vector<256xf32>
    %236 = vector.shape_cast %235 : vector<256xf32> to vector<1x256xf32>
    %cst_201 = arith.constant 0.000000e+00 : f32
    %237 = vector.broadcast %cst_201 : f32 to vector<1x256xf32>
    %238 = arith.addf %237, %236 : vector<1x256xf32>
    %239 = arith.mulf %226, %226 : vector<14x256xf32>
    %cst_202 = arith.constant dense<0.000000e+00> : vector<256xf32>
    %240 = vector.multi_reduction <add>, %239, %cst_202 [0] : vector<14x256xf32> to vector<256xf32>
    %241 = vector.shape_cast %240 : vector<256xf32> to vector<1x256xf32>
    %242 = arith.addf %238, %241 : vector<1x256xf32>
    %243 = tpu.concatenate %233, %242 in 0 : vector<1x256xf32>, vector<1x256xf32> -> vector<2x256xf32>
    %c16_i32_203 = arith.constant 16 : i32
    %244 = tpu.dynamic_rotate %243 by %c16_i32_203 dim 1 : vector<2x256xf32>, i32 -> vector<2x256xf32>
    %245 = arith.addf %243, %244 : vector<2x256xf32>
    %c32_i32_204 = arith.constant 32 : i32
    %246 = tpu.dynamic_rotate %245 by %c32_i32_204 dim 1 : vector<2x256xf32>, i32 -> vector<2x256xf32>
    %247 = arith.addf %245, %246 : vector<2x256xf32>
    %c64_i32_205 = arith.constant 64 : i32
    %248 = tpu.dynamic_rotate %247 by %c64_i32_205 dim 1 : vector<2x256xf32>, i32 -> vector<2x256xf32>
    %249 = arith.addf %247, %248 : vector<2x256xf32>
    %c128_i32_206 = arith.constant 128 : i32
    %250 = tpu.dynamic_rotate %249 by %c128_i32_206 dim 1 : vector<2x256xf32>, i32 -> vector<2x256xf32>
    %251 = arith.addf %249, %250 : vector<2x256xf32>
    %252 = vector.extract_strided_slice %251 {offsets = [0, 0], sizes = [1, 256], strides = [1, 1]} : vector<2x256xf32> to vector<1x256xf32>
    %cst_207 = arith.constant 0.00223214296 : f32
    %253 = vector.broadcast %cst_207 : f32 to vector<1x256xf32>
    %254 = arith.mulf %252, %253 : vector<1x256xf32>
    %255 = vector.extract_strided_slice %251 {offsets = [1, 0], sizes = [1, 256], strides = [1, 1]} : vector<2x256xf32> to vector<1x256xf32>
    %cst_208 = arith.constant 0.00223214296 : f32
    %256 = vector.broadcast %cst_208 : f32 to vector<1x256xf32>
    %257 = arith.mulf %255, %256 : vector<1x256xf32>
    %258 = arith.mulf %254, %254 : vector<1x256xf32>
    %259 = arith.subf %257, %258 : vector<1x256xf32>
    %cst_209 = arith.constant 0.000000e+00 : f32
    %260 = vector.broadcast %cst_209 : f32 to vector<1x256xf32>
    %261 = arith.maximumf %259, %260 : vector<1x256xf32>
    %cst_210 = arith.constant 9.99999974E-6 : f32
    %262 = vector.broadcast %cst_210 : f32 to vector<1x256xf32>
    %263 = arith.addf %261, %262 : vector<1x256xf32>
    %264 = math.rsqrt %263 : vector<1x256xf32>
    %c0_211 = arith.constant 0 : index
    %c0_212 = arith.constant 0 : index
    %265 = vector.load %arg6[%c0_211, %c0_212] : memref<1x256xf32, #tpu.memory_space<vmem>>, vector<1x256xf32>
    %266 = arith.mulf %264, %265 : vector<1x256xf32>
    %c0_213 = arith.constant 0 : index
    %c0_214 = arith.constant 0 : index
    %267 = vector.load %arg7[%c0_213, %c0_214] : memref<1x256xf32, #tpu.memory_space<vmem>>, vector<1x256xf32>
    %268 = arith.mulf %254, %266 : vector<1x256xf32>
    %269 = arith.subf %267, %268 : vector<1x256xf32>
    %270 = vector.broadcast %266 : vector<1x256xf32> to vector<14x256xf32>
    %271 = arith.mulf %203, %270 : vector<14x256xf32>
    %272 = vector.broadcast %269 : vector<1x256xf32> to vector<14x256xf32>
    %273 = arith.addf %271, %272 : vector<14x256xf32>
    %cst_215 = arith.constant 0.000000e+00 : f32
    %274 = vector.broadcast %cst_215 : f32 to vector<14x256xf32>
    %275 = arith.cmpf oge, %273, %274 : vector<14x256xf32>
    %cst_216 = arith.constant 2.000000e-01 : f32
    %276 = vector.broadcast %cst_216 : f32 to vector<14x256xf32>
    %277 = arith.mulf %276, %273 : vector<14x256xf32>
    %278 = arith.select %275, %273, %277 : vector<14x256xi1>, vector<14x256xf32>
    %279 = arith.truncf %278 : vector<14x256xf32> to vector<14x256xbf16>
    %c0_217 = arith.constant 0 : index
    %c0_218 = arith.constant 0 : index
    %c0_219 = arith.constant 0 : index
    %280 = vector.load %arg18[%c0_217, %c0_218, %c0_219] : memref<2x14x256xbf16, #tpu.memory_space<vmem>>, vector<1x14x256xbf16>
    %281 = vector.shape_cast %280 : vector<1x14x256xbf16> to vector<14x256xbf16>
    %282 = vector.shape_cast %279 : vector<14x256xbf16> to vector<1x14x256xbf16>
    tpu.vector_store %arg18[%c0_217, %c0_218, %c0_219], %282 {strides = array<i32>} : memref<2x14x256xbf16, #tpu.memory_space<vmem>>, vector<1x14x256xbf16>,
    %283 = vector.broadcast %266 : vector<1x256xf32> to vector<14x256xf32>
    %284 = arith.mulf %226, %283 : vector<14x256xf32>
    %285 = vector.broadcast %269 : vector<1x256xf32> to vector<14x256xf32>
    %286 = arith.addf %284, %285 : vector<14x256xf32>
    %cst_220 = arith.constant 0.000000e+00 : f32
    %287 = vector.broadcast %cst_220 : f32 to vector<14x256xf32>
    %288 = arith.cmpf oge, %286, %287 : vector<14x256xf32>
    %cst_221 = arith.constant 2.000000e-01 : f32
    %289 = vector.broadcast %cst_221 : f32 to vector<14x256xf32>
    %290 = arith.mulf %289, %286 : vector<14x256xf32>
    %291 = arith.select %288, %286, %290 : vector<14x256xi1>, vector<14x256xf32>
    %292 = arith.truncf %291 : vector<14x256xf32> to vector<14x256xbf16>
    %c1_222 = arith.constant 1 : index
    %c0_223 = arith.constant 0 : index
    %c0_224 = arith.constant 0 : index
    %293 = vector.load %arg18[%c1_222, %c0_223, %c0_224] : memref<2x14x256xbf16, #tpu.memory_space<vmem>>, vector<1x14x256xbf16>
    %294 = vector.shape_cast %293 : vector<1x14x256xbf16> to vector<14x256xbf16>
    %295 = vector.shape_cast %292 : vector<14x256xbf16> to vector<1x14x256xbf16>
    tpu.vector_store %arg18[%c1_222, %c0_223, %c0_224], %295 {strides = array<i32>} : memref<2x14x256xbf16, #tpu.memory_space<vmem>>, vector<1x14x256xbf16>,
    %c0_225 = arith.constant 0 : index
    %c0_226 = arith.constant 0 : index
    %c0_227 = arith.constant 0 : index
    %296 = vector.load %arg18[%c0_225, %c0_226, %c0_227] : memref<2x14x256xbf16, #tpu.memory_space<vmem>>, vector<1x11x256xbf16>
    %297 = vector.shape_cast %296 : vector<1x11x256xbf16> to vector<11x256xbf16>
    %c0_228 = arith.constant 0 : index
    %c0_229 = arith.constant 0 : index
    %c0_230 = arith.constant 0 : index
    %298 = vector.load %arg8[%c0_228, %c0_229, %c0_230] : memref<4x256x256xbf16, #tpu.memory_space<vmem>>, vector<1x256x256xbf16>
    %299 = vector.shape_cast %298 : vector<1x256x256xbf16> to vector<256x256xbf16>
    %cst_231 = arith.constant dense<0.000000e+00> : vector<11x256xf32>
    %300 = tpu.matmul %297, %299, %cst_231 {dimension_numbers = #tpu.dot_dimension_numbers<[1], [0], [0], [1], [0, 0, 1, 1], [], []>} : vector<11x256xbf16>, vector<256x256xbf16>, vector<11x256xf32> -> vector<11x256xf32>
    %c0_232 = arith.constant 0 : index
    %c1_233 = arith.constant 1 : index
    %c0_234 = arith.constant 0 : index
    %301 = vector.load %arg18[%c0_232, %c1_233, %c0_234] : memref<2x14x256xbf16, #tpu.memory_space<vmem>>, vector<1x11x256xbf16>
    %302 = vector.shape_cast %301 : vector<1x11x256xbf16> to vector<11x256xbf16>
    %c1_235 = arith.constant 1 : index
    %c0_236 = arith.constant 0 : index
    %c0_237 = arith.constant 0 : index
    %303 = vector.load %arg8[%c1_235, %c0_236, %c0_237] : memref<4x256x256xbf16, #tpu.memory_space<vmem>>, vector<1x256x256xbf16>
    %304 = vector.shape_cast %303 : vector<1x256x256xbf16> to vector<256x256xbf16>
    %cst_238 = arith.constant dense<0.000000e+00> : vector<11x256xf32>
    %305 = tpu.matmul %302, %304, %cst_238 {dimension_numbers = #tpu.dot_dimension_numbers<[1], [0], [0], [1], [0, 0, 1, 1], [], []>} : vector<11x256xbf16>, vector<256x256xbf16>, vector<11x256xf32> -> vector<11x256xf32>
    %306 = arith.addf %300, %305 : vector<11x256xf32>
    %c0_239 = arith.constant 0 : index
    %c2_240 = arith.constant 2 : index
    %c0_241 = arith.constant 0 : index
    %307 = vector.load %arg18[%c0_239, %c2_240, %c0_241] : memref<2x14x256xbf16, #tpu.memory_space<vmem>>, vector<1x11x256xbf16>
    %308 = vector.shape_cast %307 : vector<1x11x256xbf16> to vector<11x256xbf16>
    %c2_242 = arith.constant 2 : index
    %c0_243 = arith.constant 0 : index
    %c0_244 = arith.constant 0 : index
    %309 = vector.load %arg8[%c2_242, %c0_243, %c0_244] : memref<4x256x256xbf16, #tpu.memory_space<vmem>>, vector<1x256x256xbf16>
    %310 = vector.shape_cast %309 : vector<1x256x256xbf16> to vector<256x256xbf16>
    %cst_245 = arith.constant dense<0.000000e+00> : vector<11x256xf32>
    %311 = tpu.matmul %308, %310, %cst_245 {dimension_numbers = #tpu.dot_dimension_numbers<[1], [0], [0], [1], [0, 0, 1, 1], [], []>} : vector<11x256xbf16>, vector<256x256xbf16>, vector<11x256xf32> -> vector<11x256xf32>
    %312 = arith.addf %306, %311 : vector<11x256xf32>
    %c0_246 = arith.constant 0 : index
    %c3_247 = arith.constant 3 : index
    %c0_248 = arith.constant 0 : index
    %313 = vector.load %arg18[%c0_246, %c3_247, %c0_248] : memref<2x14x256xbf16, #tpu.memory_space<vmem>>, vector<1x11x256xbf16>
    %314 = vector.shape_cast %313 : vector<1x11x256xbf16> to vector<11x256xbf16>
    %c3_249 = arith.constant 3 : index
    %c0_250 = arith.constant 0 : index
    %c0_251 = arith.constant 0 : index
    %315 = vector.load %arg8[%c3_249, %c0_250, %c0_251] : memref<4x256x256xbf16, #tpu.memory_space<vmem>>, vector<1x256x256xbf16>
    %316 = vector.shape_cast %315 : vector<1x256x256xbf16> to vector<256x256xbf16>
    %cst_252 = arith.constant dense<0.000000e+00> : vector<11x256xf32>
    %317 = tpu.matmul %314, %316, %cst_252 {dimension_numbers = #tpu.dot_dimension_numbers<[1], [0], [0], [1], [0, 0, 1, 1], [], []>} : vector<11x256xbf16>, vector<256x256xbf16>, vector<11x256xf32> -> vector<11x256xf32>
    %318 = arith.addf %312, %317 : vector<11x256xf32>
    %c1_253 = arith.constant 1 : index
    %c0_254 = arith.constant 0 : index
    %c0_255 = arith.constant 0 : index
    %319 = vector.load %arg18[%c1_253, %c0_254, %c0_255] : memref<2x14x256xbf16, #tpu.memory_space<vmem>>, vector<1x11x256xbf16>
    %320 = vector.shape_cast %319 : vector<1x11x256xbf16> to vector<11x256xbf16>
    %c0_256 = arith.constant 0 : index
    %c0_257 = arith.constant 0 : index
    %c0_258 = arith.constant 0 : index
    %321 = vector.load %arg8[%c0_256, %c0_257, %c0_258] : memref<4x256x256xbf16, #tpu.memory_space<vmem>>, vector<1x256x256xbf16>
    %322 = vector.shape_cast %321 : vector<1x256x256xbf16> to vector<256x256xbf16>
    %cst_259 = arith.constant dense<0.000000e+00> : vector<11x256xf32>
    %323 = tpu.matmul %320, %322, %cst_259 {dimension_numbers = #tpu.dot_dimension_numbers<[1], [0], [0], [1], [0, 0, 1, 1], [], []>} : vector<11x256xbf16>, vector<256x256xbf16>, vector<11x256xf32> -> vector<11x256xf32>
    %c1_260 = arith.constant 1 : index
    %c1_261 = arith.constant 1 : index
    %c0_262 = arith.constant 0 : index
    %324 = vector.load %arg18[%c1_260, %c1_261, %c0_262] : memref<2x14x256xbf16, #tpu.memory_space<vmem>>, vector<1x11x256xbf16>
    %325 = vector.shape_cast %324 : vector<1x11x256xbf16> to vector<11x256xbf16>
    %c1_263 = arith.constant 1 : index
    %c0_264 = arith.constant 0 : index
    %c0_265 = arith.constant 0 : index
    %326 = vector.load %arg8[%c1_263, %c0_264, %c0_265] : memref<4x256x256xbf16, #tpu.memory_space<vmem>>, vector<1x256x256xbf16>
    %327 = vector.shape_cast %326 : vector<1x256x256xbf16> to vector<256x256xbf16>
    %cst_266 = arith.constant dense<0.000000e+00> : vector<11x256xf32>
    %328 = tpu.matmul %325, %327, %cst_266 {dimension_numbers = #tpu.dot_dimension_numbers<[1], [0], [0], [1], [0, 0, 1, 1], [], []>} : vector<11x256xbf16>, vector<256x256xbf16>, vector<11x256xf32> -> vector<11x256xf32>
    %329 = arith.addf %323, %328 : vector<11x256xf32>
    %c1_267 = arith.constant 1 : index
    %c2_268 = arith.constant 2 : index
    %c0_269 = arith.constant 0 : index
    %330 = vector.load %arg18[%c1_267, %c2_268, %c0_269] : memref<2x14x256xbf16, #tpu.memory_space<vmem>>, vector<1x11x256xbf16>
    %331 = vector.shape_cast %330 : vector<1x11x256xbf16> to vector<11x256xbf16>
    %c2_270 = arith.constant 2 : index
    %c0_271 = arith.constant 0 : index
    %c0_272 = arith.constant 0 : index
    %332 = vector.load %arg8[%c2_270, %c0_271, %c0_272] : memref<4x256x256xbf16, #tpu.memory_space<vmem>>, vector<1x256x256xbf16>
    %333 = vector.shape_cast %332 : vector<1x256x256xbf16> to vector<256x256xbf16>
    %cst_273 = arith.constant dense<0.000000e+00> : vector<11x256xf32>
    %334 = tpu.matmul %331, %333, %cst_273 {dimension_numbers = #tpu.dot_dimension_numbers<[1], [0], [0], [1], [0, 0, 1, 1], [], []>} : vector<11x256xbf16>, vector<256x256xbf16>, vector<11x256xf32> -> vector<11x256xf32>
    %335 = arith.addf %329, %334 : vector<11x256xf32>
    %c1_274 = arith.constant 1 : index
    %c3_275 = arith.constant 3 : index
    %c0_276 = arith.constant 0 : index
    %336 = vector.load %arg18[%c1_274, %c3_275, %c0_276] : memref<2x14x256xbf16, #tpu.memory_space<vmem>>, vector<1x11x256xbf16>
    %337 = vector.shape_cast %336 : vector<1x11x256xbf16> to vector<11x256xbf16>
    %c3_277 = arith.constant 3 : index
    %c0_278 = arith.constant 0 : index
    %c0_279 = arith.constant 0 : index
    %338 = vector.load %arg8[%c3_277, %c0_278, %c0_279] : memref<4x256x256xbf16, #tpu.memory_space<vmem>>, vector<1x256x256xbf16>
    %339 = vector.shape_cast %338 : vector<1x256x256xbf16> to vector<256x256xbf16>
    %cst_280 = arith.constant dense<0.000000e+00> : vector<11x256xf32>
    %340 = tpu.matmul %337, %339, %cst_280 {dimension_numbers = #tpu.dot_dimension_numbers<[1], [0], [0], [1], [0, 0, 1, 1], [], []>} : vector<11x256xbf16>, vector<256x256xbf16>, vector<11x256xf32> -> vector<11x256xf32>
    %341 = arith.addf %335, %340 : vector<11x256xf32>
    %cst_281 = arith.constant dense<0.000000e+00> : vector<256xf32>
    %342 = vector.multi_reduction <add>, %318, %cst_281 [0] : vector<11x256xf32> to vector<256xf32>
    %343 = vector.shape_cast %342 : vector<256xf32> to vector<1x256xf32>
    %cst_282 = arith.constant 0.000000e+00 : f32
    %344 = vector.broadcast %cst_282 : f32 to vector<1x256xf32>
    %345 = arith.addf %344, %343 : vector<1x256xf32>
    %cst_283 = arith.constant dense<0.000000e+00> : vector<256xf32>
    %346 = vector.multi_reduction <add>, %341, %cst_283 [0] : vector<11x256xf32> to vector<256xf32>
    %347 = vector.shape_cast %346 : vector<256xf32> to vector<1x256xf32>
    %348 = arith.addf %345, %347 : vector<1x256xf32>
    %349 = arith.mulf %318, %318 : vector<11x256xf32>
    %cst_284 = arith.constant dense<0.000000e+00> : vector<256xf32>
    %350 = vector.multi_reduction <add>, %349, %cst_284 [0] : vector<11x256xf32> to vector<256xf32>
    %351 = vector.shape_cast %350 : vector<256xf32> to vector<1x256xf32>
    %cst_285 = arith.constant 0.000000e+00 : f32
    %352 = vector.broadcast %cst_285 : f32 to vector<1x256xf32>
    %353 = arith.addf %352, %351 : vector<1x256xf32>
    %354 = arith.mulf %341, %341 : vector<11x256xf32>
    %cst_286 = arith.constant dense<0.000000e+00> : vector<256xf32>
    %355 = vector.multi_reduction <add>, %354, %cst_286 [0] : vector<11x256xf32> to vector<256xf32>
    %356 = vector.shape_cast %355 : vector<256xf32> to vector<1x256xf32>
    %357 = arith.addf %353, %356 : vector<1x256xf32>
    %358 = tpu.concatenate %348, %357 in 0 : vector<1x256xf32>, vector<1x256xf32> -> vector<2x256xf32>
    %c32_i32_287 = arith.constant 32 : i32
    %359 = tpu.dynamic_rotate %358 by %c32_i32_287 dim 1 : vector<2x256xf32>, i32 -> vector<2x256xf32>
    %360 = arith.addf %358, %359 : vector<2x256xf32>
    %c64_i32_288 = arith.constant 64 : i32
    %361 = tpu.dynamic_rotate %360 by %c64_i32_288 dim 1 : vector<2x256xf32>, i32 -> vector<2x256xf32>
    %362 = arith.addf %360, %361 : vector<2x256xf32>
    %c128_i32_289 = arith.constant 128 : i32
    %363 = tpu.dynamic_rotate %362 by %c128_i32_289 dim 1 : vector<2x256xf32>, i32 -> vector<2x256xf32>
    %364 = arith.addf %362, %363 : vector<2x256xf32>
    %365 = vector.extract_strided_slice %364 {offsets = [0, 0], sizes = [1, 256], strides = [1, 1]} : vector<2x256xf32> to vector<1x256xf32>
    %cst_290 = arith.constant 0.00568181835 : f32
    %366 = vector.broadcast %cst_290 : f32 to vector<1x256xf32>
    %367 = arith.mulf %365, %366 : vector<1x256xf32>
    %368 = vector.extract_strided_slice %364 {offsets = [1, 0], sizes = [1, 256], strides = [1, 1]} : vector<2x256xf32> to vector<1x256xf32>
    %cst_291 = arith.constant 0.00568181835 : f32
    %369 = vector.broadcast %cst_291 : f32 to vector<1x256xf32>
    %370 = arith.mulf %368, %369 : vector<1x256xf32>
    %371 = arith.mulf %367, %367 : vector<1x256xf32>
    %372 = arith.subf %370, %371 : vector<1x256xf32>
    %cst_292 = arith.constant 0.000000e+00 : f32
    %373 = vector.broadcast %cst_292 : f32 to vector<1x256xf32>
    %374 = arith.maximumf %372, %373 : vector<1x256xf32>
    %cst_293 = arith.constant 9.99999974E-6 : f32
    %375 = vector.broadcast %cst_293 : f32 to vector<1x256xf32>
    %376 = arith.addf %374, %375 : vector<1x256xf32>
    %377 = math.rsqrt %376 : vector<1x256xf32>
    %c0_294 = arith.constant 0 : index
    %c0_295 = arith.constant 0 : index
    %378 = vector.load %arg9[%c0_294, %c0_295] : memref<1x256xf32, #tpu.memory_space<vmem>>, vector<1x256xf32>
    %379 = arith.mulf %377, %378 : vector<1x256xf32>
    %c0_296 = arith.constant 0 : index
    %c0_297 = arith.constant 0 : index
    %380 = vector.load %arg10[%c0_296, %c0_297] : memref<1x256xf32, #tpu.memory_space<vmem>>, vector<1x256xf32>
    %381 = arith.mulf %367, %379 : vector<1x256xf32>
    %382 = arith.subf %380, %381 : vector<1x256xf32>
    %383 = vector.broadcast %379 : vector<1x256xf32> to vector<11x256xf32>
    %384 = arith.mulf %318, %383 : vector<11x256xf32>
    %385 = vector.broadcast %382 : vector<1x256xf32> to vector<11x256xf32>
    %386 = arith.addf %384, %385 : vector<11x256xf32>
    %cst_298 = arith.constant 0.000000e+00 : f32
    %387 = vector.broadcast %cst_298 : f32 to vector<11x256xf32>
    %388 = arith.cmpf oge, %386, %387 : vector<11x256xf32>
    %cst_299 = arith.constant 2.000000e-01 : f32
    %389 = vector.broadcast %cst_299 : f32 to vector<11x256xf32>
    %390 = arith.mulf %389, %386 : vector<11x256xf32>
    %391 = arith.select %388, %386, %390 : vector<11x256xi1>, vector<11x256xf32>
    %c0_300 = arith.constant 0 : index
    %c0_301 = arith.constant 0 : index
    %c0_302 = arith.constant 0 : index
    %392 = vector.load %arg13[%c0_300, %c0_301, %c0_302] : memref<2x11x256xf32, #tpu.memory_space<vmem>>, vector<1x11x256xf32>
    %393 = vector.shape_cast %392 : vector<1x11x256xf32> to vector<11x256xf32>
    %394 = vector.shape_cast %391 : vector<11x256xf32> to vector<1x11x256xf32>
    tpu.vector_store %arg13[%c0_300, %c0_301, %c0_302], %394 {strides = array<i32>} : memref<2x11x256xf32, #tpu.memory_space<vmem>>, vector<1x11x256xf32>,
    %395 = arith.truncf %391 : vector<11x256xf32> to vector<11x256xbf16>
    %cst_303 = arith.constant 0.000000e+00 : f32
    %396 = vector.broadcast %cst_303 : f32 to vector<1x6xf32>
    %397 = vector.extract_strided_slice %395 {offsets = [0, 0], sizes = [1, 256], strides = [1, 1]} : vector<11x256xbf16> to vector<1x256xbf16>
    %c0_304 = arith.constant 0 : index
    %c0_305 = arith.constant 0 : index
    %c0_306 = arith.constant 0 : index
    %398 = vector.load %arg11[%c0_304, %c0_305, %c0_306] : memref<11x256x6xbf16, #tpu.memory_space<vmem>>, vector<1x256x6xbf16>
    %399 = vector.shape_cast %398 : vector<1x256x6xbf16> to vector<256x6xbf16>
    %cst_307 = arith.constant dense<0.000000e+00> : vector<1x6xf32>
    %400 = tpu.matmul %397, %399, %cst_307 {dimension_numbers = #tpu.dot_dimension_numbers<[1], [0], [0], [1], [0, 0, 1, 1], [], []>} : vector<1x256xbf16>, vector<256x6xbf16>, vector<1x6xf32> -> vector<1x6xf32>
    %401 = arith.addf %396, %400 : vector<1x6xf32>
    %402 = vector.extract_strided_slice %395 {offsets = [1, 0], sizes = [1, 256], strides = [1, 1]} : vector<11x256xbf16> to vector<1x256xbf16>
    %c1_308 = arith.constant 1 : index
    %c0_309 = arith.constant 0 : index
    %c0_310 = arith.constant 0 : index
    %403 = vector.load %arg11[%c1_308, %c0_309, %c0_310] : memref<11x256x6xbf16, #tpu.memory_space<vmem>>, vector<1x256x6xbf16>
    %404 = vector.shape_cast %403 : vector<1x256x6xbf16> to vector<256x6xbf16>
    %cst_311 = arith.constant dense<0.000000e+00> : vector<1x6xf32>
    %405 = tpu.matmul %402, %404, %cst_311 {dimension_numbers = #tpu.dot_dimension_numbers<[1], [0], [0], [1], [0, 0, 1, 1], [], []>} : vector<1x256xbf16>, vector<256x6xbf16>, vector<1x6xf32> -> vector<1x6xf32>
    %406 = arith.addf %401, %405 : vector<1x6xf32>
    %407 = vector.extract_strided_slice %395 {offsets = [2, 0], sizes = [1, 256], strides = [1, 1]} : vector<11x256xbf16> to vector<1x256xbf16>
    %c2_312 = arith.constant 2 : index
    %c0_313 = arith.constant 0 : index
    %c0_314 = arith.constant 0 : index
    %408 = vector.load %arg11[%c2_312, %c0_313, %c0_314] : memref<11x256x6xbf16, #tpu.memory_space<vmem>>, vector<1x256x6xbf16>
    %409 = vector.shape_cast %408 : vector<1x256x6xbf16> to vector<256x6xbf16>
    %cst_315 = arith.constant dense<0.000000e+00> : vector<1x6xf32>
    %410 = tpu.matmul %407, %409, %cst_315 {dimension_numbers = #tpu.dot_dimension_numbers<[1], [0], [0], [1], [0, 0, 1, 1], [], []>} : vector<1x256xbf16>, vector<256x6xbf16>, vector<1x6xf32> -> vector<1x6xf32>
    %411 = arith.addf %406, %410 : vector<1x6xf32>
    %412 = vector.extract_strided_slice %395 {offsets = [3, 0], sizes = [1, 256], strides = [1, 1]} : vector<11x256xbf16> to vector<1x256xbf16>
    %c3_316 = arith.constant 3 : index
    %c0_317 = arith.constant 0 : index
    %c0_318 = arith.constant 0 : index
    %413 = vector.load %arg11[%c3_316, %c0_317, %c0_318] : memref<11x256x6xbf16, #tpu.memory_space<vmem>>, vector<1x256x6xbf16>
    %414 = vector.shape_cast %413 : vector<1x256x6xbf16> to vector<256x6xbf16>
    %cst_319 = arith.constant dense<0.000000e+00> : vector<1x6xf32>
    %415 = tpu.matmul %412, %414, %cst_319 {dimension_numbers = #tpu.dot_dimension_numbers<[1], [0], [0], [1], [0, 0, 1, 1], [], []>} : vector<1x256xbf16>, vector<256x6xbf16>, vector<1x6xf32> -> vector<1x6xf32>
    %416 = arith.addf %411, %415 : vector<1x6xf32>
    %417 = vector.extract_strided_slice %395 {offsets = [4, 0], sizes = [1, 256], strides = [1, 1]} : vector<11x256xbf16> to vector<1x256xbf16>
    %c4 = arith.constant 4 : index
    %c0_320 = arith.constant 0 : index
    %c0_321 = arith.constant 0 : index
    %418 = vector.load %arg11[%c4, %c0_320, %c0_321] : memref<11x256x6xbf16, #tpu.memory_space<vmem>>, vector<1x256x6xbf16>
    %419 = vector.shape_cast %418 : vector<1x256x6xbf16> to vector<256x6xbf16>
    %cst_322 = arith.constant dense<0.000000e+00> : vector<1x6xf32>
    %420 = tpu.matmul %417, %419, %cst_322 {dimension_numbers = #tpu.dot_dimension_numbers<[1], [0], [0], [1], [0, 0, 1, 1], [], []>} : vector<1x256xbf16>, vector<256x6xbf16>, vector<1x6xf32> -> vector<1x6xf32>
    %421 = arith.addf %416, %420 : vector<1x6xf32>
    %422 = vector.extract_strided_slice %395 {offsets = [5, 0], sizes = [1, 256], strides = [1, 1]} : vector<11x256xbf16> to vector<1x256xbf16>
    %c5 = arith.constant 5 : index
    %c0_323 = arith.constant 0 : index
    %c0_324 = arith.constant 0 : index
    %423 = vector.load %arg11[%c5, %c0_323, %c0_324] : memref<11x256x6xbf16, #tpu.memory_space<vmem>>, vector<1x256x6xbf16>
    %424 = vector.shape_cast %423 : vector<1x256x6xbf16> to vector<256x6xbf16>
    %cst_325 = arith.constant dense<0.000000e+00> : vector<1x6xf32>
    %425 = tpu.matmul %422, %424, %cst_325 {dimension_numbers = #tpu.dot_dimension_numbers<[1], [0], [0], [1], [0, 0, 1, 1], [], []>} : vector<1x256xbf16>, vector<256x6xbf16>, vector<1x6xf32> -> vector<1x6xf32>
    %426 = arith.addf %421, %425 : vector<1x6xf32>
    %427 = vector.extract_strided_slice %395 {offsets = [6, 0], sizes = [1, 256], strides = [1, 1]} : vector<11x256xbf16> to vector<1x256xbf16>
    %c6 = arith.constant 6 : index
    %c0_326 = arith.constant 0 : index
    %c0_327 = arith.constant 0 : index
    %428 = vector.load %arg11[%c6, %c0_326, %c0_327] : memref<11x256x6xbf16, #tpu.memory_space<vmem>>, vector<1x256x6xbf16>
    %429 = vector.shape_cast %428 : vector<1x256x6xbf16> to vector<256x6xbf16>
    %cst_328 = arith.constant dense<0.000000e+00> : vector<1x6xf32>
    %430 = tpu.matmul %427, %429, %cst_328 {dimension_numbers = #tpu.dot_dimension_numbers<[1], [0], [0], [1], [0, 0, 1, 1], [], []>} : vector<1x256xbf16>, vector<256x6xbf16>, vector<1x6xf32> -> vector<1x6xf32>
    %431 = arith.addf %426, %430 : vector<1x6xf32>
    %432 = vector.extract_strided_slice %395 {offsets = [7, 0], sizes = [1, 256], strides = [1, 1]} : vector<11x256xbf16> to vector<1x256xbf16>
    %c7 = arith.constant 7 : index
    %c0_329 = arith.constant 0 : index
    %c0_330 = arith.constant 0 : index
    %433 = vector.load %arg11[%c7, %c0_329, %c0_330] : memref<11x256x6xbf16, #tpu.memory_space<vmem>>, vector<1x256x6xbf16>
    %434 = vector.shape_cast %433 : vector<1x256x6xbf16> to vector<256x6xbf16>
    %cst_331 = arith.constant dense<0.000000e+00> : vector<1x6xf32>
    %435 = tpu.matmul %432, %434, %cst_331 {dimension_numbers = #tpu.dot_dimension_numbers<[1], [0], [0], [1], [0, 0, 1, 1], [], []>} : vector<1x256xbf16>, vector<256x6xbf16>, vector<1x6xf32> -> vector<1x6xf32>
    %436 = arith.addf %431, %435 : vector<1x6xf32>
    %437 = vector.extract_strided_slice %395 {offsets = [8, 0], sizes = [1, 256], strides = [1, 1]} : vector<11x256xbf16> to vector<1x256xbf16>
    %c8 = arith.constant 8 : index
    %c0_332 = arith.constant 0 : index
    %c0_333 = arith.constant 0 : index
    %438 = vector.load %arg11[%c8, %c0_332, %c0_333] : memref<11x256x6xbf16, #tpu.memory_space<vmem>>, vector<1x256x6xbf16>
    %439 = vector.shape_cast %438 : vector<1x256x6xbf16> to vector<256x6xbf16>
    %cst_334 = arith.constant dense<0.000000e+00> : vector<1x6xf32>
    %440 = tpu.matmul %437, %439, %cst_334 {dimension_numbers = #tpu.dot_dimension_numbers<[1], [0], [0], [1], [0, 0, 1, 1], [], []>} : vector<1x256xbf16>, vector<256x6xbf16>, vector<1x6xf32> -> vector<1x6xf32>
    %441 = arith.addf %436, %440 : vector<1x6xf32>
    %442 = vector.extract_strided_slice %395 {offsets = [9, 0], sizes = [1, 256], strides = [1, 1]} : vector<11x256xbf16> to vector<1x256xbf16>
    %c9 = arith.constant 9 : index
    %c0_335 = arith.constant 0 : index
    %c0_336 = arith.constant 0 : index
    %443 = vector.load %arg11[%c9, %c0_335, %c0_336] : memref<11x256x6xbf16, #tpu.memory_space<vmem>>, vector<1x256x6xbf16>
    %444 = vector.shape_cast %443 : vector<1x256x6xbf16> to vector<256x6xbf16>
    %cst_337 = arith.constant dense<0.000000e+00> : vector<1x6xf32>
    %445 = tpu.matmul %442, %444, %cst_337 {dimension_numbers = #tpu.dot_dimension_numbers<[1], [0], [0], [1], [0, 0, 1, 1], [], []>} : vector<1x256xbf16>, vector<256x6xbf16>, vector<1x6xf32> -> vector<1x6xf32>
    %446 = arith.addf %441, %445 : vector<1x6xf32>
    %447 = vector.extract_strided_slice %395 {offsets = [10, 0], sizes = [1, 256], strides = [1, 1]} : vector<11x256xbf16> to vector<1x256xbf16>
    %c10 = arith.constant 10 : index
    %c0_338 = arith.constant 0 : index
    %c0_339 = arith.constant 0 : index
    %448 = vector.load %arg11[%c10, %c0_338, %c0_339] : memref<11x256x6xbf16, #tpu.memory_space<vmem>>, vector<1x256x6xbf16>
    %449 = vector.shape_cast %448 : vector<1x256x6xbf16> to vector<256x6xbf16>
    %cst_340 = arith.constant dense<0.000000e+00> : vector<1x6xf32>
    %450 = tpu.matmul %447, %449, %cst_340 {dimension_numbers = #tpu.dot_dimension_numbers<[1], [0], [0], [1], [0, 0, 1, 1], [], []>} : vector<1x256xbf16>, vector<256x6xbf16>, vector<1x6xf32> -> vector<1x6xf32>
    %451 = arith.addf %446, %450 : vector<1x6xf32>
    %452 = vector.broadcast %379 : vector<1x256xf32> to vector<11x256xf32>
    %453 = arith.mulf %341, %452 : vector<11x256xf32>
    %454 = vector.broadcast %382 : vector<1x256xf32> to vector<11x256xf32>
    %455 = arith.addf %453, %454 : vector<11x256xf32>
    %cst_341 = arith.constant 0.000000e+00 : f32
    %456 = vector.broadcast %cst_341 : f32 to vector<11x256xf32>
    %457 = arith.cmpf oge, %455, %456 : vector<11x256xf32>
    %cst_342 = arith.constant 2.000000e-01 : f32
    %458 = vector.broadcast %cst_342 : f32 to vector<11x256xf32>
    %459 = arith.mulf %458, %455 : vector<11x256xf32>
    %460 = arith.select %457, %455, %459 : vector<11x256xi1>, vector<11x256xf32>
    %c1_343 = arith.constant 1 : index
    %c0_344 = arith.constant 0 : index
    %c0_345 = arith.constant 0 : index
    %461 = vector.load %arg13[%c1_343, %c0_344, %c0_345] : memref<2x11x256xf32, #tpu.memory_space<vmem>>, vector<1x11x256xf32>
    %462 = vector.shape_cast %461 : vector<1x11x256xf32> to vector<11x256xf32>
    %463 = vector.shape_cast %460 : vector<11x256xf32> to vector<1x11x256xf32>
    tpu.vector_store %arg13[%c1_343, %c0_344, %c0_345], %463 {strides = array<i32>} : memref<2x11x256xf32, #tpu.memory_space<vmem>>, vector<1x11x256xf32>,
    %464 = arith.truncf %460 : vector<11x256xf32> to vector<11x256xbf16>
    %cst_346 = arith.constant 0.000000e+00 : f32
    %465 = vector.broadcast %cst_346 : f32 to vector<1x6xf32>
    %466 = vector.extract_strided_slice %464 {offsets = [0, 0], sizes = [1, 256], strides = [1, 1]} : vector<11x256xbf16> to vector<1x256xbf16>
    %c0_347 = arith.constant 0 : index
    %c0_348 = arith.constant 0 : index
    %c0_349 = arith.constant 0 : index
    %467 = vector.load %arg11[%c0_347, %c0_348, %c0_349] : memref<11x256x6xbf16, #tpu.memory_space<vmem>>, vector<1x256x6xbf16>
    %468 = vector.shape_cast %467 : vector<1x256x6xbf16> to vector<256x6xbf16>
    %cst_350 = arith.constant dense<0.000000e+00> : vector<1x6xf32>
    %469 = tpu.matmul %466, %468, %cst_350 {dimension_numbers = #tpu.dot_dimension_numbers<[1], [0], [0], [1], [0, 0, 1, 1], [], []>} : vector<1x256xbf16>, vector<256x6xbf16>, vector<1x6xf32> -> vector<1x6xf32>
    %470 = arith.addf %465, %469 : vector<1x6xf32>
    %471 = vector.extract_strided_slice %464 {offsets = [1, 0], sizes = [1, 256], strides = [1, 1]} : vector<11x256xbf16> to vector<1x256xbf16>
    %c1_351 = arith.constant 1 : index
    %c0_352 = arith.constant 0 : index
    %c0_353 = arith.constant 0 : index
    %472 = vector.load %arg11[%c1_351, %c0_352, %c0_353] : memref<11x256x6xbf16, #tpu.memory_space<vmem>>, vector<1x256x6xbf16>
    %473 = vector.shape_cast %472 : vector<1x256x6xbf16> to vector<256x6xbf16>
    %cst_354 = arith.constant dense<0.000000e+00> : vector<1x6xf32>
    %474 = tpu.matmul %471, %473, %cst_354 {dimension_numbers = #tpu.dot_dimension_numbers<[1], [0], [0], [1], [0, 0, 1, 1], [], []>} : vector<1x256xbf16>, vector<256x6xbf16>, vector<1x6xf32> -> vector<1x6xf32>
    %475 = arith.addf %470, %474 : vector<1x6xf32>
    %476 = vector.extract_strided_slice %464 {offsets = [2, 0], sizes = [1, 256], strides = [1, 1]} : vector<11x256xbf16> to vector<1x256xbf16>
    %c2_355 = arith.constant 2 : index
    %c0_356 = arith.constant 0 : index
    %c0_357 = arith.constant 0 : index
    %477 = vector.load %arg11[%c2_355, %c0_356, %c0_357] : memref<11x256x6xbf16, #tpu.memory_space<vmem>>, vector<1x256x6xbf16>
    %478 = vector.shape_cast %477 : vector<1x256x6xbf16> to vector<256x6xbf16>
    %cst_358 = arith.constant dense<0.000000e+00> : vector<1x6xf32>
    %479 = tpu.matmul %476, %478, %cst_358 {dimension_numbers = #tpu.dot_dimension_numbers<[1], [0], [0], [1], [0, 0, 1, 1], [], []>} : vector<1x256xbf16>, vector<256x6xbf16>, vector<1x6xf32> -> vector<1x6xf32>
    %480 = arith.addf %475, %479 : vector<1x6xf32>
    %481 = vector.extract_strided_slice %464 {offsets = [3, 0], sizes = [1, 256], strides = [1, 1]} : vector<11x256xbf16> to vector<1x256xbf16>
    %c3_359 = arith.constant 3 : index
    %c0_360 = arith.constant 0 : index
    %c0_361 = arith.constant 0 : index
    %482 = vector.load %arg11[%c3_359, %c0_360, %c0_361] : memref<11x256x6xbf16, #tpu.memory_space<vmem>>, vector<1x256x6xbf16>
    %483 = vector.shape_cast %482 : vector<1x256x6xbf16> to vector<256x6xbf16>
    %cst_362 = arith.constant dense<0.000000e+00> : vector<1x6xf32>
    %484 = tpu.matmul %481, %483, %cst_362 {dimension_numbers = #tpu.dot_dimension_numbers<[1], [0], [0], [1], [0, 0, 1, 1], [], []>} : vector<1x256xbf16>, vector<256x6xbf16>, vector<1x6xf32> -> vector<1x6xf32>
    %485 = arith.addf %480, %484 : vector<1x6xf32>
    %486 = vector.extract_strided_slice %464 {offsets = [4, 0], sizes = [1, 256], strides = [1, 1]} : vector<11x256xbf16> to vector<1x256xbf16>
    %c4_363 = arith.constant 4 : index
    %c0_364 = arith.constant 0 : index
    %c0_365 = arith.constant 0 : index
    %487 = vector.load %arg11[%c4_363, %c0_364, %c0_365] : memref<11x256x6xbf16, #tpu.memory_space<vmem>>, vector<1x256x6xbf16>
    %488 = vector.shape_cast %487 : vector<1x256x6xbf16> to vector<256x6xbf16>
    %cst_366 = arith.constant dense<0.000000e+00> : vector<1x6xf32>
    %489 = tpu.matmul %486, %488, %cst_366 {dimension_numbers = #tpu.dot_dimension_numbers<[1], [0], [0], [1], [0, 0, 1, 1], [], []>} : vector<1x256xbf16>, vector<256x6xbf16>, vector<1x6xf32> -> vector<1x6xf32>
    %490 = arith.addf %485, %489 : vector<1x6xf32>
    %491 = vector.extract_strided_slice %464 {offsets = [5, 0], sizes = [1, 256], strides = [1, 1]} : vector<11x256xbf16> to vector<1x256xbf16>
    %c5_367 = arith.constant 5 : index
    %c0_368 = arith.constant 0 : index
    %c0_369 = arith.constant 0 : index
    %492 = vector.load %arg11[%c5_367, %c0_368, %c0_369] : memref<11x256x6xbf16, #tpu.memory_space<vmem>>, vector<1x256x6xbf16>
    %493 = vector.shape_cast %492 : vector<1x256x6xbf16> to vector<256x6xbf16>
    %cst_370 = arith.constant dense<0.000000e+00> : vector<1x6xf32>
    %494 = tpu.matmul %491, %493, %cst_370 {dimension_numbers = #tpu.dot_dimension_numbers<[1], [0], [0], [1], [0, 0, 1, 1], [], []>} : vector<1x256xbf16>, vector<256x6xbf16>, vector<1x6xf32> -> vector<1x6xf32>
    %495 = arith.addf %490, %494 : vector<1x6xf32>
    %496 = vector.extract_strided_slice %464 {offsets = [6, 0], sizes = [1, 256], strides = [1, 1]} : vector<11x256xbf16> to vector<1x256xbf16>
    %c6_371 = arith.constant 6 : index
    %c0_372 = arith.constant 0 : index
    %c0_373 = arith.constant 0 : index
    %497 = vector.load %arg11[%c6_371, %c0_372, %c0_373] : memref<11x256x6xbf16, #tpu.memory_space<vmem>>, vector<1x256x6xbf16>
    %498 = vector.shape_cast %497 : vector<1x256x6xbf16> to vector<256x6xbf16>
    %cst_374 = arith.constant dense<0.000000e+00> : vector<1x6xf32>
    %499 = tpu.matmul %496, %498, %cst_374 {dimension_numbers = #tpu.dot_dimension_numbers<[1], [0], [0], [1], [0, 0, 1, 1], [], []>} : vector<1x256xbf16>, vector<256x6xbf16>, vector<1x6xf32> -> vector<1x6xf32>
    %500 = arith.addf %495, %499 : vector<1x6xf32>
    %501 = vector.extract_strided_slice %464 {offsets = [7, 0], sizes = [1, 256], strides = [1, 1]} : vector<11x256xbf16> to vector<1x256xbf16>
    %c7_375 = arith.constant 7 : index
    %c0_376 = arith.constant 0 : index
    %c0_377 = arith.constant 0 : index
    %502 = vector.load %arg11[%c7_375, %c0_376, %c0_377] : memref<11x256x6xbf16, #tpu.memory_space<vmem>>, vector<1x256x6xbf16>
    %503 = vector.shape_cast %502 : vector<1x256x6xbf16> to vector<256x6xbf16>
    %cst_378 = arith.constant dense<0.000000e+00> : vector<1x6xf32>
    %504 = tpu.matmul %501, %503, %cst_378 {dimension_numbers = #tpu.dot_dimension_numbers<[1], [0], [0], [1], [0, 0, 1, 1], [], []>} : vector<1x256xbf16>, vector<256x6xbf16>, vector<1x6xf32> -> vector<1x6xf32>
    %505 = arith.addf %500, %504 : vector<1x6xf32>
    %506 = vector.extract_strided_slice %464 {offsets = [8, 0], sizes = [1, 256], strides = [1, 1]} : vector<11x256xbf16> to vector<1x256xbf16>
    %c8_379 = arith.constant 8 : index
    %c0_380 = arith.constant 0 : index
    %c0_381 = arith.constant 0 : index
    %507 = vector.load %arg11[%c8_379, %c0_380, %c0_381] : memref<11x256x6xbf16, #tpu.memory_space<vmem>>, vector<1x256x6xbf16>
    %508 = vector.shape_cast %507 : vector<1x256x6xbf16> to vector<256x6xbf16>
    %cst_382 = arith.constant dense<0.000000e+00> : vector<1x6xf32>
    %509 = tpu.matmul %506, %508, %cst_382 {dimension_numbers = #tpu.dot_dimension_numbers<[1], [0], [0], [1], [0, 0, 1, 1], [], []>} : vector<1x256xbf16>, vector<256x6xbf16>, vector<1x6xf32> -> vector<1x6xf32>
    %510 = arith.addf %505, %509 : vector<1x6xf32>
    %511 = vector.extract_strided_slice %464 {offsets = [9, 0], sizes = [1, 256], strides = [1, 1]} : vector<11x256xbf16> to vector<1x256xbf16>
    %c9_383 = arith.constant 9 : index
    %c0_384 = arith.constant 0 : index
    %c0_385 = arith.constant 0 : index
    %512 = vector.load %arg11[%c9_383, %c0_384, %c0_385] : memref<11x256x6xbf16, #tpu.memory_space<vmem>>, vector<1x256x6xbf16>
    %513 = vector.shape_cast %512 : vector<1x256x6xbf16> to vector<256x6xbf16>
    %cst_386 = arith.constant dense<0.000000e+00> : vector<1x6xf32>
    %514 = tpu.matmul %511, %513, %cst_386 {dimension_numbers = #tpu.dot_dimension_numbers<[1], [0], [0], [1], [0, 0, 1, 1], [], []>} : vector<1x256xbf16>, vector<256x6xbf16>, vector<1x6xf32> -> vector<1x6xf32>
    %515 = arith.addf %510, %514 : vector<1x6xf32>
    %516 = vector.extract_strided_slice %464 {offsets = [10, 0], sizes = [1, 256], strides = [1, 1]} : vector<11x256xbf16> to vector<1x256xbf16>
    %c10_387 = arith.constant 10 : index
    %c0_388 = arith.constant 0 : index
    %c0_389 = arith.constant 0 : index
    %517 = vector.load %arg11[%c10_387, %c0_388, %c0_389] : memref<11x256x6xbf16, #tpu.memory_space<vmem>>, vector<1x256x6xbf16>
    %518 = vector.shape_cast %517 : vector<1x256x6xbf16> to vector<256x6xbf16>
    %cst_390 = arith.constant dense<0.000000e+00> : vector<1x6xf32>
    %519 = tpu.matmul %516, %518, %cst_390 {dimension_numbers = #tpu.dot_dimension_numbers<[1], [0], [0], [1], [0, 0, 1, 1], [], []>} : vector<1x256xbf16>, vector<256x6xbf16>, vector<1x6xf32> -> vector<1x6xf32>
    %520 = arith.addf %515, %519 : vector<1x6xf32>
    %521 = tpu.concatenate %451, %520 in 0 : vector<1x6xf32>, vector<1x6xf32> -> vector<2x6xf32>
    %c0_391 = arith.constant 0 : index
    %c0_392 = arith.constant 0 : index
    %522 = vector.load %arg12[%c0_391, %c0_392] : memref<1x6xf32, #tpu.memory_space<vmem>>, vector<1x6xf32>
    %523 = vector.broadcast %522 : vector<1x6xf32> to vector<2x6xf32>
    %524 = arith.addf %521, %523 : vector<2x6xf32>
    %525 = vector.extract_strided_slice %524 {offsets = [0, 0], sizes = [2, 5], strides = [1, 1]} : vector<2x6xf32> to vector<2x5xf32>
    %c0_393 = arith.constant 0 : index
    %c0_394 = arith.constant 0 : index
    %526 = vector.load %arg14[%c0_393, %c0_394] : memref<2x5xf32, #tpu.memory_space<vmem>>, vector<2x5xf32>
    tpu.vector_store %arg14[%c0_393, %c0_394], %525 {strides = array<i32>} : memref<2x5xf32, #tpu.memory_space<vmem>>, vector<2x5xf32>,
    %527 = vector.extract_strided_slice %524 {offsets = [0, 5], sizes = [2, 1], strides = [1, 1]} : vector<2x6xf32> to vector<2x1xf32>
    %cst_395 = arith.constant 0.000000e+00 : f32
    %528 = vector.broadcast %cst_395 : f32 to vector<2x1xf32>
    %529 = arith.subf %528, %527 : vector<2x1xf32>
    %530 = math.exp %529 : vector<2x1xf32>
    %cst_396 = arith.constant 1.000000e+00 : f32
    %531 = vector.broadcast %cst_396 : f32 to vector<2x1xf32>
    %532 = arith.addf %531, %530 : vector<2x1xf32>
    %cst_397 = arith.constant 1.000000e+00 : f32
    %533 = vector.broadcast %cst_397 : f32 to vector<2x1xf32>
    %534 = arith.divf %533, %532 : vector<2x1xf32>
    %c0_398 = arith.constant 0 : index
    %c0_399 = arith.constant 0 : index
    %535 = vector.load %arg15[%c0_398, %c0_399] : memref<2x1xf32, #tpu.memory_space<vmem>>, vector<2x1xf32>
    tpu.vector_store %arg15[%c0_398, %c0_399], %534 {strides = array<i32>} : memref<2x1xf32, #tpu.memory_space<vmem>>, vector<2x1xf32>,
    return
  }
}

</mosaic_0001>

<llo_original>
// kernel: discriminator_forward.1
$region0: #{discriminator_forward.1}
  #allocation0 [shape = 'u32[]', space=smem, size = 0x4, offset = 0x4, fixed_abs, tag = 'smem constant byte address 0x4 - core index']
  #allocation1 [shape = 'u32[72,128]{1,0:T(1,128)}', space=vmem, size = 0x9000, scoped, tag = 'internal scratch']
  #allocation2 [shape = 'bf16[2,20,256]{2,1,0:T(8,128)(2,1)}', space=vmem, size = 0x6000, scoped, tag = 'scratch operand']
  #allocation3 [shape = 'bf16[2,17,256]{2,1,0:T(8,128)(2,1)}', space=vmem, size = 0x6000, scoped, tag = 'scratch operand']
  #allocation4 [shape = 'bf16[2,14,256]{2,1,0:T(8,128)(2,1)}', space=vmem, size = 0x4000, scoped, tag = 'scratch operand']
  %s0 = inlined_call_operand.vmem [shape: bf16[2,23,128], index: 0, kind: input, shape index: {}]
  %s1 = inlined_call_operand.vmem [shape: bf16[4,128,256], index: 1, kind: input, shape index: {}]
  %s2 = inlined_call_operand.vmem [shape: bf16[4,256,256], index: 2, kind: input, shape index: {}]
  %s3 = inlined_call_operand.vmem [shape: f32[1,256], index: 3, kind: input, shape index: {}]
  %s4 = inlined_call_operand.vmem [shape: f32[1,256], index: 4, kind: input, shape index: {}]
  %s5 = inlined_call_operand.hbm [shape: bf16[4,256,256], index: 5, kind: input, shape index: {}]
  %s6 = inlined_call_operand.vmem [shape: f32[1,256], index: 6, kind: input, shape index: {}]
  %s7 = inlined_call_operand.vmem [shape: f32[1,256], index: 7, kind: input, shape index: {}]
  %s8 = inlined_call_operand.hbm [shape: bf16[4,256,256], index: 8, kind: input, shape index: {}]
  %s9 = inlined_call_operand.vmem [shape: f32[1,256], index: 9, kind: input, shape index: {}]
  %s10 = inlined_call_operand.vmem [shape: f32[1,256], index: 10, kind: input, shape index: {}]
  %s11 = inlined_call_operand.vmem [shape: bf16[11,256,6], index: 11, kind: input, shape index: {}]
  %s12 = inlined_call_operand.vmem [shape: f32[1,6], index: 12, kind: input, shape index: {}]
  %s13 = inlined_call_operand.vmem [shape: f32[2,11,256], index: 13, kind: output, shape index: {0}]
  %s14 = inlined_call_operand.hbm [shape: f32[2,5], index: 14, kind: output, shape index: {1}]
  %s15 = inlined_call_operand.vmem [shape: f32[2,1], index: 15, kind: output, shape index: {2}]
  %16 = xla_tuple %s13, %s14, %s15
  %s17 = sld [smem:[#allocation0]]
  $region86: #{discriminator_forward.1} parent=0
    _
  %s19 = ssub.s32 1, %s17
  %s20 = scalar_select 0, %s19, %s17
  $region1: #{discriminator_forward.1} parent=0
    #allocation5 [shape = 'u8[524288]{0}', space=vmem, size = 0x80000, scoped, tag = 'input window, operand 5, single buffered']
    #allocation6 [shape = 's32[1]{0}', space=sflag, size = 0x4, scoped, tag = 'scoped memory for discriminator_forward.1']
    #allocation7 [shape = 's32[1]{0}', space=sflag, size = 0x4, scoped, tag = 'scoped memory for discriminator_forward.1']
    #allocation8 [shape = 'u8[524288]{0}', space=vmem, size = 0x80000, scoped, tag = 'input window, operand 8, single buffered']
    #allocation9 [shape = 's32[1]{0}', space=sflag, size = 0x4, scoped, tag = 'scoped memory for discriminator_forward.1']
    #allocation10 [shape = 'u8[1024]{0}', space=vmem, size = 0x400, scoped, tag = 'output window, operand 1, single buffered']
    %21 = vsyncpa [#allocation6], 0
    %22 = vsyncpa [#allocation9], 0
    %23 = vsyncpa [#allocation7], 0
    // Predicated region
    $region2: #{discriminator_forward.1} parent=1 // pred_check
      _
    $region3: #{discriminator_forward.1} parent=1 // pred_check_branch
      %25 = sbr.rel (0) target = $region5
    $region4: #{discriminator_forward.1} parent=1 // pred_region
      _
    $region5: #{discriminator_forward.1} parent=1 // pred_fallthru
      _
    // Predicated region
    $region6: #{discriminator_forward.1} parent=1 // pred_check
      _
    $region7: #{discriminator_forward.1} parent=1 // pred_check_branch
      %27 = sbr.rel (0) target = $region9
    $region8: #{discriminator_forward.1} parent=1 // pred_region
      _
    $region9: #{discriminator_forward.1} parent=1 // pred_fallthru
      _
    // Predicated region
    $region10: #{discriminator_forward.1} parent=1 // pred_check
      _
    $region11: #{discriminator_forward.1} parent=1 // pred_check_branch
      %29 = sbr.rel (0) target = $region13
    $region12: #{discriminator_forward.1} parent=1 // pred_region
      _
    $region13: #{discriminator_forward.1} parent=1 // pred_fallthru
      _
    // Predicated region
    $region14: #{discriminator_forward.1} parent=1 // pred_check
      _
    $region15: #{discriminator_forward.1} parent=1 // pred_check_branch
      %31 = sbr.rel (0) target = $region17
    $region16: #{discriminator_forward.1} parent=1 // pred_region
      _
    $region17: #{discriminator_forward.1} parent=1 // pred_fallthru
      _
    // Predicated region
    $region18: #{discriminator_forward.1} parent=1 // pred_check
      _
    $region19: #{discriminator_forward.1} parent=1 // pred_check_branch
      %33 = sbr.rel (0) target = $region21
    $region20: #{discriminator_forward.1} parent=1 // pred_region
      _
    $region21: #{discriminator_forward.1} parent=1 // pred_fallthru
      _
    // Predicated region
    $region22: #{discriminator_forward.1} parent=1 // pred_check
      _
    $region23: #{discriminator_forward.1} parent=1 // pred_check_branch
      %35 = sbr.rel (0) target = $region25
    $region24: #{discriminator_forward.1} parent=1 // pred_region
      %37 = vsyncadd [#allocation6], 0
      %s38 = sshll.u32 %s5, 4
      %s39 = int_to_ptr.hbm [resolvable:$true] %s38
      %s40 = sshll.u32 [#allocation5], 4
      %s41 = int_to_ptr.vmem [resolvable:$true] %s40
      %46 = dma.hbm_to_vmem [thread:$0]  %s39, 16384, %s41, [#allocation6], 128, 128, 8
    $region25: #{discriminator_forward.1} parent=1 // pred_fallthru
      _
    // Predicated region
    $region26: #{discriminator_forward.1} parent=1 // pred_check
      _
    $region27: #{discriminator_forward.1} parent=1 // pred_check_branch
      %48 = sbr.rel (0) target = $region29
    $region28: #{discriminator_forward.1} parent=1 // pred_region
      _
    $region29: #{discriminator_forward.1} parent=1 // pred_fallthru
      _
    // Predicated region
    $region30: #{discriminator_forward.1} parent=1 // pred_check
      _
    $region31: #{discriminator_forward.1} parent=1 // pred_check_branch
      %50 = sbr.rel (0) target = $region33
    $region32: #{discriminator_forward.1} parent=1 // pred_region
      _
    $region33: #{discriminator_forward.1} parent=1 // pred_fallthru
      _
    // Predicated region
    $region34: #{discriminator_forward.1} parent=1 // pred_check
      _
    $region35: #{discriminator_forward.1} parent=1 // pred_check_branch
      %52 = sbr.rel (0) target = $region37
    $region36: #{discriminator_forward.1} parent=1 // pred_region
      %54 = vsyncadd [#allocation9], 0
      %s55 = sshll.u32 %s8, 4
      %s56 = int_to_ptr.hbm [resolvable:$true] %s55
      %s57 = sshll.u32 [#allocation8], 4
      %s58 = int_to_ptr.vmem [resolvable:$true] %s57
      %63 = dma.hbm_to_vmem [thread:$0]  %s56, 16384, %s58, [#allocation9], 128, 128, 8
    $region37: #{discriminator_forward.1} parent=1 // pred_fallthru
      _
    // Predicated region
    $region38: #{discriminator_forward.1} parent=1 // pred_check
      _
    $region39: #{discriminator_forward.1} parent=1 // pred_check_branch
      %65 = sbr.rel (0) target = $region41
    $region40: #{discriminator_forward.1} parent=1 // pred_region
      _
    $region41: #{discriminator_forward.1} parent=1 // pred_fallthru
      _
    // Predicated region
    $region42: #{discriminator_forward.1} parent=1 // pred_check
      _
    $region43: #{discriminator_forward.1} parent=1 // pred_check_branch
      %67 = sbr.rel (0) target = $region45
    $region44: #{discriminator_forward.1} parent=1 // pred_region
      _
    $region45: #{discriminator_forward.1} parent=1 // pred_fallthru
      _
    // Predicated region
    $region46: #{discriminator_forward.1} parent=1 // pred_check
      _
    $region47: #{discriminator_forward.1} parent=1 // pred_check_branch
      %69 = sbr.rel (0) target = $region49
    $region48: #{discriminator_forward.1} parent=1 // pred_region
      _
    $region49: #{discriminator_forward.1} parent=1 // pred_fallthru
      _
    // Predicated region
    $region50: #{discriminator_forward.1} parent=1 // pred_check
      _
    $region51: #{discriminator_forward.1} parent=1 // pred_check_branch
      %71 = sbr.rel (0) target = $region53
    $region52: #{discriminator_forward.1} parent=1 // pred_region
      _
    $region53: #{discriminator_forward.1} parent=1 // pred_fallthru
      _
    // Predicated region
    $region54: #{discriminator_forward.1} parent=1 // pred_check
      _
    $region55: #{discriminator_forward.1} parent=1 // pred_check_branch
      %73 = sbr.rel (0) target = $region57
    $region56: #{discriminator_forward.1} parent=1 // pred_region
      %75 = dma.done [#allocation6], 16384
    $region57: #{discriminator_forward.1} parent=1 // pred_fallthru
      _
    // Predicated region
    $region58: #{discriminator_forward.1} parent=1 // pred_check
      _
    $region59: #{discriminator_forward.1} parent=1 // pred_check_branch
      %77 = sbr.rel (0) target = $region61
    $region60: #{discriminator_forward.1} parent=1 // pred_region
      %79 = dma.done [#allocation9], 16384
    $region61: #{discriminator_forward.1} parent=1 // pred_fallthru
      _
    %v80 = vld [vmem:[%s0] sm:$0xf]
    %v81 = vld [vmem:[%s0 + $0x4] sm:$0xf]
    %v82 = vld [vmem:[%s0 + $0x8] sm:$0x3]
    %v83 = vld [vmem:[%s1] sm:$0xff]
    %v84 = vld [vmem:[%s1 + $0x8] sm:$0xff]
    %v85 = vld [vmem:[%s1 + $0x10] sm:$0xff]
    %v86 = vld [vmem:[%s1 + $0x18] sm:$0xff]
    %v87 = vld [vmem:[%s1 + $0x20] sm:$0xff]
    %v88 = vld [vmem:[%s1 + $0x28] sm:$0xff]
    %v89 = vld [vmem:[%s1 + $0x30] sm:$0xff]
    %v90 = vld [vmem:[%s1 + $0x38] sm:$0xff]
    %v91 = vld [vmem:[%s1 + $0x40] sm:$0xff]
    %v92 = vld [vmem:[%s1 + $0x48] sm:$0xff]
    %v93 = vld [vmem:[%s1 + $0x50] sm:$0xff]
    %v94 = vld [vmem:[%s1 + $0x58] sm:$0xff]
    %v95 = vld [vmem:[%s1 + $0x60] sm:$0xff]
    %v96 = vld [vmem:[%s1 + $0x68] sm:$0xff]
    %v97 = vld [vmem:[%s1 + $0x70] sm:$0xff]
    %v98 = vld [vmem:[%s1 + $0x78] sm:$0xff]
    %v99 = vld [vmem:[%s0 + $0x8] sm:$0x7]
    %s100 = scalar_lea.vmem %s1, 128
    %v101 = vld [vmem:[%s100] sm:$0xff]
    %v102 = vld [vmem:[%s100 + $0x8] sm:$0xff]
    %v103 = vld [vmem:[%s100 + $0x10] sm:$0xff]
    %v104 = vld [vmem:[%s100 + $0x18] sm:$0xff]
    %v105 = vld [vmem:[%s100 + $0x20] sm:$0xff]
    %v106 = vld [vmem:[%s100 + $0x28] sm:$0xff]
    %v107 = vld [vmem:[%s100 + $0x30] sm:$0xff]
    %v108 = vld [vmem:[%s100 + $0x38] sm:$0xff]
    %v109 = vld [vmem:[%s100 + $0x40] sm:$0xff]
    %v110 = vld [vmem:[%s100 + $0x48] sm:$0xff]
    %v111 = vld [vmem:[%s100 + $0x50] sm:$0xff]
    %v112 = vld [vmem:[%s100 + $0x58] sm:$0xff]
    %v113 = vld [vmem:[%s100 + $0x60] sm:$0xff]
    %v114 = vld [vmem:[%s100 + $0x68] sm:$0xff]
    %v115 = vld [vmem:[%s100 + $0x70] sm:$0xff]
    %v116 = vld [vmem:[%s100 + $0x78] sm:$0xff]
    %v120 = vunpack.c.l.b16 %v80
    %v121 = vunpack.c.l.b16 %v81
    %v122 = vunpack.c.l.b16 %v99
    %v123 = vpack.c.b16 %v121, %v120
    %v124 = vpack.c.b16 %v122, %v122
    %vm125 = vsmask.f32 7424
    %v127 = vshrl.u32 %v123, 16
    %v129 = vshll.u32 %v123, 16
    %v131 = vrot.slane %v129, 1
    %v132 = vor.u32 %v127, %v131
    %v134 = vshll.u32 %v124, 16
    %v136 = vrot.slane %v134, 1
    %v137 = vsel %vm125, %v132, %v136
    %v138 = vshrl.u32 %v124, 16
    %v140 = vor.u32 %v138, %v136
    %v159 = vunpack.c.l.b16 %v101
    %v160 = vunpack.c.h.b16 %v101
    %v161 = vunpack.c.l.b16 %v102
    %v162 = vunpack.c.h.b16 %v102
    %v163 = vunpack.c.l.b16 %v103
    %v164 = vunpack.c.h.b16 %v103
    %v165 = vunpack.c.l.b16 %v104
    %v166 = vunpack.c.h.b16 %v104
    %v167 = vunpack.c.l.b16 %v105
    %v168 = vunpack.c.h.b16 %v105
    %v169 = vunpack.c.l.b16 %v106
    %v170 = vunpack.c.h.b16 %v106
    %v171 = vunpack.c.l.b16 %v107
    %v172 = vunpack.c.h.b16 %v107
    %v173 = vunpack.c.l.b16 %v108
    %v174 = vunpack.c.h.b16 %v108
    %v175 = vunpack.c.l.b16 %v109
    %v176 = vunpack.c.h.b16 %v109
    %v177 = vunpack.c.l.b16 %v110
    %v178 = vunpack.c.h.b16 %v110
    %v179 = vunpack.c.l.b16 %v111
    %v180 = vunpack.c.h.b16 %v111
    %v181 = vunpack.c.l.b16 %v112
    %v182 = vunpack.c.h.b16 %v112
    %v183 = vunpack.c.l.b16 %v113
    %v184 = vunpack.c.h.b16 %v113
    %v185 = vunpack.c.l.b16 %v114
    %v186 = vunpack.c.h.b16 %v114
    %v187 = vunpack.c.l.b16 %v115
    %v188 = vunpack.c.h.b16 %v115
    %v189 = vunpack.c.l.b16 %v116
    %v190 = vunpack.c.h.b16 %v116
    %v191 = vpack.c.b16 %v161, %v159
    %v192 = vpack.c.b16 %v162, %v160
    %v193 = vpack.c.b16 %v165, %v163
    %v194 = vpack.c.b16 %v166, %v164
    %v195 = vpack.c.b16 %v169, %v167
    %v196 = vpack.c.b16 %v170, %v168
    %v197 = vpack.c.b16 %v173, %v171
    %v198 = vpack.c.b16 %v174, %v172
    %v199 = vpack.c.b16 %v177, %v175
    %v200 = vpack.c.b16 %v178, %v176
    %v201 = vpack.c.b16 %v181, %v179
    %v202 = vpack.c.b16 %v182, %v180
    %v203 = vpack.c.b16 %v185, %v183
    %v204 = vpack.c.b16 %v186, %v184
    %v205 = vpack.c.b16 %v189, %v187
    %v206 = vpack.c.b16 %v190, %v188
    %223 = vmatpush.bf16.msra.mxu0 %v205
    %224 = vmatpush.bf16.msra.mxu0 %v203
    %225 = vmatpush.bf16.msra.mxu0 %v201
    %226 = vmatpush.bf16.msra.mxu0 %v199
    %227 = vmatpush.bf16.msra.mxu0 %v197
    %228 = vmatpush.bf16.msra.mxu0 %v195
    %229 = vmatpush.bf16.msra.mxu0 %v193
    %230 = vmatpush.bf16.msra.mxu0 %v191
    %231 = vmatmul.bf16.gmra.mxu0 %v137
    %v232 = vpop.f32.mrf.mxu0
    %v233 = vadd.f32 0.0, %v232
    %v234 = vpop.f32.mrf.mxu0
    %v235 = vadd.f32 0.0, %v234
    %236 = vmatmul.bf16.gmra.mxu0 %v140
    %v237 = vpop.f32.mrf.mxu0
    %v238 = vadd.f32 0.0, %v237
    %v239 = vpop.f32.mrf.mxu0
    %240 = vdwg.mxu0
    %241 = vmatpush.bf16.msra.mxu0 %v206
    %242 = vmatpush.bf16.msra.mxu0 %v204
    %243 = vmatpush.bf16.msra.mxu0 %v202
    %244 = vmatpush.bf16.msra.mxu0 %v200
    %245 = vmatpush.bf16.msra.mxu0 %v198
    %246 = vmatpush.bf16.msra.mxu0 %v196
    %247 = vmatpush.bf16.msra.mxu0 %v194
    %248 = vmatpush.bf16.msra.mxu0 %v192
    %249 = vmatmul.bf16.gmra.mxu0 %v137
    %v250 = vpop.f32.mrf.mxu0
    %v251 = vadd.f32 0.0, %v250
    %v252 = vpop.f32.mrf.mxu0
    %v253 = vadd.f32 0.0, %v252
    %254 = vmatmul.bf16.gmra.mxu0 %v140
    %v255 = vpop.f32.mrf.mxu0
    %v256 = vadd.f32 0.0, %v255
    %v257 = vpop.f32.mrf.mxu0
    %258 = vdwg.mxu0
    %v260 = vunpack.c.l.b16 %v82
    %v261 = vpack.c.b16 %v260, %v260
    %v280 = vunpack.c.l.b16 %v83
    %v281 = vunpack.c.h.b16 %v83
    %v282 = vunpack.c.l.b16 %v84
    %v283 = vunpack.c.h.b16 %v84
    %v284 = vunpack.c.l.b16 %v85
    %v285 = vunpack.c.h.b16 %v85
    %v286 = vunpack.c.l.b16 %v86
    %v287 = vunpack.c.h.b16 %v86
    %v288 = vunpack.c.l.b16 %v87
    %v289 = vunpack.c.h.b16 %v87
    %v290 = vunpack.c.l.b16 %v88
    %v291 = vunpack.c.h.b16 %v88
    %v292 = vunpack.c.l.b16 %v89
    %v293 = vunpack.c.h.b16 %v89
    %v294 = vunpack.c.l.b16 %v90
    %v295 = vunpack.c.h.b16 %v90
    %v296 = vunpack.c.l.b16 %v91
    %v297 = vunpack.c.h.b16 %v91
    %v298 = vunpack.c.l.b16 %v92
    %v299 = vunpack.c.h.b16 %v92
    %v300 = vunpack.c.l.b16 %v93
    %v301 = vunpack.c.h.b16 %v93
    %v302 = vunpack.c.l.b16 %v94
    %v303 = vunpack.c.h.b16 %v94
    %v304 = vunpack.c.l.b16 %v95
    %v305 = vunpack.c.h.b16 %v95
    %v306 = vunpack.c.l.b16 %v96
    %v307 = vunpack.c.h.b16 %v96
    %v308 = vunpack.c.l.b16 %v97
    %v309 = vunpack.c.h.b16 %v97
    %v310 = vunpack.c.l.b16 %v98
    %v311 = vunpack.c.h.b16 %v98
    %v312 = vpack.c.b16 %v282, %v280
    %v313 = vpack.c.b16 %v283, %v281
    %v314 = vpack.c.b16 %v286, %v284
    %v315 = vpack.c.b16 %v287, %v285
    %v316 = vpack.c.b16 %v290, %v288
    %v317 = vpack.c.b16 %v291, %v289
    %v318 = vpack.c.b16 %v294, %v292
    %v319 = vpack.c.b16 %v295, %v293
    %v320 = vpack.c.b16 %v298, %v296
    %v321 = vpack.c.b16 %v299, %v297
    %v322 = vpack.c.b16 %v302, %v300
    %v323 = vpack.c.b16 %v303, %v301
    %v324 = vpack.c.b16 %v306, %v304
    %v325 = vpack.c.b16 %v307, %v305
    %v326 = vpack.c.b16 %v310, %v308
    %v327 = vpack.c.b16 %v311, %v309
    %344 = vmatpush.bf16.msra.mxu0 %v326
    %345 = vmatpush.bf16.msra.mxu0 %v324
    %346 = vmatpush.bf16.msra.mxu0 %v322
    %347 = vmatpush.bf16.msra.mxu0 %v320
    %348 = vmatpush.bf16.msra.mxu0 %v318
    %349 = vmatpush.bf16.msra.mxu0 %v316
    %350 = vmatpush.bf16.msra.mxu0 %v314
    %351 = vmatpush.bf16.msra.mxu0 %v312
    %352 = vmatmul.bf16.gmra.mxu0 %v123
    %v353 = vpop.f32.mrf.mxu0
    %v354 = vadd.f32 %v233, %v353
    %v355 = vpop.f32.mrf.mxu0
    %v356 = vadd.f32 %v235, %v355
    %357 = vmatmul.bf16.gmra.mxu0 %v261
    %v358 = vpop.f32.mrf.mxu0
    %v359 = vadd.f32 %v238, %v358
    %v360 = vpop.f32.mrf.mxu0
    %361 = vdwg.mxu0
    %362 = vmatpush.bf16.msra.mxu0 %v327
    %363 = vmatpush.bf16.msra.mxu0 %v325
    %364 = vmatpush.bf16.msra.mxu0 %v323
    %365 = vmatpush.bf16.msra.mxu0 %v321
    %366 = vmatpush.bf16.msra.mxu0 %v319
    %367 = vmatpush.bf16.msra.mxu0 %v317
    %368 = vmatpush.bf16.msra.mxu0 %v315
    %369 = vmatpush.bf16.msra.mxu0 %v313
    %370 = vmatmul.bf16.gmra.mxu0 %v123
    %v371 = vpop.f32.mrf.mxu0
    %v372 = vadd.f32 %v251, %v371
    %v373 = vpop.f32.mrf.mxu0
    %v374 = vadd.f32 %v253, %v373
    %375 = vmatmul.bf16.gmra.mxu0 %v261
    %v376 = vpop.f32.mrf.mxu0
    %v377 = vadd.f32 %v256, %v376
    %v378 = vpop.f32.mrf.mxu0
    %379 = vdwg.mxu0
    %v380 = vld [vmem:[%s0] sm:$0xe]
    %s381 = scalar_lea.vmem %s1, 256
    %v382 = vld [vmem:[%s381] sm:$0xff]
    %v383 = vld [vmem:[%s381 + $0x8] sm:$0xff]
    %v384 = vld [vmem:[%s381 + $0x10] sm:$0xff]
    %v385 = vld [vmem:[%s381 + $0x18] sm:$0xff]
    %v386 = vld [vmem:[%s381 + $0x20] sm:$0xff]
    %v387 = vld [vmem:[%s381 + $0x28] sm:$0xff]
    %v388 = vld [vmem:[%s381 + $0x30] sm:$0xff]
    %v389 = vld [vmem:[%s381 + $0x38] sm:$0xff]
    %v390 = vld [vmem:[%s381 + $0x40] sm:$0xff]
    %v391 = vld [vmem:[%s381 + $0x48] sm:$0xff]
    %v392 = vld [vmem:[%s381 + $0x50] sm:$0xff]
    %v393 = vld [vmem:[%s381 + $0x58] sm:$0xff]
    %v394 = vld [vmem:[%s381 + $0x60] sm:$0xff]
    %v395 = vld [vmem:[%s381 + $0x68] sm:$0xff]
    %v396 = vld [vmem:[%s381 + $0x70] sm:$0xff]
    %v397 = vld [vmem:[%s381 + $0x78] sm:$0xff]
    %v399 = vunpack.c.l.b16 %v380
    %v400 = vpack.c.b16 %v121, %v399
    %vm401 = vcmask 1046528
    %v402 = vrot.slane %v400, 1
    %v403 = vrot.slane %v124, 1
    %v404 = vsel %vm401, %v402, %v403
    %v423 = vunpack.c.l.b16 %v382
    %v424 = vunpack.c.h.b16 %v382
    %v425 = vunpack.c.l.b16 %v383
    %v426 = vunpack.c.h.b16 %v383
    %v427 = vunpack.c.l.b16 %v384
    %v428 = vunpack.c.h.b16 %v384
    %v429 = vunpack.c.l.b16 %v385
    %v430 = vunpack.c.h.b16 %v385
    %v431 = vunpack.c.l.b16 %v386
    %v432 = vunpack.c.h.b16 %v386
    %v433 = vunpack.c.l.b16 %v387
    %v434 = vunpack.c.h.b16 %v387
    %v435 = vunpack.c.l.b16 %v388
    %v436 = vunpack.c.h.b16 %v388
    %v437 = vunpack.c.l.b16 %v389
    %v438 = vunpack.c.h.b16 %v389
    %v439 = vunpack.c.l.b16 %v390
    %v440 = vunpack.c.h.b16 %v390
    %v441 = vunpack.c.l.b16 %v391
    %v442 = vunpack.c.h.b16 %v391
    %v443 = vunpack.c.l.b16 %v392
    %v444 = vunpack.c.h.b16 %v392
    %v445 = vunpack.c.l.b16 %v393
    %v446 = vunpack.c.h.b16 %v393
    %v447 = vunpack.c.l.b16 %v394
    %v448 = vunpack.c.h.b16 %v394
    %v449 = vunpack.c.l.b16 %v395
    %v450 = vunpack.c.h.b16 %v395
    %v451 = vunpack.c.l.b16 %v396
    %v452 = vunpack.c.h.b16 %v396
    %v453 = vunpack.c.l.b16 %v397
    %v454 = vunpack.c.h.b16 %v397
    %v455 = vpack.c.b16 %v425, %v423
    %v456 = vpack.c.b16 %v426, %v424
    %v457 = vpack.c.b16 %v429, %v427
    %v458 = vpack.c.b16 %v430, %v428
    %v459 = vpack.c.b16 %v433, %v431
    %v460 = vpack.c.b16 %v434, %v432
    %v461 = vpack.c.b16 %v437, %v435
    %v462 = vpack.c.b16 %v438, %v436
    %v463 = vpack.c.b16 %v441, %v439
    %v464 = vpack.c.b16 %v442, %v440
    %v465 = vpack.c.b16 %v445, %v443
    %v466 = vpack.c.b16 %v446, %v444
    %v467 = vpack.c.b16 %v449, %v447
    %v468 = vpack.c.b16 %v450, %v448
    %v469 = vpack.c.b16 %v453, %v451
    %v470 = vpack.c.b16 %v454, %v452
    %487 = vmatpush.bf16.msra.mxu0 %v469
    %488 = vmatpush.bf16.msra.mxu0 %v467
    %489 = vmatpush.bf16.msra.mxu0 %v465
    %490 = vmatpush.bf16.msra.mxu0 %v463
    %491 = vmatpush.bf16.msra.mxu0 %v461
    %492 = vmatpush.bf16.msra.mxu0 %v459
    %493 = vmatpush.bf16.msra.mxu0 %v457
    %494 = vmatpush.bf16.msra.mxu0 %v455
    %495 = vmatmul.bf16.gmra.mxu0 %v404
    %v496 = vpop.f32.mrf.mxu0
    %v497 = vadd.f32 0.0, %v496
    %v498 = vpop.f32.mrf.mxu0
    %v499 = vadd.f32 0.0, %v498
    %500 = vmatmul.bf16.gmra.mxu0 %v403
    %v501 = vpop.f32.mrf.mxu0
    %v502 = vadd.f32 0.0, %v501
    %v503 = vpop.f32.mrf.mxu0
    %504 = vdwg.mxu0
    %505 = vmatpush.bf16.msra.mxu0 %v470
    %506 = vmatpush.bf16.msra.mxu0 %v468
    %507 = vmatpush.bf16.msra.mxu0 %v466
    %508 = vmatpush.bf16.msra.mxu0 %v464
    %509 = vmatpush.bf16.msra.mxu0 %v462
    %510 = vmatpush.bf16.msra.mxu0 %v460
    %511 = vmatpush.bf16.msra.mxu0 %v458
    %512 = vmatpush.bf16.msra.mxu0 %v456
    %513 = vmatmul.bf16.gmra.mxu0 %v404
    %v514 = vpop.f32.mrf.mxu0
    %v515 = vadd.f32 0.0, %v514
    %v516 = vpop.f32.mrf.mxu0
    %v517 = vadd.f32 0.0, %v516
    %518 = vmatmul.bf16.gmra.mxu0 %v403
    %v519 = vpop.f32.mrf.mxu0
    %v520 = vadd.f32 0.0, %v519
    %v521 = vpop.f32.mrf.mxu0
    %522 = vdwg.mxu0
    %v523 = vadd.f32 %v354, %v497
    %v524 = vadd.f32 %v372, %v515
    %v525 = vadd.f32 %v356, %v499
    %v526 = vadd.f32 %v374, %v517
    %v527 = vadd.f32 %v359, %v502
    %v528 = vadd.f32 %v377, %v520
    %v529 = vld [vmem:[%s0 + $0x8] sm:$0xf]
    %s530 = scalar_lea.vmem %s1, 384
    %v531 = vld [vmem:[%s530] sm:$0xff]
    %v532 = vld [vmem:[%s530 + $0x8] sm:$0xff]
    %v533 = vld [vmem:[%s530 + $0x10] sm:$0xff]
    %v534 = vld [vmem:[%s530 + $0x18] sm:$0xff]
    %v535 = vld [vmem:[%s530 + $0x20] sm:$0xff]
    %v536 = vld [vmem:[%s530 + $0x28] sm:$0xff]
    %v537 = vld [vmem:[%s530 + $0x30] sm:$0xff]
    %v538 = vld [vmem:[%s530 + $0x38] sm:$0xff]
    %v539 = vld [vmem:[%s530 + $0x40] sm:$0xff]
    %v540 = vld [vmem:[%s530 + $0x48] sm:$0xff]
    %v541 = vld [vmem:[%s530 + $0x50] sm:$0xff]
    %v542 = vld [vmem:[%s530 + $0x58] sm:$0xff]
    %v543 = vld [vmem:[%s530 + $0x60] sm:$0xff]
    %v544 = vld [vmem:[%s530 + $0x68] sm:$0xff]
    %v545 = vld [vmem:[%s530 + $0x70] sm:$0xff]
    %v546 = vld [vmem:[%s530 + $0x78] sm:$0xff]
    %v548 = vunpack.c.l.b16 %v529
    %v549 = vpack.c.b16 %v548, %v548
    %vm550 = vsmask.f32 6400
    %v552 = vshrl.u32 %v400, 16
    %v554 = vrot.slane %v552, 1
    %v555 = vshll.u32 %v400, 16
    %v557 = vrot.slane %v555, 2
    %v558 = vor.u32 %v554, %v557
    %v560 = vshrl.u32 %v549, 16
    %v562 = vrot.slane %v560, 1
    %v563 = vshll.u32 %v549, 16
    %v565 = vrot.slane %v563, 2
    %v566 = vor.u32 %v562, %v565
    %v567 = vsel %vm550, %v558, %v566
    %v586 = vunpack.c.l.b16 %v531
    %v587 = vunpack.c.h.b16 %v531
    %v588 = vunpack.c.l.b16 %v532
    %v589 = vunpack.c.h.b16 %v532
    %v590 = vunpack.c.l.b16 %v533
    %v591 = vunpack.c.h.b16 %v533
    %v592 = vunpack.c.l.b16 %v534
    %v593 = vunpack.c.h.b16 %v534
    %v594 = vunpack.c.l.b16 %v535
    %v595 = vunpack.c.h.b16 %v535
    %v596 = vunpack.c.l.b16 %v536
    %v597 = vunpack.c.h.b16 %v536
    %v598 = vunpack.c.l.b16 %v537
    %v599 = vunpack.c.h.b16 %v537
    %v600 = vunpack.c.l.b16 %v538
    %v601 = vunpack.c.h.b16 %v538
    %v602 = vunpack.c.l.b16 %v539
    %v603 = vunpack.c.h.b16 %v539
    %v604 = vunpack.c.l.b16 %v540
    %v605 = vunpack.c.h.b16 %v540
    %v606 = vunpack.c.l.b16 %v541
    %v607 = vunpack.c.h.b16 %v541
    %v608 = vunpack.c.l.b16 %v542
    %v609 = vunpack.c.h.b16 %v542
    %v610 = vunpack.c.l.b16 %v543
    %v611 = vunpack.c.h.b16 %v543
    %v612 = vunpack.c.l.b16 %v544
    %v613 = vunpack.c.h.b16 %v544
    %v614 = vunpack.c.l.b16 %v545
    %v615 = vunpack.c.h.b16 %v545
    %v616 = vunpack.c.l.b16 %v546
    %v617 = vunpack.c.h.b16 %v546
    %v618 = vpack.c.b16 %v588, %v586
    %v619 = vpack.c.b16 %v589, %v587
    %v620 = vpack.c.b16 %v592, %v590
    %v621 = vpack.c.b16 %v593, %v591
    %v622 = vpack.c.b16 %v596, %v594
    %v623 = vpack.c.b16 %v597, %v595
    %v624 = vpack.c.b16 %v600, %v598
    %v625 = vpack.c.b16 %v601, %v599
    %v626 = vpack.c.b16 %v604, %v602
    %v627 = vpack.c.b16 %v605, %v603
    %v628 = vpack.c.b16 %v608, %v606
    %v629 = vpack.c.b16 %v609, %v607
    %v630 = vpack.c.b16 %v612, %v610
    %v631 = vpack.c.b16 %v613, %v611
    %v632 = vpack.c.b16 %v616, %v614
    %v633 = vpack.c.b16 %v617, %v615
    %650 = vmatpush.bf16.msra.mxu0 %v632
    %651 = vmatpush.bf16.msra.mxu0 %v630
    %652 = vmatpush.bf16.msra.mxu0 %v628
    %653 = vmatpush.bf16.msra.mxu0 %v626
    %654 = vmatpush.bf16.msra.mxu0 %v624
    %655 = vmatpush.bf16.msra.mxu0 %v622
    %656 = vmatpush.bf16.msra.mxu0 %v620
    %657 = vmatpush.bf16.msra.mxu0 %v618
    %658 = vmatmul.bf16.gmra.mxu0 %v567
    %v659 = vpop.f32.mrf.mxu0
    %v660 = vadd.f32 0.0, %v659
    %v661 = vpop.f32.mrf.mxu0
    %v662 = vadd.f32 0.0, %v661
    %663 = vmatmul.bf16.gmra.mxu0 %v566
    %v664 = vpop.f32.mrf.mxu0
    %v665 = vadd.f32 0.0, %v664
    %v666 = vpop.f32.mrf.mxu0
    %667 = vdwg.mxu0
    %668 = vmatpush.bf16.msra.mxu0 %v633
    %669 = vmatpush.bf16.msra.mxu0 %v631
    %670 = vmatpush.bf16.msra.mxu0 %v629
    %671 = vmatpush.bf16.msra.mxu0 %v627
    %672 = vmatpush.bf16.msra.mxu0 %v625
    %673 = vmatpush.bf16.msra.mxu0 %v623
    %674 = vmatpush.bf16.msra.mxu0 %v621
    %675 = vmatpush.bf16.msra.mxu0 %v619
    %676 = vmatmul.bf16.gmra.mxu0 %v567
    %v677 = vpop.f32.mrf.mxu0
    %v678 = vadd.f32 0.0, %v677
    %v679 = vpop.f32.mrf.mxu0
    %v680 = vadd.f32 0.0, %v679
    %681 = vmatmul.bf16.gmra.mxu0 %v566
    %v682 = vpop.f32.mrf.mxu0
    %v683 = vadd.f32 0.0, %v682
    %v684 = vpop.f32.mrf.mxu0
    %685 = vdwg.mxu0
    %v686 = vadd.f32 %v523, %v660
    %v687 = vadd.f32 %v524, %v678
    %v688 = vadd.f32 %v525, %v662
    %v689 = vadd.f32 %v526, %v680
    %v690 = vadd.f32 %v527, %v665
    %v691 = vadd.f32 %v528, %v683
    %vm692 = vcmp.ge.f32.partialorder %v686, 0.0
    %vm693 = vcmp.ge.f32.partialorder %v687, 0.0
    %vm694 = vcmp.ge.f32.partialorder %v688, 0.0
    %vm695 = vcmp.ge.f32.partialorder %v689, 0.0
    %vm696 = vcmp.ge.f32.partialorder %v690, 0.0
    %vm697 = vcmp.ge.f32.partialorder %v691, 0.0
    %v698 = vmul.f32 %v686, 0.2
    %v699 = vmul.f32 %v687, 0.2
    %v700 = vmul.f32 %v688, 0.2
    %v701 = vmul.f32 %v689, 0.2
    %v702 = vmul.f32 %v690, 0.2
    %v703 = vmul.f32 %v691, 0.2
    %v704 = vsel %vm692, %v686, %v698
    %v705 = vsel %vm693, %v687, %v699
    %v706 = vsel %vm694, %v688, %v700
    %v707 = vsel %vm695, %v689, %v701
    %v708 = vsel %vm696, %v690, %v702
    %v709 = vsel %vm697, %v691, %v703
    %v710 = vpack.c.bf16 %v705, %v704
    %v711 = vpack.c.bf16 %v707, %v706
    %v712 = vpack.c.bf16 %v709, %v708
    %713 = vst [vmem:[#allocation2] sm:$0xff] %v710
    %714 = vst [vmem:[#allocation2 + $0x8] sm:$0xff] %v711
    %715 = vst [vmem:[#allocation2 + $0x10] sm:$0x33] %v712
    %s716 = scalar_lea.vmem %s0, 12
    %v717 = vld [vmem:[%s716] sm:$0xf]
    %v718 = vld [vmem:[%s716 + $0x4] sm:$0xf]
    %v719 = vld [vmem:[%s716 + $0x8] sm:$0x3]
    %v720 = vld [vmem:[%s1] sm:$0xff]
    %v721 = vld [vmem:[%s1 + $0x8] sm:$0xff]
    %v722 = vld [vmem:[%s1 + $0x10] sm:$0xff]
    %v723 = vld [vmem:[%s1 + $0x18] sm:$0xff]
    %v724 = vld [vmem:[%s1 + $0x20] sm:$0xff]
    %v725 = vld [vmem:[%s1 + $0x28] sm:$0xff]
    %v726 = vld [vmem:[%s1 + $0x30] sm:$0xff]
    %v727 = vld [vmem:[%s1 + $0x38] sm:$0xff]
    %v728 = vld [vmem:[%s1 + $0x40] sm:$0xff]
    %v729 = vld [vmem:[%s1 + $0x48] sm:$0xff]
    %v730 = vld [vmem:[%s1 + $0x50] sm:$0xff]
    %v731 = vld [vmem:[%s1 + $0x58] sm:$0xff]
    %v732 = vld [vmem:[%s1 + $0x60] sm:$0xff]
    %v733 = vld [vmem:[%s1 + $0x68] sm:$0xff]
    %v734 = vld [vmem:[%s1 + $0x70] sm:$0xff]
    %v735 = vld [vmem:[%s1 + $0x78] sm:$0xff]
    %v736 = vld [vmem:[%s716 + $0x8] sm:$0x7]
    %v737 = vld [vmem:[%s100] sm:$0xff]
    %v738 = vld [vmem:[%s100 + $0x8] sm:$0xff]
    %v739 = vld [vmem:[%s100 + $0x10] sm:$0xff]
    %v740 = vld [vmem:[%s100 + $0x18] sm:$0xff]
    %v741 = vld [vmem:[%s100 + $0x20] sm:$0xff]
    %v742 = vld [vmem:[%s100 + $0x28] sm:$0xff]
    %v743 = vld [vmem:[%s100 + $0x30] sm:$0xff]
    %v744 = vld [vmem:[%s100 + $0x38] sm:$0xff]
    %v745 = vld [vmem:[%s100 + $0x40] sm:$0xff]
    %v746 = vld [vmem:[%s100 + $0x48] sm:$0xff]
    %v747 = vld [vmem:[%s100 + $0x50] sm:$0xff]
    %v748 = vld [vmem:[%s100 + $0x58] sm:$0xff]
    %v749 = vld [vmem:[%s100 + $0x60] sm:$0xff]
    %v750 = vld [vmem:[%s100 + $0x68] sm:$0xff]
    %v751 = vld [vmem:[%s100 + $0x70] sm:$0xff]
    %v752 = vld [vmem:[%s100 + $0x78] sm:$0xff]
    %v756 = vunpack.c.l.b16 %v717
    %v757 = vunpack.c.l.b16 %v718
    %v758 = vunpack.c.l.b16 %v736
    %v759 = vpack.c.b16 %v757, %v756
    %v760 = vpack.c.b16 %v758, %v758
    %v762 = vshrl.u32 %v759, 16
    %v764 = vshll.u32 %v759, 16
    %v766 = vrot.slane %v764, 1
    %v767 = vor.u32 %v762, %v766
    %v769 = vshll.u32 %v760, 16
    %v771 = vrot.slane %v769, 1
    %v772 = vsel %vm125, %v767, %v771
    %v773 = vshrl.u32 %v760, 16
    %v775 = vor.u32 %v773, %v771
    %v794 = vunpack.c.l.b16 %v737
    %v795 = vunpack.c.h.b16 %v737
    %v796 = vunpack.c.l.b16 %v738
    %v797 = vunpack.c.h.b16 %v738
    %v798 = vunpack.c.l.b16 %v739
    %v799 = vunpack.c.h.b16 %v739
    %v800 = vunpack.c.l.b16 %v740
    %v801 = vunpack.c.h.b16 %v740
    %v802 = vunpack.c.l.b16 %v741
    %v803 = vunpack.c.h.b16 %v741
    %v804 = vunpack.c.l.b16 %v742
    %v805 = vunpack.c.h.b16 %v742
    %v806 = vunpack.c.l.b16 %v743
    %v807 = vunpack.c.h.b16 %v743
    %v808 = vunpack.c.l.b16 %v744
    %v809 = vunpack.c.h.b16 %v744
    %v810 = vunpack.c.l.b16 %v745
    %v811 = vunpack.c.h.b16 %v745
    %v812 = vunpack.c.l.b16 %v746
    %v813 = vunpack.c.h.b16 %v746
    %v814 = vunpack.c.l.b16 %v747
    %v815 = vunpack.c.h.b16 %v747
    %v816 = vunpack.c.l.b16 %v748
    %v817 = vunpack.c.h.b16 %v748
    %v818 = vunpack.c.l.b16 %v749
    %v819 = vunpack.c.h.b16 %v749
    %v820 = vunpack.c.l.b16 %v750
    %v821 = vunpack.c.h.b16 %v750
    %v822 = vunpack.c.l.b16 %v751
    %v823 = vunpack.c.h.b16 %v751
    %v824 = vunpack.c.l.b16 %v752
    %v825 = vunpack.c.h.b16 %v752
    %v826 = vpack.c.b16 %v796, %v794
    %v827 = vpack.c.b16 %v797, %v795
    %v828 = vpack.c.b16 %v800, %v798
    %v829 = vpack.c.b16 %v801, %v799
    %v830 = vpack.c.b16 %v804, %v802
    %v831 = vpack.c.b16 %v805, %v803
    %v832 = vpack.c.b16 %v808, %v806
    %v833 = vpack.c.b16 %v809, %v807
    %v834 = vpack.c.b16 %v812, %v810
    %v835 = vpack.c.b16 %v813, %v811
    %v836 = vpack.c.b16 %v816, %v814
    %v837 = vpack.c.b16 %v817, %v815
    %v838 = vpack.c.b16 %v820, %v818
    %v839 = vpack.c.b16 %v821, %v819
    %v840 = vpack.c.b16 %v824, %v822
    %v841 = vpack.c.b16 %v825, %v823
    %858 = vmatpush.bf16.msra.mxu0 %v840
    %859 = vmatpush.bf16.msra.mxu0 %v838
    %860 = vmatpush.bf16.msra.mxu0 %v836
    %861 = vmatpush.bf16.msra.mxu0 %v834
    %862 = vmatpush.bf16.msra.mxu0 %v832
    %863 = vmatpush.bf16.msra.mxu0 %v830
    %864 = vmatpush.bf16.msra.mxu0 %v828
    %865 = vmatpush.bf16.msra.mxu0 %v826
    %866 = vmatmul.bf16.gmra.mxu0 %v772
    %v867 = vpop.f32.mrf.mxu0
    %v868 = vadd.f32 0.0, %v867
    %v869 = vpop.f32.mrf.mxu0
    %v870 = vadd.f32 0.0, %v869
    %871 = vmatmul.bf16.gmra.mxu0 %v775
    %v872 = vpop.f32.mrf.mxu0
    %v873 = vadd.f32 0.0, %v872
    %v874 = vpop.f32.mrf.mxu0
    %875 = vdwg.mxu0
    %876 = vmatpush.bf16.msra.mxu0 %v841
    %877 = vmatpush.bf16.msra.mxu0 %v839
    %878 = vmatpush.bf16.msra.mxu0 %v837
    %879 = vmatpush.bf16.msra.mxu0 %v835
    %880 = vmatpush.bf16.msra.mxu0 %v833
    %881 = vmatpush.bf16.msra.mxu0 %v831
    %882 = vmatpush.bf16.msra.mxu0 %v829
    %883 = vmatpush.bf16.msra.mxu0 %v827
    %884 = vmatmul.bf16.gmra.mxu0 %v772
    %v885 = vpop.f32.mrf.mxu0
    %v886 = vadd.f32 0.0, %v885
    %v887 = vpop.f32.mrf.mxu0
    %v888 = vadd.f32 0.0, %v887
    %889 = vmatmul.bf16.gmra.mxu0 %v775
    %v890 = vpop.f32.mrf.mxu0
    %v891 = vadd.f32 0.0, %v890
    %v892 = vpop.f32.mrf.mxu0
    %893 = vdwg.mxu0
    %v895 = vunpack.c.l.b16 %v719
    %v896 = vpack.c.b16 %v895, %v895
    %v915 = vunpack.c.l.b16 %v720
    %v916 = vunpack.c.h.b16 %v720
    %v917 = vunpack.c.l.b16 %v721
    %v918 = vunpack.c.h.b16 %v721
    %v919 = vunpack.c.l.b16 %v722
    %v920 = vunpack.c.h.b16 %v722
    %v921 = vunpack.c.l.b16 %v723
    %v922 = vunpack.c.h.b16 %v723
    %v923 = vunpack.c.l.b16 %v724
    %v924 = vunpack.c.h.b16 %v724
    %v925 = vunpack.c.l.b16 %v725
    %v926 = vunpack.c.h.b16 %v725
    %v927 = vunpack.c.l.b16 %v726
    %v928 = vunpack.c.h.b16 %v726
    %v929 = vunpack.c.l.b16 %v727
    %v930 = vunpack.c.h.b16 %v727
    %v931 = vunpack.c.l.b16 %v728
    %v932 = vunpack.c.h.b16 %v728
    %v933 = vunpack.c.l.b16 %v729
    %v934 = vunpack.c.h.b16 %v729
    %v935 = vunpack.c.l.b16 %v730
    %v936 = vunpack.c.h.b16 %v730
    %v937 = vunpack.c.l.b16 %v731
    %v938 = vunpack.c.h.b16 %v731
    %v939 = vunpack.c.l.b16 %v732
    %v940 = vunpack.c.h.b16 %v732
    %v941 = vunpack.c.l.b16 %v733
    %v942 = vunpack.c.h.b16 %v733
    %v943 = vunpack.c.l.b16 %v734
    %v944 = vunpack.c.h.b16 %v734
    %v945 = vunpack.c.l.b16 %v735
    %v946 = vunpack.c.h.b16 %v735
    %v947 = vpack.c.b16 %v917, %v915
    %v948 = vpack.c.b16 %v918, %v916
    %v949 = vpack.c.b16 %v921, %v919
    %v950 = vpack.c.b16 %v922, %v920
    %v951 = vpack.c.b16 %v925, %v923
    %v952 = vpack.c.b16 %v926, %v924
    %v953 = vpack.c.b16 %v929, %v927
    %v954 = vpack.c.b16 %v930, %v928
    %v955 = vpack.c.b16 %v933, %v931
    %v956 = vpack.c.b16 %v934, %v932
    %v957 = vpack.c.b16 %v937, %v935
    %v958 = vpack.c.b16 %v938, %v936
    %v959 = vpack.c.b16 %v941, %v939
    %v960 = vpack.c.b16 %v942, %v940
    %v961 = vpack.c.b16 %v945, %v943
    %v962 = vpack.c.b16 %v946, %v944
    %979 = vmatpush.bf16.msra.mxu0 %v961
    %980 = vmatpush.bf16.msra.mxu0 %v959
    %981 = vmatpush.bf16.msra.mxu0 %v957
    %982 = vmatpush.bf16.msra.mxu0 %v955
    %983 = vmatpush.bf16.msra.mxu0 %v953
    %984 = vmatpush.bf16.msra.mxu0 %v951
    %985 = vmatpush.bf16.msra.mxu0 %v949
    %986 = vmatpush.bf16.msra.mxu0 %v947
    %987 = vmatmul.bf16.gmra.mxu0 %v759
    %v988 = vpop.f32.mrf.mxu0
    %v989 = vadd.f32 %v868, %v988
    %v990 = vpop.f32.mrf.mxu0
    %v991 = vadd.f32 %v870, %v990
    %992 = vmatmul.bf16.gmra.mxu0 %v896
    %v993 = vpop.f32.mrf.mxu0
    %v994 = vadd.f32 %v873, %v993
    %v995 = vpop.f32.mrf.mxu0
    %996 = vdwg.mxu0
    %997 = vmatpush.bf16.msra.mxu0 %v962
    %998 = vmatpush.bf16.msra.mxu0 %v960
    %999 = vmatpush.bf16.msra.mxu0 %v958
    %1000 = vmatpush.bf16.msra.mxu0 %v956
    %1001 = vmatpush.bf16.msra.mxu0 %v954
    %1002 = vmatpush.bf16.msra.mxu0 %v952
    %1003 = vmatpush.bf16.msra.mxu0 %v950
    %1004 = vmatpush.bf16.msra.mxu0 %v948
    %1005 = vmatmul.bf16.gmra.mxu0 %v759
    %v1006 = vpop.f32.mrf.mxu0
    %v1007 = vadd.f32 %v886, %v1006
    %v1008 = vpop.f32.mrf.mxu0
    %v1009 = vadd.f32 %v888, %v1008
    %1010 = vmatmul.bf16.gmra.mxu0 %v896
    %v1011 = vpop.f32.mrf.mxu0
    %v1012 = vadd.f32 %v891, %v1011
    %v1013 = vpop.f32.mrf.mxu0
    %1014 = vdwg.mxu0
    %v1015 = vld [vmem:[%s716] sm:$0xe]
    %v1016 = vld [vmem:[%s381] sm:$0xff]
    %v1017 = vld [vmem:[%s381 + $0x8] sm:$0xff]
    %v1018 = vld [vmem:[%s381 + $0x10] sm:$0xff]
    %v1019 = vld [vmem:[%s381 + $0x18] sm:$0xff]
    %v1020 = vld [vmem:[%s381 + $0x20] sm:$0xff]
    %v1021 = vld [vmem:[%s381 + $0x28] sm:$0xff]
    %v1022 = vld [vmem:[%s381 + $0x30] sm:$0xff]
    %v1023 = vld [vmem:[%s381 + $0x38] sm:$0xff]
    %v1024 = vld [vmem:[%s381 + $0x40] sm:$0xff]
    %v1025 = vld [vmem:[%s381 + $0x48] sm:$0xff]
    %v1026 = vld [vmem:[%s381 + $0x50] sm:$0xff]
    %v1027 = vld [vmem:[%s381 + $0x58] sm:$0xff]
    %v1028 = vld [vmem:[%s381 + $0x60] sm:$0xff]
    %v1029 = vld [vmem:[%s381 + $0x68] sm:$0xff]
    %v1030 = vld [vmem:[%s381 + $0x70] sm:$0xff]
    %v1031 = vld [vmem:[%s381 + $0x78] sm:$0xff]
    %v1033 = vunpack.c.l.b16 %v1015
    %v1034 = vpack.c.b16 %v757, %v1033
    %v1035 = vrot.slane %v1034, 1
    %v1036 = vrot.slane %v760, 1
    %v1037 = vsel %vm401, %v1035, %v1036
    %v1056 = vunpack.c.l.b16 %v1016
    %v1057 = vunpack.c.h.b16 %v1016
    %v1058 = vunpack.c.l.b16 %v1017
    %v1059 = vunpack.c.h.b16 %v1017
    %v1060 = vunpack.c.l.b16 %v1018
    %v1061 = vunpack.c.h.b16 %v1018
    %v1062 = vunpack.c.l.b16 %v1019
    %v1063 = vunpack.c.h.b16 %v1019
    %v1064 = vunpack.c.l.b16 %v1020
    %v1065 = vunpack.c.h.b16 %v1020
    %v1066 = vunpack.c.l.b16 %v1021
    %v1067 = vunpack.c.h.b16 %v1021
    %v1068 = vunpack.c.l.b16 %v1022
    %v1069 = vunpack.c.h.b16 %v1022
    %v1070 = vunpack.c.l.b16 %v1023
    %v1071 = vunpack.c.h.b16 %v1023
    %v1072 = vunpack.c.l.b16 %v1024
    %v1073 = vunpack.c.h.b16 %v1024
    %v1074 = vunpack.c.l.b16 %v1025
    %v1075 = vunpack.c.h.b16 %v1025
    %v1076 = vunpack.c.l.b16 %v1026
    %v1077 = vunpack.c.h.b16 %v1026
    %v1078 = vunpack.c.l.b16 %v1027
    %v1079 = vunpack.c.h.b16 %v1027
    %v1080 = vunpack.c.l.b16 %v1028
    %v1081 = vunpack.c.h.b16 %v1028
    %v1082 = vunpack.c.l.b16 %v1029
    %v1083 = vunpack.c.h.b16 %v1029
    %v1084 = vunpack.c.l.b16 %v1030
    %v1085 = vunpack.c.h.b16 %v1030
    %v1086 = vunpack.c.l.b16 %v1031
    %v1087 = vunpack.c.h.b16 %v1031
    %v1088 = vpack.c.b16 %v1058, %v1056
    %v1089 = vpack.c.b16 %v1059, %v1057
    %v1090 = vpack.c.b16 %v1062, %v1060
    %v1091 = vpack.c.b16 %v1063, %v1061
    %v1092 = vpack.c.b16 %v1066, %v1064
    %v1093 = vpack.c.b16 %v1067, %v1065
    %v1094 = vpack.c.b16 %v1070, %v1068
    %v1095 = vpack.c.b16 %v1071, %v1069
    %v1096 = vpack.c.b16 %v1074, %v1072
    %v1097 = vpack.c.b16 %v1075, %v1073
    %v1098 = vpack.c.b16 %v1078, %v1076
    %v1099 = vpack.c.b16 %v1079, %v1077
    %v1100 = vpack.c.b16 %v1082, %v1080
    %v1101 = vpack.c.b16 %v1083, %v1081
    %v1102 = vpack.c.b16 %v1086, %v1084
    %v1103 = vpack.c.b16 %v1087, %v1085
    %1120 = vmatpush.bf16.msra.mxu0 %v1102
    %1121 = vmatpush.bf16.msra.mxu0 %v1100
    %1122 = vmatpush.bf16.msra.mxu0 %v1098
    %1123 = vmatpush.bf16.msra.mxu0 %v1096
    %1124 = vmatpush.bf16.msra.mxu0 %v1094
    %1125 = vmatpush.bf16.msra.mxu0 %v1092
    %1126 = vmatpush.bf16.msra.mxu0 %v1090
    %1127 = vmatpush.bf16.msra.mxu0 %v1088
    %1128 = vmatmul.bf16.gmra.mxu0 %v1037
    %v1129 = vpop.f32.mrf.mxu0
    %v1130 = vadd.f32 0.0, %v1129
    %v1131 = vpop.f32.mrf.mxu0
    %v1132 = vadd.f32 0.0, %v1131
    %1133 = vmatmul.bf16.gmra.mxu0 %v1036
    %v1134 = vpop.f32.mrf.mxu0
    %v1135 = vadd.f32 0.0, %v1134
    %v1136 = vpop.f32.mrf.mxu0
    %1137 = vdwg.mxu0
    %1138 = vmatpush.bf16.msra.mxu0 %v1103
    %1139 = vmatpush.bf16.msra.mxu0 %v1101
    %1140 = vmatpush.bf16.msra.mxu0 %v1099
    %1141 = vmatpush.bf16.msra.mxu0 %v1097
    %1142 = vmatpush.bf16.msra.mxu0 %v1095
    %1143 = vmatpush.bf16.msra.mxu0 %v1093
    %1144 = vmatpush.bf16.msra.mxu0 %v1091
    %1145 = vmatpush.bf16.msra.mxu0 %v1089
    %1146 = vmatmul.bf16.gmra.mxu0 %v1037
    %v1147 = vpop.f32.mrf.mxu0
    %v1148 = vadd.f32 0.0, %v1147
    %v1149 = vpop.f32.mrf.mxu0
    %v1150 = vadd.f32 0.0, %v1149
    %1151 = vmatmul.bf16.gmra.mxu0 %v1036
    %v1152 = vpop.f32.mrf.mxu0
    %v1153 = vadd.f32 0.0, %v1152
    %v1154 = vpop.f32.mrf.mxu0
    %1155 = vdwg.mxu0
    %v1156 = vadd.f32 %v989, %v1130
    %v1157 = vadd.f32 %v1007, %v1148
    %v1158 = vadd.f32 %v991, %v1132
    %v1159 = vadd.f32 %v1009, %v1150
    %v1160 = vadd.f32 %v994, %v1135
    %v1161 = vadd.f32 %v1012, %v1153
    %v1162 = vld [vmem:[%s716 + $0x8] sm:$0xf]
    %v1163 = vld [vmem:[%s530] sm:$0xff]
    %v1164 = vld [vmem:[%s530 + $0x8] sm:$0xff]
    %v1165 = vld [vmem:[%s530 + $0x10] sm:$0xff]
    %v1166 = vld [vmem:[%s530 + $0x18] sm:$0xff]
    %v1167 = vld [vmem:[%s530 + $0x20] sm:$0xff]
    %v1168 = vld [vmem:[%s530 + $0x28] sm:$0xff]
    %v1169 = vld [vmem:[%s530 + $0x30] sm:$0xff]
    %v1170 = vld [vmem:[%s530 + $0x38] sm:$0xff]
    %v1171 = vld [vmem:[%s530 + $0x40] sm:$0xff]
    %v1172 = vld [vmem:[%s530 + $0x48] sm:$0xff]
    %v1173 = vld [vmem:[%s530 + $0x50] sm:$0xff]
    %v1174 = vld [vmem:[%s530 + $0x58] sm:$0xff]
    %v1175 = vld [vmem:[%s530 + $0x60] sm:$0xff]
    %v1176 = vld [vmem:[%s530 + $0x68] sm:$0xff]
    %v1177 = vld [vmem:[%s530 + $0x70] sm:$0xff]
    %v1178 = vld [vmem:[%s530 + $0x78] sm:$0xff]
    %v1180 = vunpack.c.l.b16 %v1162
    %v1181 = vpack.c.b16 %v1180, %v1180
    %v1183 = vshrl.u32 %v1034, 16
    %v1185 = vrot.slane %v1183, 1
    %v1186 = vshll.u32 %v1034, 16
    %v1188 = vrot.slane %v1186, 2
    %v1189 = vor.u32 %v1185, %v1188
    %v1191 = vshrl.u32 %v1181, 16
    %v1193 = vrot.slane %v1191, 1
    %v1194 = vshll.u32 %v1181, 16
    %v1196 = vrot.slane %v1194, 2
    %v1197 = vor.u32 %v1193, %v1196
    %v1198 = vsel %vm550, %v1189, %v1197
    %v1217 = vunpack.c.l.b16 %v1163
    %v1218 = vunpack.c.h.b16 %v1163
    %v1219 = vunpack.c.l.b16 %v1164
    %v1220 = vunpack.c.h.b16 %v1164
    %v1221 = vunpack.c.l.b16 %v1165
    %v1222 = vunpack.c.h.b16 %v1165
    %v1223 = vunpack.c.l.b16 %v1166
    %v1224 = vunpack.c.h.b16 %v1166
    %v1225 = vunpack.c.l.b16 %v1167
    %v1226 = vunpack.c.h.b16 %v1167
    %v1227 = vunpack.c.l.b16 %v1168
    %v1228 = vunpack.c.h.b16 %v1168
    %v1229 = vunpack.c.l.b16 %v1169
    %v1230 = vunpack.c.h.b16 %v1169
    %v1231 = vunpack.c.l.b16 %v1170
    %v1232 = vunpack.c.h.b16 %v1170
    %v1233 = vunpack.c.l.b16 %v1171
    %v1234 = vunpack.c.h.b16 %v1171
    %v1235 = vunpack.c.l.b16 %v1172
    %v1236 = vunpack.c.h.b16 %v1172
    %v1237 = vunpack.c.l.b16 %v1173
    %v1238 = vunpack.c.h.b16 %v1173
    %v1239 = vunpack.c.l.b16 %v1174
    %v1240 = vunpack.c.h.b16 %v1174
    %v1241 = vunpack.c.l.b16 %v1175
    %v1242 = vunpack.c.h.b16 %v1175
    %v1243 = vunpack.c.l.b16 %v1176
    %v1244 = vunpack.c.h.b16 %v1176
    %v1245 = vunpack.c.l.b16 %v1177
    %v1246 = vunpack.c.h.b16 %v1177
    %v1247 = vunpack.c.l.b16 %v1178
    %v1248 = vunpack.c.h.b16 %v1178
    %v1249 = vpack.c.b16 %v1219, %v1217
    %v1250 = vpack.c.b16 %v1220, %v1218
    %v1251 = vpack.c.b16 %v1223, %v1221
    %v1252 = vpack.c.b16 %v1224, %v1222
    %v1253 = vpack.c.b16 %v1227, %v1225
    %v1254 = vpack.c.b16 %v1228, %v1226
    %v1255 = vpack.c.b16 %v1231, %v1229
    %v1256 = vpack.c.b16 %v1232, %v1230
    %v1257 = vpack.c.b16 %v1235, %v1233
    %v1258 = vpack.c.b16 %v1236, %v1234
    %v1259 = vpack.c.b16 %v1239, %v1237
    %v1260 = vpack.c.b16 %v1240, %v1238
    %v1261 = vpack.c.b16 %v1243, %v1241
    %v1262 = vpack.c.b16 %v1244, %v1242
    %v1263 = vpack.c.b16 %v1247, %v1245
    %v1264 = vpack.c.b16 %v1248, %v1246
    %1281 = vmatpush.bf16.msra.mxu0 %v1263
    %1282 = vmatpush.bf16.msra.mxu0 %v1261
    %1283 = vmatpush.bf16.msra.mxu0 %v1259
    %1284 = vmatpush.bf16.msra.mxu0 %v1257
    %1285 = vmatpush.bf16.msra.mxu0 %v1255
    %1286 = vmatpush.bf16.msra.mxu0 %v1253
    %1287 = vmatpush.bf16.msra.mxu0 %v1251
    %1288 = vmatpush.bf16.msra.mxu0 %v1249
    %1289 = vmatmul.bf16.gmra.mxu0 %v1198
    %v1290 = vpop.f32.mrf.mxu0
    %v1291 = vadd.f32 0.0, %v1290
    %v1292 = vpop.f32.mrf.mxu0
    %v1293 = vadd.f32 0.0, %v1292
    %1294 = vmatmul.bf16.gmra.mxu0 %v1197
    %v1295 = vpop.f32.mrf.mxu0
    %v1296 = vadd.f32 0.0, %v1295
    %v1297 = vpop.f32.mrf.mxu0
    %1298 = vdwg.mxu0
    %1299 = vmatpush.bf16.msra.mxu0 %v1264
    %1300 = vmatpush.bf16.msra.mxu0 %v1262
    %1301 = vmatpush.bf16.msra.mxu0 %v1260
    %1302 = vmatpush.bf16.msra.mxu0 %v1258
    %1303 = vmatpush.bf16.msra.mxu0 %v1256
    %1304 = vmatpush.bf16.msra.mxu0 %v1254
    %1305 = vmatpush.bf16.msra.mxu0 %v1252
    %1306 = vmatpush.bf16.msra.mxu0 %v1250
    %1307 = vmatmul.bf16.gmra.mxu0 %v1198
    %v1308 = vpop.f32.mrf.mxu0
    %v1309 = vadd.f32 0.0, %v1308
    %v1310 = vpop.f32.mrf.mxu0
    %v1311 = vadd.f32 0.0, %v1310
    %1312 = vmatmul.bf16.gmra.mxu0 %v1197
    %v1313 = vpop.f32.mrf.mxu0
    %v1314 = vadd.f32 0.0, %v1313
    %v1315 = vpop.f32.mrf.mxu0
    %1316 = vdwg.mxu0
    %v1317 = vadd.f32 %v1156, %v1291
    %v1318 = vadd.f32 %v1157, %v1309
    %v1319 = vadd.f32 %v1158, %v1293
    %v1320 = vadd.f32 %v1159, %v1311
    %v1321 = vadd.f32 %v1160, %v1296
    %v1322 = vadd.f32 %v1161, %v1314
    %vm1323 = vcmp.ge.f32.partialorder %v1317, 0.0
    %vm1324 = vcmp.ge.f32.partialorder %v1318, 0.0
    %vm1325 = vcmp.ge.f32.partialorder %v1319, 0.0
    %vm1326 = vcmp.ge.f32.partialorder %v1320, 0.0
    %vm1327 = vcmp.ge.f32.partialorder %v1321, 0.0
    %vm1328 = vcmp.ge.f32.partialorder %v1322, 0.0
    %v1329 = vmul.f32 %v1317, 0.2
    %v1330 = vmul.f32 %v1318, 0.2
    %v1331 = vmul.f32 %v1319, 0.2
    %v1332 = vmul.f32 %v1320, 0.2
    %v1333 = vmul.f32 %v1321, 0.2
    %v1334 = vmul.f32 %v1322, 0.2
    %v1335 = vsel %vm1323, %v1317, %v1329
    %v1336 = vsel %vm1324, %v1318, %v1330
    %v1337 = vsel %vm1325, %v1319, %v1331
    %v1338 = vsel %vm1326, %v1320, %v1332
    %v1339 = vsel %vm1327, %v1321, %v1333
    %v1340 = vsel %vm1328, %v1322, %v1334
    %v1341 = vpack.c.bf16 %v1336, %v1335
    %v1342 = vpack.c.bf16 %v1338, %v1337
    %v1343 = vpack.c.bf16 %v1340, %v1339
    %s1344 = scalar_lea.vmem [#allocation2], 24
    %1345 = vst [vmem:[%s1344] sm:$0xff] %v1341
    %1346 = vst [vmem:[%s1344 + $0x8] sm:$0xff] %v1342
    %1347 = vst [vmem:[%s1344 + $0x10] sm:$0x33] %v1343
    %v1348 = vld [vmem:[#allocation2] sm:$0xff]
    %v1349 = vld [vmem:[#allocation2 + $0x8] sm:$0xff]
    %v1350 = vld [vmem:[#allocation2 + $0x10] sm:$0x11]
    %v1351 = vld [vmem:[%s2] sm:$0xff]
    %v1352 = vld [vmem:[%s2 + $0x8] sm:$0xff]
    %v1353 = vld [vmem:[%s2 + $0x10] sm:$0xff]
    %v1354 = vld [vmem:[%s2 + $0x18] sm:$0xff]
    %v1355 = vld [vmem:[%s2 + $0x20] sm:$0xff]
    %v1356 = vld [vmem:[%s2 + $0x28] sm:$0xff]
    %v1357 = vld [vmem:[%s2 + $0x30] sm:$0xff]
    %v1358 = vld [vmem:[%s2 + $0x38] sm:$0xff]
    %v1359 = vld [vmem:[%s2 + $0x40] sm:$0xff]
    %v1360 = vld [vmem:[%s2 + $0x48] sm:$0xff]
    %v1361 = vld [vmem:[%s2 + $0x50] sm:$0xff]
    %v1362 = vld [vmem:[%s2 + $0x58] sm:$0xff]
    %v1363 = vld [vmem:[%s2 + $0x60] sm:$0xff]
    %v1364 = vld [vmem:[%s2 + $0x68] sm:$0xff]
    %v1365 = vld [vmem:[%s2 + $0x70] sm:$0xff]
    %v1366 = vld [vmem:[%s2 + $0x78] sm:$0xff]
    %v1367 = vld [vmem:[%s2 + $0x80] sm:$0xff]
    %v1368 = vld [vmem:[%s2 + $0x88] sm:$0xff]
    %v1369 = vld [vmem:[%s2 + $0x90] sm:$0xff]
    %v1370 = vld [vmem:[%s2 + $0x98] sm:$0xff]
    %v1371 = vld [vmem:[%s2 + $0xa0] sm:$0xff]
    %v1372 = vld [vmem:[%s2 + $0xa8] sm:$0xff]
    %v1373 = vld [vmem:[%s2 + $0xb0] sm:$0xff]
    %v1374 = vld [vmem:[%s2 + $0xb8] sm:$0xff]
    %v1375 = vld [vmem:[%s2 + $0xc0] sm:$0xff]
    %v1376 = vld [vmem:[%s2 + $0xc8] sm:$0xff]
    %v1377 = vld [vmem:[%s2 + $0xd0] sm:$0xff]
    %v1378 = vld [vmem:[%s2 + $0xd8] sm:$0xff]
    %v1379 = vld [vmem:[%s2 + $0xe0] sm:$0xff]
    %v1380 = vld [vmem:[%s2 + $0xe8] sm:$0xff]
    %v1381 = vld [vmem:[%s2 + $0xf0] sm:$0xff]
    %v1382 = vld [vmem:[%s2 + $0xf8] sm:$0xff]
    %s1383 = scalar_lea.vmem %s2, 256
    %v1384 = vld [vmem:[%s1383] sm:$0xff]
    %v1385 = vld [vmem:[%s1383 + $0x8] sm:$0xff]
    %v1386 = vld [vmem:[%s1383 + $0x10] sm:$0xff]
    %v1387 = vld [vmem:[%s1383 + $0x18] sm:$0xff]
    %v1388 = vld [vmem:[%s1383 + $0x20] sm:$0xff]
    %v1389 = vld [vmem:[%s1383 + $0x28] sm:$0xff]
    %v1390 = vld [vmem:[%s1383 + $0x30] sm:$0xff]
    %v1391 = vld [vmem:[%s1383 + $0x38] sm:$0xff]
    %v1392 = vld [vmem:[%s1383 + $0x40] sm:$0xff]
    %v1393 = vld [vmem:[%s1383 + $0x48] sm:$0xff]
    %v1394 = vld [vmem:[%s1383 + $0x50] sm:$0xff]
    %v1395 = vld [vmem:[%s1383 + $0x58] sm:$0xff]
    %v1396 = vld [vmem:[%s1383 + $0x60] sm:$0xff]
    %v1397 = vld [vmem:[%s1383 + $0x68] sm:$0xff]
    %v1398 = vld [vmem:[%s1383 + $0x70] sm:$0xff]
    %v1399 = vld [vmem:[%s1383 + $0x78] sm:$0xff]
    %v1400 = vld [vmem:[%s1383 + $0x80] sm:$0xff]
    %v1401 = vld [vmem:[%s1383 + $0x88] sm:$0xff]
    %v1402 = vld [vmem:[%s1383 + $0x90] sm:$0xff]
    %v1403 = vld [vmem:[%s1383 + $0x98] sm:$0xff]
    %v1404 = vld [vmem:[%s1383 + $0xa0] sm:$0xff]
    %v1405 = vld [vmem:[%s1383 + $0xa8] sm:$0xff]
    %v1406 = vld [vmem:[%s1383 + $0xb0] sm:$0xff]
    %v1407 = vld [vmem:[%s1383 + $0xb8] sm:$0xff]
    %v1408 = vld [vmem:[%s1383 + $0xc0] sm:$0xff]
    %v1409 = vld [vmem:[%s1383 + $0xc8] sm:$0xff]
    %v1410 = vld [vmem:[%s1383 + $0xd0] sm:$0xff]
    %v1411 = vld [vmem:[%s1383 + $0xd8] sm:$0xff]
    %v1412 = vld [vmem:[%s1383 + $0xe0] sm:$0xff]
    %v1413 = vld [vmem:[%s1383 + $0xe8] sm:$0xff]
    %v1414 = vld [vmem:[%s1383 + $0xf0] sm:$0xff]
    %v1415 = vld [vmem:[%s1383 + $0xf8] sm:$0xff]
    %v1419 = vunpack.c.l.b16 %v1348
    %v1420 = vunpack.c.h.b16 %v1348
    %v1421 = vunpack.c.l.b16 %v1349
    %v1422 = vunpack.c.h.b16 %v1349
    %v1423 = vunpack.c.l.b16 %v1350
    %v1424 = vunpack.c.h.b16 %v1350
    %v1425 = vpack.c.b16 %v1421, %v1419
    %v1426 = vpack.c.b16 %v1422, %v1420
    %v1427 = vpack.c.b16 %v1423, %v1423
    %v1428 = vpack.c.b16 %v1424, %v1424
    %v1430 = vshrl.u32 %v1425, 16
    %v1432 = vshll.u32 %v1425, 16
    %v1434 = vrot.slane %v1432, 1
    %v1435 = vor.u32 %v1430, %v1434
    %v1437 = vshll.u32 %v1427, 16
    %v1439 = vrot.slane %v1437, 1
    %v1440 = vsel %vm125, %v1435, %v1439
    %v1442 = vshrl.u32 %v1426, 16
    %v1444 = vshll.u32 %v1426, 16
    %v1446 = vrot.slane %v1444, 1
    %v1447 = vor.u32 %v1442, %v1446
    %v1449 = vshll.u32 %v1428, 16
    %v1451 = vrot.slane %v1449, 1
    %v1452 = vsel %vm125, %v1447, %v1451
    %v1453 = vshrl.u32 %v1427, 16
    %v1455 = vshrl.u32 %v1428, 16
    %v1493 = vunpack.c.l.b16 %v1384
    %v1494 = vunpack.c.h.b16 %v1384
    %v1495 = vunpack.c.l.b16 %v1385
    %v1496 = vunpack.c.h.b16 %v1385
    %v1497 = vunpack.c.l.b16 %v1386
    %v1498 = vunpack.c.h.b16 %v1386
    %v1499 = vunpack.c.l.b16 %v1387
    %v1500 = vunpack.c.h.b16 %v1387
    %v1501 = vunpack.c.l.b16 %v1388
    %v1502 = vunpack.c.h.b16 %v1388
    %v1503 = vunpack.c.l.b16 %v1389
    %v1504 = vunpack.c.h.b16 %v1389
    %v1505 = vunpack.c.l.b16 %v1390
    %v1506 = vunpack.c.h.b16 %v1390
    %v1507 = vunpack.c.l.b16 %v1391
    %v1508 = vunpack.c.h.b16 %v1391
    %v1509 = vunpack.c.l.b16 %v1392
    %v1510 = vunpack.c.h.b16 %v1392
    %v1511 = vunpack.c.l.b16 %v1393
    %v1512 = vunpack.c.h.b16 %v1393
    %v1513 = vunpack.c.l.b16 %v1394
    %v1514 = vunpack.c.h.b16 %v1394
    %v1515 = vunpack.c.l.b16 %v1395
    %v1516 = vunpack.c.h.b16 %v1395
    %v1517 = vunpack.c.l.b16 %v1396
    %v1518 = vunpack.c.h.b16 %v1396
    %v1519 = vunpack.c.l.b16 %v1397
    %v1520 = vunpack.c.h.b16 %v1397
    %v1521 = vunpack.c.l.b16 %v1398
    %v1522 = vunpack.c.h.b16 %v1398
    %v1523 = vunpack.c.l.b16 %v1399
    %v1524 = vunpack.c.h.b16 %v1399
    %v1525 = vunpack.c.l.b16 %v1400
    %v1526 = vunpack.c.h.b16 %v1400
    %v1527 = vunpack.c.l.b16 %v1401
    %v1528 = vunpack.c.h.b16 %v1401
    %v1529 = vunpack.c.l.b16 %v1402
    %v1530 = vunpack.c.h.b16 %v1402
    %v1531 = vunpack.c.l.b16 %v1403
    %v1532 = vunpack.c.h.b16 %v1403
    %v1533 = vunpack.c.l.b16 %v1404
    %v1534 = vunpack.c.h.b16 %v1404
    %v1535 = vunpack.c.l.b16 %v1405
    %v1536 = vunpack.c.h.b16 %v1405
    %v1537 = vunpack.c.l.b16 %v1406
    %v1538 = vunpack.c.h.b16 %v1406
    %v1539 = vunpack.c.l.b16 %v1407
    %v1540 = vunpack.c.h.b16 %v1407
    %v1541 = vunpack.c.l.b16 %v1408
    %v1542 = vunpack.c.h.b16 %v1408
    %v1543 = vunpack.c.l.b16 %v1409
    %v1544 = vunpack.c.h.b16 %v1409
    %v1545 = vunpack.c.l.b16 %v1410
    %v1546 = vunpack.c.h.b16 %v1410
    %v1547 = vunpack.c.l.b16 %v1411
    %v1548 = vunpack.c.h.b16 %v1411
    %v1549 = vunpack.c.l.b16 %v1412
    %v1550 = vunpack.c.h.b16 %v1412
    %v1551 = vunpack.c.l.b16 %v1413
    %v1552 = vunpack.c.h.b16 %v1413
    %v1553 = vunpack.c.l.b16 %v1414
    %v1554 = vunpack.c.h.b16 %v1414
    %v1555 = vunpack.c.l.b16 %v1415
    %v1556 = vunpack.c.h.b16 %v1415
    %v1557 = vpack.c.b16 %v1495, %v1493
    %v1558 = vpack.c.b16 %v1496, %v1494
    %v1559 = vpack.c.b16 %v1499, %v1497
    %v1560 = vpack.c.b16 %v1500, %v1498
    %v1561 = vpack.c.b16 %v1503, %v1501
    %v1562 = vpack.c.b16 %v1504, %v1502
    %v1563 = vpack.c.b16 %v1507, %v1505
    %v1564 = vpack.c.b16 %v1508, %v1506
    %v1565 = vpack.c.b16 %v1511, %v1509
    %v1566 = vpack.c.b16 %v1512, %v1510
    %v1567 = vpack.c.b16 %v1515, %v1513
    %v1568 = vpack.c.b16 %v1516, %v1514
    %v1569 = vpack.c.b16 %v1519, %v1517
    %v1570 = vpack.c.b16 %v1520, %v1518
    %v1571 = vpack.c.b16 %v1523, %v1521
    %v1572 = vpack.c.b16 %v1524, %v1522
    %v1573 = vpack.c.b16 %v1527, %v1525
    %v1574 = vpack.c.b16 %v1528, %v1526
    %v1575 = vpack.c.b16 %v1531, %v1529
    %v1576 = vpack.c.b16 %v1532, %v1530
    %v1577 = vpack.c.b16 %v1535, %v1533
    %v1578 = vpack.c.b16 %v1536, %v1534
    %v1579 = vpack.c.b16 %v1539, %v1537
    %v1580 = vpack.c.b16 %v1540, %v1538
    %v1581 = vpack.c.b16 %v1543, %v1541
    %v1582 = vpack.c.b16 %v1544, %v1542
    %v1583 = vpack.c.b16 %v1547, %v1545
    %v1584 = vpack.c.b16 %v1548, %v1546
    %v1585 = vpack.c.b16 %v1551, %v1549
    %v1586 = vpack.c.b16 %v1552, %v1550
    %v1587 = vpack.c.b16 %v1555, %v1553
    %v1588 = vpack.c.b16 %v1556, %v1554
    %1621 = vmatpush.bf16.msra.mxu0 %v1571
    %1622 = vmatpush.bf16.msra.mxu0 %v1569
    %1623 = vmatpush.bf16.msra.mxu0 %v1567
    %1624 = vmatpush.bf16.msra.mxu0 %v1565
    %1625 = vmatpush.bf16.msra.mxu0 %v1563
    %1626 = vmatpush.bf16.msra.mxu0 %v1561
    %1627 = vmatpush.bf16.msra.mxu0 %v1559
    %1628 = vmatpush.bf16.msra.mxu0 %v1557
    %1629 = vmatmul.bf16.gmra.mxu0 %v1440
    %v1630 = vpop.f32.mrf.mxu0
    %v1631 = vadd.f32 0.0, %v1630
    %v1632 = vpop.f32.mrf.mxu0
    %v1633 = vadd.f32 0.0, %v1632
    %1634 = vmatmul.bf16.gmra.mxu0 %v1453
    %v1635 = vpop.f32.mrf.mxu0
    %v1636 = vadd.f32 0.0, %v1635
    %v1637 = vpop.f32.mrf.mxu0
    %1638 = vdwg.mxu0
    %1639 = vmatpush.bf16.msra.mxu0 %v1587
    %1640 = vmatpush.bf16.msra.mxu0 %v1585
    %1641 = vmatpush.bf16.msra.mxu0 %v1583
    %1642 = vmatpush.bf16.msra.mxu0 %v1581
    %1643 = vmatpush.bf16.msra.mxu0 %v1579
    %1644 = vmatpush.bf16.msra.mxu0 %v1577
    %1645 = vmatpush.bf16.msra.mxu0 %v1575
    %1646 = vmatpush.bf16.msra.mxu0 %v1573
    %1647 = vmatmul.bf16.gmra.mxu0 %v1452
    %v1648 = vpop.f32.mrf.mxu0
    %v1649 = vadd.f32 %v1631, %v1648
    %v1650 = vpop.f32.mrf.mxu0
    %v1651 = vadd.f32 %v1633, %v1650
    %1652 = vmatmul.bf16.gmra.mxu0 %v1455
    %v1653 = vpop.f32.mrf.mxu0
    %v1654 = vadd.f32 %v1636, %v1653
    %v1655 = vpop.f32.mrf.mxu0
    %1656 = vdwg.mxu0
    %1657 = vmatpush.bf16.msra.mxu0 %v1572
    %1658 = vmatpush.bf16.msra.mxu0 %v1570
    %1659 = vmatpush.bf16.msra.mxu0 %v1568
    %1660 = vmatpush.bf16.msra.mxu0 %v1566
    %1661 = vmatpush.bf16.msra.mxu0 %v1564
    %1662 = vmatpush.bf16.msra.mxu0 %v1562
    %1663 = vmatpush.bf16.msra.mxu0 %v1560
    %1664 = vmatpush.bf16.msra.mxu0 %v1558
    %1665 = vmatmul.bf16.gmra.mxu0 %v1440
    %v1666 = vpop.f32.mrf.mxu0
    %v1667 = vadd.f32 0.0, %v1666
    %v1668 = vpop.f32.mrf.mxu0
    %v1669 = vadd.f32 0.0, %v1668
    %1670 = vmatmul.bf16.gmra.mxu0 %v1453
    %v1671 = vpop.f32.mrf.mxu0
    %v1672 = vadd.f32 0.0, %v1671
    %v1673 = vpop.f32.mrf.mxu0
    %1674 = vdwg.mxu0
    %1675 = vmatpush.bf16.msra.mxu0 %v1588
    %1676 = vmatpush.bf16.msra.mxu0 %v1586
    %1677 = vmatpush.bf16.msra.mxu0 %v1584
    %1678 = vmatpush.bf16.msra.mxu0 %v1582
    %1679 = vmatpush.bf16.msra.mxu0 %v1580
    %1680 = vmatpush.bf16.msra.mxu0 %v1578
    %1681 = vmatpush.bf16.msra.mxu0 %v1576
    %1682 = vmatpush.bf16.msra.mxu0 %v1574
    %1683 = vmatmul.bf16.gmra.mxu0 %v1452
    %v1684 = vpop.f32.mrf.mxu0
    %v1685 = vadd.f32 %v1667, %v1684
    %v1686 = vpop.f32.mrf.mxu0
    %v1687 = vadd.f32 %v1669, %v1686
    %1688 = vmatmul.bf16.gmra.mxu0 %v1455
    %v1689 = vpop.f32.mrf.mxu0
    %v1690 = vadd.f32 %v1672, %v1689
    %v1691 = vpop.f32.mrf.mxu0
    %1692 = vdwg.mxu0
    %v1729 = vunpack.c.l.b16 %v1351
    %v1730 = vunpack.c.h.b16 %v1351
    %v1731 = vunpack.c.l.b16 %v1352
    %v1732 = vunpack.c.h.b16 %v1352
    %v1733 = vunpack.c.l.b16 %v1353
    %v1734 = vunpack.c.h.b16 %v1353
    %v1735 = vunpack.c.l.b16 %v1354
    %v1736 = vunpack.c.h.b16 %v1354
    %v1737 = vunpack.c.l.b16 %v1355
    %v1738 = vunpack.c.h.b16 %v1355
    %v1739 = vunpack.c.l.b16 %v1356
    %v1740 = vunpack.c.h.b16 %v1356
    %v1741 = vunpack.c.l.b16 %v1357
    %v1742 = vunpack.c.h.b16 %v1357
    %v1743 = vunpack.c.l.b16 %v1358
    %v1744 = vunpack.c.h.b16 %v1358
    %v1745 = vunpack.c.l.b16 %v1359
    %v1746 = vunpack.c.h.b16 %v1359
    %v1747 = vunpack.c.l.b16 %v1360
    %v1748 = vunpack.c.h.b16 %v1360
    %v1749 = vunpack.c.l.b16 %v1361
    %v1750 = vunpack.c.h.b16 %v1361
    %v1751 = vunpack.c.l.b16 %v1362
    %v1752 = vunpack.c.h.b16 %v1362
    %v1753 = vunpack.c.l.b16 %v1363
    %v1754 = vunpack.c.h.b16 %v1363
    %v1755 = vunpack.c.l.b16 %v1364
    %v1756 = vunpack.c.h.b16 %v1364
    %v1757 = vunpack.c.l.b16 %v1365
    %v1758 = vunpack.c.h.b16 %v1365
    %v1759 = vunpack.c.l.b16 %v1366
    %v1760 = vunpack.c.h.b16 %v1366
    %v1761 = vunpack.c.l.b16 %v1367
    %v1762 = vunpack.c.h.b16 %v1367
    %v1763 = vunpack.c.l.b16 %v1368
    %v1764 = vunpack.c.h.b16 %v1368
    %v1765 = vunpack.c.l.b16 %v1369
    %v1766 = vunpack.c.h.b16 %v1369
    %v1767 = vunpack.c.l.b16 %v1370
    %v1768 = vunpack.c.h.b16 %v1370
    %v1769 = vunpack.c.l.b16 %v1371
    %v1770 = vunpack.c.h.b16 %v1371
    %v1771 = vunpack.c.l.b16 %v1372
    %v1772 = vunpack.c.h.b16 %v1372
    %v1773 = vunpack.c.l.b16 %v1373
    %v1774 = vunpack.c.h.b16 %v1373
    %v1775 = vunpack.c.l.b16 %v1374
    %v1776 = vunpack.c.h.b16 %v1374
    %v1777 = vunpack.c.l.b16 %v1375
    %v1778 = vunpack.c.h.b16 %v1375
    %v1779 = vunpack.c.l.b16 %v1376
    %v1780 = vunpack.c.h.b16 %v1376
    %v1781 = vunpack.c.l.b16 %v1377
    %v1782 = vunpack.c.h.b16 %v1377
    %v1783 = vunpack.c.l.b16 %v1378
    %v1784 = vunpack.c.h.b16 %v1378
    %v1785 = vunpack.c.l.b16 %v1379
    %v1786 = vunpack.c.h.b16 %v1379
    %v1787 = vunpack.c.l.b16 %v1380
    %v1788 = vunpack.c.h.b16 %v1380
    %v1789 = vunpack.c.l.b16 %v1381
    %v1790 = vunpack.c.h.b16 %v1381
    %v1791 = vunpack.c.l.b16 %v1382
    %v1792 = vunpack.c.h.b16 %v1382
    %v1793 = vpack.c.b16 %v1731, %v1729
    %v1794 = vpack.c.b16 %v1732, %v1730
    %v1795 = vpack.c.b16 %v1735, %v1733
    %v1796 = vpack.c.b16 %v1736, %v1734
    %v1797 = vpack.c.b16 %v1739, %v1737
    %v1798 = vpack.c.b16 %v1740, %v1738
    %v1799 = vpack.c.b16 %v1743, %v1741
    %v1800 = vpack.c.b16 %v1744, %v1742
    %v1801 = vpack.c.b16 %v1747, %v1745
    %v1802 = vpack.c.b16 %v1748, %v1746
    %v1803 = vpack.c.b16 %v1751, %v1749
    %v1804 = vpack.c.b16 %v1752, %v1750
    %v1805 = vpack.c.b16 %v1755, %v1753
    %v1806 = vpack.c.b16 %v1756, %v1754
    %v1807 = vpack.c.b16 %v1759, %v1757
    %v1808 = vpack.c.b16 %v1760, %v1758
    %v1809 = vpack.c.b16 %v1763, %v1761
    %v1810 = vpack.c.b16 %v1764, %v1762
    %v1811 = vpack.c.b16 %v1767, %v1765
    %v1812 = vpack.c.b16 %v1768, %v1766
    %v1813 = vpack.c.b16 %v1771, %v1769
    %v1814 = vpack.c.b16 %v1772, %v1770
    %v1815 = vpack.c.b16 %v1775, %v1773
    %v1816 = vpack.c.b16 %v1776, %v1774
    %v1817 = vpack.c.b16 %v1779, %v1777
    %v1818 = vpack.c.b16 %v1780, %v1778
    %v1819 = vpack.c.b16 %v1783, %v1781
    %v1820 = vpack.c.b16 %v1784, %v1782
    %v1821 = vpack.c.b16 %v1787, %v1785
    %v1822 = vpack.c.b16 %v1788, %v1786
    %v1823 = vpack.c.b16 %v1791, %v1789
    %v1824 = vpack.c.b16 %v1792, %v1790
    %1857 = vmatpush.bf16.msra.mxu0 %v1807
    %1858 = vmatpush.bf16.msra.mxu0 %v1805
    %1859 = vmatpush.bf16.msra.mxu0 %v1803
    %1860 = vmatpush.bf16.msra.mxu0 %v1801
    %1861 = vmatpush.bf16.msra.mxu0 %v1799
    %1862 = vmatpush.bf16.msra.mxu0 %v1797
    %1863 = vmatpush.bf16.msra.mxu0 %v1795
    %1864 = vmatpush.bf16.msra.mxu0 %v1793
    %1865 = vmatmul.bf16.gmra.mxu0 %v1425
    %v1866 = vpop.f32.mrf.mxu0
    %v1867 = vadd.f32 %v1649, %v1866
    %v1868 = vpop.f32.mrf.mxu0
    %v1869 = vadd.f32 %v1651, %v1868
    %1870 = vmatmul.bf16.gmra.mxu0 %v1427
    %v1871 = vpop.f32.mrf.mxu0
    %v1872 = vadd.f32 %v1654, %v1871
    %v1873 = vpop.f32.mrf.mxu0
    %1874 = vdwg.mxu0
    %1875 = vmatpush.bf16.msra.mxu0 %v1823
    %1876 = vmatpush.bf16.msra.mxu0 %v1821
    %1877 = vmatpush.bf16.msra.mxu0 %v1819
    %1878 = vmatpush.bf16.msra.mxu0 %v1817
    %1879 = vmatpush.bf16.msra.mxu0 %v1815
    %1880 = vmatpush.bf16.msra.mxu0 %v1813
    %1881 = vmatpush.bf16.msra.mxu0 %v1811
    %1882 = vmatpush.bf16.msra.mxu0 %v1809
    %1883 = vmatmul.bf16.gmra.mxu0 %v1426
    %v1884 = vpop.f32.mrf.mxu0
    %v1885 = vadd.f32 %v1867, %v1884
    %v1886 = vpop.f32.mrf.mxu0
    %v1887 = vadd.f32 %v1869, %v1886
    %1888 = vmatmul.bf16.gmra.mxu0 %v1428
    %v1889 = vpop.f32.mrf.mxu0
    %v1890 = vadd.f32 %v1872, %v1889
    %v1891 = vpop.f32.mrf.mxu0
    %1892 = vdwg.mxu0
    %1893 = vmatpush.bf16.msra.mxu0 %v1808
    %1894 = vmatpush.bf16.msra.mxu0 %v1806
    %1895 = vmatpush.bf16.msra.mxu0 %v1804
    %1896 = vmatpush.bf16.msra.mxu0 %v1802
    %1897 = vmatpush.bf16.msra.mxu0 %v1800
    %1898 = vmatpush.bf16.msra.mxu0 %v1798
    %1899 = vmatpush.bf16.msra.mxu0 %v1796
    %1900 = vmatpush.bf16.msra.mxu0 %v1794
    %1901 = vmatmul.bf16.gmra.mxu0 %v1425
    %v1902 = vpop.f32.mrf.mxu0
    %v1903 = vadd.f32 %v1685, %v1902
    %v1904 = vpop.f32.mrf.mxu0
    %v1905 = vadd.f32 %v1687, %v1904
    %1906 = vmatmul.bf16.gmra.mxu0 %v1427
    %v1907 = vpop.f32.mrf.mxu0
    %v1908 = vadd.f32 %v1690, %v1907
    %v1909 = vpop.f32.mrf.mxu0
    %1910 = vdwg.mxu0
    %1911 = vmatpush.bf16.msra.mxu0 %v1824
    %1912 = vmatpush.bf16.msra.mxu0 %v1822
    %1913 = vmatpush.bf16.msra.mxu0 %v1820
    %1914 = vmatpush.bf16.msra.mxu0 %v1818
    %1915 = vmatpush.bf16.msra.mxu0 %v1816
    %1916 = vmatpush.bf16.msra.mxu0 %v1814
    %1917 = vmatpush.bf16.msra.mxu0 %v1812
    %1918 = vmatpush.bf16.msra.mxu0 %v1810
    %1919 = vmatmul.bf16.gmra.mxu0 %v1426
    %v1920 = vpop.f32.mrf.mxu0
    %v1921 = vadd.f32 %v1903, %v1920
    %v1922 = vpop.f32.mrf.mxu0
    %v1923 = vadd.f32 %v1905, %v1922
    %1924 = vmatmul.bf16.gmra.mxu0 %v1428
    %v1925 = vpop.f32.mrf.mxu0
    %v1926 = vadd.f32 %v1908, %v1925
    %v1927 = vpop.f32.mrf.mxu0
    %1928 = vdwg.mxu0
    %v1929 = vld [vmem:[#allocation2] sm:$0xee]
    %v1930 = vld [vmem:[#allocation2 + $0x10] sm:$0x33]
    %s1931 = scalar_lea.vmem %s2, 512
    %v1932 = vld [vmem:[%s1931] sm:$0xff]
    %v1933 = vld [vmem:[%s1931 + $0x8] sm:$0xff]
    %v1934 = vld [vmem:[%s1931 + $0x10] sm:$0xff]
    %v1935 = vld [vmem:[%s1931 + $0x18] sm:$0xff]
    %v1936 = vld [vmem:[%s1931 + $0x20] sm:$0xff]
    %v1937 = vld [vmem:[%s1931 + $0x28] sm:$0xff]
    %v1938 = vld [vmem:[%s1931 + $0x30] sm:$0xff]
    %v1939 = vld [vmem:[%s1931 + $0x38] sm:$0xff]
    %v1940 = vld [vmem:[%s1931 + $0x40] sm:$0xff]
    %v1941 = vld [vmem:[%s1931 + $0x48] sm:$0xff]
    %v1942 = vld [vmem:[%s1931 + $0x50] sm:$0xff]
    %v1943 = vld [vmem:[%s1931 + $0x58] sm:$0xff]
    %v1944 = vld [vmem:[%s1931 + $0x60] sm:$0xff]
    %v1945 = vld [vmem:[%s1931 + $0x68] sm:$0xff]
    %v1946 = vld [vmem:[%s1931 + $0x70] sm:$0xff]
    %v1947 = vld [vmem:[%s1931 + $0x78] sm:$0xff]
    %v1948 = vld [vmem:[%s1931 + $0x80] sm:$0xff]
    %v1949 = vld [vmem:[%s1931 + $0x88] sm:$0xff]
    %v1950 = vld [vmem:[%s1931 + $0x90] sm:$0xff]
    %v1951 = vld [vmem:[%s1931 + $0x98] sm:$0xff]
    %v1952 = vld [vmem:[%s1931 + $0xa0] sm:$0xff]
    %v1953 = vld [vmem:[%s1931 + $0xa8] sm:$0xff]
    %v1954 = vld [vmem:[%s1931 + $0xb0] sm:$0xff]
    %v1955 = vld [vmem:[%s1931 + $0xb8] sm:$0xff]
    %v1956 = vld [vmem:[%s1931 + $0xc0] sm:$0xff]
    %v1957 = vld [vmem:[%s1931 + $0xc8] sm:$0xff]
    %v1958 = vld [vmem:[%s1931 + $0xd0] sm:$0xff]
    %v1959 = vld [vmem:[%s1931 + $0xd8] sm:$0xff]
    %v1960 = vld [vmem:[%s1931 + $0xe0] sm:$0xff]
    %v1961 = vld [vmem:[%s1931 + $0xe8] sm:$0xff]
    %v1962 = vld [vmem:[%s1931 + $0xf0] sm:$0xff]
    %v1963 = vld [vmem:[%s1931 + $0xf8] sm:$0xff]
    %v1966 = vunpack.c.l.b16 %v1929
    %v1967 = vunpack.c.h.b16 %v1929
    %v1968 = vunpack.c.l.b16 %v1930
    %v1969 = vunpack.c.h.b16 %v1930
    %v1970 = vpack.c.b16 %v1421, %v1966
    %v1971 = vpack.c.b16 %v1422, %v1967
    %v1972 = vpack.c.b16 %v1968, %v1968
    %v1973 = vpack.c.b16 %v1969, %v1969
    %v1974 = vrot.slane %v1970, 1
    %v1975 = vrot.slane %v1972, 1
    %v1976 = vsel %vm401, %v1974, %v1975
    %v1977 = vrot.slane %v1971, 1
    %v1978 = vrot.slane %v1973, 1
    %v1979 = vsel %vm401, %v1977, %v1978
    %v2016 = vunpack.c.l.b16 %v1932
    %v2017 = vunpack.c.h.b16 %v1932
    %v2018 = vunpack.c.l.b16 %v1933
    %v2019 = vunpack.c.h.b16 %v1933
    %v2020 = vunpack.c.l.b16 %v1934
    %v2021 = vunpack.c.h.b16 %v1934
    %v2022 = vunpack.c.l.b16 %v1935
    %v2023 = vunpack.c.h.b16 %v1935
    %v2024 = vunpack.c.l.b16 %v1936
    %v2025 = vunpack.c.h.b16 %v1936
    %v2026 = vunpack.c.l.b16 %v1937
    %v2027 = vunpack.c.h.b16 %v1937
    %v2028 = vunpack.c.l.b16 %v1938
    %v2029 = vunpack.c.h.b16 %v1938
    %v2030 = vunpack.c.l.b16 %v1939
    %v2031 = vunpack.c.h.b16 %v1939
    %v2032 = vunpack.c.l.b16 %v1940
    %v2033 = vunpack.c.h.b16 %v1940
    %v2034 = vunpack.c.l.b16 %v1941
    %v2035 = vunpack.c.h.b16 %v1941
    %v2036 = vunpack.c.l.b16 %v1942
    %v2037 = vunpack.c.h.b16 %v1942
    %v2038 = vunpack.c.l.b16 %v1943
    %v2039 = vunpack.c.h.b16 %v1943
    %v2040 = vunpack.c.l.b16 %v1944
    %v2041 = vunpack.c.h.b16 %v1944
    %v2042 = vunpack.c.l.b16 %v1945
    %v2043 = vunpack.c.h.b16 %v1945
    %v2044 = vunpack.c.l.b16 %v1946
    %v2045 = vunpack.c.h.b16 %v1946
    %v2046 = vunpack.c.l.b16 %v1947
    %v2047 = vunpack.c.h.b16 %v1947
    %v2048 = vunpack.c.l.b16 %v1948
    %v2049 = vunpack.c.h.b16 %v1948
    %v2050 = vunpack.c.l.b16 %v1949
    %v2051 = vunpack.c.h.b16 %v1949
    %v2052 = vunpack.c.l.b16 %v1950
    %v2053 = vunpack.c.h.b16 %v1950
    %v2054 = vunpack.c.l.b16 %v1951
    %v2055 = vunpack.c.h.b16 %v1951
    %v2056 = vunpack.c.l.b16 %v1952
    %v2057 = vunpack.c.h.b16 %v1952
    %v2058 = vunpack.c.l.b16 %v1953
    %v2059 = vunpack.c.h.b16 %v1953
    %v2060 = vunpack.c.l.b16 %v1954
    %v2061 = vunpack.c.h.b16 %v1954
    %v2062 = vunpack.c.l.b16 %v1955
    %v2063 = vunpack.c.h.b16 %v1955
    %v2064 = vunpack.c.l.b16 %v1956
    %v2065 = vunpack.c.h.b16 %v1956
    %v2066 = vunpack.c.l.b16 %v1957
    %v2067 = vunpack.c.h.b16 %v1957
    %v2068 = vunpack.c.l.b16 %v1958
    %v2069 = vunpack.c.h.b16 %v1958
    %v2070 = vunpack.c.l.b16 %v1959
    %v2071 = vunpack.c.h.b16 %v1959
    %v2072 = vunpack.c.l.b16 %v1960
    %v2073 = vunpack.c.h.b16 %v1960
    %v2074 = vunpack.c.l.b16 %v1961
    %v2075 = vunpack.c.h.b16 %v1961
    %v2076 = vunpack.c.l.b16 %v1962
    %v2077 = vunpack.c.h.b16 %v1962
    %v2078 = vunpack.c.l.b16 %v1963
    %v2079 = vunpack.c.h.b16 %v1963
    %v2080 = vpack.c.b16 %v2018, %v2016
    %v2081 = vpack.c.b16 %v2019, %v2017
    %v2082 = vpack.c.b16 %v2022, %v2020
    %v2083 = vpack.c.b16 %v2023, %v2021
    %v2084 = vpack.c.b16 %v2026, %v2024
    %v2085 = vpack.c.b16 %v2027, %v2025
    %v2086 = vpack.c.b16 %v2030, %v2028
    %v2087 = vpack.c.b16 %v2031, %v2029
    %v2088 = vpack.c.b16 %v2034, %v2032
    %v2089 = vpack.c.b16 %v2035, %v2033
    %v2090 = vpack.c.b16 %v2038, %v2036
    %v2091 = vpack.c.b16 %v2039, %v2037
    %v2092 = vpack.c.b16 %v2042, %v2040
    %v2093 = vpack.c.b16 %v2043, %v2041
    %v2094 = vpack.c.b16 %v2046, %v2044
    %v2095 = vpack.c.b16 %v2047, %v2045
    %v2096 = vpack.c.b16 %v2050, %v2048
    %v2097 = vpack.c.b16 %v2051, %v2049
    %v2098 = vpack.c.b16 %v2054, %v2052
    %v2099 = vpack.c.b16 %v2055, %v2053
    %v2100 = vpack.c.b16 %v2058, %v2056
    %v2101 = vpack.c.b16 %v2059, %v2057
    %v2102 = vpack.c.b16 %v2062, %v2060
    %v2103 = vpack.c.b16 %v2063, %v2061
    %v2104 = vpack.c.b16 %v2066, %v2064
    %v2105 = vpack.c.b16 %v2067, %v2065
    %v2106 = vpack.c.b16 %v2070, %v2068
    %v2107 = vpack.c.b16 %v2071, %v2069
    %v2108 = vpack.c.b16 %v2074, %v2072
    %v2109 = vpack.c.b16 %v2075, %v2073
    %v2110 = vpack.c.b16 %v2078, %v2076
    %v2111 = vpack.c.b16 %v2079, %v2077
    %2144 = vmatpush.bf16.msra.mxu0 %v2094
    %2145 = vmatpush.bf16.msra.mxu0 %v2092
    %2146 = vmatpush.bf16.msra.mxu0 %v2090
    %2147 = vmatpush.bf16.msra.mxu0 %v2088
    %2148 = vmatpush.bf16.msra.mxu0 %v2086
    %2149 = vmatpush.bf16.msra.mxu0 %v2084
    %2150 = vmatpush.bf16.msra.mxu0 %v2082
    %2151 = vmatpush.bf16.msra.mxu0 %v2080
    %2152 = vmatmul.bf16.gmra.mxu0 %v1976
    %v2153 = vpop.f32.mrf.mxu0
    %v2154 = vadd.f32 0.0, %v2153
    %v2155 = vpop.f32.mrf.mxu0
    %v2156 = vadd.f32 0.0, %v2155
    %2157 = vmatmul.bf16.gmra.mxu0 %v1975
    %v2158 = vpop.f32.mrf.mxu0
    %v2159 = vadd.f32 0.0, %v2158
    %v2160 = vpop.f32.mrf.mxu0
    %2161 = vdwg.mxu0
    %2162 = vmatpush.bf16.msra.mxu0 %v2110
    %2163 = vmatpush.bf16.msra.mxu0 %v2108
    %2164 = vmatpush.bf16.msra.mxu0 %v2106
    %2165 = vmatpush.bf16.msra.mxu0 %v2104
    %2166 = vmatpush.bf16.msra.mxu0 %v2102
    %2167 = vmatpush.bf16.msra.mxu0 %v2100
    %2168 = vmatpush.bf16.msra.mxu0 %v2098
    %2169 = vmatpush.bf16.msra.mxu0 %v2096
    %2170 = vmatmul.bf16.gmra.mxu0 %v1979
    %v2171 = vpop.f32.mrf.mxu0
    %v2172 = vadd.f32 %v2154, %v2171
    %v2173 = vpop.f32.mrf.mxu0
    %v2174 = vadd.f32 %v2156, %v2173
    %2175 = vmatmul.bf16.gmra.mxu0 %v1978
    %v2176 = vpop.f32.mrf.mxu0
    %v2177 = vadd.f32 %v2159, %v2176
    %v2178 = vpop.f32.mrf.mxu0
    %2179 = vdwg.mxu0
    %2180 = vmatpush.bf16.msra.mxu0 %v2095
    %2181 = vmatpush.bf16.msra.mxu0 %v2093
    %2182 = vmatpush.bf16.msra.mxu0 %v2091
    %2183 = vmatpush.bf16.msra.mxu0 %v2089
    %2184 = vmatpush.bf16.msra.mxu0 %v2087
    %2185 = vmatpush.bf16.msra.mxu0 %v2085
    %2186 = vmatpush.bf16.msra.mxu0 %v2083
    %2187 = vmatpush.bf16.msra.mxu0 %v2081
    %2188 = vmatmul.bf16.gmra.mxu0 %v1976
    %v2189 = vpop.f32.mrf.mxu0
    %v2190 = vadd.f32 0.0, %v2189
    %v2191 = vpop.f32.mrf.mxu0
    %v2192 = vadd.f32 0.0, %v2191
    %2193 = vmatmul.bf16.gmra.mxu0 %v1975
    %v2194 = vpop.f32.mrf.mxu0
    %v2195 = vadd.f32 0.0, %v2194
    %v2196 = vpop.f32.mrf.mxu0
    %2197 = vdwg.mxu0
    %2198 = vmatpush.bf16.msra.mxu0 %v2111
    %2199 = vmatpush.bf16.msra.mxu0 %v2109
    %2200 = vmatpush.bf16.msra.mxu0 %v2107
    %2201 = vmatpush.bf16.msra.mxu0 %v2105
    %2202 = vmatpush.bf16.msra.mxu0 %v2103
    %2203 = vmatpush.bf16.msra.mxu0 %v2101
    %2204 = vmatpush.bf16.msra.mxu0 %v2099
    %2205 = vmatpush.bf16.msra.mxu0 %v2097
    %2206 = vmatmul.bf16.gmra.mxu0 %v1979
    %v2207 = vpop.f32.mrf.mxu0
    %v2208 = vadd.f32 %v2190, %v2207
    %v2209 = vpop.f32.mrf.mxu0
    %v2210 = vadd.f32 %v2192, %v2209
    %2211 = vmatmul.bf16.gmra.mxu0 %v1978
    %v2212 = vpop.f32.mrf.mxu0
    %v2213 = vadd.f32 %v2195, %v2212
    %v2214 = vpop.f32.mrf.mxu0
    %2215 = vdwg.mxu0
    %v2216 = vadd.f32 %v1885, %v2172
    %v2217 = vadd.f32 %v1921, %v2208
    %v2218 = vadd.f32 %v1887, %v2174
    %v2219 = vadd.f32 %v1923, %v2210
    %v2220 = vadd.f32 %v1890, %v2177
    %v2221 = vadd.f32 %v1926, %v2213
    %s2222 = scalar_lea.vmem %s2, 768
    %v2223 = vld [vmem:[%s2222] sm:$0xff]
    %v2224 = vld [vmem:[%s2222 + $0x8] sm:$0xff]
    %v2225 = vld [vmem:[%s2222 + $0x10] sm:$0xff]
    %v2226 = vld [vmem:[%s2222 + $0x18] sm:$0xff]
    %v2227 = vld [vmem:[%s2222 + $0x20] sm:$0xff]
    %v2228 = vld [vmem:[%s2222 + $0x28] sm:$0xff]
    %v2229 = vld [vmem:[%s2222 + $0x30] sm:$0xff]
    %v2230 = vld [vmem:[%s2222 + $0x38] sm:$0xff]
    %v2231 = vld [vmem:[%s2222 + $0x40] sm:$0xff]
    %v2232 = vld [vmem:[%s2222 + $0x48] sm:$0xff]
    %v2233 = vld [vmem:[%s2222 + $0x50] sm:$0xff]
    %v2234 = vld [vmem:[%s2222 + $0x58] sm:$0xff]
    %v2235 = vld [vmem:[%s2222 + $0x60] sm:$0xff]
    %v2236 = vld [vmem:[%s2222 + $0x68] sm:$0xff]
    %v2237 = vld [vmem:[%s2222 + $0x70] sm:$0xff]
    %v2238 = vld [vmem:[%s2222 + $0x78] sm:$0xff]
    %v2239 = vld [vmem:[%s2222 + $0x80] sm:$0xff]
    %v2240 = vld [vmem:[%s2222 + $0x88] sm:$0xff]
    %v2241 = vld [vmem:[%s2222 + $0x90] sm:$0xff]
    %v2242 = vld [vmem:[%s2222 + $0x98] sm:$0xff]
    %v2243 = vld [vmem:[%s2222 + $0xa0] sm:$0xff]
    %v2244 = vld [vmem:[%s2222 + $0xa8] sm:$0xff]
    %v2245 = vld [vmem:[%s2222 + $0xb0] sm:$0xff]
    %v2246 = vld [vmem:[%s2222 + $0xb8] sm:$0xff]
    %v2247 = vld [vmem:[%s2222 + $0xc0] sm:$0xff]
    %v2248 = vld [vmem:[%s2222 + $0xc8] sm:$0xff]
    %v2249 = vld [vmem:[%s2222 + $0xd0] sm:$0xff]
    %v2250 = vld [vmem:[%s2222 + $0xd8] sm:$0xff]
    %v2251 = vld [vmem:[%s2222 + $0xe0] sm:$0xff]
    %v2252 = vld [vmem:[%s2222 + $0xe8] sm:$0xff]
    %v2253 = vld [vmem:[%s2222 + $0xf0] sm:$0xff]
    %v2254 = vld [vmem:[%s2222 + $0xf8] sm:$0xff]
    %v2256 = vshrl.u32 %v1970, 16
    %v2258 = vrot.slane %v2256, 1
    %v2259 = vshll.u32 %v1970, 16
    %v2261 = vrot.slane %v2259, 2
    %v2262 = vor.u32 %v2258, %v2261
    %v2264 = vshrl.u32 %v1972, 16
    %v2266 = vrot.slane %v2264, 1
    %v2267 = vshll.u32 %v1972, 16
    %v2269 = vrot.slane %v2267, 2
    %v2270 = vor.u32 %v2266, %v2269
    %v2271 = vsel %vm550, %v2262, %v2270
    %v2273 = vshrl.u32 %v1971, 16
    %v2275 = vrot.slane %v2273, 1
    %v2276 = vshll.u32 %v1971, 16
    %v2278 = vrot.slane %v2276, 2
    %v2279 = vor.u32 %v2275, %v2278
    %v2281 = vshrl.u32 %v1973, 16
    %v2283 = vrot.slane %v2281, 1
    %v2284 = vshll.u32 %v1973, 16
    %v2286 = vrot.slane %v2284, 2
    %v2287 = vor.u32 %v2283, %v2286
    %v2288 = vsel %vm550, %v2279, %v2287
    %v2325 = vunpack.c.l.b16 %v2223
    %v2326 = vunpack.c.h.b16 %v2223
    %v2327 = vunpack.c.l.b16 %v2224
    %v2328 = vunpack.c.h.b16 %v2224
    %v2329 = vunpack.c.l.b16 %v2225
    %v2330 = vunpack.c.h.b16 %v2225
    %v2331 = vunpack.c.l.b16 %v2226
    %v2332 = vunpack.c.h.b16 %v2226
    %v2333 = vunpack.c.l.b16 %v2227
    %v2334 = vunpack.c.h.b16 %v2227
    %v2335 = vunpack.c.l.b16 %v2228
    %v2336 = vunpack.c.h.b16 %v2228
    %v2337 = vunpack.c.l.b16 %v2229
    %v2338 = vunpack.c.h.b16 %v2229
    %v2339 = vunpack.c.l.b16 %v2230
    %v2340 = vunpack.c.h.b16 %v2230
    %v2341 = vunpack.c.l.b16 %v2231
    %v2342 = vunpack.c.h.b16 %v2231
    %v2343 = vunpack.c.l.b16 %v2232
    %v2344 = vunpack.c.h.b16 %v2232
    %v2345 = vunpack.c.l.b16 %v2233
    %v2346 = vunpack.c.h.b16 %v2233
    %v2347 = vunpack.c.l.b16 %v2234
    %v2348 = vunpack.c.h.b16 %v2234
    %v2349 = vunpack.c.l.b16 %v2235
    %v2350 = vunpack.c.h.b16 %v2235
    %v2351 = vunpack.c.l.b16 %v2236
    %v2352 = vunpack.c.h.b16 %v2236
    %v2353 = vunpack.c.l.b16 %v2237
    %v2354 = vunpack.c.h.b16 %v2237
    %v2355 = vunpack.c.l.b16 %v2238
    %v2356 = vunpack.c.h.b16 %v2238
    %v2357 = vunpack.c.l.b16 %v2239
    %v2358 = vunpack.c.h.b16 %v2239
    %v2359 = vunpack.c.l.b16 %v2240
    %v2360 = vunpack.c.h.b16 %v2240
    %v2361 = vunpack.c.l.b16 %v2241
    %v2362 = vunpack.c.h.b16 %v2241
    %v2363 = vunpack.c.l.b16 %v2242
    %v2364 = vunpack.c.h.b16 %v2242
    %v2365 = vunpack.c.l.b16 %v2243
    %v2366 = vunpack.c.h.b16 %v2243
    %v2367 = vunpack.c.l.b16 %v2244
    %v2368 = vunpack.c.h.b16 %v2244
    %v2369 = vunpack.c.l.b16 %v2245
    %v2370 = vunpack.c.h.b16 %v2245
    %v2371 = vunpack.c.l.b16 %v2246
    %v2372 = vunpack.c.h.b16 %v2246
    %v2373 = vunpack.c.l.b16 %v2247
    %v2374 = vunpack.c.h.b16 %v2247
    %v2375 = vunpack.c.l.b16 %v2248
    %v2376 = vunpack.c.h.b16 %v2248
    %v2377 = vunpack.c.l.b16 %v2249
    %v2378 = vunpack.c.h.b16 %v2249
    %v2379 = vunpack.c.l.b16 %v2250
    %v2380 = vunpack.c.h.b16 %v2250
    %v2381 = vunpack.c.l.b16 %v2251
    %v2382 = vunpack.c.h.b16 %v2251
    %v2383 = vunpack.c.l.b16 %v2252
    %v2384 = vunpack.c.h.b16 %v2252
    %v2385 = vunpack.c.l.b16 %v2253
    %v2386 = vunpack.c.h.b16 %v2253
    %v2387 = vunpack.c.l.b16 %v2254
    %v2388 = vunpack.c.h.b16 %v2254
    %v2389 = vpack.c.b16 %v2327, %v2325
    %v2390 = vpack.c.b16 %v2328, %v2326
    %v2391 = vpack.c.b16 %v2331, %v2329
    %v2392 = vpack.c.b16 %v2332, %v2330
    %v2393 = vpack.c.b16 %v2335, %v2333
    %v2394 = vpack.c.b16 %v2336, %v2334
    %v2395 = vpack.c.b16 %v2339, %v2337
    %v2396 = vpack.c.b16 %v2340, %v2338
    %v2397 = vpack.c.b16 %v2343, %v2341
    %v2398 = vpack.c.b16 %v2344, %v2342
    %v2399 = vpack.c.b16 %v2347, %v2345
    %v2400 = vpack.c.b16 %v2348, %v2346
    %v2401 = vpack.c.b16 %v2351, %v2349
    %v2402 = vpack.c.b16 %v2352, %v2350
    %v2403 = vpack.c.b16 %v2355, %v2353
    %v2404 = vpack.c.b16 %v2356, %v2354
    %v2405 = vpack.c.b16 %v2359, %v2357
    %v2406 = vpack.c.b16 %v2360, %v2358
    %v2407 = vpack.c.b16 %v2363, %v2361
    %v2408 = vpack.c.b16 %v2364, %v2362
    %v2409 = vpack.c.b16 %v2367, %v2365
    %v2410 = vpack.c.b16 %v2368, %v2366
    %v2411 = vpack.c.b16 %v2371, %v2369
    %v2412 = vpack.c.b16 %v2372, %v2370
    %v2413 = vpack.c.b16 %v2375, %v2373
    %v2414 = vpack.c.b16 %v2376, %v2374
    %v2415 = vpack.c.b16 %v2379, %v2377
    %v2416 = vpack.c.b16 %v2380, %v2378
    %v2417 = vpack.c.b16 %v2383, %v2381
    %v2418 = vpack.c.b16 %v2384, %v2382
    %v2419 = vpack.c.b16 %v2387, %v2385
    %v2420 = vpack.c.b16 %v2388, %v2386
    %2453 = vmatpush.bf16.msra.mxu0 %v2403
    %2454 = vmatpush.bf16.msra.mxu0 %v2401
    %2455 = vmatpush.bf16.msra.mxu0 %v2399
    %2456 = vmatpush.bf16.msra.mxu0 %v2397
    %2457 = vmatpush.bf16.msra.mxu0 %v2395
    %2458 = vmatpush.bf16.msra.mxu0 %v2393
    %2459 = vmatpush.bf16.msra.mxu0 %v2391
    %2460 = vmatpush.bf16.msra.mxu0 %v2389
    %2461 = vmatmul.bf16.gmra.mxu0 %v2271
    %v2462 = vpop.f32.mrf.mxu0
    %v2463 = vadd.f32 0.0, %v2462
    %v2464 = vpop.f32.mrf.mxu0
    %v2465 = vadd.f32 0.0, %v2464
    %2466 = vmatmul.bf16.gmra.mxu0 %v2266
    %v2467 = vpop.f32.mrf.mxu0
    %v2468 = vadd.f32 0.0, %v2467
    %v2469 = vpop.f32.mrf.mxu0
    %2470 = vdwg.mxu0
    %2471 = vmatpush.bf16.msra.mxu0 %v2419
    %2472 = vmatpush.bf16.msra.mxu0 %v2417
    %2473 = vmatpush.bf16.msra.mxu0 %v2415
    %2474 = vmatpush.bf16.msra.mxu0 %v2413
    %2475 = vmatpush.bf16.msra.mxu0 %v2411
    %2476 = vmatpush.bf16.msra.mxu0 %v2409
    %2477 = vmatpush.bf16.msra.mxu0 %v2407
    %2478 = vmatpush.bf16.msra.mxu0 %v2405
    %2479 = vmatmul.bf16.gmra.mxu0 %v2288
    %v2480 = vpop.f32.mrf.mxu0
    %v2481 = vadd.f32 %v2463, %v2480
    %v2482 = vpop.f32.mrf.mxu0
    %v2483 = vadd.f32 %v2465, %v2482
    %2484 = vmatmul.bf16.gmra.mxu0 %v2283
    %v2485 = vpop.f32.mrf.mxu0
    %v2486 = vadd.f32 %v2468, %v2485
    %v2487 = vpop.f32.mrf.mxu0
    %2488 = vdwg.mxu0
    %2489 = vmatpush.bf16.msra.mxu0 %v2404
    %2490 = vmatpush.bf16.msra.mxu0 %v2402
    %2491 = vmatpush.bf16.msra.mxu0 %v2400
    %2492 = vmatpush.bf16.msra.mxu0 %v2398
    %2493 = vmatpush.bf16.msra.mxu0 %v2396
    %2494 = vmatpush.bf16.msra.mxu0 %v2394
    %2495 = vmatpush.bf16.msra.mxu0 %v2392
    %2496 = vmatpush.bf16.msra.mxu0 %v2390
    %2497 = vmatmul.bf16.gmra.mxu0 %v2271
    %v2498 = vpop.f32.mrf.mxu0
    %v2499 = vadd.f32 0.0, %v2498
    %v2500 = vpop.f32.mrf.mxu0
    %v2501 = vadd.f32 0.0, %v2500
    %2502 = vmatmul.bf16.gmra.mxu0 %v2266
    %v2503 = vpop.f32.mrf.mxu0
    %v2504 = vadd.f32 0.0, %v2503
    %v2505 = vpop.f32.mrf.mxu0
    %2506 = vdwg.mxu0
    %2507 = vmatpush.bf16.msra.mxu0 %v2420
    %2508 = vmatpush.bf16.msra.mxu0 %v2418
    %2509 = vmatpush.bf16.msra.mxu0 %v2416
    %2510 = vmatpush.bf16.msra.mxu0 %v2414
    %2511 = vmatpush.bf16.msra.mxu0 %v2412
    %2512 = vmatpush.bf16.msra.mxu0 %v2410
    %2513 = vmatpush.bf16.msra.mxu0 %v2408
    %2514 = vmatpush.bf16.msra.mxu0 %v2406
    %2515 = vmatmul.bf16.gmra.mxu0 %v2288
    %v2516 = vpop.f32.mrf.mxu0
    %v2517 = vadd.f32 %v2499, %v2516
    %v2518 = vpop.f32.mrf.mxu0
    %v2519 = vadd.f32 %v2501, %v2518
    %2520 = vmatmul.bf16.gmra.mxu0 %v2283
    %v2521 = vpop.f32.mrf.mxu0
    %v2522 = vadd.f32 %v2504, %v2521
    %v2523 = vpop.f32.mrf.mxu0
    %2524 = vdwg.mxu0
    %v2525 = vadd.f32 %v2216, %v2481
    %v2526 = vadd.f32 %v2217, %v2517
    %v2527 = vadd.f32 %v2218, %v2483
    %v2528 = vadd.f32 %v2219, %v2519
    %v2529 = vadd.f32 %v2220, %v2486
    %v2530 = vadd.f32 %v2221, %v2522
    %v2531 = vld [vmem:[%s1344] sm:$0xff]
    %v2532 = vld [vmem:[%s1344 + $0x8] sm:$0xff]
    %v2533 = vld [vmem:[%s1344 + $0x10] sm:$0x11]
    %v2537 = vunpack.c.l.b16 %v2531
    %v2538 = vunpack.c.h.b16 %v2531
    %v2539 = vunpack.c.l.b16 %v2532
    %v2540 = vunpack.c.h.b16 %v2532
    %v2541 = vunpack.c.l.b16 %v2533
    %v2542 = vunpack.c.h.b16 %v2533
    %v2543 = vpack.c.b16 %v2539, %v2537
    %v2544 = vpack.c.b16 %v2540, %v2538
    %v2545 = vpack.c.b16 %v2541, %v2541
    %v2546 = vpack.c.b16 %v2542, %v2542
    %v2548 = vshrl.u32 %v2543, 16
    %v2550 = vshll.u32 %v2543, 16
    %v2552 = vrot.slane %v2550, 1
    %v2553 = vor.u32 %v2548, %v2552
    %v2555 = vshll.u32 %v2545, 16
    %v2557 = vrot.slane %v2555, 1
    %v2558 = vsel %vm125, %v2553, %v2557
    %v2560 = vshrl.u32 %v2544, 16
    %v2562 = vshll.u32 %v2544, 16
    %v2564 = vrot.slane %v2562, 1
    %v2565 = vor.u32 %v2560, %v2564
    %v2567 = vshll.u32 %v2546, 16
    %v2569 = vrot.slane %v2567, 1
    %v2570 = vsel %vm125, %v2565, %v2569
    %v2571 = vshrl.u32 %v2545, 16
    %v2573 = vshrl.u32 %v2546, 16
    %2579 = vmatpush.bf16.msra.mxu0 %v1571
    %2580 = vmatpush.bf16.msra.mxu0 %v1569
    %2581 = vmatpush.bf16.msra.mxu0 %v1567
    %2582 = vmatpush.bf16.msra.mxu0 %v1565
    %2583 = vmatpush.bf16.msra.mxu0 %v1563
    %2584 = vmatpush.bf16.msra.mxu0 %v1561
    %2585 = vmatpush.bf16.msra.mxu0 %v1559
    %2586 = vmatpush.bf16.msra.mxu0 %v1557
    %2587 = vmatmul.bf16.gmra.mxu0 %v2558
    %v2588 = vpop.f32.mrf.mxu0
    %v2589 = vadd.f32 0.0, %v2588
    %v2590 = vpop.f32.mrf.mxu0
    %v2591 = vadd.f32 0.0, %v2590
    %2592 = vmatmul.bf16.gmra.mxu0 %v2571
    %v2593 = vpop.f32.mrf.mxu0
    %v2594 = vadd.f32 0.0, %v2593
    %v2595 = vpop.f32.mrf.mxu0
    %2596 = vdwg.mxu0
    %2597 = vmatpush.bf16.msra.mxu0 %v1587
    %2598 = vmatpush.bf16.msra.mxu0 %v1585
    %2599 = vmatpush.bf16.msra.mxu0 %v1583
    %2600 = vmatpush.bf16.msra.mxu0 %v1581
    %2601 = vmatpush.bf16.msra.mxu0 %v1579
    %2602 = vmatpush.bf16.msra.mxu0 %v1577
    %2603 = vmatpush.bf16.msra.mxu0 %v1575
    %2604 = vmatpush.bf16.msra.mxu0 %v1573
    %2605 = vmatmul.bf16.gmra.mxu0 %v2570
    %v2606 = vpop.f32.mrf.mxu0
    %v2607 = vadd.f32 %v2589, %v2606
    %v2608 = vpop.f32.mrf.mxu0
    %v2609 = vadd.f32 %v2591, %v2608
    %2610 = vmatmul.bf16.gmra.mxu0 %v2573
    %v2611 = vpop.f32.mrf.mxu0
    %v2612 = vadd.f32 %v2594, %v2611
    %v2613 = vpop.f32.mrf.mxu0
    %2614 = vdwg.mxu0
    %2615 = vmatpush.bf16.msra.mxu0 %v1572
    %2616 = vmatpush.bf16.msra.mxu0 %v1570
    %2617 = vmatpush.bf16.msra.mxu0 %v1568
    %2618 = vmatpush.bf16.msra.mxu0 %v1566
    %2619 = vmatpush.bf16.msra.mxu0 %v1564
    %2620 = vmatpush.bf16.msra.mxu0 %v1562
    %2621 = vmatpush.bf16.msra.mxu0 %v1560
    %2622 = vmatpush.bf16.msra.mxu0 %v1558
    %2623 = vmatmul.bf16.gmra.mxu0 %v2558
    %v2624 = vpop.f32.mrf.mxu0
    %v2625 = vadd.f32 0.0, %v2624
    %v2626 = vpop.f32.mrf.mxu0
    %v2627 = vadd.f32 0.0, %v2626
    %2628 = vmatmul.bf16.gmra.mxu0 %v2571
    %v2629 = vpop.f32.mrf.mxu0
    %v2630 = vadd.f32 0.0, %v2629
    %v2631 = vpop.f32.mrf.mxu0
    %2632 = vdwg.mxu0
    %2633 = vmatpush.bf16.msra.mxu0 %v1588
    %2634 = vmatpush.bf16.msra.mxu0 %v1586
    %2635 = vmatpush.bf16.msra.mxu0 %v1584
    %2636 = vmatpush.bf16.msra.mxu0 %v1582
    %2637 = vmatpush.bf16.msra.mxu0 %v1580
    %2638 = vmatpush.bf16.msra.mxu0 %v1578
    %2639 = vmatpush.bf16.msra.mxu0 %v1576
    %2640 = vmatpush.bf16.msra.mxu0 %v1574
    %2641 = vmatmul.bf16.gmra.mxu0 %v2570
    %v2642 = vpop.f32.mrf.mxu0
    %v2643 = vadd.f32 %v2625, %v2642
    %v2644 = vpop.f32.mrf.mxu0
    %v2645 = vadd.f32 %v2627, %v2644
    %2646 = vmatmul.bf16.gmra.mxu0 %v2573
    %v2647 = vpop.f32.mrf.mxu0
    %v2648 = vadd.f32 %v2630, %v2647
    %v2649 = vpop.f32.mrf.mxu0
    %2650 = vdwg.mxu0
    %2655 = vmatpush.bf16.msra.mxu0 %v1807
    %2656 = vmatpush.bf16.msra.mxu0 %v1805
    %2657 = vmatpush.bf16.msra.mxu0 %v1803
    %2658 = vmatpush.bf16.msra.mxu0 %v1801
    %2659 = vmatpush.bf16.msra.mxu0 %v1799
    %2660 = vmatpush.bf16.msra.mxu0 %v1797
    %2661 = vmatpush.bf16.msra.mxu0 %v1795
    %2662 = vmatpush.bf16.msra.mxu0 %v1793
    %2663 = vmatmul.bf16.gmra.mxu0 %v2543
    %v2664 = vpop.f32.mrf.mxu0
    %v2665 = vadd.f32 %v2607, %v2664
    %v2666 = vpop.f32.mrf.mxu0
    %v2667 = vadd.f32 %v2609, %v2666
    %2668 = vmatmul.bf16.gmra.mxu0 %v2545
    %v2669 = vpop.f32.mrf.mxu0
    %v2670 = vadd.f32 %v2612, %v2669
    %v2671 = vpop.f32.mrf.mxu0
    %2672 = vdwg.mxu0
    %2673 = vmatpush.bf16.msra.mxu0 %v1823
    %2674 = vmatpush.bf16.msra.mxu0 %v1821
    %2675 = vmatpush.bf16.msra.mxu0 %v1819
    %2676 = vmatpush.bf16.msra.mxu0 %v1817
    %2677 = vmatpush.bf16.msra.mxu0 %v1815
    %2678 = vmatpush.bf16.msra.mxu0 %v1813
    %2679 = vmatpush.bf16.msra.mxu0 %v1811
    %2680 = vmatpush.bf16.msra.mxu0 %v1809
    %2681 = vmatmul.bf16.gmra.mxu0 %v2544
    %v2682 = vpop.f32.mrf.mxu0
    %v2683 = vadd.f32 %v2665, %v2682
    %v2684 = vpop.f32.mrf.mxu0
    %v2685 = vadd.f32 %v2667, %v2684
    %2686 = vmatmul.bf16.gmra.mxu0 %v2546
    %v2687 = vpop.f32.mrf.mxu0
    %v2688 = vadd.f32 %v2670, %v2687
    %v2689 = vpop.f32.mrf.mxu0
    %2690 = vdwg.mxu0
    %2691 = vmatpush.bf16.msra.mxu0 %v1808
    %2692 = vmatpush.bf16.msra.mxu0 %v1806
    %2693 = vmatpush.bf16.msra.mxu0 %v1804
    %2694 = vmatpush.bf16.msra.mxu0 %v1802
    %2695 = vmatpush.bf16.msra.mxu0 %v1800
    %2696 = vmatpush.bf16.msra.mxu0 %v1798
    %2697 = vmatpush.bf16.msra.mxu0 %v1796
    %2698 = vmatpush.bf16.msra.mxu0 %v1794
    %2699 = vmatmul.bf16.gmra.mxu0 %v2543
    %v2700 = vpop.f32.mrf.mxu0
    %v2701 = vadd.f32 %v2643, %v2700
    %v2702 = vpop.f32.mrf.mxu0
    %v2703 = vadd.f32 %v2645, %v2702
    %2704 = vmatmul.bf16.gmra.mxu0 %v2545
    %v2705 = vpop.f32.mrf.mxu0
    %v2706 = vadd.f32 %v2648, %v2705
    %v2707 = vpop.f32.mrf.mxu0
    %2708 = vdwg.mxu0
    %2709 = vmatpush.bf16.msra.mxu0 %v1824
    %2710 = vmatpush.bf16.msra.mxu0 %v1822
    %2711 = vmatpush.bf16.msra.mxu0 %v1820
    %2712 = vmatpush.bf16.msra.mxu0 %v1818
    %2713 = vmatpush.bf16.msra.mxu0 %v1816
    %2714 = vmatpush.bf16.msra.mxu0 %v1814
    %2715 = vmatpush.bf16.msra.mxu0 %v1812
    %2716 = vmatpush.bf16.msra.mxu0 %v1810
    %2717 = vmatmul.bf16.gmra.mxu0 %v2544
    %v2718 = vpop.f32.mrf.mxu0
    %v2719 = vadd.f32 %v2701, %v2718
    %v2720 = vpop.f32.mrf.mxu0
    %v2721 = vadd.f32 %v2703, %v2720
    %2722 = vmatmul.bf16.gmra.mxu0 %v2546
    %v2723 = vpop.f32.mrf.mxu0
    %v2724 = vadd.f32 %v2706, %v2723
    %v2725 = vpop.f32.mrf.mxu0
    %2726 = vdwg.mxu0
    %v2727 = vld [vmem:[%s1344] sm:$0xee]
    %v2728 = vld [vmem:[%s1344 + $0x10] sm:$0x33]
    %v2731 = vunpack.c.l.b16 %v2727
    %v2732 = vunpack.c.h.b16 %v2727
    %v2733 = vunpack.c.l.b16 %v2728
    %v2734 = vunpack.c.h.b16 %v2728
    %v2735 = vpack.c.b16 %v2539, %v2731
    %v2736 = vpack.c.b16 %v2540, %v2732
    %v2737 = vpack.c.b16 %v2733, %v2733
    %v2738 = vpack.c.b16 %v2734, %v2734
    %v2739 = vrot.slane %v2735, 1
    %v2740 = vrot.slane %v2737, 1
    %v2741 = vsel %vm401, %v2739, %v2740
    %v2742 = vrot.slane %v2736, 1
    %v2743 = vrot.slane %v2738, 1
    %v2744 = vsel %vm401, %v2742, %v2743
    %2749 = vmatpush.bf16.msra.mxu0 %v2094
    %2750 = vmatpush.bf16.msra.mxu0 %v2092
    %2751 = vmatpush.bf16.msra.mxu0 %v2090
    %2752 = vmatpush.bf16.msra.mxu0 %v2088
    %2753 = vmatpush.bf16.msra.mxu0 %v2086
    %2754 = vmatpush.bf16.msra.mxu0 %v2084
    %2755 = vmatpush.bf16.msra.mxu0 %v2082
    %2756 = vmatpush.bf16.msra.mxu0 %v2080
    %2757 = vmatmul.bf16.gmra.mxu0 %v2741
    %v2758 = vpop.f32.mrf.mxu0
    %v2759 = vadd.f32 0.0, %v2758
    %v2760 = vpop.f32.mrf.mxu0
    %v2761 = vadd.f32 0.0, %v2760
    %2762 = vmatmul.bf16.gmra.mxu0 %v2740
    %v2763 = vpop.f32.mrf.mxu0
    %v2764 = vadd.f32 0.0, %v2763
    %v2765 = vpop.f32.mrf.mxu0
    %2766 = vdwg.mxu0
    %2767 = vmatpush.bf16.msra.mxu0 %v2110
    %2768 = vmatpush.bf16.msra.mxu0 %v2108
    %2769 = vmatpush.bf16.msra.mxu0 %v2106
    %2770 = vmatpush.bf16.msra.mxu0 %v2104
    %2771 = vmatpush.bf16.msra.mxu0 %v2102
    %2772 = vmatpush.bf16.msra.mxu0 %v2100
    %2773 = vmatpush.bf16.msra.mxu0 %v2098
    %2774 = vmatpush.bf16.msra.mxu0 %v2096
    %2775 = vmatmul.bf16.gmra.mxu0 %v2744
    %v2776 = vpop.f32.mrf.mxu0
    %v2777 = vadd.f32 %v2759, %v2776
    %v2778 = vpop.f32.mrf.mxu0
    %v2779 = vadd.f32 %v2761, %v2778
    %2780 = vmatmul.bf16.gmra.mxu0 %v2743
    %v2781 = vpop.f32.mrf.mxu0
    %v2782 = vadd.f32 %v2764, %v2781
    %v2783 = vpop.f32.mrf.mxu0
    %2784 = vdwg.mxu0
    %2785 = vmatpush.bf16.msra.mxu0 %v2095
    %2786 = vmatpush.bf16.msra.mxu0 %v2093
    %2787 = vmatpush.bf16.msra.mxu0 %v2091
    %2788 = vmatpush.bf16.msra.mxu0 %v2089
    %2789 = vmatpush.bf16.msra.mxu0 %v2087
    %2790 = vmatpush.bf16.msra.mxu0 %v2085
    %2791 = vmatpush.bf16.msra.mxu0 %v2083
    %2792 = vmatpush.bf16.msra.mxu0 %v2081
    %2793 = vmatmul.bf16.gmra.mxu0 %v2741
    %v2794 = vpop.f32.mrf.mxu0
    %v2795 = vadd.f32 0.0, %v2794
    %v2796 = vpop.f32.mrf.mxu0
    %v2797 = vadd.f32 0.0, %v2796
    %2798 = vmatmul.bf16.gmra.mxu0 %v2740
    %v2799 = vpop.f32.mrf.mxu0
    %v2800 = vadd.f32 0.0, %v2799
    %v2801 = vpop.f32.mrf.mxu0
    %2802 = vdwg.mxu0
    %2803 = vmatpush.bf16.msra.mxu0 %v2111
    %2804 = vmatpush.bf16.msra.mxu0 %v2109
    %2805 = vmatpush.bf16.msra.mxu0 %v2107
    %2806 = vmatpush.bf16.msra.mxu0 %v2105
    %2807 = vmatpush.bf16.msra.mxu0 %v2103
    %2808 = vmatpush.bf16.msra.mxu0 %v2101
    %2809 = vmatpush.bf16.msra.mxu0 %v2099
    %2810 = vmatpush.bf16.msra.mxu0 %v2097
    %2811 = vmatmul.bf16.gmra.mxu0 %v2744
    %v2812 = vpop.f32.mrf.mxu0
    %v2813 = vadd.f32 %v2795, %v2812
    %v2814 = vpop.f32.mrf.mxu0
    %v2815 = vadd.f32 %v2797, %v2814
    %2816 = vmatmul.bf16.gmra.mxu0 %v2743
    %v2817 = vpop.f32.mrf.mxu0
    %v2818 = vadd.f32 %v2800, %v2817
    %v2819 = vpop.f32.mrf.mxu0
    %2820 = vdwg.mxu0
    %v2821 = vadd.f32 %v2683, %v2777
    %v2822 = vadd.f32 %v2719, %v2813
    %v2823 = vadd.f32 %v2685, %v2779
    %v2824 = vadd.f32 %v2721, %v2815
    %v2825 = vadd.f32 %v2688, %v2782
    %v2826 = vadd.f32 %v2724, %v2818
    %v2828 = vshrl.u32 %v2735, 16
    %v2830 = vrot.slane %v2828, 1
    %v2831 = vshll.u32 %v2735, 16
    %v2833 = vrot.slane %v2831, 2
    %v2834 = vor.u32 %v2830, %v2833
    %v2836 = vshrl.u32 %v2737, 16
    %v2838 = vrot.slane %v2836, 1
    %v2839 = vshll.u32 %v2737, 16
    %v2841 = vrot.slane %v2839, 2
    %v2842 = vor.u32 %v2838, %v2841
    %v2843 = vsel %vm550, %v2834, %v2842
    %v2845 = vshrl.u32 %v2736, 16
    %v2847 = vrot.slane %v2845, 1
    %v2848 = vshll.u32 %v2736, 16
    %v2850 = vrot.slane %v2848, 2
    %v2851 = vor.u32 %v2847, %v2850
    %v2853 = vshrl.u32 %v2738, 16
    %v2855 = vrot.slane %v2853, 1
    %v2856 = vshll.u32 %v2738, 16
    %v2858 = vrot.slane %v2856, 2
    %v2859 = vor.u32 %v2855, %v2858
    %v2860 = vsel %vm550, %v2851, %v2859
    %2865 = vmatpush.bf16.msra.mxu0 %v2403
    %2866 = vmatpush.bf16.msra.mxu0 %v2401
    %2867 = vmatpush.bf16.msra.mxu0 %v2399
    %2868 = vmatpush.bf16.msra.mxu0 %v2397
    %2869 = vmatpush.bf16.msra.mxu0 %v2395
    %2870 = vmatpush.bf16.msra.mxu0 %v2393
    %2871 = vmatpush.bf16.msra.mxu0 %v2391
    %2872 = vmatpush.bf16.msra.mxu0 %v2389
    %2873 = vmatmul.bf16.gmra.mxu0 %v2843
    %v2874 = vpop.f32.mrf.mxu0
    %v2875 = vadd.f32 0.0, %v2874
    %v2876 = vpop.f32.mrf.mxu0
    %v2877 = vadd.f32 0.0, %v2876
    %2878 = vmatmul.bf16.gmra.mxu0 %v2838
    %v2879 = vpop.f32.mrf.mxu0
    %v2880 = vadd.f32 0.0, %v2879
    %v2881 = vpop.f32.mrf.mxu0
    %2882 = vdwg.mxu0
    %2883 = vmatpush.bf16.msra.mxu0 %v2419
    %2884 = vmatpush.bf16.msra.mxu0 %v2417
    %2885 = vmatpush.bf16.msra.mxu0 %v2415
    %2886 = vmatpush.bf16.msra.mxu0 %v2413
    %2887 = vmatpush.bf16.msra.mxu0 %v2411
    %2888 = vmatpush.bf16.msra.mxu0 %v2409
    %2889 = vmatpush.bf16.msra.mxu0 %v2407
    %2890 = vmatpush.bf16.msra.mxu0 %v2405
    %2891 = vmatmul.bf16.gmra.mxu0 %v2860
    %v2892 = vpop.f32.mrf.mxu0
    %v2893 = vadd.f32 %v2875, %v2892
    %v2894 = vpop.f32.mrf.mxu0
    %v2895 = vadd.f32 %v2877, %v2894
    %2896 = vmatmul.bf16.gmra.mxu0 %v2855
    %v2897 = vpop.f32.mrf.mxu0
    %v2898 = vadd.f32 %v2880, %v2897
    %v2899 = vpop.f32.mrf.mxu0
    %2900 = vdwg.mxu0
    %2901 = vmatpush.bf16.msra.mxu0 %v2404
    %2902 = vmatpush.bf16.msra.mxu0 %v2402
    %2903 = vmatpush.bf16.msra.mxu0 %v2400
    %2904 = vmatpush.bf16.msra.mxu0 %v2398
    %2905 = vmatpush.bf16.msra.mxu0 %v2396
    %2906 = vmatpush.bf16.msra.mxu0 %v2394
    %2907 = vmatpush.bf16.msra.mxu0 %v2392
    %2908 = vmatpush.bf16.msra.mxu0 %v2390
    %2909 = vmatmul.bf16.gmra.mxu0 %v2843
    %v2910 = vpop.f32.mrf.mxu0
    %v2911 = vadd.f32 0.0, %v2910
    %v2912 = vpop.f32.mrf.mxu0
    %v2913 = vadd.f32 0.0, %v2912
    %2914 = vmatmul.bf16.gmra.mxu0 %v2838
    %v2915 = vpop.f32.mrf.mxu0
    %v2916 = vadd.f32 0.0, %v2915
    %v2917 = vpop.f32.mrf.mxu0
    %2918 = vdwg.mxu0
    %2919 = vmatpush.bf16.msra.mxu0 %v2420
    %2920 = vmatpush.bf16.msra.mxu0 %v2418
    %2921 = vmatpush.bf16.msra.mxu0 %v2416
    %2922 = vmatpush.bf16.msra.mxu0 %v2414
    %2923 = vmatpush.bf16.msra.mxu0 %v2412
    %2924 = vmatpush.bf16.msra.mxu0 %v2410
    %2925 = vmatpush.bf16.msra.mxu0 %v2408
    %2926 = vmatpush.bf16.msra.mxu0 %v2406
    %2927 = vmatmul.bf16.gmra.mxu0 %v2860
    %v2928 = vpop.f32.mrf.mxu0
    %v2929 = vadd.f32 %v2911, %v2928
    %v2930 = vpop.f32.mrf.mxu0
    %v2931 = vadd.f32 %v2913, %v2930
    %2932 = vmatmul.bf16.gmra.mxu0 %v2855
    %v2933 = vpop.f32.mrf.mxu0
    %v2934 = vadd.f32 %v2916, %v2933
    %v2935 = vpop.f32.mrf.mxu0
    %2936 = vdwg.mxu0
    %v2937 = vadd.f32 %v2821, %v2893
    %v2938 = vadd.f32 %v2822, %v2929
    %v2939 = vadd.f32 %v2823, %v2895
    %v2940 = vadd.f32 %v2824, %v2931
    %v2941 = vadd.f32 %v2825, %v2898
    %v2942 = vadd.f32 %v2826, %v2934
    %v2943 = vadd.f32 %v2525, %v2527
    %vm2944 = vcmask 1040384
    %v2945 = vsel %vm2944, %v2529, 0.0
    %v2946 = vadd.f32 %v2943, %v2945
    %v2947 = vrot.slane %v2946, 4
    %v2948 = vadd.f32 %v2946, %v2947
    %v2949 = vrot.slane %v2948, 2
    %v2950 = vadd.f32 %v2948, %v2949
    %v2951 = vrot.slane %v2950, 1
    %v2952 = vadd.f32 %v2950, %v2951
    %v2953 = vadd.f32 %v2526, %v2528
    %v2954 = vsel %vm2944, %v2530, 0.0
    %v2955 = vadd.f32 %v2953, %v2954
    %v2956 = vrot.slane %v2955, 4
    %v2957 = vadd.f32 %v2955, %v2956
    %v2958 = vrot.slane %v2957, 2
    %v2959 = vadd.f32 %v2957, %v2958
    %v2960 = vrot.slane %v2959, 1
    %v2961 = vadd.f32 %v2959, %v2960
    %v2962 = vadd.f32 %v2952, 0.0
    %v2963 = vadd.f32 %v2961, 0.0
    %v2964 = vadd.f32 %v2937, %v2939
    %v2965 = vsel %vm2944, %v2941, 0.0
    %v2966 = vadd.f32 %v2964, %v2965
    %v2967 = vrot.slane %v2966, 4
    %v2968 = vadd.f32 %v2966, %v2967
    %v2969 = vrot.slane %v2968, 2
    %v2970 = vadd.f32 %v2968, %v2969
    %v2971 = vrot.slane %v2970, 1
    %v2972 = vadd.f32 %v2970, %v2971
    %v2973 = vadd.f32 %v2938, %v2940
    %v2974 = vsel %vm2944, %v2942, 0.0
    %v2975 = vadd.f32 %v2973, %v2974
    %v2976 = vrot.slane %v2975, 4
    %v2977 = vadd.f32 %v2975, %v2976
    %v2978 = vrot.slane %v2977, 2
    %v2979 = vadd.f32 %v2977, %v2978
    %v2980 = vrot.slane %v2979, 1
    %v2981 = vadd.f32 %v2979, %v2980
    %v2982 = vadd.f32 %v2962, %v2972
    %v2983 = vadd.f32 %v2963, %v2981
    %v2984 = vmul.f32 %v2525, %v2525
    %v2985 = vmul.f32 %v2526, %v2526
    %v2986 = vmul.f32 %v2527, %v2527
    %v2987 = vmul.f32 %v2528, %v2528
    %v2988 = vmul.f32 %v2529, %v2529
    %v2989 = vmul.f32 %v2530, %v2530
    %v2990 = vadd.f32 %v2984, %v2986
    %v2991 = vsel %vm2944, %v2988, 0.0
    %v2992 = vadd.f32 %v2990, %v2991
    %v2993 = vrot.slane %v2992, 4
    %v2994 = vadd.f32 %v2992, %v2993
    %v2995 = vrot.slane %v2994, 2
    %v2996 = vadd.f32 %v2994, %v2995
    %v2997 = vrot.slane %v2996, 1
    %v2998 = vadd.f32 %v2996, %v2997
    %v2999 = vadd.f32 %v2985, %v2987
    %v3000 = vsel %vm2944, %v2989, 0.0
    %v3001 = vadd.f32 %v2999, %v3000
    %v3002 = vrot.slane %v3001, 4
    %v3003 = vadd.f32 %v3001, %v3002
    %v3004 = vrot.slane %v3003, 2
    %v3005 = vadd.f32 %v3003, %v3004
    %v3006 = vrot.slane %v3005, 1
    %v3007 = vadd.f32 %v3005, %v3006
    %v3008 = vadd.f32 %v2998, 0.0
    %v3009 = vadd.f32 %v3007, 0.0
    %v3010 = vmul.f32 %v2937, %v2937
    %v3011 = vmul.f32 %v2938, %v2938
    %v3012 = vmul.f32 %v2939, %v2939
    %v3013 = vmul.f32 %v2940, %v2940
    %v3014 = vmul.f32 %v2941, %v2941
    %v3015 = vmul.f32 %v2942, %v2942
    %v3016 = vadd.f32 %v3010, %v3012
    %v3017 = vsel %vm2944, %v3014, 0.0
    %v3018 = vadd.f32 %v3016, %v3017
    %v3019 = vrot.slane %v3018, 4
    %v3020 = vadd.f32 %v3018, %v3019
    %v3021 = vrot.slane %v3020, 2
    %v3022 = vadd.f32 %v3020, %v3021
    %v3023 = vrot.slane %v3022, 1
    %v3024 = vadd.f32 %v3022, %v3023
    %v3025 = vadd.f32 %v3011, %v3013
    %v3026 = vsel %vm2944, %v3015, 0.0
    %v3027 = vadd.f32 %v3025, %v3026
    %v3028 = vrot.slane %v3027, 4
    %v3029 = vadd.f32 %v3027, %v3028
    %v3030 = vrot.slane %v3029, 2
    %v3031 = vadd.f32 %v3029, %v3030
    %v3032 = vrot.slane %v3031, 1
    %v3033 = vadd.f32 %v3031, %v3032
    %v3034 = vadd.f32 %v3008, %v3024
    %v3035 = vadd.f32 %v3009, %v3033
    %v3036 = vsel %vm2944, %v2982, %v3034
    %v3037 = vsel %vm2944, %v2983, %v3035
    %3038 = vrot.lane.b32.xlu0 %v3036, 8
    %v3039 = vpop.permute.xlu0 %3038
    %3040 = vrot.lane.b32.xlu0 %v3037, 8
    %v3041 = vpop.permute.xlu0 %3040
    %v3042 = vlaneseq
    %v3043 = vand.u32 %v3042, 127
    %vm3044 = vcmp.lt.s32.totalorder %v3043, 8
    %v3045 = vsel %vm3044, %v3039, %v3041
    %v3046 = vsel %vm3044, %v3041, %v3039
    %v3047 = vadd.f32 %v3036, %v3046
    %v3048 = vadd.f32 %v3037, %v3045
    %3049 = vrot.lane.b32.xlu0 %v3047, 16
    %v3050 = vpop.permute.xlu0 %3049
    %3051 = vrot.lane.b32.xlu0 %v3048, 16
    %v3052 = vpop.permute.xlu0 %3051
    %vm3053 = vcmp.lt.s32.totalorder %v3043, 16
    %v3054 = vsel %vm3053, %v3050, %v3052
    %v3055 = vsel %vm3053, %v3052, %v3050
    %v3056 = vadd.f32 %v3047, %v3055
    %v3057 = vadd.f32 %v3048, %v3054
    %3058 = vrot.lane.b32.xlu0 %v3056, 32
    %v3059 = vpop.permute.xlu0 %3058
    %3060 = vrot.lane.b32.xlu0 %v3057, 32
    %v3061 = vpop.permute.xlu0 %3060
    %vm3062 = vcmp.lt.s32.totalorder %v3043, 32
    %v3063 = vsel %vm3062, %v3059, %v3061
    %v3064 = vsel %vm3062, %v3061, %v3059
    %v3065 = vadd.f32 %v3056, %v3064
    %v3066 = vadd.f32 %v3057, %v3063
    %3067 = vrot.lane.b32.xlu0 %v3065, 64
    %v3068 = vpop.permute.xlu0 %3067
    %3069 = vrot.lane.b32.xlu0 %v3066, 64
    %v3070 = vpop.permute.xlu0 %3069
    %vm3071 = vcmp.lt.s32.totalorder %v3043, 64
    %v3072 = vsel %vm3071, %v3068, %v3070
    %v3073 = vsel %vm3071, %v3070, %v3068
    %v3074 = vadd.f32 %v3065, %v3073
    %v3075 = vadd.f32 %v3066, %v3072
    %v3076 = vadd.f32 %v3074, %v3075
    %v3077 = vmul.f32 %v3076, 0.00091911765
    %v3078 = vmul.f32 %v3077, %v3077
    %v3080 = vrot.slane %v3078, 7
    %v3082 = vsub.f32 %v3077, %v3080
    %v3083 = vmax.f32 %v3082, 0.0
    %v3084 = vadd.f32 %v3083, 1e-05
    %v3085 = vrsqrt.pop %v3084
    %v3086 = vmul.f32 %v3085, %v3084
    %v3087 = vmul.f32 %v3086, %v3085
    %v3088 = vmul.f32 0.5, %v3087
    %v3089 = vsub.f32 1.5, %v3088
    %v3090 = vmul.f32 %v3085, %v3089
    %vm3091 = vweird.f32 %v3084
    %vm3092 = vweird.f32 %v3085
    %vm3093 = vmor %vm3091, %vm3092
    %v3094 = vsel %vm3093, %v3085, %v3090
    %v3095 = vld [vmem:[%s3] sm:$0x3]
    %v3097 = vperm.slane %v3095, 0
    %v3098 = vperm.slane %v3095, 1
    %v3101 = vmul.f32 %v3094, %v3097
    %v3102 = vmul.f32 %v3094, %v3098
    %v3103 = vld [vmem:[%s4] sm:$0x3]
    %v3106 = vrot.slane %v3101, 1
    %v3107 = vrot.slane %v3102, 1
    %v3110 = vmul.f32 %v3077, %v3106
    %v3111 = vmul.f32 %v3077, %v3107
    %v3114 = vrot.slane %v3111, 7
    %v3115 = vsel %vm2944, %v3110, %v3114
    %v3117 = vsub.f32 %v3103, %v3115
    %v3118 = vperm.slane %v3101, 1
    %v3119 = vperm.slane %v3102, 1
    %v3120 = vmul.f32 %v2525, %v3118
    %v3121 = vmul.f32 %v2526, %v3119
    %v3122 = vmul.f32 %v2527, %v3118
    %v3123 = vmul.f32 %v2528, %v3119
    %v3124 = vmul.f32 %v2529, %v3118
    %v3125 = vmul.f32 %v2530, %v3119
    %v3127 = vperm.slane %v3117, 0
    %v3128 = vperm.slane %v3117, 1
    %v3131 = vadd.f32 %v3120, %v3127
    %v3132 = vadd.f32 %v3121, %v3128
    %v3133 = vadd.f32 %v3122, %v3127
    %v3134 = vadd.f32 %v3123, %v3128
    %v3135 = vadd.f32 %v3124, %v3127
    %v3136 = vadd.f32 %v3125, %v3128
    %vm3137 = vcmp.ge.f32.partialorder %v3131, 0.0
    %vm3138 = vcmp.ge.f32.partialorder %v3132, 0.0
    %vm3139 = vcmp.ge.f32.partialorder %v3133, 0.0
    %vm3140 = vcmp.ge.f32.partialorder %v3134, 0.0
    %vm3141 = vcmp.ge.f32.partialorder %v3135, 0.0
    %vm3142 = vcmp.ge.f32.partialorder %v3136, 0.0
    %v3143 = vmul.f32 %v3131, 0.2
    %v3144 = vmul.f32 %v3132, 0.2
    %v3145 = vmul.f32 %v3133, 0.2
    %v3146 = vmul.f32 %v3134, 0.2
    %v3147 = vmul.f32 %v3135, 0.2
    %v3148 = vmul.f32 %v3136, 0.2
    %v3149 = vsel %vm3137, %v3131, %v3143
    %v3150 = vsel %vm3138, %v3132, %v3144
    %v3151 = vsel %vm3139, %v3133, %v3145
    %v3152 = vsel %vm3140, %v3134, %v3146
    %v3153 = vsel %vm3141, %v3135, %v3147
    %v3154 = vsel %vm3142, %v3136, %v3148
    %v3155 = vpack.c.bf16 %v3150, %v3149
    %v3156 = vpack.c.bf16 %v3152, %v3151
    %v3157 = vpack.c.bf16 %v3154, %v3153
    %3158 = vst [vmem:[#allocation3] sm:$0xff] %v3155
    %3159 = vst [vmem:[#allocation3 + $0x8] sm:$0xff] %v3156
    %vm3160 = vcmask 1040384
    %vm3161 = vsmask.f32 256
    %vm3162 = vmand %vm3160, %vm3161
    %vm3163 = vcmask 1044484
    %vm3164 = vsmask.f32 4352
    %vm3165 = vmand %vm3163, %vm3164
    %vm3166 = vmor %vm3165, %vm3162
    %v3167 = vld [vmem:[#allocation3 + $0x10] sm:$0x11]
    %v3168 = vsel %vm3166, %v3157, %v3167
    %3169 = vst [vmem:[#allocation3 + $0x10] sm:$0x11] %v3168
    %v3170 = vmul.f32 %v2937, %v3118
    %v3171 = vmul.f32 %v2938, %v3119
    %v3172 = vmul.f32 %v2939, %v3118
    %v3173 = vmul.f32 %v2940, %v3119
    %v3174 = vmul.f32 %v2941, %v3118
    %v3175 = vmul.f32 %v2942, %v3119
    %v3176 = vadd.f32 %v3170, %v3127
    %v3177 = vadd.f32 %v3171, %v3128
    %v3178 = vadd.f32 %v3172, %v3127
    %v3179 = vadd.f32 %v3173, %v3128
    %v3180 = vadd.f32 %v3174, %v3127
    %v3181 = vadd.f32 %v3175, %v3128
    %vm3182 = vcmp.ge.f32.partialorder %v3176, 0.0
    %vm3183 = vcmp.ge.f32.partialorder %v3177, 0.0
    %vm3184 = vcmp.ge.f32.partialorder %v3178, 0.0
    %vm3185 = vcmp.ge.f32.partialorder %v3179, 0.0
    %vm3186 = vcmp.ge.f32.partialorder %v3180, 0.0
    %vm3187 = vcmp.ge.f32.partialorder %v3181, 0.0
    %v3188 = vmul.f32 %v3176, 0.2
    %v3189 = vmul.f32 %v3177, 0.2
    %v3190 = vmul.f32 %v3178, 0.2
    %v3191 = vmul.f32 %v3179, 0.2
    %v3192 = vmul.f32 %v3180, 0.2
    %v3193 = vmul.f32 %v3181, 0.2
    %v3194 = vsel %vm3182, %v3176, %v3188
    %v3195 = vsel %vm3183, %v3177, %v3189
    %v3196 = vsel %vm3184, %v3178, %v3190
    %v3197 = vsel %vm3185, %v3179, %v3191
    %v3198 = vsel %vm3186, %v3180, %v3192
    %v3199 = vsel %vm3187, %v3181, %v3193
    %v3200 = vpack.c.bf16 %v3195, %v3194
    %v3201 = vpack.c.bf16 %v3197, %v3196
    %v3202 = vpack.c.bf16 %v3199, %v3198
    %s3203 = scalar_lea.vmem [#allocation3], 24
    %3204 = vst [vmem:[%s3203] sm:$0xff] %v3200
    %3205 = vst [vmem:[%s3203 + $0x8] sm:$0xff] %v3201
    %v3206 = vld [vmem:[%s3203 + $0x10] sm:$0x11]
    %v3207 = vsel %vm3166, %v3202, %v3206
    %3208 = vst [vmem:[%s3203 + $0x10] sm:$0x11] %v3207
    %v3209 = vld [vmem:[#allocation3] sm:$0xff]
    %v3210 = vld [vmem:[#allocation3 + $0x8] sm:$0x77]
    %v3211 = vld [vmem:[#allocation5] sm:$0xff]
    %v3212 = vld [vmem:[#allocation5 + $0x8] sm:$0xff]
    %v3213 = vld [vmem:[#allocation5 + $0x10] sm:$0xff]
    %v3214 = vld [vmem:[#allocation5 + $0x18] sm:$0xff]
    %v3215 = vld [vmem:[#allocation5 + $0x20] sm:$0xff]
    %v3216 = vld [vmem:[#allocation5 + $0x28] sm:$0xff]
    %v3217 = vld [vmem:[#allocation5 + $0x30] sm:$0xff]
    %v3218 = vld [vmem:[#allocation5 + $0x38] sm:$0xff]
    %v3219 = vld [vmem:[#allocation5 + $0x40] sm:$0xff]
    %v3220 = vld [vmem:[#allocation5 + $0x48] sm:$0xff]
    %v3221 = vld [vmem:[#allocation5 + $0x50] sm:$0xff]
    %v3222 = vld [vmem:[#allocation5 + $0x58] sm:$0xff]
    %v3223 = vld [vmem:[#allocation5 + $0x60] sm:$0xff]
    %v3224 = vld [vmem:[#allocation5 + $0x68] sm:$0xff]
    %v3225 = vld [vmem:[#allocation5 + $0x70] sm:$0xff]
    %v3226 = vld [vmem:[#allocation5 + $0x78] sm:$0xff]
    %v3227 = vld [vmem:[#allocation5 + $0x80] sm:$0xff]
    %v3228 = vld [vmem:[#allocation5 + $0x88] sm:$0xff]
    %v3229 = vld [vmem:[#allocation5 + $0x90] sm:$0xff]
    %v3230 = vld [vmem:[#allocation5 + $0x98] sm:$0xff]
    %v3231 = vld [vmem:[#allocation5 + $0xa0] sm:$0xff]
    %v3232 = vld [vmem:[#allocation5 + $0xa8] sm:$0xff]
    %v3233 = vld [vmem:[#allocation5 + $0xb0] sm:$0xff]
    %v3234 = vld [vmem:[#allocation5 + $0xb8] sm:$0xff]
    %v3235 = vld [vmem:[#allocation5 + $0xc0] sm:$0xff]
    %v3236 = vld [vmem:[#allocation5 + $0xc8] sm:$0xff]
    %v3237 = vld [vmem:[#allocation5 + $0xd0] sm:$0xff]
    %v3238 = vld [vmem:[#allocation5 + $0xd8] sm:$0xff]
    %v3239 = vld [vmem:[#allocation5 + $0xe0] sm:$0xff]
    %v3240 = vld [vmem:[#allocation5 + $0xe8] sm:$0xff]
    %v3241 = vld [vmem:[#allocation5 + $0xf0] sm:$0xff]
    %v3242 = vld [vmem:[#allocation5 + $0xf8] sm:$0xff]
    %v3243 = vld [vmem:[#allocation3 + $0x8] sm:$0xff]
    %s3244 = scalar_lea.vmem [#allocation5], 256
    %v3245 = vld [vmem:[%s3244] sm:$0xff]
    %v3246 = vld [vmem:[%s3244 + $0x8] sm:$0xff]
    %v3247 = vld [vmem:[%s3244 + $0x10] sm:$0xff]
    %v3248 = vld [vmem:[%s3244 + $0x18] sm:$0xff]
    %v3249 = vld [vmem:[%s3244 + $0x20] sm:$0xff]
    %v3250 = vld [vmem:[%s3244 + $0x28] sm:$0xff]
    %v3251 = vld [vmem:[%s3244 + $0x30] sm:$0xff]
    %v3252 = vld [vmem:[%s3244 + $0x38] sm:$0xff]
    %v3253 = vld [vmem:[%s3244 + $0x40] sm:$0xff]
    %v3254 = vld [vmem:[%s3244 + $0x48] sm:$0xff]
    %v3255 = vld [vmem:[%s3244 + $0x50] sm:$0xff]
    %v3256 = vld [vmem:[%s3244 + $0x58] sm:$0xff]
    %v3257 = vld [vmem:[%s3244 + $0x60] sm:$0xff]
    %v3258 = vld [vmem:[%s3244 + $0x68] sm:$0xff]
    %v3259 = vld [vmem:[%s3244 + $0x70] sm:$0xff]
    %v3260 = vld [vmem:[%s3244 + $0x78] sm:$0xff]
    %v3261 = vld [vmem:[%s3244 + $0x80] sm:$0xff]
    %v3262 = vld [vmem:[%s3244 + $0x88] sm:$0xff]
    %v3263 = vld [vmem:[%s3244 + $0x90] sm:$0xff]
    %v3264 = vld [vmem:[%s3244 + $0x98] sm:$0xff]
    %v3265 = vld [vmem:[%s3244 + $0xa0] sm:$0xff]
    %v3266 = vld [vmem:[%s3244 + $0xa8] sm:$0xff]
    %v3267 = vld [vmem:[%s3244 + $0xb0] sm:$0xff]
    %v3268 = vld [vmem:[%s3244 + $0xb8] sm:$0xff]
    %v3269 = vld [vmem:[%s3244 + $0xc0] sm:$0xff]
    %v3270 = vld [vmem:[%s3244 + $0xc8] sm:$0xff]
    %v3271 = vld [vmem:[%s3244 + $0xd0] sm:$0xff]
    %v3272 = vld [vmem:[%s3244 + $0xd8] sm:$0xff]
    %v3273 = vld [vmem:[%s3244 + $0xe0] sm:$0xff]
    %v3274 = vld [vmem:[%s3244 + $0xe8] sm:$0xff]
    %v3275 = vld [vmem:[%s3244 + $0xf0] sm:$0xff]
    %v3276 = vld [vmem:[%s3244 + $0xf8] sm:$0xff]
    %v3279 = vunpack.c.l.b16 %v3209
    %v3280 = vunpack.c.h.b16 %v3209
    %v3281 = vunpack.c.l.b16 %v3243
    %v3282 = vunpack.c.h.b16 %v3243
    %v3283 = vpack.c.b16 %v3281, %v3279
    %v3284 = vpack.c.b16 %v3282, %v3280
    %v3286 = vshrl.u32 %v3283, 16
    %v3288 = vshll.u32 %v3283, 16
    %v3290 = vrot.slane %v3288, 1
    %v3291 = vor.u32 %v3286, %v3290
    %v3293 = vshrl.u32 %v3284, 16
    %v3295 = vshll.u32 %v3284, 16
    %v3297 = vrot.slane %v3295, 1
    %v3298 = vor.u32 %v3293, %v3297
    %v3333 = vunpack.c.l.b16 %v3245
    %v3334 = vunpack.c.h.b16 %v3245
    %v3335 = vunpack.c.l.b16 %v3246
    %v3336 = vunpack.c.h.b16 %v3246
    %v3337 = vunpack.c.l.b16 %v3247
    %v3338 = vunpack.c.h.b16 %v3247
    %v3339 = vunpack.c.l.b16 %v3248
    %v3340 = vunpack.c.h.b16 %v3248
    %v3341 = vunpack.c.l.b16 %v3249
    %v3342 = vunpack.c.h.b16 %v3249
    %v3343 = vunpack.c.l.b16 %v3250
    %v3344 = vunpack.c.h.b16 %v3250
    %v3345 = vunpack.c.l.b16 %v3251
    %v3346 = vunpack.c.h.b16 %v3251
    %v3347 = vunpack.c.l.b16 %v3252
    %v3348 = vunpack.c.h.b16 %v3252
    %v3349 = vunpack.c.l.b16 %v3253
    %v3350 = vunpack.c.h.b16 %v3253
    %v3351 = vunpack.c.l.b16 %v3254
    %v3352 = vunpack.c.h.b16 %v3254
    %v3353 = vunpack.c.l.b16 %v3255
    %v3354 = vunpack.c.h.b16 %v3255
    %v3355 = vunpack.c.l.b16 %v3256
    %v3356 = vunpack.c.h.b16 %v3256
    %v3357 = vunpack.c.l.b16 %v3257
    %v3358 = vunpack.c.h.b16 %v3257
    %v3359 = vunpack.c.l.b16 %v3258
    %v3360 = vunpack.c.h.b16 %v3258
    %v3361 = vunpack.c.l.b16 %v3259
    %v3362 = vunpack.c.h.b16 %v3259
    %v3363 = vunpack.c.l.b16 %v3260
    %v3364 = vunpack.c.h.b16 %v3260
    %v3365 = vunpack.c.l.b16 %v3261
    %v3366 = vunpack.c.h.b16 %v3261
    %v3367 = vunpack.c.l.b16 %v3262
    %v3368 = vunpack.c.h.b16 %v3262
    %v3369 = vunpack.c.l.b16 %v3263
    %v3370 = vunpack.c.h.b16 %v3263
    %v3371 = vunpack.c.l.b16 %v3264
    %v3372 = vunpack.c.h.b16 %v3264
    %v3373 = vunpack.c.l.b16 %v3265
    %v3374 = vunpack.c.h.b16 %v3265
    %v3375 = vunpack.c.l.b16 %v3266
    %v3376 = vunpack.c.h.b16 %v3266
    %v3377 = vunpack.c.l.b16 %v3267
    %v3378 = vunpack.c.h.b16 %v3267
    %v3379 = vunpack.c.l.b16 %v3268
    %v3380 = vunpack.c.h.b16 %v3268
    %v3381 = vunpack.c.l.b16 %v3269
    %v3382 = vunpack.c.h.b16 %v3269
    %v3383 = vunpack.c.l.b16 %v3270
    %v3384 = vunpack.c.h.b16 %v3270
    %v3385 = vunpack.c.l.b16 %v3271
    %v3386 = vunpack.c.h.b16 %v3271
    %v3387 = vunpack.c.l.b16 %v3272
    %v3388 = vunpack.c.h.b16 %v3272
    %v3389 = vunpack.c.l.b16 %v3273
    %v3390 = vunpack.c.h.b16 %v3273
    %v3391 = vunpack.c.l.b16 %v3274
    %v3392 = vunpack.c.h.b16 %v3274
    %v3393 = vunpack.c.l.b16 %v3275
    %v3394 = vunpack.c.h.b16 %v3275
    %v3395 = vunpack.c.l.b16 %v3276
    %v3396 = vunpack.c.h.b16 %v3276
    %v3397 = vpack.c.b16 %v3335, %v3333
    %v3398 = vpack.c.b16 %v3336, %v3334
    %v3399 = vpack.c.b16 %v3339, %v3337
    %v3400 = vpack.c.b16 %v3340, %v3338
    %v3401 = vpack.c.b16 %v3343, %v3341
    %v3402 = vpack.c.b16 %v3344, %v3342
    %v3403 = vpack.c.b16 %v3347, %v3345
    %v3404 = vpack.c.b16 %v3348, %v3346
    %v3405 = vpack.c.b16 %v3351, %v3349
    %v3406 = vpack.c.b16 %v3352, %v3350
    %v3407 = vpack.c.b16 %v3355, %v3353
    %v3408 = vpack.c.b16 %v3356, %v3354
    %v3409 = vpack.c.b16 %v3359, %v3357
    %v3410 = vpack.c.b16 %v3360, %v3358
    %v3411 = vpack.c.b16 %v3363, %v3361
    %v3412 = vpack.c.b16 %v3364, %v3362
    %v3413 = vpack.c.b16 %v3367, %v3365
    %v3414 = vpack.c.b16 %v3368, %v3366
    %v3415 = vpack.c.b16 %v3371, %v3369
    %v3416 = vpack.c.b16 %v3372, %v3370
    %v3417 = vpack.c.b16 %v3375, %v3373
    %v3418 = vpack.c.b16 %v3376, %v3374
    %v3419 = vpack.c.b16 %v3379, %v3377
    %v3420 = vpack.c.b16 %v3380, %v3378
    %v3421 = vpack.c.b16 %v3383, %v3381
    %v3422 = vpack.c.b16 %v3384, %v3382
    %v3423 = vpack.c.b16 %v3387, %v3385
    %v3424 = vpack.c.b16 %v3388, %v3386
    %v3425 = vpack.c.b16 %v3391, %v3389
    %v3426 = vpack.c.b16 %v3392, %v3390
    %v3427 = vpack.c.b16 %v3395, %v3393
    %v3428 = vpack.c.b16 %v3396, %v3394
    %3461 = vmatpush.bf16.msra.mxu0 %v3411
    %3462 = vmatpush.bf16.msra.mxu0 %v3409
    %3463 = vmatpush.bf16.msra.mxu0 %v3407
    %3464 = vmatpush.bf16.msra.mxu0 %v3405
    %3465 = vmatpush.bf16.msra.mxu0 %v3403
    %3466 = vmatpush.bf16.msra.mxu0 %v3401
    %3467 = vmatpush.bf16.msra.mxu0 %v3399
    %3468 = vmatpush.bf16.msra.mxu0 %v3397
    %3469 = vmatmul.bf16.gmra.mxu0 %v3291
    %v3470 = vpop.f32.mrf.mxu0
    %v3471 = vadd.f32 0.0, %v3470
    %v3472 = vpop.f32.mrf.mxu0
    %v3473 = vadd.f32 0.0, %v3472
    %3474 = vdwg.mxu0
    %3475 = vmatpush.bf16.msra.mxu0 %v3427
    %3476 = vmatpush.bf16.msra.mxu0 %v3425
    %3477 = vmatpush.bf16.msra.mxu0 %v3423
    %3478 = vmatpush.bf16.msra.mxu0 %v3421
    %3479 = vmatpush.bf16.msra.mxu0 %v3419
    %3480 = vmatpush.bf16.msra.mxu0 %v3417
    %3481 = vmatpush.bf16.msra.mxu0 %v3415
    %3482 = vmatpush.bf16.msra.mxu0 %v3413
    %3483 = vmatmul.bf16.gmra.mxu0 %v3298
    %v3484 = vpop.f32.mrf.mxu0
    %v3485 = vadd.f32 %v3471, %v3484
    %v3486 = vpop.f32.mrf.mxu0
    %v3487 = vadd.f32 %v3473, %v3486
    %3488 = vdwg.mxu0
    %3489 = vmatpush.bf16.msra.mxu0 %v3412
    %3490 = vmatpush.bf16.msra.mxu0 %v3410
    %3491 = vmatpush.bf16.msra.mxu0 %v3408
    %3492 = vmatpush.bf16.msra.mxu0 %v3406
    %3493 = vmatpush.bf16.msra.mxu0 %v3404
    %3494 = vmatpush.bf16.msra.mxu0 %v3402
    %3495 = vmatpush.bf16.msra.mxu0 %v3400
    %3496 = vmatpush.bf16.msra.mxu0 %v3398
    %3497 = vmatmul.bf16.gmra.mxu0 %v3291
    %v3498 = vpop.f32.mrf.mxu0
    %v3499 = vadd.f32 0.0, %v3498
    %v3500 = vpop.f32.mrf.mxu0
    %v3501 = vadd.f32 0.0, %v3500
    %3502 = vdwg.mxu0
    %3503 = vmatpush.bf16.msra.mxu0 %v3428
    %3504 = vmatpush.bf16.msra.mxu0 %v3426
    %3505 = vmatpush.bf16.msra.mxu0 %v3424
    %3506 = vmatpush.bf16.msra.mxu0 %v3422
    %3507 = vmatpush.bf16.msra.mxu0 %v3420
    %3508 = vmatpush.bf16.msra.mxu0 %v3418
    %3509 = vmatpush.bf16.msra.mxu0 %v3416
    %3510 = vmatpush.bf16.msra.mxu0 %v3414
    %3511 = vmatmul.bf16.gmra.mxu0 %v3298
    %v3512 = vpop.f32.mrf.mxu0
    %v3513 = vadd.f32 %v3499, %v3512
    %v3514 = vpop.f32.mrf.mxu0
    %v3515 = vadd.f32 %v3501, %v3514
    %3516 = vdwg.mxu0
    %v3518 = vunpack.c.l.b16 %v3210
    %v3519 = vunpack.c.h.b16 %v3210
    %v3520 = vpack.c.b16 %v3518, %v3279
    %v3521 = vpack.c.b16 %v3519, %v3280
    %v3556 = vunpack.c.l.b16 %v3211
    %v3557 = vunpack.c.h.b16 %v3211
    %v3558 = vunpack.c.l.b16 %v3212
    %v3559 = vunpack.c.h.b16 %v3212
    %v3560 = vunpack.c.l.b16 %v3213
    %v3561 = vunpack.c.h.b16 %v3213
    %v3562 = vunpack.c.l.b16 %v3214
    %v3563 = vunpack.c.h.b16 %v3214
    %v3564 = vunpack.c.l.b16 %v3215
    %v3565 = vunpack.c.h.b16 %v3215
    %v3566 = vunpack.c.l.b16 %v3216
    %v3567 = vunpack.c.h.b16 %v3216
    %v3568 = vunpack.c.l.b16 %v3217
    %v3569 = vunpack.c.h.b16 %v3217
    %v3570 = vunpack.c.l.b16 %v3218
    %v3571 = vunpack.c.h.b16 %v3218
    %v3572 = vunpack.c.l.b16 %v3219
    %v3573 = vunpack.c.h.b16 %v3219
    %v3574 = vunpack.c.l.b16 %v3220
    %v3575 = vunpack.c.h.b16 %v3220
    %v3576 = vunpack.c.l.b16 %v3221
    %v3577 = vunpack.c.h.b16 %v3221
    %v3578 = vunpack.c.l.b16 %v3222
    %v3579 = vunpack.c.h.b16 %v3222
    %v3580 = vunpack.c.l.b16 %v3223
    %v3581 = vunpack.c.h.b16 %v3223
    %v3582 = vunpack.c.l.b16 %v3224
    %v3583 = vunpack.c.h.b16 %v3224
    %v3584 = vunpack.c.l.b16 %v3225
    %v3585 = vunpack.c.h.b16 %v3225
    %v3586 = vunpack.c.l.b16 %v3226
    %v3587 = vunpack.c.h.b16 %v3226
    %v3588 = vunpack.c.l.b16 %v3227
    %v3589 = vunpack.c.h.b16 %v3227
    %v3590 = vunpack.c.l.b16 %v3228
    %v3591 = vunpack.c.h.b16 %v3228
    %v3592 = vunpack.c.l.b16 %v3229
    %v3593 = vunpack.c.h.b16 %v3229
    %v3594 = vunpack.c.l.b16 %v3230
    %v3595 = vunpack.c.h.b16 %v3230
    %v3596 = vunpack.c.l.b16 %v3231
    %v3597 = vunpack.c.h.b16 %v3231
    %v3598 = vunpack.c.l.b16 %v3232
    %v3599 = vunpack.c.h.b16 %v3232
    %v3600 = vunpack.c.l.b16 %v3233
    %v3601 = vunpack.c.h.b16 %v3233
    %v3602 = vunpack.c.l.b16 %v3234
    %v3603 = vunpack.c.h.b16 %v3234
    %v3604 = vunpack.c.l.b16 %v3235
    %v3605 = vunpack.c.h.b16 %v3235
    %v3606 = vunpack.c.l.b16 %v3236
    %v3607 = vunpack.c.h.b16 %v3236
    %v3608 = vunpack.c.l.b16 %v3237
    %v3609 = vunpack.c.h.b16 %v3237
    %v3610 = vunpack.c.l.b16 %v3238
    %v3611 = vunpack.c.h.b16 %v3238
    %v3612 = vunpack.c.l.b16 %v3239
    %v3613 = vunpack.c.h.b16 %v3239
    %v3614 = vunpack.c.l.b16 %v3240
    %v3615 = vunpack.c.h.b16 %v3240
    %v3616 = vunpack.c.l.b16 %v3241
    %v3617 = vunpack.c.h.b16 %v3241
    %v3618 = vunpack.c.l.b16 %v3242
    %v3619 = vunpack.c.h.b16 %v3242
    %v3620 = vpack.c.b16 %v3558, %v3556
    %v3621 = vpack.c.b16 %v3559, %v3557
    %v3622 = vpack.c.b16 %v3562, %v3560
    %v3623 = vpack.c.b16 %v3563, %v3561
    %v3624 = vpack.c.b16 %v3566, %v3564
    %v3625 = vpack.c.b16 %v3567, %v3565
    %v3626 = vpack.c.b16 %v3570, %v3568
    %v3627 = vpack.c.b16 %v3571, %v3569
    %v3628 = vpack.c.b16 %v3574, %v3572
    %v3629 = vpack.c.b16 %v3575, %v3573
    %v3630 = vpack.c.b16 %v3578, %v3576
    %v3631 = vpack.c.b16 %v3579, %v3577
    %v3632 = vpack.c.b16 %v3582, %v3580
    %v3633 = vpack.c.b16 %v3583, %v3581
    %v3634 = vpack.c.b16 %v3586, %v3584
    %v3635 = vpack.c.b16 %v3587, %v3585
    %v3636 = vpack.c.b16 %v3590, %v3588
    %v3637 = vpack.c.b16 %v3591, %v3589
    %v3638 = vpack.c.b16 %v3594, %v3592
    %v3639 = vpack.c.b16 %v3595, %v3593
    %v3640 = vpack.c.b16 %v3598, %v3596
    %v3641 = vpack.c.b16 %v3599, %v3597
    %v3642 = vpack.c.b16 %v3602, %v3600
    %v3643 = vpack.c.b16 %v3603, %v3601
    %v3644 = vpack.c.b16 %v3606, %v3604
    %v3645 = vpack.c.b16 %v3607, %v3605
    %v3646 = vpack.c.b16 %v3610, %v3608
    %v3647 = vpack.c.b16 %v3611, %v3609
    %v3648 = vpack.c.b16 %v3614, %v3612
    %v3649 = vpack.c.b16 %v3615, %v3613
    %v3650 = vpack.c.b16 %v3618, %v3616
    %v3651 = vpack.c.b16 %v3619, %v3617
    %3684 = vmatpush.bf16.msra.mxu0 %v3634
    %3685 = vmatpush.bf16.msra.mxu0 %v3632
    %3686 = vmatpush.bf16.msra.mxu0 %v3630
    %3687 = vmatpush.bf16.msra.mxu0 %v3628
    %3688 = vmatpush.bf16.msra.mxu0 %v3626
    %3689 = vmatpush.bf16.msra.mxu0 %v3624
    %3690 = vmatpush.bf16.msra.mxu0 %v3622
    %3691 = vmatpush.bf16.msra.mxu0 %v3620
    %3692 = vmatmul.bf16.gmra.mxu0 %v3520
    %v3693 = vpop.f32.mrf.mxu0
    %v3694 = vadd.f32 %v3485, %v3693
    %v3695 = vpop.f32.mrf.mxu0
    %v3696 = vadd.f32 %v3487, %v3695
    %3697 = vdwg.mxu0
    %3698 = vmatpush.bf16.msra.mxu0 %v3650
    %3699 = vmatpush.bf16.msra.mxu0 %v3648
    %3700 = vmatpush.bf16.msra.mxu0 %v3646
    %3701 = vmatpush.bf16.msra.mxu0 %v3644
    %3702 = vmatpush.bf16.msra.mxu0 %v3642
    %3703 = vmatpush.bf16.msra.mxu0 %v3640
    %3704 = vmatpush.bf16.msra.mxu0 %v3638
    %3705 = vmatpush.bf16.msra.mxu0 %v3636
    %3706 = vmatmul.bf16.gmra.mxu0 %v3521
    %v3707 = vpop.f32.mrf.mxu0
    %v3708 = vadd.f32 %v3694, %v3707
    %v3709 = vpop.f32.mrf.mxu0
    %v3710 = vadd.f32 %v3696, %v3709
    %3711 = vdwg.mxu0
    %3712 = vmatpush.bf16.msra.mxu0 %v3635
    %3713 = vmatpush.bf16.msra.mxu0 %v3633
    %3714 = vmatpush.bf16.msra.mxu0 %v3631
    %3715 = vmatpush.bf16.msra.mxu0 %v3629
    %3716 = vmatpush.bf16.msra.mxu0 %v3627
    %3717 = vmatpush.bf16.msra.mxu0 %v3625
    %3718 = vmatpush.bf16.msra.mxu0 %v3623
    %3719 = vmatpush.bf16.msra.mxu0 %v3621
    %3720 = vmatmul.bf16.gmra.mxu0 %v3520
    %v3721 = vpop.f32.mrf.mxu0
    %v3722 = vadd.f32 %v3513, %v3721
    %v3723 = vpop.f32.mrf.mxu0
    %v3724 = vadd.f32 %v3515, %v3723
    %3725 = vdwg.mxu0
    %3726 = vmatpush.bf16.msra.mxu0 %v3651
    %3727 = vmatpush.bf16.msra.mxu0 %v3649
    %3728 = vmatpush.bf16.msra.mxu0 %v3647
    %3729 = vmatpush.bf16.msra.mxu0 %v3645
    %3730 = vmatpush.bf16.msra.mxu0 %v3643
    %3731 = vmatpush.bf16.msra.mxu0 %v3641
    %3732 = vmatpush.bf16.msra.mxu0 %v3639
    %3733 = vmatpush.bf16.msra.mxu0 %v3637
    %3734 = vmatmul.bf16.gmra.mxu0 %v3521
    %v3735 = vpop.f32.mrf.mxu0
    %v3736 = vadd.f32 %v3722, %v3735
    %v3737 = vpop.f32.mrf.mxu0
    %v3738 = vadd.f32 %v3724, %v3737
    %3739 = vdwg.mxu0
    %v3740 = vld [vmem:[#allocation3] sm:$0xee]
    %s3741 = scalar_lea.vmem [#allocation5], 512
    %v3742 = vld [vmem:[%s3741] sm:$0xff]
    %v3743 = vld [vmem:[%s3741 + $0x8] sm:$0xff]
    %v3744 = vld [vmem:[%s3741 + $0x10] sm:$0xff]
    %v3745 = vld [vmem:[%s3741 + $0x18] sm:$0xff]
    %v3746 = vld [vmem:[%s3741 + $0x20] sm:$0xff]
    %v3747 = vld [vmem:[%s3741 + $0x28] sm:$0xff]
    %v3748 = vld [vmem:[%s3741 + $0x30] sm:$0xff]
    %v3749 = vld [vmem:[%s3741 + $0x38] sm:$0xff]
    %v3750 = vld [vmem:[%s3741 + $0x40] sm:$0xff]
    %v3751 = vld [vmem:[%s3741 + $0x48] sm:$0xff]
    %v3752 = vld [vmem:[%s3741 + $0x50] sm:$0xff]
    %v3753 = vld [vmem:[%s3741 + $0x58] sm:$0xff]
    %v3754 = vld [vmem:[%s3741 + $0x60] sm:$0xff]
    %v3755 = vld [vmem:[%s3741 + $0x68] sm:$0xff]
    %v3756 = vld [vmem:[%s3741 + $0x70] sm:$0xff]
    %v3757 = vld [vmem:[%s3741 + $0x78] sm:$0xff]
    %v3758 = vld [vmem:[%s3741 + $0x80] sm:$0xff]
    %v3759 = vld [vmem:[%s3741 + $0x88] sm:$0xff]
    %v3760 = vld [vmem:[%s3741 + $0x90] sm:$0xff]
    %v3761 = vld [vmem:[%s3741 + $0x98] sm:$0xff]
    %v3762 = vld [vmem:[%s3741 + $0xa0] sm:$0xff]
    %v3763 = vld [vmem:[%s3741 + $0xa8] sm:$0xff]
    %v3764 = vld [vmem:[%s3741 + $0xb0] sm:$0xff]
    %v3765 = vld [vmem:[%s3741 + $0xb8] sm:$0xff]
    %v3766 = vld [vmem:[%s3741 + $0xc0] sm:$0xff]
    %v3767 = vld [vmem:[%s3741 + $0xc8] sm:$0xff]
    %v3768 = vld [vmem:[%s3741 + $0xd0] sm:$0xff]
    %v3769 = vld [vmem:[%s3741 + $0xd8] sm:$0xff]
    %v3770 = vld [vmem:[%s3741 + $0xe0] sm:$0xff]
    %v3771 = vld [vmem:[%s3741 + $0xe8] sm:$0xff]
    %v3772 = vld [vmem:[%s3741 + $0xf0] sm:$0xff]
    %v3773 = vld [vmem:[%s3741 + $0xf8] sm:$0xff]
    %v3775 = vunpack.c.l.b16 %v3740
    %v3776 = vunpack.c.h.b16 %v3740
    %v3777 = vpack.c.b16 %v3281, %v3775
    %v3778 = vpack.c.b16 %v3282, %v3776
    %v3779 = vrot.slane %v3777, 1
    %v3780 = vrot.slane %v3778, 1
    %v3815 = vunpack.c.l.b16 %v3742
    %v3816 = vunpack.c.h.b16 %v3742
    %v3817 = vunpack.c.l.b16 %v3743
    %v3818 = vunpack.c.h.b16 %v3743
    %v3819 = vunpack.c.l.b16 %v3744
    %v3820 = vunpack.c.h.b16 %v3744
    %v3821 = vunpack.c.l.b16 %v3745
    %v3822 = vunpack.c.h.b16 %v3745
    %v3823 = vunpack.c.l.b16 %v3746
    %v3824 = vunpack.c.h.b16 %v3746
    %v3825 = vunpack.c.l.b16 %v3747
    %v3826 = vunpack.c.h.b16 %v3747
    %v3827 = vunpack.c.l.b16 %v3748
    %v3828 = vunpack.c.h.b16 %v3748
    %v3829 = vunpack.c.l.b16 %v3749
    %v3830 = vunpack.c.h.b16 %v3749
    %v3831 = vunpack.c.l.b16 %v3750
    %v3832 = vunpack.c.h.b16 %v3750
    %v3833 = vunpack.c.l.b16 %v3751
    %v3834 = vunpack.c.h.b16 %v3751
    %v3835 = vunpack.c.l.b16 %v3752
    %v3836 = vunpack.c.h.b16 %v3752
    %v3837 = vunpack.c.l.b16 %v3753
    %v3838 = vunpack.c.h.b16 %v3753
    %v3839 = vunpack.c.l.b16 %v3754
    %v3840 = vunpack.c.h.b16 %v3754
    %v3841 = vunpack.c.l.b16 %v3755
    %v3842 = vunpack.c.h.b16 %v3755
    %v3843 = vunpack.c.l.b16 %v3756
    %v3844 = vunpack.c.h.b16 %v3756
    %v3845 = vunpack.c.l.b16 %v3757
    %v3846 = vunpack.c.h.b16 %v3757
    %v3847 = vunpack.c.l.b16 %v3758
    %v3848 = vunpack.c.h.b16 %v3758
    %v3849 = vunpack.c.l.b16 %v3759
    %v3850 = vunpack.c.h.b16 %v3759
    %v3851 = vunpack.c.l.b16 %v3760
    %v3852 = vunpack.c.h.b16 %v3760
    %v3853 = vunpack.c.l.b16 %v3761
    %v3854 = vunpack.c.h.b16 %v3761
    %v3855 = vunpack.c.l.b16 %v3762
    %v3856 = vunpack.c.h.b16 %v3762
    %v3857 = vunpack.c.l.b16 %v3763
    %v3858 = vunpack.c.h.b16 %v3763
    %v3859 = vunpack.c.l.b16 %v3764
    %v3860 = vunpack.c.h.b16 %v3764
    %v3861 = vunpack.c.l.b16 %v3765
    %v3862 = vunpack.c.h.b16 %v3765
    %v3863 = vunpack.c.l.b16 %v3766
    %v3864 = vunpack.c.h.b16 %v3766
    %v3865 = vunpack.c.l.b16 %v3767
    %v3866 = vunpack.c.h.b16 %v3767
    %v3867 = vunpack.c.l.b16 %v3768
    %v3868 = vunpack.c.h.b16 %v3768
    %v3869 = vunpack.c.l.b16 %v3769
    %v3870 = vunpack.c.h.b16 %v3769
    %v3871 = vunpack.c.l.b16 %v3770
    %v3872 = vunpack.c.h.b16 %v3770
    %v3873 = vunpack.c.l.b16 %v3771
    %v3874 = vunpack.c.h.b16 %v3771
    %v3875 = vunpack.c.l.b16 %v3772
    %v3876 = vunpack.c.h.b16 %v3772
    %v3877 = vunpack.c.l.b16 %v3773
    %v3878 = vunpack.c.h.b16 %v3773
    %v3879 = vpack.c.b16 %v3817, %v3815
    %v3880 = vpack.c.b16 %v3818, %v3816
    %v3881 = vpack.c.b16 %v3821, %v3819
    %v3882 = vpack.c.b16 %v3822, %v3820
    %v3883 = vpack.c.b16 %v3825, %v3823
    %v3884 = vpack.c.b16 %v3826, %v3824
    %v3885 = vpack.c.b16 %v3829, %v3827
    %v3886 = vpack.c.b16 %v3830, %v3828
    %v3887 = vpack.c.b16 %v3833, %v3831
    %v3888 = vpack.c.b16 %v3834, %v3832
    %v3889 = vpack.c.b16 %v3837, %v3835
    %v3890 = vpack.c.b16 %v3838, %v3836
    %v3891 = vpack.c.b16 %v3841, %v3839
    %v3892 = vpack.c.b16 %v3842, %v3840
    %v3893 = vpack.c.b16 %v3845, %v3843
    %v3894 = vpack.c.b16 %v3846, %v3844
    %v3895 = vpack.c.b16 %v3849, %v3847
    %v3896 = vpack.c.b16 %v3850, %v3848
    %v3897 = vpack.c.b16 %v3853, %v3851
    %v3898 = vpack.c.b16 %v3854, %v3852
    %v3899 = vpack.c.b16 %v3857, %v3855
    %v3900 = vpack.c.b16 %v3858, %v3856
    %v3901 = vpack.c.b16 %v3861, %v3859
    %v3902 = vpack.c.b16 %v3862, %v3860
    %v3903 = vpack.c.b16 %v3865, %v3863
    %v3904 = vpack.c.b16 %v3866, %v3864
    %v3905 = vpack.c.b16 %v3869, %v3867
    %v3906 = vpack.c.b16 %v3870, %v3868
    %v3907 = vpack.c.b16 %v3873, %v3871
    %v3908 = vpack.c.b16 %v3874, %v3872
    %v3909 = vpack.c.b16 %v3877, %v3875
    %v3910 = vpack.c.b16 %v3878, %v3876
    %3943 = vmatpush.bf16.msra.mxu0 %v3893
    %3944 = vmatpush.bf16.msra.mxu0 %v3891
    %3945 = vmatpush.bf16.msra.mxu0 %v3889
    %3946 = vmatpush.bf16.msra.mxu0 %v3887
    %3947 = vmatpush.bf16.msra.mxu0 %v3885
    %3948 = vmatpush.bf16.msra.mxu0 %v3883
    %3949 = vmatpush.bf16.msra.mxu0 %v3881
    %3950 = vmatpush.bf16.msra.mxu0 %v3879
    %3951 = vmatmul.bf16.gmra.mxu0 %v3779
    %v3952 = vpop.f32.mrf.mxu0
    %v3953 = vadd.f32 0.0, %v3952
    %v3954 = vpop.f32.mrf.mxu0
    %v3955 = vadd.f32 0.0, %v3954
    %3956 = vdwg.mxu0
    %3957 = vmatpush.bf16.msra.mxu0 %v3909
    %3958 = vmatpush.bf16.msra.mxu0 %v3907
    %3959 = vmatpush.bf16.msra.mxu0 %v3905
    %3960 = vmatpush.bf16.msra.mxu0 %v3903
    %3961 = vmatpush.bf16.msra.mxu0 %v3901
    %3962 = vmatpush.bf16.msra.mxu0 %v3899
    %3963 = vmatpush.bf16.msra.mxu0 %v3897
    %3964 = vmatpush.bf16.msra.mxu0 %v3895
    %3965 = vmatmul.bf16.gmra.mxu0 %v3780
    %v3966 = vpop.f32.mrf.mxu0
    %v3967 = vadd.f32 %v3953, %v3966
    %v3968 = vpop.f32.mrf.mxu0
    %v3969 = vadd.f32 %v3955, %v3968
    %3970 = vdwg.mxu0
    %3971 = vmatpush.bf16.msra.mxu0 %v3894
    %3972 = vmatpush.bf16.msra.mxu0 %v3892
    %3973 = vmatpush.bf16.msra.mxu0 %v3890
    %3974 = vmatpush.bf16.msra.mxu0 %v3888
    %3975 = vmatpush.bf16.msra.mxu0 %v3886
    %3976 = vmatpush.bf16.msra.mxu0 %v3884
    %3977 = vmatpush.bf16.msra.mxu0 %v3882
    %3978 = vmatpush.bf16.msra.mxu0 %v3880
    %3979 = vmatmul.bf16.gmra.mxu0 %v3779
    %v3980 = vpop.f32.mrf.mxu0
    %v3981 = vadd.f32 0.0, %v3980
    %v3982 = vpop.f32.mrf.mxu0
    %v3983 = vadd.f32 0.0, %v3982
    %3984 = vdwg.mxu0
    %3985 = vmatpush.bf16.msra.mxu0 %v3910
    %3986 = vmatpush.bf16.msra.mxu0 %v3908
    %3987 = vmatpush.bf16.msra.mxu0 %v3906
    %3988 = vmatpush.bf16.msra.mxu0 %v3904
    %3989 = vmatpush.bf16.msra.mxu0 %v3902
    %3990 = vmatpush.bf16.msra.mxu0 %v3900
    %3991 = vmatpush.bf16.msra.mxu0 %v3898
    %3992 = vmatpush.bf16.msra.mxu0 %v3896
    %3993 = vmatmul.bf16.gmra.mxu0 %v3780
    %v3994 = vpop.f32.mrf.mxu0
    %v3995 = vadd.f32 %v3981, %v3994
    %v3996 = vpop.f32.mrf.mxu0
    %v3997 = vadd.f32 %v3983, %v3996
    %3998 = vdwg.mxu0
    %v3999 = vadd.f32 %v3708, %v3967
    %v4000 = vadd.f32 %v3736, %v3995
    %v4001 = vadd.f32 %v3710, %v3969
    %v4002 = vadd.f32 %v3738, %v3997
    %v4003 = vld [vmem:[#allocation3] sm:$0xee]
    %v4004 = vld [vmem:[#allocation3 + $0x8] sm:$0xff]
    %v4005 = vld [vmem:[#allocation3 + $0x10] sm:$0x11]
    %s4006 = scalar_lea.vmem [#allocation5], 768
    %v4007 = vld [vmem:[%s4006] sm:$0xff]
    %v4008 = vld [vmem:[%s4006 + $0x8] sm:$0xff]
    %v4009 = vld [vmem:[%s4006 + $0x10] sm:$0xff]
    %v4010 = vld [vmem:[%s4006 + $0x18] sm:$0xff]
    %v4011 = vld [vmem:[%s4006 + $0x20] sm:$0xff]
    %v4012 = vld [vmem:[%s4006 + $0x28] sm:$0xff]
    %v4013 = vld [vmem:[%s4006 + $0x30] sm:$0xff]
    %v4014 = vld [vmem:[%s4006 + $0x38] sm:$0xff]
    %v4015 = vld [vmem:[%s4006 + $0x40] sm:$0xff]
    %v4016 = vld [vmem:[%s4006 + $0x48] sm:$0xff]
    %v4017 = vld [vmem:[%s4006 + $0x50] sm:$0xff]
    %v4018 = vld [vmem:[%s4006 + $0x58] sm:$0xff]
    %v4019 = vld [vmem:[%s4006 + $0x60] sm:$0xff]
    %v4020 = vld [vmem:[%s4006 + $0x68] sm:$0xff]
    %v4021 = vld [vmem:[%s4006 + $0x70] sm:$0xff]
    %v4022 = vld [vmem:[%s4006 + $0x78] sm:$0xff]
    %v4023 = vld [vmem:[%s4006 + $0x80] sm:$0xff]
    %v4024 = vld [vmem:[%s4006 + $0x88] sm:$0xff]
    %v4025 = vld [vmem:[%s4006 + $0x90] sm:$0xff]
    %v4026 = vld [vmem:[%s4006 + $0x98] sm:$0xff]
    %v4027 = vld [vmem:[%s4006 + $0xa0] sm:$0xff]
    %v4028 = vld [vmem:[%s4006 + $0xa8] sm:$0xff]
    %v4029 = vld [vmem:[%s4006 + $0xb0] sm:$0xff]
    %v4030 = vld [vmem:[%s4006 + $0xb8] sm:$0xff]
    %v4031 = vld [vmem:[%s4006 + $0xc0] sm:$0xff]
    %v4032 = vld [vmem:[%s4006 + $0xc8] sm:$0xff]
    %v4033 = vld [vmem:[%s4006 + $0xd0] sm:$0xff]
    %v4034 = vld [vmem:[%s4006 + $0xd8] sm:$0xff]
    %v4035 = vld [vmem:[%s4006 + $0xe0] sm:$0xff]
    %v4036 = vld [vmem:[%s4006 + $0xe8] sm:$0xff]
    %v4037 = vld [vmem:[%s4006 + $0xf0] sm:$0xff]
    %v4038 = vld [vmem:[%s4006 + $0xf8] sm:$0xff]
    %v4042 = vunpack.c.l.b16 %v4003
    %v4043 = vunpack.c.h.b16 %v4003
    %v4044 = vunpack.c.l.b16 %v4004
    %v4045 = vunpack.c.h.b16 %v4004
    %v4046 = vunpack.c.l.b16 %v4005
    %v4047 = vunpack.c.h.b16 %v4005
    %v4048 = vpack.c.b16 %v4044, %v4042
    %v4049 = vpack.c.b16 %v4045, %v4043
    %v4050 = vpack.c.b16 %v4046, %v4046
    %v4051 = vpack.c.b16 %v4047, %v4047
    %v4053 = vshrl.u32 %v4048, 16
    %v4055 = vrot.slane %v4053, 1
    %v4056 = vshll.u32 %v4048, 16
    %v4058 = vrot.slane %v4056, 2
    %v4059 = vor.u32 %v4055, %v4058
    %v4061 = vshll.u32 %v4050, 16
    %v4063 = vrot.slane %v4061, 2
    %v4064 = vsel %vm550, %v4059, %v4063
    %v4066 = vshrl.u32 %v4049, 16
    %v4068 = vrot.slane %v4066, 1
    %v4069 = vshll.u32 %v4049, 16
    %v4071 = vrot.slane %v4069, 2
    %v4072 = vor.u32 %v4068, %v4071
    %v4074 = vshll.u32 %v4051, 16
    %v4076 = vrot.slane %v4074, 2
    %v4077 = vsel %vm550, %v4072, %v4076
    %v4112 = vunpack.c.l.b16 %v4007
    %v4113 = vunpack.c.h.b16 %v4007
    %v4114 = vunpack.c.l.b16 %v4008
    %v4115 = vunpack.c.h.b16 %v4008
    %v4116 = vunpack.c.l.b16 %v4009
    %v4117 = vunpack.c.h.b16 %v4009
    %v4118 = vunpack.c.l.b16 %v4010
    %v4119 = vunpack.c.h.b16 %v4010
    %v4120 = vunpack.c.l.b16 %v4011
    %v4121 = vunpack.c.h.b16 %v4011
    %v4122 = vunpack.c.l.b16 %v4012
    %v4123 = vunpack.c.h.b16 %v4012
    %v4124 = vunpack.c.l.b16 %v4013
    %v4125 = vunpack.c.h.b16 %v4013
    %v4126 = vunpack.c.l.b16 %v4014
    %v4127 = vunpack.c.h.b16 %v4014
    %v4128 = vunpack.c.l.b16 %v4015
    %v4129 = vunpack.c.h.b16 %v4015
    %v4130 = vunpack.c.l.b16 %v4016
    %v4131 = vunpack.c.h.b16 %v4016
    %v4132 = vunpack.c.l.b16 %v4017
    %v4133 = vunpack.c.h.b16 %v4017
    %v4134 = vunpack.c.l.b16 %v4018
    %v4135 = vunpack.c.h.b16 %v4018
    %v4136 = vunpack.c.l.b16 %v4019
    %v4137 = vunpack.c.h.b16 %v4019
    %v4138 = vunpack.c.l.b16 %v4020
    %v4139 = vunpack.c.h.b16 %v4020
    %v4140 = vunpack.c.l.b16 %v4021
    %v4141 = vunpack.c.h.b16 %v4021
    %v4142 = vunpack.c.l.b16 %v4022
    %v4143 = vunpack.c.h.b16 %v4022
    %v4144 = vunpack.c.l.b16 %v4023
    %v4145 = vunpack.c.h.b16 %v4023
    %v4146 = vunpack.c.l.b16 %v4024
    %v4147 = vunpack.c.h.b16 %v4024
    %v4148 = vunpack.c.l.b16 %v4025
    %v4149 = vunpack.c.h.b16 %v4025
    %v4150 = vunpack.c.l.b16 %v4026
    %v4151 = vunpack.c.h.b16 %v4026
    %v4152 = vunpack.c.l.b16 %v4027
    %v4153 = vunpack.c.h.b16 %v4027
    %v4154 = vunpack.c.l.b16 %v4028
    %v4155 = vunpack.c.h.b16 %v4028
    %v4156 = vunpack.c.l.b16 %v4029
    %v4157 = vunpack.c.h.b16 %v4029
    %v4158 = vunpack.c.l.b16 %v4030
    %v4159 = vunpack.c.h.b16 %v4030
    %v4160 = vunpack.c.l.b16 %v4031
    %v4161 = vunpack.c.h.b16 %v4031
    %v4162 = vunpack.c.l.b16 %v4032
    %v4163 = vunpack.c.h.b16 %v4032
    %v4164 = vunpack.c.l.b16 %v4033
    %v4165 = vunpack.c.h.b16 %v4033
    %v4166 = vunpack.c.l.b16 %v4034
    %v4167 = vunpack.c.h.b16 %v4034
    %v4168 = vunpack.c.l.b16 %v4035
    %v4169 = vunpack.c.h.b16 %v4035
    %v4170 = vunpack.c.l.b16 %v4036
    %v4171 = vunpack.c.h.b16 %v4036
    %v4172 = vunpack.c.l.b16 %v4037
    %v4173 = vunpack.c.h.b16 %v4037
    %v4174 = vunpack.c.l.b16 %v4038
    %v4175 = vunpack.c.h.b16 %v4038
    %v4176 = vpack.c.b16 %v4114, %v4112
    %v4177 = vpack.c.b16 %v4115, %v4113
    %v4178 = vpack.c.b16 %v4118, %v4116
    %v4179 = vpack.c.b16 %v4119, %v4117
    %v4180 = vpack.c.b16 %v4122, %v4120
    %v4181 = vpack.c.b16 %v4123, %v4121
    %v4182 = vpack.c.b16 %v4126, %v4124
    %v4183 = vpack.c.b16 %v4127, %v4125
    %v4184 = vpack.c.b16 %v4130, %v4128
    %v4185 = vpack.c.b16 %v4131, %v4129
    %v4186 = vpack.c.b16 %v4134, %v4132
    %v4187 = vpack.c.b16 %v4135, %v4133
    %v4188 = vpack.c.b16 %v4138, %v4136
    %v4189 = vpack.c.b16 %v4139, %v4137
    %v4190 = vpack.c.b16 %v4142, %v4140
    %v4191 = vpack.c.b16 %v4143, %v4141
    %v4192 = vpack.c.b16 %v4146, %v4144
    %v4193 = vpack.c.b16 %v4147, %v4145
    %v4194 = vpack.c.b16 %v4150, %v4148
    %v4195 = vpack.c.b16 %v4151, %v4149
    %v4196 = vpack.c.b16 %v4154, %v4152
    %v4197 = vpack.c.b16 %v4155, %v4153
    %v4198 = vpack.c.b16 %v4158, %v4156
    %v4199 = vpack.c.b16 %v4159, %v4157
    %v4200 = vpack.c.b16 %v4162, %v4160
    %v4201 = vpack.c.b16 %v4163, %v4161
    %v4202 = vpack.c.b16 %v4166, %v4164
    %v4203 = vpack.c.b16 %v4167, %v4165
    %v4204 = vpack.c.b16 %v4170, %v4168
    %v4205 = vpack.c.b16 %v4171, %v4169
    %v4206 = vpack.c.b16 %v4174, %v4172
    %v4207 = vpack.c.b16 %v4175, %v4173
    %4240 = vmatpush.bf16.msra.mxu0 %v4190
    %4241 = vmatpush.bf16.msra.mxu0 %v4188
    %4242 = vmatpush.bf16.msra.mxu0 %v4186
    %4243 = vmatpush.bf16.msra.mxu0 %v4184
    %4244 = vmatpush.bf16.msra.mxu0 %v4182
    %4245 = vmatpush.bf16.msra.mxu0 %v4180
    %4246 = vmatpush.bf16.msra.mxu0 %v4178
    %4247 = vmatpush.bf16.msra.mxu0 %v4176
    %4248 = vmatmul.bf16.gmra.mxu0 %v4064
    %v4249 = vpop.f32.mrf.mxu0
    %v4250 = vadd.f32 0.0, %v4249
    %v4251 = vpop.f32.mrf.mxu0
    %v4252 = vadd.f32 0.0, %v4251
    %4253 = vdwg.mxu0
    %4254 = vmatpush.bf16.msra.mxu0 %v4206
    %4255 = vmatpush.bf16.msra.mxu0 %v4204
    %4256 = vmatpush.bf16.msra.mxu0 %v4202
    %4257 = vmatpush.bf16.msra.mxu0 %v4200
    %4258 = vmatpush.bf16.msra.mxu0 %v4198
    %4259 = vmatpush.bf16.msra.mxu0 %v4196
    %4260 = vmatpush.bf16.msra.mxu0 %v4194
    %4261 = vmatpush.bf16.msra.mxu0 %v4192
    %4262 = vmatmul.bf16.gmra.mxu0 %v4077
    %v4263 = vpop.f32.mrf.mxu0
    %v4264 = vadd.f32 %v4250, %v4263
    %v4265 = vpop.f32.mrf.mxu0
    %v4266 = vadd.f32 %v4252, %v4265
    %4267 = vdwg.mxu0
    %4268 = vmatpush.bf16.msra.mxu0 %v4191
    %4269 = vmatpush.bf16.msra.mxu0 %v4189
    %4270 = vmatpush.bf16.msra.mxu0 %v4187
    %4271 = vmatpush.bf16.msra.mxu0 %v4185
    %4272 = vmatpush.bf16.msra.mxu0 %v4183
    %4273 = vmatpush.bf16.msra.mxu0 %v4181
    %4274 = vmatpush.bf16.msra.mxu0 %v4179
    %4275 = vmatpush.bf16.msra.mxu0 %v4177
    %4276 = vmatmul.bf16.gmra.mxu0 %v4064
    %v4277 = vpop.f32.mrf.mxu0
    %v4278 = vadd.f32 0.0, %v4277
    %v4279 = vpop.f32.mrf.mxu0
    %v4280 = vadd.f32 0.0, %v4279
    %4281 = vdwg.mxu0
    %4282 = vmatpush.bf16.msra.mxu0 %v4207
    %4283 = vmatpush.bf16.msra.mxu0 %v4205
    %4284 = vmatpush.bf16.msra.mxu0 %v4203
    %4285 = vmatpush.bf16.msra.mxu0 %v4201
    %4286 = vmatpush.bf16.msra.mxu0 %v4199
    %4287 = vmatpush.bf16.msra.mxu0 %v4197
    %4288 = vmatpush.bf16.msra.mxu0 %v4195
    %4289 = vmatpush.bf16.msra.mxu0 %v4193
    %4290 = vmatmul.bf16.gmra.mxu0 %v4077
    %v4291 = vpop.f32.mrf.mxu0
    %v4292 = vadd.f32 %v4278, %v4291
    %v4293 = vpop.f32.mrf.mxu0
    %v4294 = vadd.f32 %v4280, %v4293
    %4295 = vdwg.mxu0
    %v4296 = vadd.f32 %v3999, %v4264
    %v4297 = vadd.f32 %v4000, %v4292
    %v4298 = vadd.f32 %v4001, %v4266
    %v4299 = vadd.f32 %v4002, %v4294
    %v4300 = vld [vmem:[%s3203] sm:$0xff]
    %v4301 = vld [vmem:[%s3203 + $0x8] sm:$0x77]
    %v4302 = vld [vmem:[%s3203 + $0x8] sm:$0xff]
    %v4305 = vunpack.c.l.b16 %v4300
    %v4306 = vunpack.c.h.b16 %v4300
    %v4307 = vunpack.c.l.b16 %v4302
    %v4308 = vunpack.c.h.b16 %v4302
    %v4309 = vpack.c.b16 %v4307, %v4305
    %v4310 = vpack.c.b16 %v4308, %v4306
    %v4312 = vshrl.u32 %v4309, 16
    %v4314 = vshll.u32 %v4309, 16
    %v4316 = vrot.slane %v4314, 1
    %v4317 = vor.u32 %v4312, %v4316
    %v4319 = vshrl.u32 %v4310, 16
    %v4321 = vshll.u32 %v4310, 16
    %v4323 = vrot.slane %v4321, 1
    %v4324 = vor.u32 %v4319, %v4323
    %4327 = vmatpush.bf16.msra.mxu0 %v3411
    %4328 = vmatpush.bf16.msra.mxu0 %v3409
    %4329 = vmatpush.bf16.msra.mxu0 %v3407
    %4330 = vmatpush.bf16.msra.mxu0 %v3405
    %4331 = vmatpush.bf16.msra.mxu0 %v3403
    %4332 = vmatpush.bf16.msra.mxu0 %v3401
    %4333 = vmatpush.bf16.msra.mxu0 %v3399
    %4334 = vmatpush.bf16.msra.mxu0 %v3397
    %4335 = vmatmul.bf16.gmra.mxu0 %v4317
    %v4336 = vpop.f32.mrf.mxu0
    %v4337 = vadd.f32 0.0, %v4336
    %v4338 = vpop.f32.mrf.mxu0
    %v4339 = vadd.f32 0.0, %v4338
    %4340 = vdwg.mxu0
    %4341 = vmatpush.bf16.msra.mxu0 %v3427
    %4342 = vmatpush.bf16.msra.mxu0 %v3425
    %4343 = vmatpush.bf16.msra.mxu0 %v3423
    %4344 = vmatpush.bf16.msra.mxu0 %v3421
    %4345 = vmatpush.bf16.msra.mxu0 %v3419
    %4346 = vmatpush.bf16.msra.mxu0 %v3417
    %4347 = vmatpush.bf16.msra.mxu0 %v3415
    %4348 = vmatpush.bf16.msra.mxu0 %v3413
    %4349 = vmatmul.bf16.gmra.mxu0 %v4324
    %v4350 = vpop.f32.mrf.mxu0
    %v4351 = vadd.f32 %v4337, %v4350
    %v4352 = vpop.f32.mrf.mxu0
    %v4353 = vadd.f32 %v4339, %v4352
    %4354 = vdwg.mxu0
    %4355 = vmatpush.bf16.msra.mxu0 %v3412
    %4356 = vmatpush.bf16.msra.mxu0 %v3410
    %4357 = vmatpush.bf16.msra.mxu0 %v3408
    %4358 = vmatpush.bf16.msra.mxu0 %v3406
    %4359 = vmatpush.bf16.msra.mxu0 %v3404
    %4360 = vmatpush.bf16.msra.mxu0 %v3402
    %4361 = vmatpush.bf16.msra.mxu0 %v3400
    %4362 = vmatpush.bf16.msra.mxu0 %v3398
    %4363 = vmatmul.bf16.gmra.mxu0 %v4317
    %v4364 = vpop.f32.mrf.mxu0
    %v4365 = vadd.f32 0.0, %v4364
    %v4366 = vpop.f32.mrf.mxu0
    %v4367 = vadd.f32 0.0, %v4366
    %4368 = vdwg.mxu0
    %4369 = vmatpush.bf16.msra.mxu0 %v3428
    %4370 = vmatpush.bf16.msra.mxu0 %v3426
    %4371 = vmatpush.bf16.msra.mxu0 %v3424
    %4372 = vmatpush.bf16.msra.mxu0 %v3422
    %4373 = vmatpush.bf16.msra.mxu0 %v3420
    %4374 = vmatpush.bf16.msra.mxu0 %v3418
    %4375 = vmatpush.bf16.msra.mxu0 %v3416
    %4376 = vmatpush.bf16.msra.mxu0 %v3414
    %4377 = vmatmul.bf16.gmra.mxu0 %v4324
    %v4378 = vpop.f32.mrf.mxu0
    %v4379 = vadd.f32 %v4365, %v4378
    %v4380 = vpop.f32.mrf.mxu0
    %v4381 = vadd.f32 %v4367, %v4380
    %4382 = vdwg.mxu0
    %v4384 = vunpack.c.l.b16 %v4301
    %v4385 = vunpack.c.h.b16 %v4301
    %v4386 = vpack.c.b16 %v4384, %v4305
    %v4387 = vpack.c.b16 %v4385, %v4306
    %4390 = vmatpush.bf16.msra.mxu0 %v3634
    %4391 = vmatpush.bf16.msra.mxu0 %v3632
    %4392 = vmatpush.bf16.msra.mxu0 %v3630
    %4393 = vmatpush.bf16.msra.mxu0 %v3628
    %4394 = vmatpush.bf16.msra.mxu0 %v3626
    %4395 = vmatpush.bf16.msra.mxu0 %v3624
    %4396 = vmatpush.bf16.msra.mxu0 %v3622
    %4397 = vmatpush.bf16.msra.mxu0 %v3620
    %4398 = vmatmul.bf16.gmra.mxu0 %v4386
    %v4399 = vpop.f32.mrf.mxu0
    %v4400 = vadd.f32 %v4351, %v4399
    %v4401 = vpop.f32.mrf.mxu0
    %v4402 = vadd.f32 %v4353, %v4401
    %4403 = vdwg.mxu0
    %4404 = vmatpush.bf16.msra.mxu0 %v3650
    %4405 = vmatpush.bf16.msra.mxu0 %v3648
    %4406 = vmatpush.bf16.msra.mxu0 %v3646
    %4407 = vmatpush.bf16.msra.mxu0 %v3644
    %4408 = vmatpush.bf16.msra.mxu0 %v3642
    %4409 = vmatpush.bf16.msra.mxu0 %v3640
    %4410 = vmatpush.bf16.msra.mxu0 %v3638
    %4411 = vmatpush.bf16.msra.mxu0 %v3636
    %4412 = vmatmul.bf16.gmra.mxu0 %v4387
    %v4413 = vpop.f32.mrf.mxu0
    %v4414 = vadd.f32 %v4400, %v4413
    %v4415 = vpop.f32.mrf.mxu0
    %v4416 = vadd.f32 %v4402, %v4415
    %4417 = vdwg.mxu0
    %4418 = vmatpush.bf16.msra.mxu0 %v3635
    %4419 = vmatpush.bf16.msra.mxu0 %v3633
    %4420 = vmatpush.bf16.msra.mxu0 %v3631
    %4421 = vmatpush.bf16.msra.mxu0 %v3629
    %4422 = vmatpush.bf16.msra.mxu0 %v3627
    %4423 = vmatpush.bf16.msra.mxu0 %v3625
    %4424 = vmatpush.bf16.msra.mxu0 %v3623
    %4425 = vmatpush.bf16.msra.mxu0 %v3621
    %4426 = vmatmul.bf16.gmra.mxu0 %v4386
    %v4427 = vpop.f32.mrf.mxu0
    %v4428 = vadd.f32 %v4379, %v4427
    %v4429 = vpop.f32.mrf.mxu0
    %v4430 = vadd.f32 %v4381, %v4429
    %4431 = vdwg.mxu0
    %4432 = vmatpush.bf16.msra.mxu0 %v3651
    %4433 = vmatpush.bf16.msra.mxu0 %v3649
    %4434 = vmatpush.bf16.msra.mxu0 %v3647
    %4435 = vmatpush.bf16.msra.mxu0 %v3645
    %4436 = vmatpush.bf16.msra.mxu0 %v3643
    %4437 = vmatpush.bf16.msra.mxu0 %v3641
    %4438 = vmatpush.bf16.msra.mxu0 %v3639
    %4439 = vmatpush.bf16.msra.mxu0 %v3637
    %4440 = vmatmul.bf16.gmra.mxu0 %v4387
    %v4441 = vpop.f32.mrf.mxu0
    %v4442 = vadd.f32 %v4428, %v4441
    %v4443 = vpop.f32.mrf.mxu0
    %v4444 = vadd.f32 %v4430, %v4443
    %4445 = vdwg.mxu0
    %v4446 = vld [vmem:[%s3203] sm:$0xee]
    %v4448 = vunpack.c.l.b16 %v4446
    %v4449 = vunpack.c.h.b16 %v4446
    %v4450 = vpack.c.b16 %v4307, %v4448
    %v4451 = vpack.c.b16 %v4308, %v4449
    %v4452 = vrot.slane %v4450, 1
    %v4453 = vrot.slane %v4451, 1
    %4456 = vmatpush.bf16.msra.mxu0 %v3893
    %4457 = vmatpush.bf16.msra.mxu0 %v3891
    %4458 = vmatpush.bf16.msra.mxu0 %v3889
    %4459 = vmatpush.bf16.msra.mxu0 %v3887
    %4460 = vmatpush.bf16.msra.mxu0 %v3885
    %4461 = vmatpush.bf16.msra.mxu0 %v3883
    %4462 = vmatpush.bf16.msra.mxu0 %v3881
    %4463 = vmatpush.bf16.msra.mxu0 %v3879
    %4464 = vmatmul.bf16.gmra.mxu0 %v4452
    %v4465 = vpop.f32.mrf.mxu0
    %v4466 = vadd.f32 0.0, %v4465
    %v4467 = vpop.f32.mrf.mxu0
    %v4468 = vadd.f32 0.0, %v4467
    %4469 = vdwg.mxu0
    %4470 = vmatpush.bf16.msra.mxu0 %v3909
    %4471 = vmatpush.bf16.msra.mxu0 %v3907
    %4472 = vmatpush.bf16.msra.mxu0 %v3905
    %4473 = vmatpush.bf16.msra.mxu0 %v3903
    %4474 = vmatpush.bf16.msra.mxu0 %v3901
    %4475 = vmatpush.bf16.msra.mxu0 %v3899
    %4476 = vmatpush.bf16.msra.mxu0 %v3897
    %4477 = vmatpush.bf16.msra.mxu0 %v3895
    %4478 = vmatmul.bf16.gmra.mxu0 %v4453
    %v4479 = vpop.f32.mrf.mxu0
    %v4480 = vadd.f32 %v4466, %v4479
    %v4481 = vpop.f32.mrf.mxu0
    %v4482 = vadd.f32 %v4468, %v4481
    %4483 = vdwg.mxu0
    %4484 = vmatpush.bf16.msra.mxu0 %v3894
    %4485 = vmatpush.bf16.msra.mxu0 %v3892
    %4486 = vmatpush.bf16.msra.mxu0 %v3890
    %4487 = vmatpush.bf16.msra.mxu0 %v3888
    %4488 = vmatpush.bf16.msra.mxu0 %v3886
    %4489 = vmatpush.bf16.msra.mxu0 %v3884
    %4490 = vmatpush.bf16.msra.mxu0 %v3882
    %4491 = vmatpush.bf16.msra.mxu0 %v3880
    %4492 = vmatmul.bf16.gmra.mxu0 %v4452
    %v4493 = vpop.f32.mrf.mxu0
    %v4494 = vadd.f32 0.0, %v4493
    %v4495 = vpop.f32.mrf.mxu0
    %v4496 = vadd.f32 0.0, %v4495
    %4497 = vdwg.mxu0
    %4498 = vmatpush.bf16.msra.mxu0 %v3910
    %4499 = vmatpush.bf16.msra.mxu0 %v3908
    %4500 = vmatpush.bf16.msra.mxu0 %v3906
    %4501 = vmatpush.bf16.msra.mxu0 %v3904
    %4502 = vmatpush.bf16.msra.mxu0 %v3902
    %4503 = vmatpush.bf16.msra.mxu0 %v3900
    %4504 = vmatpush.bf16.msra.mxu0 %v3898
    %4505 = vmatpush.bf16.msra.mxu0 %v3896
    %4506 = vmatmul.bf16.gmra.mxu0 %v4453
    %v4507 = vpop.f32.mrf.mxu0
    %v4508 = vadd.f32 %v4494, %v4507
    %v4509 = vpop.f32.mrf.mxu0
    %v4510 = vadd.f32 %v4496, %v4509
    %4511 = vdwg.mxu0
    %v4512 = vadd.f32 %v4414, %v4480
    %v4513 = vadd.f32 %v4442, %v4508
    %v4514 = vadd.f32 %v4416, %v4482
    %v4515 = vadd.f32 %v4444, %v4510
    %v4516 = vld [vmem:[%s3203] sm:$0xee]
    %v4517 = vld [vmem:[%s3203 + $0x8] sm:$0xff]
    %v4518 = vld [vmem:[%s3203 + $0x10] sm:$0x11]
    %v4522 = vunpack.c.l.b16 %v4516
    %v4523 = vunpack.c.h.b16 %v4516
    %v4524 = vunpack.c.l.b16 %v4517
    %v4525 = vunpack.c.h.b16 %v4517
    %v4526 = vunpack.c.l.b16 %v4518
    %v4527 = vunpack.c.h.b16 %v4518
    %v4528 = vpack.c.b16 %v4524, %v4522
    %v4529 = vpack.c.b16 %v4525, %v4523
    %v4530 = vpack.c.b16 %v4526, %v4526
    %v4531 = vpack.c.b16 %v4527, %v4527
    %v4533 = vshrl.u32 %v4528, 16
    %v4535 = vrot.slane %v4533, 1
    %v4536 = vshll.u32 %v4528, 16
    %v4538 = vrot.slane %v4536, 2
    %v4539 = vor.u32 %v4535, %v4538
    %v4541 = vshll.u32 %v4530, 16
    %v4543 = vrot.slane %v4541, 2
    %v4544 = vsel %vm550, %v4539, %v4543
    %v4546 = vshrl.u32 %v4529, 16
    %v4548 = vrot.slane %v4546, 1
    %v4549 = vshll.u32 %v4529, 16
    %v4551 = vrot.slane %v4549, 2
    %v4552 = vor.u32 %v4548, %v4551
    %v4554 = vshll.u32 %v4531, 16
    %v4556 = vrot.slane %v4554, 2
    %v4557 = vsel %vm550, %v4552, %v4556
    %4560 = vmatpush.bf16.msra.mxu0 %v4190
    %4561 = vmatpush.bf16.msra.mxu0 %v4188
    %4562 = vmatpush.bf16.msra.mxu0 %v4186
    %4563 = vmatpush.bf16.msra.mxu0 %v4184
    %4564 = vmatpush.bf16.msra.mxu0 %v4182
    %4565 = vmatpush.bf16.msra.mxu0 %v4180
    %4566 = vmatpush.bf16.msra.mxu0 %v4178
    %4567 = vmatpush.bf16.msra.mxu0 %v4176
    %4568 = vmatmul.bf16.gmra.mxu0 %v4544
    %v4569 = vpop.f32.mrf.mxu0
    %v4570 = vadd.f32 0.0, %v4569
    %v4571 = vpop.f32.mrf.mxu0
    %v4572 = vadd.f32 0.0, %v4571
    %4573 = vdwg.mxu0
    %4574 = vmatpush.bf16.msra.mxu0 %v4206
    %4575 = vmatpush.bf16.msra.mxu0 %v4204
    %4576 = vmatpush.bf16.msra.mxu0 %v4202
    %4577 = vmatpush.bf16.msra.mxu0 %v4200
    %4578 = vmatpush.bf16.msra.mxu0 %v4198
    %4579 = vmatpush.bf16.msra.mxu0 %v4196
    %4580 = vmatpush.bf16.msra.mxu0 %v4194
    %4581 = vmatpush.bf16.msra.mxu0 %v4192
    %4582 = vmatmul.bf16.gmra.mxu0 %v4557
    %v4583 = vpop.f32.mrf.mxu0
    %v4584 = vadd.f32 %v4570, %v4583
    %v4585 = vpop.f32.mrf.mxu0
    %v4586 = vadd.f32 %v4572, %v4585
    %4587 = vdwg.mxu0
    %4588 = vmatpush.bf16.msra.mxu0 %v4191
    %4589 = vmatpush.bf16.msra.mxu0 %v4189
    %4590 = vmatpush.bf16.msra.mxu0 %v4187
    %4591 = vmatpush.bf16.msra.mxu0 %v4185
    %4592 = vmatpush.bf16.msra.mxu0 %v4183
    %4593 = vmatpush.bf16.msra.mxu0 %v4181
    %4594 = vmatpush.bf16.msra.mxu0 %v4179
    %4595 = vmatpush.bf16.msra.mxu0 %v4177
    %4596 = vmatmul.bf16.gmra.mxu0 %v4544
    %v4597 = vpop.f32.mrf.mxu0
    %v4598 = vadd.f32 0.0, %v4597
    %v4599 = vpop.f32.mrf.mxu0
    %v4600 = vadd.f32 0.0, %v4599
    %4601 = vdwg.mxu0
    %4602 = vmatpush.bf16.msra.mxu0 %v4207
    %4603 = vmatpush.bf16.msra.mxu0 %v4205
    %4604 = vmatpush.bf16.msra.mxu0 %v4203
    %4605 = vmatpush.bf16.msra.mxu0 %v4201
    %4606 = vmatpush.bf16.msra.mxu0 %v4199
    %4607 = vmatpush.bf16.msra.mxu0 %v4197
    %4608 = vmatpush.bf16.msra.mxu0 %v4195
    %4609 = vmatpush.bf16.msra.mxu0 %v4193
    %4610 = vmatmul.bf16.gmra.mxu0 %v4557
    %v4611 = vpop.f32.mrf.mxu0
    %v4612 = vadd.f32 %v4598, %v4611
    %v4613 = vpop.f32.mrf.mxu0
    %v4614 = vadd.f32 %v4600, %v4613
    %4615 = vdwg.mxu0
    %v4616 = vadd.f32 %v4512, %v4584
    %v4617 = vadd.f32 %v4513, %v4612
    %v4618 = vadd.f32 %v4514, %v4586
    %v4619 = vadd.f32 %v4515, %v4614
    %vm4620 = vcmask 1045504
    %v4621 = vsel %vm4620, %v4298, 0.0
    %v4622 = vadd.f32 %v4296, %v4621
    %v4623 = vrot.slane %v4622, 4
    %v4624 = vadd.f32 %v4622, %v4623
    %v4625 = vrot.slane %v4624, 2
    %v4626 = vadd.f32 %v4624, %v4625
    %v4627 = vrot.slane %v4626, 1
    %v4628 = vadd.f32 %v4626, %v4627
    %v4629 = vsel %vm4620, %v4299, 0.0
    %v4630 = vadd.f32 %v4297, %v4629
    %v4631 = vrot.slane %v4630, 4
    %v4632 = vadd.f32 %v4630, %v4631
    %v4633 = vrot.slane %v4632, 2
    %v4634 = vadd.f32 %v4632, %v4633
    %v4635 = vrot.slane %v4634, 1
    %v4636 = vadd.f32 %v4634, %v4635
    %v4637 = vadd.f32 %v4628, 0.0
    %v4638 = vadd.f32 %v4636, 0.0
    %v4639 = vsel %vm4620, %v4618, 0.0
    %v4640 = vadd.f32 %v4616, %v4639
    %v4641 = vrot.slane %v4640, 4
    %v4642 = vadd.f32 %v4640, %v4641
    %v4643 = vrot.slane %v4642, 2
    %v4644 = vadd.f32 %v4642, %v4643
    %v4645 = vrot.slane %v4644, 1
    %v4646 = vadd.f32 %v4644, %v4645
    %v4647 = vsel %vm4620, %v4619, 0.0
    %v4648 = vadd.f32 %v4617, %v4647
    %v4649 = vrot.slane %v4648, 4
    %v4650 = vadd.f32 %v4648, %v4649
    %v4651 = vrot.slane %v4650, 2
    %v4652 = vadd.f32 %v4650, %v4651
    %v4653 = vrot.slane %v4652, 1
    %v4654 = vadd.f32 %v4652, %v4653
    %v4655 = vadd.f32 %v4637, %v4646
    %v4656 = vadd.f32 %v4638, %v4654
    %v4657 = vmul.f32 %v4296, %v4296
    %v4658 = vmul.f32 %v4297, %v4297
    %v4659 = vmul.f32 %v4298, %v4298
    %v4660 = vmul.f32 %v4299, %v4299
    %v4661 = vsel %vm4620, %v4659, 0.0
    %v4662 = vadd.f32 %v4657, %v4661
    %v4663 = vrot.slane %v4662, 4
    %v4664 = vadd.f32 %v4662, %v4663
    %v4665 = vrot.slane %v4664, 2
    %v4666 = vadd.f32 %v4664, %v4665
    %v4667 = vrot.slane %v4666, 1
    %v4668 = vadd.f32 %v4666, %v4667
    %v4669 = vsel %vm4620, %v4660, 0.0
    %v4670 = vadd.f32 %v4658, %v4669
    %v4671 = vrot.slane %v4670, 4
    %v4672 = vadd.f32 %v4670, %v4671
    %v4673 = vrot.slane %v4672, 2
    %v4674 = vadd.f32 %v4672, %v4673
    %v4675 = vrot.slane %v4674, 1
    %v4676 = vadd.f32 %v4674, %v4675
    %v4677 = vadd.f32 %v4668, 0.0
    %v4678 = vadd.f32 %v4676, 0.0
    %v4679 = vmul.f32 %v4616, %v4616
    %v4680 = vmul.f32 %v4617, %v4617
    %v4681 = vmul.f32 %v4618, %v4618
    %v4682 = vmul.f32 %v4619, %v4619
    %v4683 = vsel %vm4620, %v4681, 0.0
    %v4684 = vadd.f32 %v4679, %v4683
    %v4685 = vrot.slane %v4684, 4
    %v4686 = vadd.f32 %v4684, %v4685
    %v4687 = vrot.slane %v4686, 2
    %v4688 = vadd.f32 %v4686, %v4687
    %v4689 = vrot.slane %v4688, 1
    %v4690 = vadd.f32 %v4688, %v4689
    %v4691 = vsel %vm4620, %v4682, 0.0
    %v4692 = vadd.f32 %v4680, %v4691
    %v4693 = vrot.slane %v4692, 4
    %v4694 = vadd.f32 %v4692, %v4693
    %v4695 = vrot.slane %v4694, 2
    %v4696 = vadd.f32 %v4694, %v4695
    %v4697 = vrot.slane %v4696, 1
    %v4698 = vadd.f32 %v4696, %v4697
    %v4699 = vadd.f32 %v4677, %v4690
    %v4700 = vadd.f32 %v4678, %v4698
    %v4701 = vsel %vm2944, %v4655, %v4699
    %v4702 = vsel %vm2944, %v4656, %v4700
    %4703 = vrot.lane.b32.xlu0 %v4701, 16
    %v4704 = vpop.permute.xlu0 %4703
    %4705 = vrot.lane.b32.xlu0 %v4702, 16
    %v4706 = vpop.permute.xlu0 %4705
    %v4707 = vsel %vm3053, %v4704, %v4706
    %v4708 = vsel %vm3053, %v4706, %v4704
    %v4709 = vadd.f32 %v4701, %v4708
    %v4710 = vadd.f32 %v4702, %v4707
    %4711 = vrot.lane.b32.xlu0 %v4709, 32
    %v4712 = vpop.permute.xlu0 %4711
    %4713 = vrot.lane.b32.xlu0 %v4710, 32
    %v4714 = vpop.permute.xlu0 %4713
    %v4715 = vsel %vm3062, %v4712, %v4714
    %v4716 = vsel %vm3062, %v4714, %v4712
    %v4717 = vadd.f32 %v4709, %v4716
    %v4718 = vadd.f32 %v4710, %v4715
    %4719 = vrot.lane.b32.xlu0 %v4717, 64
    %v4720 = vpop.permute.xlu0 %4719
    %4721 = vrot.lane.b32.xlu0 %v4718, 64
    %v4722 = vpop.permute.xlu0 %4721
    %v4723 = vsel %vm3071, %v4720, %v4722
    %v4724 = vsel %vm3071, %v4722, %v4720
    %v4725 = vadd.f32 %v4717, %v4724
    %v4726 = vadd.f32 %v4718, %v4723
    %v4727 = vadd.f32 %v4725, %v4726
    %v4728 = vmul.f32 %v4727, 0.002232143
    %v4729 = vmul.f32 %v4728, %v4728
    %v4731 = vrot.slane %v4729, 7
    %v4733 = vsub.f32 %v4728, %v4731
    %v4734 = vmax.f32 %v4733, 0.0
    %v4735 = vadd.f32 %v4734, 1e-05
    %v4736 = vrsqrt.pop %v4735
    %v4737 = vmul.f32 %v4736, %v4735
    %v4738 = vmul.f32 %v4737, %v4736
    %v4739 = vmul.f32 0.5, %v4738
    %v4740 = vsub.f32 1.5, %v4739
    %v4741 = vmul.f32 %v4736, %v4740
    %vm4742 = vweird.f32 %v4735
    %vm4743 = vweird.f32 %v4736
    %vm4744 = vmor %vm4742, %vm4743
    %v4745 = vsel %vm4744, %v4736, %v4741
    %v4746 = vld [vmem:[%s6] sm:$0x3]
    %v4748 = vperm.slane %v4746, 0
    %v4749 = vperm.slane %v4746, 1
    %v4752 = vmul.f32 %v4745, %v4748
    %v4753 = vmul.f32 %v4745, %v4749
    %v4754 = vld [vmem:[%s7] sm:$0x3]
    %v4757 = vrot.slane %v4752, 1
    %v4758 = vrot.slane %v4753, 1
    %v4761 = vmul.f32 %v4728, %v4757
    %v4762 = vmul.f32 %v4728, %v4758
    %v4765 = vrot.slane %v4762, 7
    %v4766 = vsel %vm2944, %v4761, %v4765
    %v4768 = vsub.f32 %v4754, %v4766
    %v4769 = vperm.slane %v4752, 1
    %v4770 = vperm.slane %v4753, 1
    %v4771 = vmul.f32 %v4296, %v4769
    %v4772 = vmul.f32 %v4297, %v4770
    %v4773 = vmul.f32 %v4298, %v4769
    %v4774 = vmul.f32 %v4299, %v4770
    %v4776 = vperm.slane %v4768, 0
    %v4777 = vperm.slane %v4768, 1
    %v4780 = vadd.f32 %v4771, %v4776
    %v4781 = vadd.f32 %v4772, %v4777
    %v4782 = vadd.f32 %v4773, %v4776
    %v4783 = vadd.f32 %v4774, %v4777
    %vm4784 = vcmp.ge.f32.partialorder %v4780, 0.0
    %vm4785 = vcmp.ge.f32.partialorder %v4781, 0.0
    %vm4786 = vcmp.ge.f32.partialorder %v4782, 0.0
    %vm4787 = vcmp.ge.f32.partialorder %v4783, 0.0
    %v4788 = vmul.f32 %v4780, 0.2
    %v4789 = vmul.f32 %v4781, 0.2
    %v4790 = vmul.f32 %v4782, 0.2
    %v4791 = vmul.f32 %v4783, 0.2
    %v4792 = vsel %vm4784, %v4780, %v4788
    %v4793 = vsel %vm4785, %v4781, %v4789
    %v4794 = vsel %vm4786, %v4782, %v4790
    %v4795 = vsel %vm4787, %v4783, %v4791
    %v4796 = vpack.c.bf16 %v4793, %v4792
    %v4797 = vpack.c.bf16 %v4795, %v4794
    %4798 = vst [vmem:[#allocation4] sm:$0xff] %v4796
    %4799 = vst [vmem:[#allocation4 + $0x8] sm:$0x77] %v4797
    %v4800 = vmul.f32 %v4616, %v4769
    %v4801 = vmul.f32 %v4617, %v4770
    %v4802 = vmul.f32 %v4618, %v4769
    %v4803 = vmul.f32 %v4619, %v4770
    %v4804 = vadd.f32 %v4800, %v4776
    %v4805 = vadd.f32 %v4801, %v4777
    %v4806 = vadd.f32 %v4802, %v4776
    %v4807 = vadd.f32 %v4803, %v4777
    %vm4808 = vcmp.ge.f32.partialorder %v4804, 0.0
    %vm4809 = vcmp.ge.f32.partialorder %v4805, 0.0
    %vm4810 = vcmp.ge.f32.partialorder %v4806, 0.0
    %vm4811 = vcmp.ge.f32.partialorder %v4807, 0.0
    %v4812 = vmul.f32 %v4804, 0.2
    %v4813 = vmul.f32 %v4805, 0.2
    %v4814 = vmul.f32 %v4806, 0.2
    %v4815 = vmul.f32 %v4807, 0.2
    %v4816 = vsel %vm4808, %v4804, %v4812
    %v4817 = vsel %vm4809, %v4805, %v4813
    %v4818 = vsel %vm4810, %v4806, %v4814
    %v4819 = vsel %vm4811, %v4807, %v4815
    %v4820 = vpack.c.bf16 %v4817, %v4816
    %v4821 = vpack.c.bf16 %v4819, %v4818
    %s4822 = scalar_lea.vmem [#allocation4], 16
    %4823 = vst [vmem:[%s4822] sm:$0xff] %v4820
    %4824 = vst [vmem:[%s4822 + $0x8] sm:$0x77] %v4821
    %v4825 = vld [vmem:[#allocation4] sm:$0xff]
    %v4826 = vld [vmem:[#allocation4 + $0x8] sm:$0x33]
    %v4827 = vld [vmem:[#allocation8] sm:$0xff]
    %v4828 = vld [vmem:[#allocation8 + $0x8] sm:$0xff]
    %v4829 = vld [vmem:[#allocation8 + $0x10] sm:$0xff]
    %v4830 = vld [vmem:[#allocation8 + $0x18] sm:$0xff]
    %v4831 = vld [vmem:[#allocation8 + $0x20] sm:$0xff]
    %v4832 = vld [vmem:[#allocation8 + $0x28] sm:$0xff]
    %v4833 = vld [vmem:[#allocation8 + $0x30] sm:$0xff]
    %v4834 = vld [vmem:[#allocation8 + $0x38] sm:$0xff]
    %v4835 = vld [vmem:[#allocation8 + $0x40] sm:$0xff]
    %v4836 = vld [vmem:[#allocation8 + $0x48] sm:$0xff]
    %v4837 = vld [vmem:[#allocation8 + $0x50] sm:$0xff]
    %v4838 = vld [vmem:[#allocation8 + $0x58] sm:$0xff]
    %v4839 = vld [vmem:[#allocation8 + $0x60] sm:$0xff]
    %v4840 = vld [vmem:[#allocation8 + $0x68] sm:$0xff]
    %v4841 = vld [vmem:[#allocation8 + $0x70] sm:$0xff]
    %v4842 = vld [vmem:[#allocation8 + $0x78] sm:$0xff]
    %v4843 = vld [vmem:[#allocation8 + $0x80] sm:$0xff]
    %v4844 = vld [vmem:[#allocation8 + $0x88] sm:$0xff]
    %v4845 = vld [vmem:[#allocation8 + $0x90] sm:$0xff]
    %v4846 = vld [vmem:[#allocation8 + $0x98] sm:$0xff]
    %v4847 = vld [vmem:[#allocation8 + $0xa0] sm:$0xff]
    %v4848 = vld [vmem:[#allocation8 + $0xa8] sm:$0xff]
    %v4849 = vld [vmem:[#allocation8 + $0xb0] sm:$0xff]
    %v4850 = vld [vmem:[#allocation8 + $0xb8] sm:$0xff]
    %v4851 = vld [vmem:[#allocation8 + $0xc0] sm:$0xff]
    %v4852 = vld [vmem:[#allocation8 + $0xc8] sm:$0xff]
    %v4853 = vld [vmem:[#allocation8 + $0xd0] sm:$0xff]
    %v4854 = vld [vmem:[#allocation8 + $0xd8] sm:$0xff]
    %v4855 = vld [vmem:[#allocation8 + $0xe0] sm:$0xff]
    %v4856 = vld [vmem:[#allocation8 + $0xe8] sm:$0xff]
    %v4857 = vld [vmem:[#allocation8 + $0xf0] sm:$0xff]
    %v4858 = vld [vmem:[#allocation8 + $0xf8] sm:$0xff]
    %s4859 = scalar_lea.vmem [#allocation8], 256
    %v4860 = vld [vmem:[%s4859] sm:$0xff]
    %v4861 = vld [vmem:[%s4859 + $0x8] sm:$0xff]
    %v4862 = vld [vmem:[%s4859 + $0x10] sm:$0xff]
    %v4863 = vld [vmem:[%s4859 + $0x18] sm:$0xff]
    %v4864 = vld [vmem:[%s4859 + $0x20] sm:$0xff]
    %v4865 = vld [vmem:[%s4859 + $0x28] sm:$0xff]
    %v4866 = vld [vmem:[%s4859 + $0x30] sm:$0xff]
    %v4867 = vld [vmem:[%s4859 + $0x38] sm:$0xff]
    %v4868 = vld [vmem:[%s4859 + $0x40] sm:$0xff]
    %v4869 = vld [vmem:[%s4859 + $0x48] sm:$0xff]
    %v4870 = vld [vmem:[%s4859 + $0x50] sm:$0xff]
    %v4871 = vld [vmem:[%s4859 + $0x58] sm:$0xff]
    %v4872 = vld [vmem:[%s4859 + $0x60] sm:$0xff]
    %v4873 = vld [vmem:[%s4859 + $0x68] sm:$0xff]
    %v4874 = vld [vmem:[%s4859 + $0x70] sm:$0xff]
    %v4875 = vld [vmem:[%s4859 + $0x78] sm:$0xff]
    %v4876 = vld [vmem:[%s4859 + $0x80] sm:$0xff]
    %v4877 = vld [vmem:[%s4859 + $0x88] sm:$0xff]
    %v4878 = vld [vmem:[%s4859 + $0x90] sm:$0xff]
    %v4879 = vld [vmem:[%s4859 + $0x98] sm:$0xff]
    %v4880 = vld [vmem:[%s4859 + $0xa0] sm:$0xff]
    %v4881 = vld [vmem:[%s4859 + $0xa8] sm:$0xff]
    %v4882 = vld [vmem:[%s4859 + $0xb0] sm:$0xff]
    %v4883 = vld [vmem:[%s4859 + $0xb8] sm:$0xff]
    %v4884 = vld [vmem:[%s4859 + $0xc0] sm:$0xff]
    %v4885 = vld [vmem:[%s4859 + $0xc8] sm:$0xff]
    %v4886 = vld [vmem:[%s4859 + $0xd0] sm:$0xff]
    %v4887 = vld [vmem:[%s4859 + $0xd8] sm:$0xff]
    %v4888 = vld [vmem:[%s4859 + $0xe0] sm:$0xff]
    %v4889 = vld [vmem:[%s4859 + $0xe8] sm:$0xff]
    %v4890 = vld [vmem:[%s4859 + $0xf0] sm:$0xff]
    %v4891 = vld [vmem:[%s4859 + $0xf8] sm:$0xff]
    %v4894 = vunpack.c.l.b16 %v4825
    %v4895 = vunpack.c.h.b16 %v4825
    %v4896 = vunpack.c.l.b16 %v4826
    %v4897 = vunpack.c.h.b16 %v4826
    %v4898 = vpack.c.b16 %v4896, %v4894
    %v4899 = vpack.c.b16 %v4897, %v4895
    %v4901 = vshrl.u32 %v4898, 16
    %v4903 = vshll.u32 %v4898, 16
    %v4905 = vrot.slane %v4903, 1
    %v4906 = vor.u32 %v4901, %v4905
    %v4908 = vshrl.u32 %v4899, 16
    %v4910 = vshll.u32 %v4899, 16
    %v4912 = vrot.slane %v4910, 1
    %v4913 = vor.u32 %v4908, %v4912
    %v4948 = vunpack.c.l.b16 %v4860
    %v4949 = vunpack.c.h.b16 %v4860
    %v4950 = vunpack.c.l.b16 %v4861
    %v4951 = vunpack.c.h.b16 %v4861
    %v4952 = vunpack.c.l.b16 %v4862
    %v4953 = vunpack.c.h.b16 %v4862
    %v4954 = vunpack.c.l.b16 %v4863
    %v4955 = vunpack.c.h.b16 %v4863
    %v4956 = vunpack.c.l.b16 %v4864
    %v4957 = vunpack.c.h.b16 %v4864
    %v4958 = vunpack.c.l.b16 %v4865
    %v4959 = vunpack.c.h.b16 %v4865
    %v4960 = vunpack.c.l.b16 %v4866
    %v4961 = vunpack.c.h.b16 %v4866
    %v4962 = vunpack.c.l.b16 %v4867
    %v4963 = vunpack.c.h.b16 %v4867
    %v4964 = vunpack.c.l.b16 %v4868
    %v4965 = vunpack.c.h.b16 %v4868
    %v4966 = vunpack.c.l.b16 %v4869
    %v4967 = vunpack.c.h.b16 %v4869
    %v4968 = vunpack.c.l.b16 %v4870
    %v4969 = vunpack.c.h.b16 %v4870
    %v4970 = vunpack.c.l.b16 %v4871
    %v4971 = vunpack.c.h.b16 %v4871
    %v4972 = vunpack.c.l.b16 %v4872
    %v4973 = vunpack.c.h.b16 %v4872
    %v4974 = vunpack.c.l.b16 %v4873
    %v4975 = vunpack.c.h.b16 %v4873
    %v4976 = vunpack.c.l.b16 %v4874
    %v4977 = vunpack.c.h.b16 %v4874
    %v4978 = vunpack.c.l.b16 %v4875
    %v4979 = vunpack.c.h.b16 %v4875
    %v4980 = vunpack.c.l.b16 %v4876
    %v4981 = vunpack.c.h.b16 %v4876
    %v4982 = vunpack.c.l.b16 %v4877
    %v4983 = vunpack.c.h.b16 %v4877
    %v4984 = vunpack.c.l.b16 %v4878
    %v4985 = vunpack.c.h.b16 %v4878
    %v4986 = vunpack.c.l.b16 %v4879
    %v4987 = vunpack.c.h.b16 %v4879
    %v4988 = vunpack.c.l.b16 %v4880
    %v4989 = vunpack.c.h.b16 %v4880
    %v4990 = vunpack.c.l.b16 %v4881
    %v4991 = vunpack.c.h.b16 %v4881
    %v4992 = vunpack.c.l.b16 %v4882
    %v4993 = vunpack.c.h.b16 %v4882
    %v4994 = vunpack.c.l.b16 %v4883
    %v4995 = vunpack.c.h.b16 %v4883
    %v4996 = vunpack.c.l.b16 %v4884
    %v4997 = vunpack.c.h.b16 %v4884
    %v4998 = vunpack.c.l.b16 %v4885
    %v4999 = vunpack.c.h.b16 %v4885
    %v5000 = vunpack.c.l.b16 %v4886
    %v5001 = vunpack.c.h.b16 %v4886
    %v5002 = vunpack.c.l.b16 %v4887
    %v5003 = vunpack.c.h.b16 %v4887
    %v5004 = vunpack.c.l.b16 %v4888
    %v5005 = vunpack.c.h.b16 %v4888
    %v5006 = vunpack.c.l.b16 %v4889
    %v5007 = vunpack.c.h.b16 %v4889
    %v5008 = vunpack.c.l.b16 %v4890
    %v5009 = vunpack.c.h.b16 %v4890
    %v5010 = vunpack.c.l.b16 %v4891
    %v5011 = vunpack.c.h.b16 %v4891
    %v5012 = vpack.c.b16 %v4950, %v4948
    %v5013 = vpack.c.b16 %v4951, %v4949
    %v5014 = vpack.c.b16 %v4954, %v4952
    %v5015 = vpack.c.b16 %v4955, %v4953
    %v5016 = vpack.c.b16 %v4958, %v4956
    %v5017 = vpack.c.b16 %v4959, %v4957
    %v5018 = vpack.c.b16 %v4962, %v4960
    %v5019 = vpack.c.b16 %v4963, %v4961
    %v5020 = vpack.c.b16 %v4966, %v4964
    %v5021 = vpack.c.b16 %v4967, %v4965
    %v5022 = vpack.c.b16 %v4970, %v4968
    %v5023 = vpack.c.b16 %v4971, %v4969
    %v5024 = vpack.c.b16 %v4974, %v4972
    %v5025 = vpack.c.b16 %v4975, %v4973
    %v5026 = vpack.c.b16 %v4978, %v4976
    %v5027 = vpack.c.b16 %v4979, %v4977
    %v5028 = vpack.c.b16 %v4982, %v4980
    %v5029 = vpack.c.b16 %v4983, %v4981
    %v5030 = vpack.c.b16 %v4986, %v4984
    %v5031 = vpack.c.b16 %v4987, %v4985
    %v5032 = vpack.c.b16 %v4990, %v4988
    %v5033 = vpack.c.b16 %v4991, %v4989
    %v5034 = vpack.c.b16 %v4994, %v4992
    %v5035 = vpack.c.b16 %v4995, %v4993
    %v5036 = vpack.c.b16 %v4998, %v4996
    %v5037 = vpack.c.b16 %v4999, %v4997
    %v5038 = vpack.c.b16 %v5002, %v5000
    %v5039 = vpack.c.b16 %v5003, %v5001
    %v5040 = vpack.c.b16 %v5006, %v5004
    %v5041 = vpack.c.b16 %v5007, %v5005
    %v5042 = vpack.c.b16 %v5010, %v5008
    %v5043 = vpack.c.b16 %v5011, %v5009
    %5076 = vmatpush.bf16.msra.mxu0 %v5026
    %5077 = vmatpush.bf16.msra.mxu0 %v5024
    %5078 = vmatpush.bf16.msra.mxu0 %v5022
    %5079 = vmatpush.bf16.msra.mxu0 %v5020
    %5080 = vmatpush.bf16.msra.mxu0 %v5018
    %5081 = vmatpush.bf16.msra.mxu0 %v5016
    %5082 = vmatpush.bf16.msra.mxu0 %v5014
    %5083 = vmatpush.bf16.msra.mxu0 %v5012
    %5084 = vmatmul.bf16.gmra.mxu0 %v4906
    %v5085 = vpop.f32.mrf.mxu0
    %v5086 = vadd.f32 0.0, %v5085
    %v5087 = vpop.f32.mrf.mxu0
    %v5088 = vadd.f32 0.0, %v5087
    %5089 = vdwg.mxu0
    %5090 = vmatpush.bf16.msra.mxu0 %v5042
    %5091 = vmatpush.bf16.msra.mxu0 %v5040
    %5092 = vmatpush.bf16.msra.mxu0 %v5038
    %5093 = vmatpush.bf16.msra.mxu0 %v5036
    %5094 = vmatpush.bf16.msra.mxu0 %v5034
    %5095 = vmatpush.bf16.msra.mxu0 %v5032
    %5096 = vmatpush.bf16.msra.mxu0 %v5030
    %5097 = vmatpush.bf16.msra.mxu0 %v5028
    %5098 = vmatmul.bf16.gmra.mxu0 %v4913
    %v5099 = vpop.f32.mrf.mxu0
    %v5100 = vadd.f32 %v5086, %v5099
    %v5101 = vpop.f32.mrf.mxu0
    %v5102 = vadd.f32 %v5088, %v5101
    %5103 = vdwg.mxu0
    %5104 = vmatpush.bf16.msra.mxu0 %v5027
    %5105 = vmatpush.bf16.msra.mxu0 %v5025
    %5106 = vmatpush.bf16.msra.mxu0 %v5023
    %5107 = vmatpush.bf16.msra.mxu0 %v5021
    %5108 = vmatpush.bf16.msra.mxu0 %v5019
    %5109 = vmatpush.bf16.msra.mxu0 %v5017
    %5110 = vmatpush.bf16.msra.mxu0 %v5015
    %5111 = vmatpush.bf16.msra.mxu0 %v5013
    %5112 = vmatmul.bf16.gmra.mxu0 %v4906
    %v5113 = vpop.f32.mrf.mxu0
    %v5114 = vadd.f32 0.0, %v5113
    %v5115 = vpop.f32.mrf.mxu0
    %v5116 = vadd.f32 0.0, %v5115
    %5117 = vdwg.mxu0
    %5118 = vmatpush.bf16.msra.mxu0 %v5043
    %5119 = vmatpush.bf16.msra.mxu0 %v5041
    %5120 = vmatpush.bf16.msra.mxu0 %v5039
    %5121 = vmatpush.bf16.msra.mxu0 %v5037
    %5122 = vmatpush.bf16.msra.mxu0 %v5035
    %5123 = vmatpush.bf16.msra.mxu0 %v5033
    %5124 = vmatpush.bf16.msra.mxu0 %v5031
    %5125 = vmatpush.bf16.msra.mxu0 %v5029
    %5126 = vmatmul.bf16.gmra.mxu0 %v4913
    %v5127 = vpop.f32.mrf.mxu0
    %v5128 = vadd.f32 %v5114, %v5127
    %v5129 = vpop.f32.mrf.mxu0
    %v5130 = vadd.f32 %v5116, %v5129
    %5131 = vdwg.mxu0
    %v5166 = vunpack.c.l.b16 %v4827
    %v5167 = vunpack.c.h.b16 %v4827
    %v5168 = vunpack.c.l.b16 %v4828
    %v5169 = vunpack.c.h.b16 %v4828
    %v5170 = vunpack.c.l.b16 %v4829
    %v5171 = vunpack.c.h.b16 %v4829
    %v5172 = vunpack.c.l.b16 %v4830
    %v5173 = vunpack.c.h.b16 %v4830
    %v5174 = vunpack.c.l.b16 %v4831
    %v5175 = vunpack.c.h.b16 %v4831
    %v5176 = vunpack.c.l.b16 %v4832
    %v5177 = vunpack.c.h.b16 %v4832
    %v5178 = vunpack.c.l.b16 %v4833
    %v5179 = vunpack.c.h.b16 %v4833
    %v5180 = vunpack.c.l.b16 %v4834
    %v5181 = vunpack.c.h.b16 %v4834
    %v5182 = vunpack.c.l.b16 %v4835
    %v5183 = vunpack.c.h.b16 %v4835
    %v5184 = vunpack.c.l.b16 %v4836
    %v5185 = vunpack.c.h.b16 %v4836
    %v5186 = vunpack.c.l.b16 %v4837
    %v5187 = vunpack.c.h.b16 %v4837
    %v5188 = vunpack.c.l.b16 %v4838
    %v5189 = vunpack.c.h.b16 %v4838
    %v5190 = vunpack.c.l.b16 %v4839
    %v5191 = vunpack.c.h.b16 %v4839
    %v5192 = vunpack.c.l.b16 %v4840
    %v5193 = vunpack.c.h.b16 %v4840
    %v5194 = vunpack.c.l.b16 %v4841
    %v5195 = vunpack.c.h.b16 %v4841
    %v5196 = vunpack.c.l.b16 %v4842
    %v5197 = vunpack.c.h.b16 %v4842
    %v5198 = vunpack.c.l.b16 %v4843
    %v5199 = vunpack.c.h.b16 %v4843
    %v5200 = vunpack.c.l.b16 %v4844
    %v5201 = vunpack.c.h.b16 %v4844
    %v5202 = vunpack.c.l.b16 %v4845
    %v5203 = vunpack.c.h.b16 %v4845
    %v5204 = vunpack.c.l.b16 %v4846
    %v5205 = vunpack.c.h.b16 %v4846
    %v5206 = vunpack.c.l.b16 %v4847
    %v5207 = vunpack.c.h.b16 %v4847
    %v5208 = vunpack.c.l.b16 %v4848
    %v5209 = vunpack.c.h.b16 %v4848
    %v5210 = vunpack.c.l.b16 %v4849
    %v5211 = vunpack.c.h.b16 %v4849
    %v5212 = vunpack.c.l.b16 %v4850
    %v5213 = vunpack.c.h.b16 %v4850
    %v5214 = vunpack.c.l.b16 %v4851
    %v5215 = vunpack.c.h.b16 %v4851
    %v5216 = vunpack.c.l.b16 %v4852
    %v5217 = vunpack.c.h.b16 %v4852
    %v5218 = vunpack.c.l.b16 %v4853
    %v5219 = vunpack.c.h.b16 %v4853
    %v5220 = vunpack.c.l.b16 %v4854
    %v5221 = vunpack.c.h.b16 %v4854
    %v5222 = vunpack.c.l.b16 %v4855
    %v5223 = vunpack.c.h.b16 %v4855
    %v5224 = vunpack.c.l.b16 %v4856
    %v5225 = vunpack.c.h.b16 %v4856
    %v5226 = vunpack.c.l.b16 %v4857
    %v5227 = vunpack.c.h.b16 %v4857
    %v5228 = vunpack.c.l.b16 %v4858
    %v5229 = vunpack.c.h.b16 %v4858
    %v5230 = vpack.c.b16 %v5168, %v5166
    %v5231 = vpack.c.b16 %v5169, %v5167
    %v5232 = vpack.c.b16 %v5172, %v5170
    %v5233 = vpack.c.b16 %v5173, %v5171
    %v5234 = vpack.c.b16 %v5176, %v5174
    %v5235 = vpack.c.b16 %v5177, %v5175
    %v5236 = vpack.c.b16 %v5180, %v5178
    %v5237 = vpack.c.b16 %v5181, %v5179
    %v5238 = vpack.c.b16 %v5184, %v5182
    %v5239 = vpack.c.b16 %v5185, %v5183
    %v5240 = vpack.c.b16 %v5188, %v5186
    %v5241 = vpack.c.b16 %v5189, %v5187
    %v5242 = vpack.c.b16 %v5192, %v5190
    %v5243 = vpack.c.b16 %v5193, %v5191
    %v5244 = vpack.c.b16 %v5196, %v5194
    %v5245 = vpack.c.b16 %v5197, %v5195
    %v5246 = vpack.c.b16 %v5200, %v5198
    %v5247 = vpack.c.b16 %v5201, %v5199
    %v5248 = vpack.c.b16 %v5204, %v5202
    %v5249 = vpack.c.b16 %v5205, %v5203
    %v5250 = vpack.c.b16 %v5208, %v5206
    %v5251 = vpack.c.b16 %v5209, %v5207
    %v5252 = vpack.c.b16 %v5212, %v5210
    %v5253 = vpack.c.b16 %v5213, %v5211
    %v5254 = vpack.c.b16 %v5216, %v5214
    %v5255 = vpack.c.b16 %v5217, %v5215
    %v5256 = vpack.c.b16 %v5220, %v5218
    %v5257 = vpack.c.b16 %v5221, %v5219
    %v5258 = vpack.c.b16 %v5224, %v5222
    %v5259 = vpack.c.b16 %v5225, %v5223
    %v5260 = vpack.c.b16 %v5228, %v5226
    %v5261 = vpack.c.b16 %v5229, %v5227
    %5294 = vmatpush.bf16.msra.mxu0 %v5244
    %5295 = vmatpush.bf16.msra.mxu0 %v5242
    %5296 = vmatpush.bf16.msra.mxu0 %v5240
    %5297 = vmatpush.bf16.msra.mxu0 %v5238
    %5298 = vmatpush.bf16.msra.mxu0 %v5236
    %5299 = vmatpush.bf16.msra.mxu0 %v5234
    %5300 = vmatpush.bf16.msra.mxu0 %v5232
    %5301 = vmatpush.bf16.msra.mxu0 %v5230
    %5302 = vmatmul.bf16.gmra.mxu0 %v4898
    %v5303 = vpop.f32.mrf.mxu0
    %v5304 = vadd.f32 %v5100, %v5303
    %v5305 = vpop.f32.mrf.mxu0
    %v5306 = vadd.f32 %v5102, %v5305
    %5307 = vdwg.mxu0
    %5308 = vmatpush.bf16.msra.mxu0 %v5260
    %5309 = vmatpush.bf16.msra.mxu0 %v5258
    %5310 = vmatpush.bf16.msra.mxu0 %v5256
    %5311 = vmatpush.bf16.msra.mxu0 %v5254
    %5312 = vmatpush.bf16.msra.mxu0 %v5252
    %5313 = vmatpush.bf16.msra.mxu0 %v5250
    %5314 = vmatpush.bf16.msra.mxu0 %v5248
    %5315 = vmatpush.bf16.msra.mxu0 %v5246
    %5316 = vmatmul.bf16.gmra.mxu0 %v4899
    %v5317 = vpop.f32.mrf.mxu0
    %v5318 = vadd.f32 %v5304, %v5317
    %v5319 = vpop.f32.mrf.mxu0
    %v5320 = vadd.f32 %v5306, %v5319
    %5321 = vdwg.mxu0
    %5322 = vmatpush.bf16.msra.mxu0 %v5245
    %5323 = vmatpush.bf16.msra.mxu0 %v5243
    %5324 = vmatpush.bf16.msra.mxu0 %v5241
    %5325 = vmatpush.bf16.msra.mxu0 %v5239
    %5326 = vmatpush.bf16.msra.mxu0 %v5237
    %5327 = vmatpush.bf16.msra.mxu0 %v5235
    %5328 = vmatpush.bf16.msra.mxu0 %v5233
    %5329 = vmatpush.bf16.msra.mxu0 %v5231
    %5330 = vmatmul.bf16.gmra.mxu0 %v4898
    %v5331 = vpop.f32.mrf.mxu0
    %v5332 = vadd.f32 %v5128, %v5331
    %v5333 = vpop.f32.mrf.mxu0
    %v5334 = vadd.f32 %v5130, %v5333
    %5335 = vdwg.mxu0
    %5336 = vmatpush.bf16.msra.mxu0 %v5261
    %5337 = vmatpush.bf16.msra.mxu0 %v5259
    %5338 = vmatpush.bf16.msra.mxu0 %v5257
    %5339 = vmatpush.bf16.msra.mxu0 %v5255
    %5340 = vmatpush.bf16.msra.mxu0 %v5253
    %5341 = vmatpush.bf16.msra.mxu0 %v5251
    %5342 = vmatpush.bf16.msra.mxu0 %v5249
    %5343 = vmatpush.bf16.msra.mxu0 %v5247
    %5344 = vmatmul.bf16.gmra.mxu0 %v4899
    %v5345 = vpop.f32.mrf.mxu0
    %v5346 = vadd.f32 %v5332, %v5345
    %v5347 = vpop.f32.mrf.mxu0
    %v5348 = vadd.f32 %v5334, %v5347
    %5349 = vdwg.mxu0
    %v5350 = vld [vmem:[#allocation4] sm:$0xee]
    %v5351 = vld [vmem:[#allocation4 + $0x8] sm:$0x77]
    %s5352 = scalar_lea.vmem [#allocation8], 512
    %v5353 = vld [vmem:[%s5352] sm:$0xff]
    %v5354 = vld [vmem:[%s5352 + $0x8] sm:$0xff]
    %v5355 = vld [vmem:[%s5352 + $0x10] sm:$0xff]
    %v5356 = vld [vmem:[%s5352 + $0x18] sm:$0xff]
    %v5357 = vld [vmem:[%s5352 + $0x20] sm:$0xff]
    %v5358 = vld [vmem:[%s5352 + $0x28] sm:$0xff]
    %v5359 = vld [vmem:[%s5352 + $0x30] sm:$0xff]
    %v5360 = vld [vmem:[%s5352 + $0x38] sm:$0xff]
    %v5361 = vld [vmem:[%s5352 + $0x40] sm:$0xff]
    %v5362 = vld [vmem:[%s5352 + $0x48] sm:$0xff]
    %v5363 = vld [vmem:[%s5352 + $0x50] sm:$0xff]
    %v5364 = vld [vmem:[%s5352 + $0x58] sm:$0xff]
    %v5365 = vld [vmem:[%s5352 + $0x60] sm:$0xff]
    %v5366 = vld [vmem:[%s5352 + $0x68] sm:$0xff]
    %v5367 = vld [vmem:[%s5352 + $0x70] sm:$0xff]
    %v5368 = vld [vmem:[%s5352 + $0x78] sm:$0xff]
    %v5369 = vld [vmem:[%s5352 + $0x80] sm:$0xff]
    %v5370 = vld [vmem:[%s5352 + $0x88] sm:$0xff]
    %v5371 = vld [vmem:[%s5352 + $0x90] sm:$0xff]
    %v5372 = vld [vmem:[%s5352 + $0x98] sm:$0xff]
    %v5373 = vld [vmem:[%s5352 + $0xa0] sm:$0xff]
    %v5374 = vld [vmem:[%s5352 + $0xa8] sm:$0xff]
    %v5375 = vld [vmem:[%s5352 + $0xb0] sm:$0xff]
    %v5376 = vld [vmem:[%s5352 + $0xb8] sm:$0xff]
    %v5377 = vld [vmem:[%s5352 + $0xc0] sm:$0xff]
    %v5378 = vld [vmem:[%s5352 + $0xc8] sm:$0xff]
    %v5379 = vld [vmem:[%s5352 + $0xd0] sm:$0xff]
    %v5380 = vld [vmem:[%s5352 + $0xd8] sm:$0xff]
    %v5381 = vld [vmem:[%s5352 + $0xe0] sm:$0xff]
    %v5382 = vld [vmem:[%s5352 + $0xe8] sm:$0xff]
    %v5383 = vld [vmem:[%s5352 + $0xf0] sm:$0xff]
    %v5384 = vld [vmem:[%s5352 + $0xf8] sm:$0xff]
    %v5387 = vunpack.c.l.b16 %v5350
    %v5388 = vunpack.c.h.b16 %v5350
    %v5389 = vunpack.c.l.b16 %v5351
    %v5390 = vunpack.c.h.b16 %v5351
    %v5391 = vpack.c.b16 %v5389, %v5387
    %v5392 = vpack.c.b16 %v5390, %v5388
    %v5393 = vrot.slane %v5391, 1
    %v5394 = vrot.slane %v5392, 1
    %v5429 = vunpack.c.l.b16 %v5353
    %v5430 = vunpack.c.h.b16 %v5353
    %v5431 = vunpack.c.l.b16 %v5354
    %v5432 = vunpack.c.h.b16 %v5354
    %v5433 = vunpack.c.l.b16 %v5355
    %v5434 = vunpack.c.h.b16 %v5355
    %v5435 = vunpack.c.l.b16 %v5356
    %v5436 = vunpack.c.h.b16 %v5356
    %v5437 = vunpack.c.l.b16 %v5357
    %v5438 = vunpack.c.h.b16 %v5357
    %v5439 = vunpack.c.l.b16 %v5358
    %v5440 = vunpack.c.h.b16 %v5358
    %v5441 = vunpack.c.l.b16 %v5359
    %v5442 = vunpack.c.h.b16 %v5359
    %v5443 = vunpack.c.l.b16 %v5360
    %v5444 = vunpack.c.h.b16 %v5360
    %v5445 = vunpack.c.l.b16 %v5361
    %v5446 = vunpack.c.h.b16 %v5361
    %v5447 = vunpack.c.l.b16 %v5362
    %v5448 = vunpack.c.h.b16 %v5362
    %v5449 = vunpack.c.l.b16 %v5363
    %v5450 = vunpack.c.h.b16 %v5363
    %v5451 = vunpack.c.l.b16 %v5364
    %v5452 = vunpack.c.h.b16 %v5364
    %v5453 = vunpack.c.l.b16 %v5365
    %v5454 = vunpack.c.h.b16 %v5365
    %v5455 = vunpack.c.l.b16 %v5366
    %v5456 = vunpack.c.h.b16 %v5366
    %v5457 = vunpack.c.l.b16 %v5367
    %v5458 = vunpack.c.h.b16 %v5367
    %v5459 = vunpack.c.l.b16 %v5368
    %v5460 = vunpack.c.h.b16 %v5368
    %v5461 = vunpack.c.l.b16 %v5369
    %v5462 = vunpack.c.h.b16 %v5369
    %v5463 = vunpack.c.l.b16 %v5370
    %v5464 = vunpack.c.h.b16 %v5370
    %v5465 = vunpack.c.l.b16 %v5371
    %v5466 = vunpack.c.h.b16 %v5371
    %v5467 = vunpack.c.l.b16 %v5372
    %v5468 = vunpack.c.h.b16 %v5372
    %v5469 = vunpack.c.l.b16 %v5373
    %v5470 = vunpack.c.h.b16 %v5373
    %v5471 = vunpack.c.l.b16 %v5374
    %v5472 = vunpack.c.h.b16 %v5374
    %v5473 = vunpack.c.l.b16 %v5375
    %v5474 = vunpack.c.h.b16 %v5375
    %v5475 = vunpack.c.l.b16 %v5376
    %v5476 = vunpack.c.h.b16 %v5376
    %v5477 = vunpack.c.l.b16 %v5377
    %v5478 = vunpack.c.h.b16 %v5377
    %v5479 = vunpack.c.l.b16 %v5378
    %v5480 = vunpack.c.h.b16 %v5378
    %v5481 = vunpack.c.l.b16 %v5379
    %v5482 = vunpack.c.h.b16 %v5379
    %v5483 = vunpack.c.l.b16 %v5380
    %v5484 = vunpack.c.h.b16 %v5380
    %v5485 = vunpack.c.l.b16 %v5381
    %v5486 = vunpack.c.h.b16 %v5381
    %v5487 = vunpack.c.l.b16 %v5382
    %v5488 = vunpack.c.h.b16 %v5382
    %v5489 = vunpack.c.l.b16 %v5383
    %v5490 = vunpack.c.h.b16 %v5383
    %v5491 = vunpack.c.l.b16 %v5384
    %v5492 = vunpack.c.h.b16 %v5384
    %v5493 = vpack.c.b16 %v5431, %v5429
    %v5494 = vpack.c.b16 %v5432, %v5430
    %v5495 = vpack.c.b16 %v5435, %v5433
    %v5496 = vpack.c.b16 %v5436, %v5434
    %v5497 = vpack.c.b16 %v5439, %v5437
    %v5498 = vpack.c.b16 %v5440, %v5438
    %v5499 = vpack.c.b16 %v5443, %v5441
    %v5500 = vpack.c.b16 %v5444, %v5442
    %v5501 = vpack.c.b16 %v5447, %v5445
    %v5502 = vpack.c.b16 %v5448, %v5446
    %v5503 = vpack.c.b16 %v5451, %v5449
    %v5504 = vpack.c.b16 %v5452, %v5450
    %v5505 = vpack.c.b16 %v5455, %v5453
    %v5506 = vpack.c.b16 %v5456, %v5454
    %v5507 = vpack.c.b16 %v5459, %v5457
    %v5508 = vpack.c.b16 %v5460, %v5458
    %v5509 = vpack.c.b16 %v5463, %v5461
    %v5510 = vpack.c.b16 %v5464, %v5462
    %v5511 = vpack.c.b16 %v5467, %v5465
    %v5512 = vpack.c.b16 %v5468, %v5466
    %v5513 = vpack.c.b16 %v5471, %v5469
    %v5514 = vpack.c.b16 %v5472, %v5470
    %v5515 = vpack.c.b16 %v5475, %v5473
    %v5516 = vpack.c.b16 %v5476, %v5474
    %v5517 = vpack.c.b16 %v5479, %v5477
    %v5518 = vpack.c.b16 %v5480, %v5478
    %v5519 = vpack.c.b16 %v5483, %v5481
    %v5520 = vpack.c.b16 %v5484, %v5482
    %v5521 = vpack.c.b16 %v5487, %v5485
    %v5522 = vpack.c.b16 %v5488, %v5486
    %v5523 = vpack.c.b16 %v5491, %v5489
    %v5524 = vpack.c.b16 %v5492, %v5490
    %5557 = vmatpush.bf16.msra.mxu0 %v5507
    %5558 = vmatpush.bf16.msra.mxu0 %v5505
    %5559 = vmatpush.bf16.msra.mxu0 %v5503
    %5560 = vmatpush.bf16.msra.mxu0 %v5501
    %5561 = vmatpush.bf16.msra.mxu0 %v5499
    %5562 = vmatpush.bf16.msra.mxu0 %v5497
    %5563 = vmatpush.bf16.msra.mxu0 %v5495
    %5564 = vmatpush.bf16.msra.mxu0 %v5493
    %5565 = vmatmul.bf16.gmra.mxu0 %v5393
    %v5566 = vpop.f32.mrf.mxu0
    %v5567 = vadd.f32 0.0, %v5566
    %v5568 = vpop.f32.mrf.mxu0
    %v5569 = vadd.f32 0.0, %v5568
    %5570 = vdwg.mxu0
    %5571 = vmatpush.bf16.msra.mxu0 %v5523
    %5572 = vmatpush.bf16.msra.mxu0 %v5521
    %5573 = vmatpush.bf16.msra.mxu0 %v5519
    %5574 = vmatpush.bf16.msra.mxu0 %v5517
    %5575 = vmatpush.bf16.msra.mxu0 %v5515
    %5576 = vmatpush.bf16.msra.mxu0 %v5513
    %5577 = vmatpush.bf16.msra.mxu0 %v5511
    %5578 = vmatpush.bf16.msra.mxu0 %v5509
    %5579 = vmatmul.bf16.gmra.mxu0 %v5394
    %v5580 = vpop.f32.mrf.mxu0
    %v5581 = vadd.f32 %v5567, %v5580
    %v5582 = vpop.f32.mrf.mxu0
    %v5583 = vadd.f32 %v5569, %v5582
    %5584 = vdwg.mxu0
    %5585 = vmatpush.bf16.msra.mxu0 %v5508
    %5586 = vmatpush.bf16.msra.mxu0 %v5506
    %5587 = vmatpush.bf16.msra.mxu0 %v5504
    %5588 = vmatpush.bf16.msra.mxu0 %v5502
    %5589 = vmatpush.bf16.msra.mxu0 %v5500
    %5590 = vmatpush.bf16.msra.mxu0 %v5498
    %5591 = vmatpush.bf16.msra.mxu0 %v5496
    %5592 = vmatpush.bf16.msra.mxu0 %v5494
    %5593 = vmatmul.bf16.gmra.mxu0 %v5393
    %v5594 = vpop.f32.mrf.mxu0
    %v5595 = vadd.f32 0.0, %v5594
    %v5596 = vpop.f32.mrf.mxu0
    %v5597 = vadd.f32 0.0, %v5596
    %5598 = vdwg.mxu0
    %5599 = vmatpush.bf16.msra.mxu0 %v5524
    %5600 = vmatpush.bf16.msra.mxu0 %v5522
    %5601 = vmatpush.bf16.msra.mxu0 %v5520
    %5602 = vmatpush.bf16.msra.mxu0 %v5518
    %5603 = vmatpush.bf16.msra.mxu0 %v5516
    %5604 = vmatpush.bf16.msra.mxu0 %v5514
    %5605 = vmatpush.bf16.msra.mxu0 %v5512
    %5606 = vmatpush.bf16.msra.mxu0 %v5510
    %5607 = vmatmul.bf16.gmra.mxu0 %v5394
    %v5608 = vpop.f32.mrf.mxu0
    %v5609 = vadd.f32 %v5595, %v5608
    %v5610 = vpop.f32.mrf.mxu0
    %v5611 = vadd.f32 %v5597, %v5610
    %5612 = vdwg.mxu0
    %v5613 = vadd.f32 %v5318, %v5581
    %v5614 = vadd.f32 %v5346, %v5609
    %v5615 = vadd.f32 %v5320, %v5583
    %v5616 = vadd.f32 %v5348, %v5611
    %s5617 = scalar_lea.vmem [#allocation8], 768
    %v5618 = vld [vmem:[%s5617] sm:$0xff]
    %v5619 = vld [vmem:[%s5617 + $0x8] sm:$0xff]
    %v5620 = vld [vmem:[%s5617 + $0x10] sm:$0xff]
    %v5621 = vld [vmem:[%s5617 + $0x18] sm:$0xff]
    %v5622 = vld [vmem:[%s5617 + $0x20] sm:$0xff]
    %v5623 = vld [vmem:[%s5617 + $0x28] sm:$0xff]
    %v5624 = vld [vmem:[%s5617 + $0x30] sm:$0xff]
    %v5625 = vld [vmem:[%s5617 + $0x38] sm:$0xff]
    %v5626 = vld [vmem:[%s5617 + $0x40] sm:$0xff]
    %v5627 = vld [vmem:[%s5617 + $0x48] sm:$0xff]
    %v5628 = vld [vmem:[%s5617 + $0x50] sm:$0xff]
    %v5629 = vld [vmem:[%s5617 + $0x58] sm:$0xff]
    %v5630 = vld [vmem:[%s5617 + $0x60] sm:$0xff]
    %v5631 = vld [vmem:[%s5617 + $0x68] sm:$0xff]
    %v5632 = vld [vmem:[%s5617 + $0x70] sm:$0xff]
    %v5633 = vld [vmem:[%s5617 + $0x78] sm:$0xff]
    %v5634 = vld [vmem:[%s5617 + $0x80] sm:$0xff]
    %v5635 = vld [vmem:[%s5617 + $0x88] sm:$0xff]
    %v5636 = vld [vmem:[%s5617 + $0x90] sm:$0xff]
    %v5637 = vld [vmem:[%s5617 + $0x98] sm:$0xff]
    %v5638 = vld [vmem:[%s5617 + $0xa0] sm:$0xff]
    %v5639 = vld [vmem:[%s5617 + $0xa8] sm:$0xff]
    %v5640 = vld [vmem:[%s5617 + $0xb0] sm:$0xff]
    %v5641 = vld [vmem:[%s5617 + $0xb8] sm:$0xff]
    %v5642 = vld [vmem:[%s5617 + $0xc0] sm:$0xff]
    %v5643 = vld [vmem:[%s5617 + $0xc8] sm:$0xff]
    %v5644 = vld [vmem:[%s5617 + $0xd0] sm:$0xff]
    %v5645 = vld [vmem:[%s5617 + $0xd8] sm:$0xff]
    %v5646 = vld [vmem:[%s5617 + $0xe0] sm:$0xff]
    %v5647 = vld [vmem:[%s5617 + $0xe8] sm:$0xff]
    %v5648 = vld [vmem:[%s5617 + $0xf0] sm:$0xff]
    %v5649 = vld [vmem:[%s5617 + $0xf8] sm:$0xff]
    %v5651 = vshrl.u32 %v5391, 16
    %v5653 = vrot.slane %v5651, 1
    %v5654 = vshll.u32 %v5391, 16
    %v5656 = vrot.slane %v5654, 2
    %v5657 = vor.u32 %v5653, %v5656
    %v5659 = vshrl.u32 %v5392, 16
    %v5661 = vrot.slane %v5659, 1
    %v5662 = vshll.u32 %v5392, 16
    %v5664 = vrot.slane %v5662, 2
    %v5665 = vor.u32 %v5661, %v5664
    %v5700 = vunpack.c.l.b16 %v5618
    %v5701 = vunpack.c.h.b16 %v5618
    %v5702 = vunpack.c.l.b16 %v5619
    %v5703 = vunpack.c.h.b16 %v5619
    %v5704 = vunpack.c.l.b16 %v5620
    %v5705 = vunpack.c.h.b16 %v5620
    %v5706 = vunpack.c.l.b16 %v5621
    %v5707 = vunpack.c.h.b16 %v5621
    %v5708 = vunpack.c.l.b16 %v5622
    %v5709 = vunpack.c.h.b16 %v5622
    %v5710 = vunpack.c.l.b16 %v5623
    %v5711 = vunpack.c.h.b16 %v5623
    %v5712 = vunpack.c.l.b16 %v5624
    %v5713 = vunpack.c.h.b16 %v5624
    %v5714 = vunpack.c.l.b16 %v5625
    %v5715 = vunpack.c.h.b16 %v5625
    %v5716 = vunpack.c.l.b16 %v5626
    %v5717 = vunpack.c.h.b16 %v5626
    %v5718 = vunpack.c.l.b16 %v5627
    %v5719 = vunpack.c.h.b16 %v5627
    %v5720 = vunpack.c.l.b16 %v5628
    %v5721 = vunpack.c.h.b16 %v5628
    %v5722 = vunpack.c.l.b16 %v5629
    %v5723 = vunpack.c.h.b16 %v5629
    %v5724 = vunpack.c.l.b16 %v5630
    %v5725 = vunpack.c.h.b16 %v5630
    %v5726 = vunpack.c.l.b16 %v5631
    %v5727 = vunpack.c.h.b16 %v5631
    %v5728 = vunpack.c.l.b16 %v5632
    %v5729 = vunpack.c.h.b16 %v5632
    %v5730 = vunpack.c.l.b16 %v5633
    %v5731 = vunpack.c.h.b16 %v5633
    %v5732 = vunpack.c.l.b16 %v5634
    %v5733 = vunpack.c.h.b16 %v5634
    %v5734 = vunpack.c.l.b16 %v5635
    %v5735 = vunpack.c.h.b16 %v5635
    %v5736 = vunpack.c.l.b16 %v5636
    %v5737 = vunpack.c.h.b16 %v5636
    %v5738 = vunpack.c.l.b16 %v5637
    %v5739 = vunpack.c.h.b16 %v5637
    %v5740 = vunpack.c.l.b16 %v5638
    %v5741 = vunpack.c.h.b16 %v5638
    %v5742 = vunpack.c.l.b16 %v5639
    %v5743 = vunpack.c.h.b16 %v5639
    %v5744 = vunpack.c.l.b16 %v5640
    %v5745 = vunpack.c.h.b16 %v5640
    %v5746 = vunpack.c.l.b16 %v5641
    %v5747 = vunpack.c.h.b16 %v5641
    %v5748 = vunpack.c.l.b16 %v5642
    %v5749 = vunpack.c.h.b16 %v5642
    %v5750 = vunpack.c.l.b16 %v5643
    %v5751 = vunpack.c.h.b16 %v5643
    %v5752 = vunpack.c.l.b16 %v5644
    %v5753 = vunpack.c.h.b16 %v5644
    %v5754 = vunpack.c.l.b16 %v5645
    %v5755 = vunpack.c.h.b16 %v5645
    %v5756 = vunpack.c.l.b16 %v5646
    %v5757 = vunpack.c.h.b16 %v5646
    %v5758 = vunpack.c.l.b16 %v5647
    %v5759 = vunpack.c.h.b16 %v5647
    %v5760 = vunpack.c.l.b16 %v5648
    %v5761 = vunpack.c.h.b16 %v5648
    %v5762 = vunpack.c.l.b16 %v5649
    %v5763 = vunpack.c.h.b16 %v5649
    %v5764 = vpack.c.b16 %v5702, %v5700
    %v5765 = vpack.c.b16 %v5703, %v5701
    %v5766 = vpack.c.b16 %v5706, %v5704
    %v5767 = vpack.c.b16 %v5707, %v5705
    %v5768 = vpack.c.b16 %v5710, %v5708
    %v5769 = vpack.c.b16 %v5711, %v5709
    %v5770 = vpack.c.b16 %v5714, %v5712
    %v5771 = vpack.c.b16 %v5715, %v5713
    %v5772 = vpack.c.b16 %v5718, %v5716
    %v5773 = vpack.c.b16 %v5719, %v5717
    %v5774 = vpack.c.b16 %v5722, %v5720
    %v5775 = vpack.c.b16 %v5723, %v5721
    %v5776 = vpack.c.b16 %v5726, %v5724
    %v5777 = vpack.c.b16 %v5727, %v5725
    %v5778 = vpack.c.b16 %v5730, %v5728
    %v5779 = vpack.c.b16 %v5731, %v5729
    %v5780 = vpack.c.b16 %v5734, %v5732
    %v5781 = vpack.c.b16 %v5735, %v5733
    %v5782 = vpack.c.b16 %v5738, %v5736
    %v5783 = vpack.c.b16 %v5739, %v5737
    %v5784 = vpack.c.b16 %v5742, %v5740
    %v5785 = vpack.c.b16 %v5743, %v5741
    %v5786 = vpack.c.b16 %v5746, %v5744
    %v5787 = vpack.c.b16 %v5747, %v5745
    %v5788 = vpack.c.b16 %v5750, %v5748
    %v5789 = vpack.c.b16 %v5751, %v5749
    %v5790 = vpack.c.b16 %v5754, %v5752
    %v5791 = vpack.c.b16 %v5755, %v5753
    %v5792 = vpack.c.b16 %v5758, %v5756
    %v5793 = vpack.c.b16 %v5759, %v5757
    %v5794 = vpack.c.b16 %v5762, %v5760
    %v5795 = vpack.c.b16 %v5763, %v5761
    %5828 = vmatpush.bf16.msra.mxu0 %v5778
    %5829 = vmatpush.bf16.msra.mxu0 %v5776
    %5830 = vmatpush.bf16.msra.mxu0 %v5774
    %5831 = vmatpush.bf16.msra.mxu0 %v5772
    %5832 = vmatpush.bf16.msra.mxu0 %v5770
    %5833 = vmatpush.bf16.msra.mxu0 %v5768
    %5834 = vmatpush.bf16.msra.mxu0 %v5766
    %5835 = vmatpush.bf16.msra.mxu0 %v5764
    %5836 = vmatmul.bf16.gmra.mxu0 %v5657
    %v5837 = vpop.f32.mrf.mxu0
    %v5838 = vadd.f32 0.0, %v5837
    %v5839 = vpop.f32.mrf.mxu0
    %v5840 = vadd.f32 0.0, %v5839
    %5841 = vdwg.mxu0
    %5842 = vmatpush.bf16.msra.mxu0 %v5794
    %5843 = vmatpush.bf16.msra.mxu0 %v5792
    %5844 = vmatpush.bf16.msra.mxu0 %v5790
    %5845 = vmatpush.bf16.msra.mxu0 %v5788
    %5846 = vmatpush.bf16.msra.mxu0 %v5786
    %5847 = vmatpush.bf16.msra.mxu0 %v5784
    %5848 = vmatpush.bf16.msra.mxu0 %v5782
    %5849 = vmatpush.bf16.msra.mxu0 %v5780
    %5850 = vmatmul.bf16.gmra.mxu0 %v5665
    %v5851 = vpop.f32.mrf.mxu0
    %v5852 = vadd.f32 %v5838, %v5851
    %v5853 = vpop.f32.mrf.mxu0
    %v5854 = vadd.f32 %v5840, %v5853
    %5855 = vdwg.mxu0
    %5856 = vmatpush.bf16.msra.mxu0 %v5779
    %5857 = vmatpush.bf16.msra.mxu0 %v5777
    %5858 = vmatpush.bf16.msra.mxu0 %v5775
    %5859 = vmatpush.bf16.msra.mxu0 %v5773
    %5860 = vmatpush.bf16.msra.mxu0 %v5771
    %5861 = vmatpush.bf16.msra.mxu0 %v5769
    %5862 = vmatpush.bf16.msra.mxu0 %v5767
    %5863 = vmatpush.bf16.msra.mxu0 %v5765
    %5864 = vmatmul.bf16.gmra.mxu0 %v5657
    %v5865 = vpop.f32.mrf.mxu0
    %v5866 = vadd.f32 0.0, %v5865
    %v5867 = vpop.f32.mrf.mxu0
    %v5868 = vadd.f32 0.0, %v5867
    %5869 = vdwg.mxu0
    %5870 = vmatpush.bf16.msra.mxu0 %v5795
    %5871 = vmatpush.bf16.msra.mxu0 %v5793
    %5872 = vmatpush.bf16.msra.mxu0 %v5791
    %5873 = vmatpush.bf16.msra.mxu0 %v5789
    %5874 = vmatpush.bf16.msra.mxu0 %v5787
    %5875 = vmatpush.bf16.msra.mxu0 %v5785
    %5876 = vmatpush.bf16.msra.mxu0 %v5783
    %5877 = vmatpush.bf16.msra.mxu0 %v5781
    %5878 = vmatmul.bf16.gmra.mxu0 %v5665
    %v5879 = vpop.f32.mrf.mxu0
    %v5880 = vadd.f32 %v5866, %v5879
    %v5881 = vpop.f32.mrf.mxu0
    %v5882 = vadd.f32 %v5868, %v5881
    %5883 = vdwg.mxu0
    %v5884 = vadd.f32 %v5613, %v5852
    %v5885 = vadd.f32 %v5614, %v5880
    %v5886 = vadd.f32 %v5615, %v5854
    %v5887 = vadd.f32 %v5616, %v5882
    %v5888 = vld [vmem:[%s4822] sm:$0xff]
    %v5889 = vld [vmem:[%s4822 + $0x8] sm:$0x33]
    %v5892 = vunpack.c.l.b16 %v5888
    %v5893 = vunpack.c.h.b16 %v5888
    %v5894 = vunpack.c.l.b16 %v5889
    %v5895 = vunpack.c.h.b16 %v5889
    %v5896 = vpack.c.b16 %v5894, %v5892
    %v5897 = vpack.c.b16 %v5895, %v5893
    %v5899 = vshrl.u32 %v5896, 16
    %v5901 = vshll.u32 %v5896, 16
    %v5903 = vrot.slane %v5901, 1
    %v5904 = vor.u32 %v5899, %v5903
    %v5906 = vshrl.u32 %v5897, 16
    %v5908 = vshll.u32 %v5897, 16
    %v5910 = vrot.slane %v5908, 1
    %v5911 = vor.u32 %v5906, %v5910
    %5914 = vmatpush.bf16.msra.mxu0 %v5026
    %5915 = vmatpush.bf16.msra.mxu0 %v5024
    %5916 = vmatpush.bf16.msra.mxu0 %v5022
    %5917 = vmatpush.bf16.msra.mxu0 %v5020
    %5918 = vmatpush.bf16.msra.mxu0 %v5018
    %5919 = vmatpush.bf16.msra.mxu0 %v5016
    %5920 = vmatpush.bf16.msra.mxu0 %v5014
    %5921 = vmatpush.bf16.msra.mxu0 %v5012
    %5922 = vmatmul.bf16.gmra.mxu0 %v5904
    %v5923 = vpop.f32.mrf.mxu0
    %v5924 = vadd.f32 0.0, %v5923
    %v5925 = vpop.f32.mrf.mxu0
    %v5926 = vadd.f32 0.0, %v5925
    %5927 = vdwg.mxu0
    %5928 = vmatpush.bf16.msra.mxu0 %v5042
    %5929 = vmatpush.bf16.msra.mxu0 %v5040
    %5930 = vmatpush.bf16.msra.mxu0 %v5038
    %5931 = vmatpush.bf16.msra.mxu0 %v5036
    %5932 = vmatpush.bf16.msra.mxu0 %v5034
    %5933 = vmatpush.bf16.msra.mxu0 %v5032
    %5934 = vmatpush.bf16.msra.mxu0 %v5030
    %5935 = vmatpush.bf16.msra.mxu0 %v5028
    %5936 = vmatmul.bf16.gmra.mxu0 %v5911
    %v5937 = vpop.f32.mrf.mxu0
    %v5938 = vadd.f32 %v5924, %v5937
    %v5939 = vpop.f32.mrf.mxu0
    %v5940 = vadd.f32 %v5926, %v5939
    %5941 = vdwg.mxu0
    %5942 = vmatpush.bf16.msra.mxu0 %v5027
    %5943 = vmatpush.bf16.msra.mxu0 %v5025
    %5944 = vmatpush.bf16.msra.mxu0 %v5023
    %5945 = vmatpush.bf16.msra.mxu0 %v5021
    %5946 = vmatpush.bf16.msra.mxu0 %v5019
    %5947 = vmatpush.bf16.msra.mxu0 %v5017
    %5948 = vmatpush.bf16.msra.mxu0 %v5015
    %5949 = vmatpush.bf16.msra.mxu0 %v5013
    %5950 = vmatmul.bf16.gmra.mxu0 %v5904
    %v5951 = vpop.f32.mrf.mxu0
    %v5952 = vadd.f32 0.0, %v5951
    %v5953 = vpop.f32.mrf.mxu0
    %v5954 = vadd.f32 0.0, %v5953
    %5955 = vdwg.mxu0
    %5956 = vmatpush.bf16.msra.mxu0 %v5043
    %5957 = vmatpush.bf16.msra.mxu0 %v5041
    %5958 = vmatpush.bf16.msra.mxu0 %v5039
    %5959 = vmatpush.bf16.msra.mxu0 %v5037
    %5960 = vmatpush.bf16.msra.mxu0 %v5035
    %5961 = vmatpush.bf16.msra.mxu0 %v5033
    %5962 = vmatpush.bf16.msra.mxu0 %v5031
    %5963 = vmatpush.bf16.msra.mxu0 %v5029
    %5964 = vmatmul.bf16.gmra.mxu0 %v5911
    %v5965 = vpop.f32.mrf.mxu0
    %v5966 = vadd.f32 %v5952, %v5965
    %v5967 = vpop.f32.mrf.mxu0
    %v5968 = vadd.f32 %v5954, %v5967
    %5969 = vdwg.mxu0
    %5972 = vmatpush.bf16.msra.mxu0 %v5244
    %5973 = vmatpush.bf16.msra.mxu0 %v5242
    %5974 = vmatpush.bf16.msra.mxu0 %v5240
    %5975 = vmatpush.bf16.msra.mxu0 %v5238
    %5976 = vmatpush.bf16.msra.mxu0 %v5236
    %5977 = vmatpush.bf16.msra.mxu0 %v5234
    %5978 = vmatpush.bf16.msra.mxu0 %v5232
    %5979 = vmatpush.bf16.msra.mxu0 %v5230
    %5980 = vmatmul.bf16.gmra.mxu0 %v5896
    %v5981 = vpop.f32.mrf.mxu0
    %v5982 = vadd.f32 %v5938, %v5981
    %v5983 = vpop.f32.mrf.mxu0
    %v5984 = vadd.f32 %v5940, %v5983
    %5985 = vdwg.mxu0
    %5986 = vmatpush.bf16.msra.mxu0 %v5260
    %5987 = vmatpush.bf16.msra.mxu0 %v5258
    %5988 = vmatpush.bf16.msra.mxu0 %v5256
    %5989 = vmatpush.bf16.msra.mxu0 %v5254
    %5990 = vmatpush.bf16.msra.mxu0 %v5252
    %5991 = vmatpush.bf16.msra.mxu0 %v5250
    %5992 = vmatpush.bf16.msra.mxu0 %v5248
    %5993 = vmatpush.bf16.msra.mxu0 %v5246
    %5994 = vmatmul.bf16.gmra.mxu0 %v5897
    %v5995 = vpop.f32.mrf.mxu0
    %v5996 = vadd.f32 %v5982, %v5995
    %v5997 = vpop.f32.mrf.mxu0
    %v5998 = vadd.f32 %v5984, %v5997
    %5999 = vdwg.mxu0
    %6000 = vmatpush.bf16.msra.mxu0 %v5245
    %6001 = vmatpush.bf16.msra.mxu0 %v5243
    %6002 = vmatpush.bf16.msra.mxu0 %v5241
    %6003 = vmatpush.bf16.msra.mxu0 %v5239
    %6004 = vmatpush.bf16.msra.mxu0 %v5237
    %6005 = vmatpush.bf16.msra.mxu0 %v5235
    %6006 = vmatpush.bf16.msra.mxu0 %v5233
    %6007 = vmatpush.bf16.msra.mxu0 %v5231
    %6008 = vmatmul.bf16.gmra.mxu0 %v5896
    %v6009 = vpop.f32.mrf.mxu0
    %v6010 = vadd.f32 %v5966, %v6009
    %v6011 = vpop.f32.mrf.mxu0
    %v6012 = vadd.f32 %v5968, %v6011
    %6013 = vdwg.mxu0
    %6014 = vmatpush.bf16.msra.mxu0 %v5261
    %6015 = vmatpush.bf16.msra.mxu0 %v5259
    %6016 = vmatpush.bf16.msra.mxu0 %v5257
    %6017 = vmatpush.bf16.msra.mxu0 %v5255
    %6018 = vmatpush.bf16.msra.mxu0 %v5253
    %6019 = vmatpush.bf16.msra.mxu0 %v5251
    %6020 = vmatpush.bf16.msra.mxu0 %v5249
    %6021 = vmatpush.bf16.msra.mxu0 %v5247
    %6022 = vmatmul.bf16.gmra.mxu0 %v5897
    %v6023 = vpop.f32.mrf.mxu0
    %v6024 = vadd.f32 %v6010, %v6023
    %v6025 = vpop.f32.mrf.mxu0
    %v6026 = vadd.f32 %v6012, %v6025
    %6027 = vdwg.mxu0
    %v6028 = vld [vmem:[%s4822] sm:$0xee]
    %v6029 = vld [vmem:[%s4822 + $0x8] sm:$0x77]
    %v6032 = vunpack.c.l.b16 %v6028
    %v6033 = vunpack.c.h.b16 %v6028
    %v6034 = vunpack.c.l.b16 %v6029
    %v6035 = vunpack.c.h.b16 %v6029
    %v6036 = vpack.c.b16 %v6034, %v6032
    %v6037 = vpack.c.b16 %v6035, %v6033
    %v6038 = vrot.slane %v6036, 1
    %v6039 = vrot.slane %v6037, 1
    %6042 = vmatpush.bf16.msra.mxu0 %v5507
    %6043 = vmatpush.bf16.msra.mxu0 %v5505
    %6044 = vmatpush.bf16.msra.mxu0 %v5503
    %6045 = vmatpush.bf16.msra.mxu0 %v5501
    %6046 = vmatpush.bf16.msra.mxu0 %v5499
    %6047 = vmatpush.bf16.msra.mxu0 %v5497
    %6048 = vmatpush.bf16.msra.mxu0 %v5495
    %6049 = vmatpush.bf16.msra.mxu0 %v5493
    %6050 = vmatmul.bf16.gmra.mxu0 %v6038
    %v6051 = vpop.f32.mrf.mxu0
    %v6052 = vadd.f32 0.0, %v6051
    %v6053 = vpop.f32.mrf.mxu0
    %v6054 = vadd.f32 0.0, %v6053
    %6055 = vdwg.mxu0
    %6056 = vmatpush.bf16.msra.mxu0 %v5523
    %6057 = vmatpush.bf16.msra.mxu0 %v5521
    %6058 = vmatpush.bf16.msra.mxu0 %v5519
    %6059 = vmatpush.bf16.msra.mxu0 %v5517
    %6060 = vmatpush.bf16.msra.mxu0 %v5515
    %6061 = vmatpush.bf16.msra.mxu0 %v5513
    %6062 = vmatpush.bf16.msra.mxu0 %v5511
    %6063 = vmatpush.bf16.msra.mxu0 %v5509
    %6064 = vmatmul.bf16.gmra.mxu0 %v6039
    %v6065 = vpop.f32.mrf.mxu0
    %v6066 = vadd.f32 %v6052, %v6065
    %v6067 = vpop.f32.mrf.mxu0
    %v6068 = vadd.f32 %v6054, %v6067
    %6069 = vdwg.mxu0
    %6070 = vmatpush.bf16.msra.mxu0 %v5508
    %6071 = vmatpush.bf16.msra.mxu0 %v5506
    %6072 = vmatpush.bf16.msra.mxu0 %v5504
    %6073 = vmatpush.bf16.msra.mxu0 %v5502
    %6074 = vmatpush.bf16.msra.mxu0 %v5500
    %6075 = vmatpush.bf16.msra.mxu0 %v5498
    %6076 = vmatpush.bf16.msra.mxu0 %v5496
    %6077 = vmatpush.bf16.msra.mxu0 %v5494
    %6078 = vmatmul.bf16.gmra.mxu0 %v6038
    %v6079 = vpop.f32.mrf.mxu0
    %v6080 = vadd.f32 0.0, %v6079
    %v6081 = vpop.f32.mrf.mxu0
    %v6082 = vadd.f32 0.0, %v6081
    %6083 = vdwg.mxu0
    %6084 = vmatpush.bf16.msra.mxu0 %v5524
    %6085 = vmatpush.bf16.msra.mxu0 %v5522
    %6086 = vmatpush.bf16.msra.mxu0 %v5520
    %6087 = vmatpush.bf16.msra.mxu0 %v5518
    %6088 = vmatpush.bf16.msra.mxu0 %v5516
    %6089 = vmatpush.bf16.msra.mxu0 %v5514
    %6090 = vmatpush.bf16.msra.mxu0 %v5512
    %6091 = vmatpush.bf16.msra.mxu0 %v5510
    %6092 = vmatmul.bf16.gmra.mxu0 %v6039
    %v6093 = vpop.f32.mrf.mxu0
    %v6094 = vadd.f32 %v6080, %v6093
    %v6095 = vpop.f32.mrf.mxu0
    %v6096 = vadd.f32 %v6082, %v6095
    %6097 = vdwg.mxu0
    %v6098 = vadd.f32 %v5996, %v6066
    %v6099 = vadd.f32 %v6024, %v6094
    %v6100 = vadd.f32 %v5998, %v6068
    %v6101 = vadd.f32 %v6026, %v6096
    %v6103 = vshrl.u32 %v6036, 16
    %v6105 = vrot.slane %v6103, 1
    %v6106 = vshll.u32 %v6036, 16
    %v6108 = vrot.slane %v6106, 2
    %v6109 = vor.u32 %v6105, %v6108
    %v6111 = vshrl.u32 %v6037, 16
    %v6113 = vrot.slane %v6111, 1
    %v6114 = vshll.u32 %v6037, 16
    %v6116 = vrot.slane %v6114, 2
    %v6117 = vor.u32 %v6113, %v6116
    %6120 = vmatpush.bf16.msra.mxu0 %v5778
    %6121 = vmatpush.bf16.msra.mxu0 %v5776
    %6122 = vmatpush.bf16.msra.mxu0 %v5774
    %6123 = vmatpush.bf16.msra.mxu0 %v5772
    %6124 = vmatpush.bf16.msra.mxu0 %v5770
    %6125 = vmatpush.bf16.msra.mxu0 %v5768
    %6126 = vmatpush.bf16.msra.mxu0 %v5766
    %6127 = vmatpush.bf16.msra.mxu0 %v5764
    %6128 = vmatmul.bf16.gmra.mxu0 %v6109
    %v6129 = vpop.f32.mrf.mxu0
    %v6130 = vadd.f32 0.0, %v6129
    %v6131 = vpop.f32.mrf.mxu0
    %v6132 = vadd.f32 0.0, %v6131
    %6133 = vdwg.mxu0
    %6134 = vmatpush.bf16.msra.mxu0 %v5794
    %6135 = vmatpush.bf16.msra.mxu0 %v5792
    %6136 = vmatpush.bf16.msra.mxu0 %v5790
    %6137 = vmatpush.bf16.msra.mxu0 %v5788
    %6138 = vmatpush.bf16.msra.mxu0 %v5786
    %6139 = vmatpush.bf16.msra.mxu0 %v5784
    %6140 = vmatpush.bf16.msra.mxu0 %v5782
    %6141 = vmatpush.bf16.msra.mxu0 %v5780
    %6142 = vmatmul.bf16.gmra.mxu0 %v6117
    %v6143 = vpop.f32.mrf.mxu0
    %v6144 = vadd.f32 %v6130, %v6143
    %v6145 = vpop.f32.mrf.mxu0
    %v6146 = vadd.f32 %v6132, %v6145
    %6147 = vdwg.mxu0
    %6148 = vmatpush.bf16.msra.mxu0 %v5779
    %6149 = vmatpush.bf16.msra.mxu0 %v5777
    %6150 = vmatpush.bf16.msra.mxu0 %v5775
    %6151 = vmatpush.bf16.msra.mxu0 %v5773
    %6152 = vmatpush.bf16.msra.mxu0 %v5771
    %6153 = vmatpush.bf16.msra.mxu0 %v5769
    %6154 = vmatpush.bf16.msra.mxu0 %v5767
    %6155 = vmatpush.bf16.msra.mxu0 %v5765
    %6156 = vmatmul.bf16.gmra.mxu0 %v6109
    %v6157 = vpop.f32.mrf.mxu0
    %v6158 = vadd.f32 0.0, %v6157
    %v6159 = vpop.f32.mrf.mxu0
    %v6160 = vadd.f32 0.0, %v6159
    %6161 = vdwg.mxu0
    %6162 = vmatpush.bf16.msra.mxu0 %v5795
    %6163 = vmatpush.bf16.msra.mxu0 %v5793
    %6164 = vmatpush.bf16.msra.mxu0 %v5791
    %6165 = vmatpush.bf16.msra.mxu0 %v5789
    %6166 = vmatpush.bf16.msra.mxu0 %v5787
    %6167 = vmatpush.bf16.msra.mxu0 %v5785
    %6168 = vmatpush.bf16.msra.mxu0 %v5783
    %6169 = vmatpush.bf16.msra.mxu0 %v5781
    %6170 = vmatmul.bf16.gmra.mxu0 %v6117
    %v6171 = vpop.f32.mrf.mxu0
    %v6172 = vadd.f32 %v6158, %v6171
    %v6173 = vpop.f32.mrf.mxu0
    %v6174 = vadd.f32 %v6160, %v6173
    %6175 = vdwg.mxu0
    %v6176 = vadd.f32 %v6098, %v6144
    %v6177 = vadd.f32 %v6099, %v6172
    %v6178 = vadd.f32 %v6100, %v6146
    %v6179 = vadd.f32 %v6101, %v6174
    %vm6180 = vcmask 1042432
    %v6181 = vsel %vm6180, %v5886, 0.0
    %v6182 = vadd.f32 %v5884, %v6181
    %v6183 = vrot.slane %v6182, 4
    %v6184 = vadd.f32 %v6182, %v6183
    %v6185 = vrot.slane %v6184, 2
    %v6186 = vadd.f32 %v6184, %v6185
    %v6187 = vrot.slane %v6186, 1
    %v6188 = vadd.f32 %v6186, %v6187
    %v6189 = vsel %vm6180, %v5887, 0.0
    %v6190 = vadd.f32 %v5885, %v6189
    %v6191 = vrot.slane %v6190, 4
    %v6192 = vadd.f32 %v6190, %v6191
    %v6193 = vrot.slane %v6192, 2
    %v6194 = vadd.f32 %v6192, %v6193
    %v6195 = vrot.slane %v6194, 1
    %v6196 = vadd.f32 %v6194, %v6195
    %v6197 = vadd.f32 %v6188, 0.0
    %v6198 = vadd.f32 %v6196, 0.0
    %v6199 = vsel %vm6180, %v6178, 0.0
    %v6200 = vadd.f32 %v6176, %v6199
    %v6201 = vrot.slane %v6200, 4
    %v6202 = vadd.f32 %v6200, %v6201
    %v6203 = vrot.slane %v6202, 2
    %v6204 = vadd.f32 %v6202, %v6203
    %v6205 = vrot.slane %v6204, 1
    %v6206 = vadd.f32 %v6204, %v6205
    %v6207 = vsel %vm6180, %v6179, 0.0
    %v6208 = vadd.f32 %v6177, %v6207
    %v6209 = vrot.slane %v6208, 4
    %v6210 = vadd.f32 %v6208, %v6209
    %v6211 = vrot.slane %v6210, 2
    %v6212 = vadd.f32 %v6210, %v6211
    %v6213 = vrot.slane %v6212, 1
    %v6214 = vadd.f32 %v6212, %v6213
    %v6215 = vadd.f32 %v6197, %v6206
    %v6216 = vadd.f32 %v6198, %v6214
    %v6217 = vmul.f32 %v5884, %v5884
    %v6218 = vmul.f32 %v5885, %v5885
    %v6219 = vmul.f32 %v5886, %v5886
    %v6220 = vmul.f32 %v5887, %v5887
    %v6221 = vsel %vm6180, %v6219, 0.0
    %v6222 = vadd.f32 %v6217, %v6221
    %v6223 = vrot.slane %v6222, 4
    %v6224 = vadd.f32 %v6222, %v6223
    %v6225 = vrot.slane %v6224, 2
    %v6226 = vadd.f32 %v6224, %v6225
    %v6227 = vrot.slane %v6226, 1
    %v6228 = vadd.f32 %v6226, %v6227
    %v6229 = vsel %vm6180, %v6220, 0.0
    %v6230 = vadd.f32 %v6218, %v6229
    %v6231 = vrot.slane %v6230, 4
    %v6232 = vadd.f32 %v6230, %v6231
    %v6233 = vrot.slane %v6232, 2
    %v6234 = vadd.f32 %v6232, %v6233
    %v6235 = vrot.slane %v6234, 1
    %v6236 = vadd.f32 %v6234, %v6235
    %v6237 = vadd.f32 %v6228, 0.0
    %v6238 = vadd.f32 %v6236, 0.0
    %v6239 = vmul.f32 %v6176, %v6176
    %v6240 = vmul.f32 %v6177, %v6177
    %v6241 = vmul.f32 %v6178, %v6178
    %v6242 = vmul.f32 %v6179, %v6179
    %v6243 = vsel %vm6180, %v6241, 0.0
    %v6244 = vadd.f32 %v6239, %v6243
    %v6245 = vrot.slane %v6244, 4
    %v6246 = vadd.f32 %v6244, %v6245
    %v6247 = vrot.slane %v6246, 2
    %v6248 = vadd.f32 %v6246, %v6247
    %v6249 = vrot.slane %v6248, 1
    %v6250 = vadd.f32 %v6248, %v6249
    %v6251 = vsel %vm6180, %v6242, 0.0
    %v6252 = vadd.f32 %v6240, %v6251
    %v6253 = vrot.slane %v6252, 4
    %v6254 = vadd.f32 %v6252, %v6253
    %v6255 = vrot.slane %v6254, 2
    %v6256 = vadd.f32 %v6254, %v6255
    %v6257 = vrot.slane %v6256, 1
    %v6258 = vadd.f32 %v6256, %v6257
    %v6259 = vadd.f32 %v6237, %v6250
    %v6260 = vadd.f32 %v6238, %v6258
    %v6261 = vsel %vm2944, %v6215, %v6259
    %v6262 = vsel %vm2944, %v6216, %v6260
    %6263 = vrot.lane.b32.xlu0 %v6261, 32
    %v6264 = vpop.permute.xlu0 %6263
    %6265 = vrot.lane.b32.xlu0 %v6262, 32
    %v6266 = vpop.permute.xlu0 %6265
    %v6267 = vsel %vm3062, %v6264, %v6266
    %v6268 = vsel %vm3062, %v6266, %v6264
    %v6269 = vadd.f32 %v6261, %v6268
    %v6270 = vadd.f32 %v6262, %v6267
    %6271 = vrot.lane.b32.xlu0 %v6269, 64
    %v6272 = vpop.permute.xlu0 %6271
    %6273 = vrot.lane.b32.xlu0 %v6270, 64
    %v6274 = vpop.permute.xlu0 %6273
    %v6275 = vsel %vm3071, %v6272, %v6274
    %v6276 = vsel %vm3071, %v6274, %v6272
    %v6277 = vadd.f32 %v6269, %v6276
    %v6278 = vadd.f32 %v6270, %v6275
    %v6279 = vadd.f32 %v6277, %v6278
    %v6280 = vmul.f32 %v6279, 0.0056818184
    %v6281 = vmul.f32 %v6280, %v6280
    %v6283 = vrot.slane %v6281, 7
    %v6285 = vsub.f32 %v6280, %v6283
    %v6286 = vmax.f32 %v6285, 0.0
    %v6287 = vadd.f32 %v6286, 1e-05
    %v6288 = vrsqrt.pop %v6287
    %v6289 = vmul.f32 %v6288, %v6287
    %v6290 = vmul.f32 %v6289, %v6288
    %v6291 = vmul.f32 0.5, %v6290
    %v6292 = vsub.f32 1.5, %v6291
    %v6293 = vmul.f32 %v6288, %v6292
    %vm6294 = vweird.f32 %v6287
    %vm6295 = vweird.f32 %v6288
    %vm6296 = vmor %vm6294, %vm6295
    %v6297 = vsel %vm6296, %v6288, %v6293
    %v6298 = vld [vmem:[%s9] sm:$0x3]
    %v6300 = vperm.slane %v6298, 0
    %v6301 = vperm.slane %v6298, 1
    %v6304 = vmul.f32 %v6297, %v6300
    %v6305 = vmul.f32 %v6297, %v6301
    %v6306 = vld [vmem:[%s10] sm:$0x3]
    %v6309 = vrot.slane %v6304, 1
    %v6310 = vrot.slane %v6305, 1
    %v6313 = vmul.f32 %v6280, %v6309
    %v6314 = vmul.f32 %v6280, %v6310
    %v6317 = vrot.slane %v6314, 7
    %v6318 = vsel %vm2944, %v6313, %v6317
    %v6320 = vsub.f32 %v6306, %v6318
    %v6321 = vperm.slane %v6304, 1
    %v6322 = vperm.slane %v6305, 1
    %v6323 = vmul.f32 %v5884, %v6321
    %v6324 = vmul.f32 %v5885, %v6322
    %v6325 = vmul.f32 %v5886, %v6321
    %v6326 = vmul.f32 %v5887, %v6322
    %v6328 = vperm.slane %v6320, 0
    %v6329 = vperm.slane %v6320, 1
    %v6332 = vadd.f32 %v6323, %v6328
    %v6333 = vadd.f32 %v6324, %v6329
    %v6334 = vadd.f32 %v6325, %v6328
    %v6335 = vadd.f32 %v6326, %v6329
    %vm6336 = vcmp.ge.f32.partialorder %v6332, 0.0
    %vm6337 = vcmp.ge.f32.partialorder %v6333, 0.0
    %vm6338 = vcmp.ge.f32.partialorder %v6334, 0.0
    %vm6339 = vcmp.ge.f32.partialorder %v6335, 0.0
    %v6340 = vmul.f32 %v6332, 0.2
    %v6341 = vmul.f32 %v6333, 0.2
    %v6342 = vmul.f32 %v6334, 0.2
    %v6343 = vmul.f32 %v6335, 0.2
    %v6344 = vsel %vm6336, %v6332, %v6340
    %v6345 = vsel %vm6337, %v6333, %v6341
    %v6346 = vsel %vm6338, %v6334, %v6342
    %v6347 = vsel %vm6339, %v6335, %v6343
    %6348 = vst [vmem:[%s13] sm:$0xff] %v6344
    %6349 = vst [vmem:[%s13 + $0x8] sm:$0xff] %v6345
    %6350 = vst [vmem:[%s13 + $0x10] sm:$0x7] %v6346
    %6351 = vst [vmem:[%s13 + $0x18] sm:$0x7] %v6347
    %v6352 = vpack.c.bf16 %v6345, %v6344
    %v6353 = vpack.c.bf16 %v6347, %v6346
    %v6354 = vld [vmem:[%s11] sm:$0xf]
    %v6355 = vld [vmem:[%s11 + $0x4] sm:$0xf]
    %v6356 = vld [vmem:[%s11 + $0x8] sm:$0xf]
    %v6357 = vld [vmem:[%s11 + $0xc] sm:$0xf]
    %v6358 = vld [vmem:[%s11 + $0x10] sm:$0xf]
    %v6359 = vld [vmem:[%s11 + $0x14] sm:$0xf]
    %v6360 = vld [vmem:[%s11 + $0x18] sm:$0xf]
    %v6361 = vld [vmem:[%s11 + $0x1c] sm:$0xf]
    %v6362 = vld [vmem:[%s11 + $0x20] sm:$0xf]
    %v6363 = vld [vmem:[%s11 + $0x24] sm:$0xf]
    %v6364 = vld [vmem:[%s11 + $0x28] sm:$0xf]
    %v6365 = vld [vmem:[%s11 + $0x2c] sm:$0xf]
    %v6366 = vld [vmem:[%s11 + $0x30] sm:$0xf]
    %v6367 = vld [vmem:[%s11 + $0x34] sm:$0xf]
    %v6368 = vld [vmem:[%s11 + $0x38] sm:$0xf]
    %v6369 = vld [vmem:[%s11 + $0x3c] sm:$0xf]
    %v6370 = vld [vmem:[%s11 + $0x40] sm:$0xf]
    %v6371 = vld [vmem:[%s11 + $0x44] sm:$0xf]
    %v6372 = vld [vmem:[%s11 + $0x48] sm:$0xf]
    %v6373 = vld [vmem:[%s11 + $0x4c] sm:$0xf]
    %v6374 = vld [vmem:[%s11 + $0x50] sm:$0xf]
    %v6375 = vld [vmem:[%s11 + $0x54] sm:$0xf]
    %v6376 = vld [vmem:[%s11 + $0x58] sm:$0xf]
    %v6377 = vld [vmem:[%s11 + $0x5c] sm:$0xf]
    %v6378 = vld [vmem:[%s11 + $0x60] sm:$0xf]
    %v6379 = vld [vmem:[%s11 + $0x64] sm:$0xf]
    %v6380 = vld [vmem:[%s11 + $0x68] sm:$0xf]
    %v6381 = vld [vmem:[%s11 + $0x6c] sm:$0xf]
    %v6382 = vld [vmem:[%s11 + $0x70] sm:$0xf]
    %v6383 = vld [vmem:[%s11 + $0x74] sm:$0xf]
    %v6384 = vld [vmem:[%s11 + $0x78] sm:$0xf]
    %v6385 = vld [vmem:[%s11 + $0x7c] sm:$0xf]
    %s6386 = scalar_lea.vmem %s11, 128
    %v6387 = vld [vmem:[%s6386] sm:$0xf]
    %v6388 = vld [vmem:[%s6386 + $0x4] sm:$0xf]
    %v6389 = vld [vmem:[%s6386 + $0x8] sm:$0xf]
    %v6390 = vld [vmem:[%s6386 + $0xc] sm:$0xf]
    %v6391 = vld [vmem:[%s6386 + $0x10] sm:$0xf]
    %v6392 = vld [vmem:[%s6386 + $0x14] sm:$0xf]
    %v6393 = vld [vmem:[%s6386 + $0x18] sm:$0xf]
    %v6394 = vld [vmem:[%s6386 + $0x1c] sm:$0xf]
    %v6395 = vld [vmem:[%s6386 + $0x20] sm:$0xf]
    %v6396 = vld [vmem:[%s6386 + $0x24] sm:$0xf]
    %v6397 = vld [vmem:[%s6386 + $0x28] sm:$0xf]
    %v6398 = vld [vmem:[%s6386 + $0x2c] sm:$0xf]
    %v6399 = vld [vmem:[%s6386 + $0x30] sm:$0xf]
    %v6400 = vld [vmem:[%s6386 + $0x34] sm:$0xf]
    %v6401 = vld [vmem:[%s6386 + $0x38] sm:$0xf]
    %v6402 = vld [vmem:[%s6386 + $0x3c] sm:$0xf]
    %v6403 = vld [vmem:[%s6386 + $0x40] sm:$0xf]
    %v6404 = vld [vmem:[%s6386 + $0x44] sm:$0xf]
    %v6405 = vld [vmem:[%s6386 + $0x48] sm:$0xf]
    %v6406 = vld [vmem:[%s6386 + $0x4c] sm:$0xf]
    %v6407 = vld [vmem:[%s6386 + $0x50] sm:$0xf]
    %v6408 = vld [vmem:[%s6386 + $0x54] sm:$0xf]
    %v6409 = vld [vmem:[%s6386 + $0x58] sm:$0xf]
    %v6410 = vld [vmem:[%s6386 + $0x5c] sm:$0xf]
    %v6411 = vld [vmem:[%s6386 + $0x60] sm:$0xf]
    %v6412 = vld [vmem:[%s6386 + $0x64] sm:$0xf]
    %v6413 = vld [vmem:[%s6386 + $0x68] sm:$0xf]
    %v6414 = vld [vmem:[%s6386 + $0x6c] sm:$0xf]
    %v6415 = vld [vmem:[%s6386 + $0x70] sm:$0xf]
    %v6416 = vld [vmem:[%s6386 + $0x74] sm:$0xf]
    %v6417 = vld [vmem:[%s6386 + $0x78] sm:$0xf]
    %v6418 = vld [vmem:[%s6386 + $0x7c] sm:$0xf]
    %v6420 = vunpack.c.l.b16 %v6352
    %v6421 = vunpack.c.h.b16 %v6352
    %v6422 = vpack.c.b16 %v6420, %v6420
    %v6423 = vpack.c.b16 %v6421, %v6421
    %v6425 = vshrl.u32 %v6422, 16
    %v6428 = vshrl.u32 %v6423, 16
    %v6464 = vunpack.c.l.b16 %v6387
    %v6465 = vunpack.c.l.b16 %v6388
    %v6466 = vunpack.c.l.b16 %v6389
    %v6467 = vunpack.c.l.b16 %v6390
    %v6468 = vunpack.c.l.b16 %v6391
    %v6469 = vunpack.c.l.b16 %v6392
    %v6470 = vunpack.c.l.b16 %v6393
    %v6471 = vunpack.c.l.b16 %v6394
    %v6472 = vunpack.c.l.b16 %v6395
    %v6473 = vunpack.c.l.b16 %v6396
    %v6474 = vunpack.c.l.b16 %v6397
    %v6475 = vunpack.c.l.b16 %v6398
    %v6476 = vunpack.c.l.b16 %v6399
    %v6477 = vunpack.c.l.b16 %v6400
    %v6478 = vunpack.c.l.b16 %v6401
    %v6479 = vunpack.c.l.b16 %v6402
    %v6480 = vunpack.c.l.b16 %v6403
    %v6481 = vunpack.c.l.b16 %v6404
    %v6482 = vunpack.c.l.b16 %v6405
    %v6483 = vunpack.c.l.b16 %v6406
    %v6484 = vunpack.c.l.b16 %v6407
    %v6485 = vunpack.c.l.b16 %v6408
    %v6486 = vunpack.c.l.b16 %v6409
    %v6487 = vunpack.c.l.b16 %v6410
    %v6488 = vunpack.c.l.b16 %v6411
    %v6489 = vunpack.c.l.b16 %v6412
    %v6490 = vunpack.c.l.b16 %v6413
    %v6491 = vunpack.c.l.b16 %v6414
    %v6492 = vunpack.c.l.b16 %v6415
    %v6493 = vunpack.c.l.b16 %v6416
    %v6494 = vunpack.c.l.b16 %v6417
    %v6495 = vunpack.c.l.b16 %v6418
    %v6496 = vpack.c.b16 %v6465, %v6464
    %v6497 = vpack.c.b16 %v6467, %v6466
    %v6498 = vpack.c.b16 %v6469, %v6468
    %v6499 = vpack.c.b16 %v6471, %v6470
    %v6500 = vpack.c.b16 %v6473, %v6472
    %v6501 = vpack.c.b16 %v6475, %v6474
    %v6502 = vpack.c.b16 %v6477, %v6476
    %v6503 = vpack.c.b16 %v6479, %v6478
    %v6504 = vpack.c.b16 %v6481, %v6480
    %v6505 = vpack.c.b16 %v6483, %v6482
    %v6506 = vpack.c.b16 %v6485, %v6484
    %v6507 = vpack.c.b16 %v6487, %v6486
    %v6508 = vpack.c.b16 %v6489, %v6488
    %v6509 = vpack.c.b16 %v6491, %v6490
    %v6510 = vpack.c.b16 %v6493, %v6492
    %v6511 = vpack.c.b16 %v6495, %v6494
    %6528 = vmatpush.bf16.msra.mxu0 %v6503
    %6529 = vmatpush.bf16.msra.mxu0 %v6502
    %6530 = vmatpush.bf16.msra.mxu0 %v6501
    %6531 = vmatpush.bf16.msra.mxu0 %v6500
    %6532 = vmatpush.bf16.msra.mxu0 %v6499
    %6533 = vmatpush.bf16.msra.mxu0 %v6498
    %6534 = vmatpush.bf16.msra.mxu0 %v6497
    %6535 = vmatpush.bf16.msra.mxu0 %v6496
    %6536 = vmatmul.bf16.gmra.mxu0 %v6425
    %v6537 = vpop.f32.mrf.mxu0
    %v6538 = vadd.f32 0.0, %v6537
    %v6539 = vpop.f32.mrf.mxu0
    %6540 = vdwg.mxu0
    %6541 = vmatpush.bf16.msra.mxu0 %v6511
    %6542 = vmatpush.bf16.msra.mxu0 %v6510
    %6543 = vmatpush.bf16.msra.mxu0 %v6509
    %6544 = vmatpush.bf16.msra.mxu0 %v6508
    %6545 = vmatpush.bf16.msra.mxu0 %v6507
    %6546 = vmatpush.bf16.msra.mxu0 %v6506
    %6547 = vmatpush.bf16.msra.mxu0 %v6505
    %6548 = vmatpush.bf16.msra.mxu0 %v6504
    %6549 = vmatmul.bf16.gmra.mxu0 %v6428
    %v6550 = vpop.f32.mrf.mxu0
    %v6551 = vadd.f32 %v6538, %v6550
    %v6552 = vpop.f32.mrf.mxu0
    %6553 = vdwg.mxu0
    %v6588 = vunpack.c.l.b16 %v6354
    %v6589 = vunpack.c.l.b16 %v6355
    %v6590 = vunpack.c.l.b16 %v6356
    %v6591 = vunpack.c.l.b16 %v6357
    %v6592 = vunpack.c.l.b16 %v6358
    %v6593 = vunpack.c.l.b16 %v6359
    %v6594 = vunpack.c.l.b16 %v6360
    %v6595 = vunpack.c.l.b16 %v6361
    %v6596 = vunpack.c.l.b16 %v6362
    %v6597 = vunpack.c.l.b16 %v6363
    %v6598 = vunpack.c.l.b16 %v6364
    %v6599 = vunpack.c.l.b16 %v6365
    %v6600 = vunpack.c.l.b16 %v6366
    %v6601 = vunpack.c.l.b16 %v6367
    %v6602 = vunpack.c.l.b16 %v6368
    %v6603 = vunpack.c.l.b16 %v6369
    %v6604 = vunpack.c.l.b16 %v6370
    %v6605 = vunpack.c.l.b16 %v6371
    %v6606 = vunpack.c.l.b16 %v6372
    %v6607 = vunpack.c.l.b16 %v6373
    %v6608 = vunpack.c.l.b16 %v6374
    %v6609 = vunpack.c.l.b16 %v6375
    %v6610 = vunpack.c.l.b16 %v6376
    %v6611 = vunpack.c.l.b16 %v6377
    %v6612 = vunpack.c.l.b16 %v6378
    %v6613 = vunpack.c.l.b16 %v6379
    %v6614 = vunpack.c.l.b16 %v6380
    %v6615 = vunpack.c.l.b16 %v6381
    %v6616 = vunpack.c.l.b16 %v6382
    %v6617 = vunpack.c.l.b16 %v6383
    %v6618 = vunpack.c.l.b16 %v6384
    %v6619 = vunpack.c.l.b16 %v6385
    %v6620 = vpack.c.b16 %v6589, %v6588
    %v6621 = vpack.c.b16 %v6591, %v6590
    %v6622 = vpack.c.b16 %v6593, %v6592
    %v6623 = vpack.c.b16 %v6595, %v6594
    %v6624 = vpack.c.b16 %v6597, %v6596
    %v6625 = vpack.c.b16 %v6599, %v6598
    %v6626 = vpack.c.b16 %v6601, %v6600
    %v6627 = vpack.c.b16 %v6603, %v6602
    %v6628 = vpack.c.b16 %v6605, %v6604
    %v6629 = vpack.c.b16 %v6607, %v6606
    %v6630 = vpack.c.b16 %v6609, %v6608
    %v6631 = vpack.c.b16 %v6611, %v6610
    %v6632 = vpack.c.b16 %v6613, %v6612
    %v6633 = vpack.c.b16 %v6615, %v6614
    %v6634 = vpack.c.b16 %v6617, %v6616
    %v6635 = vpack.c.b16 %v6619, %v6618
    %6652 = vmatpush.bf16.msra.mxu0 %v6627
    %6653 = vmatpush.bf16.msra.mxu0 %v6626
    %6654 = vmatpush.bf16.msra.mxu0 %v6625
    %6655 = vmatpush.bf16.msra.mxu0 %v6624
    %6656 = vmatpush.bf16.msra.mxu0 %v6623
    %6657 = vmatpush.bf16.msra.mxu0 %v6622
    %6658 = vmatpush.bf16.msra.mxu0 %v6621
    %6659 = vmatpush.bf16.msra.mxu0 %v6620
    %6660 = vmatmul.bf16.gmra.mxu0 %v6422
    %v6661 = vpop.f32.mrf.mxu0
    %v6662 = vadd.f32 %v6551, %v6661
    %v6663 = vpop.f32.mrf.mxu0
    %6664 = vdwg.mxu0
    %6665 = vmatpush.bf16.msra.mxu0 %v6635
    %6666 = vmatpush.bf16.msra.mxu0 %v6634
    %6667 = vmatpush.bf16.msra.mxu0 %v6633
    %6668 = vmatpush.bf16.msra.mxu0 %v6632
    %6669 = vmatpush.bf16.msra.mxu0 %v6631
    %6670 = vmatpush.bf16.msra.mxu0 %v6630
    %6671 = vmatpush.bf16.msra.mxu0 %v6629
    %6672 = vmatpush.bf16.msra.mxu0 %v6628
    %6673 = vmatmul.bf16.gmra.mxu0 %v6423
    %v6674 = vpop.f32.mrf.mxu0
    %v6675 = vadd.f32 %v6662, %v6674
    %v6676 = vpop.f32.mrf.mxu0
    %6677 = vdwg.mxu0
    %s6678 = scalar_lea.vmem %s11, 256
    %v6679 = vld [vmem:[%s6678] sm:$0xf]
    %v6680 = vld [vmem:[%s6678 + $0x4] sm:$0xf]
    %v6681 = vld [vmem:[%s6678 + $0x8] sm:$0xf]
    %v6682 = vld [vmem:[%s6678 + $0xc] sm:$0xf]
    %v6683 = vld [vmem:[%s6678 + $0x10] sm:$0xf]
    %v6684 = vld [vmem:[%s6678 + $0x14] sm:$0xf]
    %v6685 = vld [vmem:[%s6678 + $0x18] sm:$0xf]
    %v6686 = vld [vmem:[%s6678 + $0x1c] sm:$0xf]
    %v6687 = vld [vmem:[%s6678 + $0x20] sm:$0xf]
    %v6688 = vld [vmem:[%s6678 + $0x24] sm:$0xf]
    %v6689 = vld [vmem:[%s6678 + $0x28] sm:$0xf]
    %v6690 = vld [vmem:[%s6678 + $0x2c] sm:$0xf]
    %v6691 = vld [vmem:[%s6678 + $0x30] sm:$0xf]
    %v6692 = vld [vmem:[%s6678 + $0x34] sm:$0xf]
    %v6693 = vld [vmem:[%s6678 + $0x38] sm:$0xf]
    %v6694 = vld [vmem:[%s6678 + $0x3c] sm:$0xf]
    %v6695 = vld [vmem:[%s6678 + $0x40] sm:$0xf]
    %v6696 = vld [vmem:[%s6678 + $0x44] sm:$0xf]
    %v6697 = vld [vmem:[%s6678 + $0x48] sm:$0xf]
    %v6698 = vld [vmem:[%s6678 + $0x4c] sm:$0xf]
    %v6699 = vld [vmem:[%s6678 + $0x50] sm:$0xf]
    %v6700 = vld [vmem:[%s6678 + $0x54] sm:$0xf]
    %v6701 = vld [vmem:[%s6678 + $0x58] sm:$0xf]
    %v6702 = vld [vmem:[%s6678 + $0x5c] sm:$0xf]
    %v6703 = vld [vmem:[%s6678 + $0x60] sm:$0xf]
    %v6704 = vld [vmem:[%s6678 + $0x64] sm:$0xf]
    %v6705 = vld [vmem:[%s6678 + $0x68] sm:$0xf]
    %v6706 = vld [vmem:[%s6678 + $0x6c] sm:$0xf]
    %v6707 = vld [vmem:[%s6678 + $0x70] sm:$0xf]
    %v6708 = vld [vmem:[%s6678 + $0x74] sm:$0xf]
    %v6709 = vld [vmem:[%s6678 + $0x78] sm:$0xf]
    %v6710 = vld [vmem:[%s6678 + $0x7c] sm:$0xf]
    %v6711 = vrot.slane %v6422, 1
    %v6712 = vrot.slane %v6423, 1
    %v6747 = vunpack.c.l.b16 %v6679
    %v6748 = vunpack.c.l.b16 %v6680
    %v6749 = vunpack.c.l.b16 %v6681
    %v6750 = vunpack.c.l.b16 %v6682
    %v6751 = vunpack.c.l.b16 %v6683
    %v6752 = vunpack.c.l.b16 %v6684
    %v6753 = vunpack.c.l.b16 %v6685
    %v6754 = vunpack.c.l.b16 %v6686
    %v6755 = vunpack.c.l.b16 %v6687
    %v6756 = vunpack.c.l.b16 %v6688
    %v6757 = vunpack.c.l.b16 %v6689
    %v6758 = vunpack.c.l.b16 %v6690
    %v6759 = vunpack.c.l.b16 %v6691
    %v6760 = vunpack.c.l.b16 %v6692
    %v6761 = vunpack.c.l.b16 %v6693
    %v6762 = vunpack.c.l.b16 %v6694
    %v6763 = vunpack.c.l.b16 %v6695
    %v6764 = vunpack.c.l.b16 %v6696
    %v6765 = vunpack.c.l.b16 %v6697
    %v6766 = vunpack.c.l.b16 %v6698
    %v6767 = vunpack.c.l.b16 %v6699
    %v6768 = vunpack.c.l.b16 %v6700
    %v6769 = vunpack.c.l.b16 %v6701
    %v6770 = vunpack.c.l.b16 %v6702
    %v6771 = vunpack.c.l.b16 %v6703
    %v6772 = vunpack.c.l.b16 %v6704
    %v6773 = vunpack.c.l.b16 %v6705
    %v6774 = vunpack.c.l.b16 %v6706
    %v6775 = vunpack.c.l.b16 %v6707
    %v6776 = vunpack.c.l.b16 %v6708
    %v6777 = vunpack.c.l.b16 %v6709
    %v6778 = vunpack.c.l.b16 %v6710
    %v6779 = vpack.c.b16 %v6748, %v6747
    %v6780 = vpack.c.b16 %v6750, %v6749
    %v6781 = vpack.c.b16 %v6752, %v6751
    %v6782 = vpack.c.b16 %v6754, %v6753
    %v6783 = vpack.c.b16 %v6756, %v6755
    %v6784 = vpack.c.b16 %v6758, %v6757
    %v6785 = vpack.c.b16 %v6760, %v6759
    %v6786 = vpack.c.b16 %v6762, %v6761
    %v6787 = vpack.c.b16 %v6764, %v6763
    %v6788 = vpack.c.b16 %v6766, %v6765
    %v6789 = vpack.c.b16 %v6768, %v6767
    %v6790 = vpack.c.b16 %v6770, %v6769
    %v6791 = vpack.c.b16 %v6772, %v6771
    %v6792 = vpack.c.b16 %v6774, %v6773
    %v6793 = vpack.c.b16 %v6776, %v6775
    %v6794 = vpack.c.b16 %v6778, %v6777
    %6811 = vmatpush.bf16.msra.mxu0 %v6786
    %6812 = vmatpush.bf16.msra.mxu0 %v6785
    %6813 = vmatpush.bf16.msra.mxu0 %v6784
    %6814 = vmatpush.bf16.msra.mxu0 %v6783
    %6815 = vmatpush.bf16.msra.mxu0 %v6782
    %6816 = vmatpush.bf16.msra.mxu0 %v6781
    %6817 = vmatpush.bf16.msra.mxu0 %v6780
    %6818 = vmatpush.bf16.msra.mxu0 %v6779
    %6819 = vmatmul.bf16.gmra.mxu0 %v6711
    %v6820 = vpop.f32.mrf.mxu0
    %v6821 = vadd.f32 0.0, %v6820
    %v6822 = vpop.f32.mrf.mxu0
    %6823 = vdwg.mxu0
    %6824 = vmatpush.bf16.msra.mxu0 %v6794
    %6825 = vmatpush.bf16.msra.mxu0 %v6793
    %6826 = vmatpush.bf16.msra.mxu0 %v6792
    %6827 = vmatpush.bf16.msra.mxu0 %v6791
    %6828 = vmatpush.bf16.msra.mxu0 %v6790
    %6829 = vmatpush.bf16.msra.mxu0 %v6789
    %6830 = vmatpush.bf16.msra.mxu0 %v6788
    %6831 = vmatpush.bf16.msra.mxu0 %v6787
    %6832 = vmatmul.bf16.gmra.mxu0 %v6712
    %v6833 = vpop.f32.mrf.mxu0
    %v6834 = vadd.f32 %v6821, %v6833
    %v6835 = vpop.f32.mrf.mxu0
    %6836 = vdwg.mxu0
    %v6837 = vadd.f32 %v6675, %v6834
    %s6838 = scalar_lea.vmem %s11, 384
    %v6839 = vld [vmem:[%s6838] sm:$0xf]
    %v6840 = vld [vmem:[%s6838 + $0x4] sm:$0xf]
    %v6841 = vld [vmem:[%s6838 + $0x8] sm:$0xf]
    %v6842 = vld [vmem:[%s6838 + $0xc] sm:$0xf]
    %v6843 = vld [vmem:[%s6838 + $0x10] sm:$0xf]
    %v6844 = vld [vmem:[%s6838 + $0x14] sm:$0xf]
    %v6845 = vld [vmem:[%s6838 + $0x18] sm:$0xf]
    %v6846 = vld [vmem:[%s6838 + $0x1c] sm:$0xf]
    %v6847 = vld [vmem:[%s6838 + $0x20] sm:$0xf]
    %v6848 = vld [vmem:[%s6838 + $0x24] sm:$0xf]
    %v6849 = vld [vmem:[%s6838 + $0x28] sm:$0xf]
    %v6850 = vld [vmem:[%s6838 + $0x2c] sm:$0xf]
    %v6851 = vld [vmem:[%s6838 + $0x30] sm:$0xf]
    %v6852 = vld [vmem:[%s6838 + $0x34] sm:$0xf]
    %v6853 = vld [vmem:[%s6838 + $0x38] sm:$0xf]
    %v6854 = vld [vmem:[%s6838 + $0x3c] sm:$0xf]
    %v6855 = vld [vmem:[%s6838 + $0x40] sm:$0xf]
    %v6856 = vld [vmem:[%s6838 + $0x44] sm:$0xf]
    %v6857 = vld [vmem:[%s6838 + $0x48] sm:$0xf]
    %v6858 = vld [vmem:[%s6838 + $0x4c] sm:$0xf]
    %v6859 = vld [vmem:[%s6838 + $0x50] sm:$0xf]
    %v6860 = vld [vmem:[%s6838 + $0x54] sm:$0xf]
    %v6861 = vld [vmem:[%s6838 + $0x58] sm:$0xf]
    %v6862 = vld [vmem:[%s6838 + $0x5c] sm:$0xf]
    %v6863 = vld [vmem:[%s6838 + $0x60] sm:$0xf]
    %v6864 = vld [vmem:[%s6838 + $0x64] sm:$0xf]
    %v6865 = vld [vmem:[%s6838 + $0x68] sm:$0xf]
    %v6866 = vld [vmem:[%s6838 + $0x6c] sm:$0xf]
    %v6867 = vld [vmem:[%s6838 + $0x70] sm:$0xf]
    %v6868 = vld [vmem:[%s6838 + $0x74] sm:$0xf]
    %v6869 = vld [vmem:[%s6838 + $0x78] sm:$0xf]
    %v6870 = vld [vmem:[%s6838 + $0x7c] sm:$0xf]
    %v6871 = vrot.slane %v6425, 1
    %v6872 = vrot.slane %v6428, 1
    %v6907 = vunpack.c.l.b16 %v6839
    %v6908 = vunpack.c.l.b16 %v6840
    %v6909 = vunpack.c.l.b16 %v6841
    %v6910 = vunpack.c.l.b16 %v6842
    %v6911 = vunpack.c.l.b16 %v6843
    %v6912 = vunpack.c.l.b16 %v6844
    %v6913 = vunpack.c.l.b16 %v6845
    %v6914 = vunpack.c.l.b16 %v6846
    %v6915 = vunpack.c.l.b16 %v6847
    %v6916 = vunpack.c.l.b16 %v6848
    %v6917 = vunpack.c.l.b16 %v6849
    %v6918 = vunpack.c.l.b16 %v6850
    %v6919 = vunpack.c.l.b16 %v6851
    %v6920 = vunpack.c.l.b16 %v6852
    %v6921 = vunpack.c.l.b16 %v6853
    %v6922 = vunpack.c.l.b16 %v6854
    %v6923 = vunpack.c.l.b16 %v6855
    %v6924 = vunpack.c.l.b16 %v6856
    %v6925 = vunpack.c.l.b16 %v6857
    %v6926 = vunpack.c.l.b16 %v6858
    %v6927 = vunpack.c.l.b16 %v6859
    %v6928 = vunpack.c.l.b16 %v6860
    %v6929 = vunpack.c.l.b16 %v6861
    %v6930 = vunpack.c.l.b16 %v6862
    %v6931 = vunpack.c.l.b16 %v6863
    %v6932 = vunpack.c.l.b16 %v6864
    %v6933 = vunpack.c.l.b16 %v6865
    %v6934 = vunpack.c.l.b16 %v6866
    %v6935 = vunpack.c.l.b16 %v6867
    %v6936 = vunpack.c.l.b16 %v6868
    %v6937 = vunpack.c.l.b16 %v6869
    %v6938 = vunpack.c.l.b16 %v6870
    %v6939 = vpack.c.b16 %v6908, %v6907
    %v6940 = vpack.c.b16 %v6910, %v6909
    %v6941 = vpack.c.b16 %v6912, %v6911
    %v6942 = vpack.c.b16 %v6914, %v6913
    %v6943 = vpack.c.b16 %v6916, %v6915
    %v6944 = vpack.c.b16 %v6918, %v6917
    %v6945 = vpack.c.b16 %v6920, %v6919
    %v6946 = vpack.c.b16 %v6922, %v6921
    %v6947 = vpack.c.b16 %v6924, %v6923
    %v6948 = vpack.c.b16 %v6926, %v6925
    %v6949 = vpack.c.b16 %v6928, %v6927
    %v6950 = vpack.c.b16 %v6930, %v6929
    %v6951 = vpack.c.b16 %v6932, %v6931
    %v6952 = vpack.c.b16 %v6934, %v6933
    %v6953 = vpack.c.b16 %v6936, %v6935
    %v6954 = vpack.c.b16 %v6938, %v6937
    %6971 = vmatpush.bf16.msra.mxu0 %v6946
    %6972 = vmatpush.bf16.msra.mxu0 %v6945
    %6973 = vmatpush.bf16.msra.mxu0 %v6944
    %6974 = vmatpush.bf16.msra.mxu0 %v6943
    %6975 = vmatpush.bf16.msra.mxu0 %v6942
    %6976 = vmatpush.bf16.msra.mxu0 %v6941
    %6977 = vmatpush.bf16.msra.mxu0 %v6940
    %6978 = vmatpush.bf16.msra.mxu0 %v6939
    %6979 = vmatmul.bf16.gmra.mxu0 %v6871
    %v6980 = vpop.f32.mrf.mxu0
    %v6981 = vadd.f32 0.0, %v6980
    %v6982 = vpop.f32.mrf.mxu0
    %6983 = vdwg.mxu0
    %6984 = vmatpush.bf16.msra.mxu0 %v6954
    %6985 = vmatpush.bf16.msra.mxu0 %v6953
    %6986 = vmatpush.bf16.msra.mxu0 %v6952
    %6987 = vmatpush.bf16.msra.mxu0 %v6951
    %6988 = vmatpush.bf16.msra.mxu0 %v6950
    %6989 = vmatpush.bf16.msra.mxu0 %v6949
    %6990 = vmatpush.bf16.msra.mxu0 %v6948
    %6991 = vmatpush.bf16.msra.mxu0 %v6947
    %6992 = vmatmul.bf16.gmra.mxu0 %v6872
    %v6993 = vpop.f32.mrf.mxu0
    %v6994 = vadd.f32 %v6981, %v6993
    %v6995 = vpop.f32.mrf.mxu0
    %6996 = vdwg.mxu0
    %v6997 = vadd.f32 %v6837, %v6994
    %s6998 = scalar_lea.vmem %s11, 512
    %v6999 = vld [vmem:[%s6998] sm:$0xf]
    %v7000 = vld [vmem:[%s6998 + $0x4] sm:$0xf]
    %v7001 = vld [vmem:[%s6998 + $0x8] sm:$0xf]
    %v7002 = vld [vmem:[%s6998 + $0xc] sm:$0xf]
    %v7003 = vld [vmem:[%s6998 + $0x10] sm:$0xf]
    %v7004 = vld [vmem:[%s6998 + $0x14] sm:$0xf]
    %v7005 = vld [vmem:[%s6998 + $0x18] sm:$0xf]
    %v7006 = vld [vmem:[%s6998 + $0x1c] sm:$0xf]
    %v7007 = vld [vmem:[%s6998 + $0x20] sm:$0xf]
    %v7008 = vld [vmem:[%s6998 + $0x24] sm:$0xf]
    %v7009 = vld [vmem:[%s6998 + $0x28] sm:$0xf]
    %v7010 = vld [vmem:[%s6998 + $0x2c] sm:$0xf]
    %v7011 = vld [vmem:[%s6998 + $0x30] sm:$0xf]
    %v7012 = vld [vmem:[%s6998 + $0x34] sm:$0xf]
    %v7013 = vld [vmem:[%s6998 + $0x38] sm:$0xf]
    %v7014 = vld [vmem:[%s6998 + $0x3c] sm:$0xf]
    %v7015 = vld [vmem:[%s6998 + $0x40] sm:$0xf]
    %v7016 = vld [vmem:[%s6998 + $0x44] sm:$0xf]
    %v7017 = vld [vmem:[%s6998 + $0x48] sm:$0xf]
    %v7018 = vld [vmem:[%s6998 + $0x4c] sm:$0xf]
    %v7019 = vld [vmem:[%s6998 + $0x50] sm:$0xf]
    %v7020 = vld [vmem:[%s6998 + $0x54] sm:$0xf]
    %v7021 = vld [vmem:[%s6998 + $0x58] sm:$0xf]
    %v7022 = vld [vmem:[%s6998 + $0x5c] sm:$0xf]
    %v7023 = vld [vmem:[%s6998 + $0x60] sm:$0xf]
    %v7024 = vld [vmem:[%s6998 + $0x64] sm:$0xf]
    %v7025 = vld [vmem:[%s6998 + $0x68] sm:$0xf]
    %v7026 = vld [vmem:[%s6998 + $0x6c] sm:$0xf]
    %v7027 = vld [vmem:[%s6998 + $0x70] sm:$0xf]
    %v7028 = vld [vmem:[%s6998 + $0x74] sm:$0xf]
    %v7029 = vld [vmem:[%s6998 + $0x78] sm:$0xf]
    %v7030 = vld [vmem:[%s6998 + $0x7c] sm:$0xf]
    %v7031 = vrot.slane %v6422, 2
    %v7032 = vrot.slane %v6423, 2
    %v7067 = vunpack.c.l.b16 %v6999
    %v7068 = vunpack.c.l.b16 %v7000
    %v7069 = vunpack.c.l.b16 %v7001
    %v7070 = vunpack.c.l.b16 %v7002
    %v7071 = vunpack.c.l.b16 %v7003
    %v7072 = vunpack.c.l.b16 %v7004
    %v7073 = vunpack.c.l.b16 %v7005
    %v7074 = vunpack.c.l.b16 %v7006
    %v7075 = vunpack.c.l.b16 %v7007
    %v7076 = vunpack.c.l.b16 %v7008
    %v7077 = vunpack.c.l.b16 %v7009
    %v7078 = vunpack.c.l.b16 %v7010
    %v7079 = vunpack.c.l.b16 %v7011
    %v7080 = vunpack.c.l.b16 %v7012
    %v7081 = vunpack.c.l.b16 %v7013
    %v7082 = vunpack.c.l.b16 %v7014
    %v7083 = vunpack.c.l.b16 %v7015
    %v7084 = vunpack.c.l.b16 %v7016
    %v7085 = vunpack.c.l.b16 %v7017
    %v7086 = vunpack.c.l.b16 %v7018
    %v7087 = vunpack.c.l.b16 %v7019
    %v7088 = vunpack.c.l.b16 %v7020
    %v7089 = vunpack.c.l.b16 %v7021
    %v7090 = vunpack.c.l.b16 %v7022
    %v7091 = vunpack.c.l.b16 %v7023
    %v7092 = vunpack.c.l.b16 %v7024
    %v7093 = vunpack.c.l.b16 %v7025
    %v7094 = vunpack.c.l.b16 %v7026
    %v7095 = vunpack.c.l.b16 %v7027
    %v7096 = vunpack.c.l.b16 %v7028
    %v7097 = vunpack.c.l.b16 %v7029
    %v7098 = vunpack.c.l.b16 %v7030
    %v7099 = vpack.c.b16 %v7068, %v7067
    %v7100 = vpack.c.b16 %v7070, %v7069
    %v7101 = vpack.c.b16 %v7072, %v7071
    %v7102 = vpack.c.b16 %v7074, %v7073
    %v7103 = vpack.c.b16 %v7076, %v7075
    %v7104 = vpack.c.b16 %v7078, %v7077
    %v7105 = vpack.c.b16 %v7080, %v7079
    %v7106 = vpack.c.b16 %v7082, %v7081
    %v7107 = vpack.c.b16 %v7084, %v7083
    %v7108 = vpack.c.b16 %v7086, %v7085
    %v7109 = vpack.c.b16 %v7088, %v7087
    %v7110 = vpack.c.b16 %v7090, %v7089
    %v7111 = vpack.c.b16 %v7092, %v7091
    %v7112 = vpack.c.b16 %v7094, %v7093
    %v7113 = vpack.c.b16 %v7096, %v7095
    %v7114 = vpack.c.b16 %v7098, %v7097
    %7131 = vmatpush.bf16.msra.mxu0 %v7106
    %7132 = vmatpush.bf16.msra.mxu0 %v7105
    %7133 = vmatpush.bf16.msra.mxu0 %v7104
    %7134 = vmatpush.bf16.msra.mxu0 %v7103
    %7135 = vmatpush.bf16.msra.mxu0 %v7102
    %7136 = vmatpush.bf16.msra.mxu0 %v7101
    %7137 = vmatpush.bf16.msra.mxu0 %v7100
    %7138 = vmatpush.bf16.msra.mxu0 %v7099
    %7139 = vmatmul.bf16.gmra.mxu0 %v7031
    %v7140 = vpop.f32.mrf.mxu0
    %v7141 = vadd.f32 0.0, %v7140
    %v7142 = vpop.f32.mrf.mxu0
    %7143 = vdwg.mxu0
    %7144 = vmatpush.bf16.msra.mxu0 %v7114
    %7145 = vmatpush.bf16.msra.mxu0 %v7113
    %7146 = vmatpush.bf16.msra.mxu0 %v7112
    %7147 = vmatpush.bf16.msra.mxu0 %v7111
    %7148 = vmatpush.bf16.msra.mxu0 %v7110
    %7149 = vmatpush.bf16.msra.mxu0 %v7109
    %7150 = vmatpush.bf16.msra.mxu0 %v7108
    %7151 = vmatpush.bf16.msra.mxu0 %v7107
    %7152 = vmatmul.bf16.gmra.mxu0 %v7032
    %v7153 = vpop.f32.mrf.mxu0
    %v7154 = vadd.f32 %v7141, %v7153
    %v7155 = vpop.f32.mrf.mxu0
    %7156 = vdwg.mxu0
    %v7157 = vadd.f32 %v6997, %v7154
    %s7158 = scalar_lea.vmem %s11, 640
    %v7159 = vld [vmem:[%s7158] sm:$0xf]
    %v7160 = vld [vmem:[%s7158 + $0x4] sm:$0xf]
    %v7161 = vld [vmem:[%s7158 + $0x8] sm:$0xf]
    %v7162 = vld [vmem:[%s7158 + $0xc] sm:$0xf]
    %v7163 = vld [vmem:[%s7158 + $0x10] sm:$0xf]
    %v7164 = vld [vmem:[%s7158 + $0x14] sm:$0xf]
    %v7165 = vld [vmem:[%s7158 + $0x18] sm:$0xf]
    %v7166 = vld [vmem:[%s7158 + $0x1c] sm:$0xf]
    %v7167 = vld [vmem:[%s7158 + $0x20] sm:$0xf]
    %v7168 = vld [vmem:[%s7158 + $0x24] sm:$0xf]
    %v7169 = vld [vmem:[%s7158 + $0x28] sm:$0xf]
    %v7170 = vld [vmem:[%s7158 + $0x2c] sm:$0xf]
    %v7171 = vld [vmem:[%s7158 + $0x30] sm:$0xf]
    %v7172 = vld [vmem:[%s7158 + $0x34] sm:$0xf]
    %v7173 = vld [vmem:[%s7158 + $0x38] sm:$0xf]
    %v7174 = vld [vmem:[%s7158 + $0x3c] sm:$0xf]
    %v7175 = vld [vmem:[%s7158 + $0x40] sm:$0xf]
    %v7176 = vld [vmem:[%s7158 + $0x44] sm:$0xf]
    %v7177 = vld [vmem:[%s7158 + $0x48] sm:$0xf]
    %v7178 = vld [vmem:[%s7158 + $0x4c] sm:$0xf]
    %v7179 = vld [vmem:[%s7158 + $0x50] sm:$0xf]
    %v7180 = vld [vmem:[%s7158 + $0x54] sm:$0xf]
    %v7181 = vld [vmem:[%s7158 + $0x58] sm:$0xf]
    %v7182 = vld [vmem:[%s7158 + $0x5c] sm:$0xf]
    %v7183 = vld [vmem:[%s7158 + $0x60] sm:$0xf]
    %v7184 = vld [vmem:[%s7158 + $0x64] sm:$0xf]
    %v7185 = vld [vmem:[%s7158 + $0x68] sm:$0xf]
    %v7186 = vld [vmem:[%s7158 + $0x6c] sm:$0xf]
    %v7187 = vld [vmem:[%s7158 + $0x70] sm:$0xf]
    %v7188 = vld [vmem:[%s7158 + $0x74] sm:$0xf]
    %v7189 = vld [vmem:[%s7158 + $0x78] sm:$0xf]
    %v7190 = vld [vmem:[%s7158 + $0x7c] sm:$0xf]
    %v7191 = vrot.slane %v6425, 2
    %v7192 = vrot.slane %v6428, 2
    %v7227 = vunpack.c.l.b16 %v7159
    %v7228 = vunpack.c.l.b16 %v7160
    %v7229 = vunpack.c.l.b16 %v7161
    %v7230 = vunpack.c.l.b16 %v7162
    %v7231 = vunpack.c.l.b16 %v7163
    %v7232 = vunpack.c.l.b16 %v7164
    %v7233 = vunpack.c.l.b16 %v7165
    %v7234 = vunpack.c.l.b16 %v7166
    %v7235 = vunpack.c.l.b16 %v7167
    %v7236 = vunpack.c.l.b16 %v7168
    %v7237 = vunpack.c.l.b16 %v7169
    %v7238 = vunpack.c.l.b16 %v7170
    %v7239 = vunpack.c.l.b16 %v7171
    %v7240 = vunpack.c.l.b16 %v7172
    %v7241 = vunpack.c.l.b16 %v7173
    %v7242 = vunpack.c.l.b16 %v7174
    %v7243 = vunpack.c.l.b16 %v7175
    %v7244 = vunpack.c.l.b16 %v7176
    %v7245 = vunpack.c.l.b16 %v7177
    %v7246 = vunpack.c.l.b16 %v7178
    %v7247 = vunpack.c.l.b16 %v7179
    %v7248 = vunpack.c.l.b16 %v7180
    %v7249 = vunpack.c.l.b16 %v7181
    %v7250 = vunpack.c.l.b16 %v7182
    %v7251 = vunpack.c.l.b16 %v7183
    %v7252 = vunpack.c.l.b16 %v7184
    %v7253 = vunpack.c.l.b16 %v7185
    %v7254 = vunpack.c.l.b16 %v7186
    %v7255 = vunpack.c.l.b16 %v7187
    %v7256 = vunpack.c.l.b16 %v7188
    %v7257 = vunpack.c.l.b16 %v7189
    %v7258 = vunpack.c.l.b16 %v7190
    %v7259 = vpack.c.b16 %v7228, %v7227
    %v7260 = vpack.c.b16 %v7230, %v7229
    %v7261 = vpack.c.b16 %v7232, %v7231
    %v7262 = vpack.c.b16 %v7234, %v7233
    %v7263 = vpack.c.b16 %v7236, %v7235
    %v7264 = vpack.c.b16 %v7238, %v7237
    %v7265 = vpack.c.b16 %v7240, %v7239
    %v7266 = vpack.c.b16 %v7242, %v7241
    %v7267 = vpack.c.b16 %v7244, %v7243
    %v7268 = vpack.c.b16 %v7246, %v7245
    %v7269 = vpack.c.b16 %v7248, %v7247
    %v7270 = vpack.c.b16 %v7250, %v7249
    %v7271 = vpack.c.b16 %v7252, %v7251
    %v7272 = vpack.c.b16 %v7254, %v7253
    %v7273 = vpack.c.b16 %v7256, %v7255
    %v7274 = vpack.c.b16 %v7258, %v7257
    %7291 = vmatpush.bf16.msra.mxu0 %v7266
    %7292 = vmatpush.bf16.msra.mxu0 %v7265
    %7293 = vmatpush.bf16.msra.mxu0 %v7264
    %7294 = vmatpush.bf16.msra.mxu0 %v7263
    %7295 = vmatpush.bf16.msra.mxu0 %v7262
    %7296 = vmatpush.bf16.msra.mxu0 %v7261
    %7297 = vmatpush.bf16.msra.mxu0 %v7260
    %7298 = vmatpush.bf16.msra.mxu0 %v7259
    %7299 = vmatmul.bf16.gmra.mxu0 %v7191
    %v7300 = vpop.f32.mrf.mxu0
    %v7301 = vadd.f32 0.0, %v7300
    %v7302 = vpop.f32.mrf.mxu0
    %7303 = vdwg.mxu0
    %7304 = vmatpush.bf16.msra.mxu0 %v7274
    %7305 = vmatpush.bf16.msra.mxu0 %v7273
    %7306 = vmatpush.bf16.msra.mxu0 %v7272
    %7307 = vmatpush.bf16.msra.mxu0 %v7271
    %7308 = vmatpush.bf16.msra.mxu0 %v7270
    %7309 = vmatpush.bf16.msra.mxu0 %v7269
    %7310 = vmatpush.bf16.msra.mxu0 %v7268
    %7311 = vmatpush.bf16.msra.mxu0 %v7267
    %7312 = vmatmul.bf16.gmra.mxu0 %v7192
    %v7313 = vpop.f32.mrf.mxu0
    %v7314 = vadd.f32 %v7301, %v7313
    %v7315 = vpop.f32.mrf.mxu0
    %7316 = vdwg.mxu0
    %v7317 = vadd.f32 %v7157, %v7314
    %s7318 = scalar_lea.vmem %s11, 768
    %v7319 = vld [vmem:[%s7318] sm:$0xf]
    %v7320 = vld [vmem:[%s7318 + $0x4] sm:$0xf]
    %v7321 = vld [vmem:[%s7318 + $0x8] sm:$0xf]
    %v7322 = vld [vmem:[%s7318 + $0xc] sm:$0xf]
    %v7323 = vld [vmem:[%s7318 + $0x10] sm:$0xf]
    %v7324 = vld [vmem:[%s7318 + $0x14] sm:$0xf]
    %v7325 = vld [vmem:[%s7318 + $0x18] sm:$0xf]
    %v7326 = vld [vmem:[%s7318 + $0x1c] sm:$0xf]
    %v7327 = vld [vmem:[%s7318 + $0x20] sm:$0xf]
    %v7328 = vld [vmem:[%s7318 + $0x24] sm:$0xf]
    %v7329 = vld [vmem:[%s7318 + $0x28] sm:$0xf]
    %v7330 = vld [vmem:[%s7318 + $0x2c] sm:$0xf]
    %v7331 = vld [vmem:[%s7318 + $0x30] sm:$0xf]
    %v7332 = vld [vmem:[%s7318 + $0x34] sm:$0xf]
    %v7333 = vld [vmem:[%s7318 + $0x38] sm:$0xf]
    %v7334 = vld [vmem:[%s7318 + $0x3c] sm:$0xf]
    %v7335 = vld [vmem:[%s7318 + $0x40] sm:$0xf]
    %v7336 = vld [vmem:[%s7318 + $0x44] sm:$0xf]
    %v7337 = vld [vmem:[%s7318 + $0x48] sm:$0xf]
    %v7338 = vld [vmem:[%s7318 + $0x4c] sm:$0xf]
    %v7339 = vld [vmem:[%s7318 + $0x50] sm:$0xf]
    %v7340 = vld [vmem:[%s7318 + $0x54] sm:$0xf]
    %v7341 = vld [vmem:[%s7318 + $0x58] sm:$0xf]
    %v7342 = vld [vmem:[%s7318 + $0x5c] sm:$0xf]
    %v7343 = vld [vmem:[%s7318 + $0x60] sm:$0xf]
    %v7344 = vld [vmem:[%s7318 + $0x64] sm:$0xf]
    %v7345 = vld [vmem:[%s7318 + $0x68] sm:$0xf]
    %v7346 = vld [vmem:[%s7318 + $0x6c] sm:$0xf]
    %v7347 = vld [vmem:[%s7318 + $0x70] sm:$0xf]
    %v7348 = vld [vmem:[%s7318 + $0x74] sm:$0xf]
    %v7349 = vld [vmem:[%s7318 + $0x78] sm:$0xf]
    %v7350 = vld [vmem:[%s7318 + $0x7c] sm:$0xf]
    %v7351 = vrot.slane %v6422, 3
    %v7352 = vrot.slane %v6423, 3
    %v7387 = vunpack.c.l.b16 %v7319
    %v7388 = vunpack.c.l.b16 %v7320
    %v7389 = vunpack.c.l.b16 %v7321
    %v7390 = vunpack.c.l.b16 %v7322
    %v7391 = vunpack.c.l.b16 %v7323
    %v7392 = vunpack.c.l.b16 %v7324
    %v7393 = vunpack.c.l.b16 %v7325
    %v7394 = vunpack.c.l.b16 %v7326
    %v7395 = vunpack.c.l.b16 %v7327
    %v7396 = vunpack.c.l.b16 %v7328
    %v7397 = vunpack.c.l.b16 %v7329
    %v7398 = vunpack.c.l.b16 %v7330
    %v7399 = vunpack.c.l.b16 %v7331
    %v7400 = vunpack.c.l.b16 %v7332
    %v7401 = vunpack.c.l.b16 %v7333
    %v7402 = vunpack.c.l.b16 %v7334
    %v7403 = vunpack.c.l.b16 %v7335
    %v7404 = vunpack.c.l.b16 %v7336
    %v7405 = vunpack.c.l.b16 %v7337
    %v7406 = vunpack.c.l.b16 %v7338
    %v7407 = vunpack.c.l.b16 %v7339
    %v7408 = vunpack.c.l.b16 %v7340
    %v7409 = vunpack.c.l.b16 %v7341
    %v7410 = vunpack.c.l.b16 %v7342
    %v7411 = vunpack.c.l.b16 %v7343
    %v7412 = vunpack.c.l.b16 %v7344
    %v7413 = vunpack.c.l.b16 %v7345
    %v7414 = vunpack.c.l.b16 %v7346
    %v7415 = vunpack.c.l.b16 %v7347
    %v7416 = vunpack.c.l.b16 %v7348
    %v7417 = vunpack.c.l.b16 %v7349
    %v7418 = vunpack.c.l.b16 %v7350
    %v7419 = vpack.c.b16 %v7388, %v7387
    %v7420 = vpack.c.b16 %v7390, %v7389
    %v7421 = vpack.c.b16 %v7392, %v7391
    %v7422 = vpack.c.b16 %v7394, %v7393
    %v7423 = vpack.c.b16 %v7396, %v7395
    %v7424 = vpack.c.b16 %v7398, %v7397
    %v7425 = vpack.c.b16 %v7400, %v7399
    %v7426 = vpack.c.b16 %v7402, %v7401
    %v7427 = vpack.c.b16 %v7404, %v7403
    %v7428 = vpack.c.b16 %v7406, %v7405
    %v7429 = vpack.c.b16 %v7408, %v7407
    %v7430 = vpack.c.b16 %v7410, %v7409
    %v7431 = vpack.c.b16 %v7412, %v7411
    %v7432 = vpack.c.b16 %v7414, %v7413
    %v7433 = vpack.c.b16 %v7416, %v7415
    %v7434 = vpack.c.b16 %v7418, %v7417
    %7451 = vmatpush.bf16.msra.mxu0 %v7426
    %7452 = vmatpush.bf16.msra.mxu0 %v7425
    %7453 = vmatpush.bf16.msra.mxu0 %v7424
    %7454 = vmatpush.bf16.msra.mxu0 %v7423
    %7455 = vmatpush.bf16.msra.mxu0 %v7422
    %7456 = vmatpush.bf16.msra.mxu0 %v7421
    %7457 = vmatpush.bf16.msra.mxu0 %v7420
    %7458 = vmatpush.bf16.msra.mxu0 %v7419
    %7459 = vmatmul.bf16.gmra.mxu0 %v7351
    %v7460 = vpop.f32.mrf.mxu0
    %v7461 = vadd.f32 0.0, %v7460
    %v7462 = vpop.f32.mrf.mxu0
    %7463 = vdwg.mxu0
    %7464 = vmatpush.bf16.msra.mxu0 %v7434
    %7465 = vmatpush.bf16.msra.mxu0 %v7433
    %7466 = vmatpush.bf16.msra.mxu0 %v7432
    %7467 = vmatpush.bf16.msra.mxu0 %v7431
    %7468 = vmatpush.bf16.msra.mxu0 %v7430
    %7469 = vmatpush.bf16.msra.mxu0 %v7429
    %7470 = vmatpush.bf16.msra.mxu0 %v7428
    %7471 = vmatpush.bf16.msra.mxu0 %v7427
    %7472 = vmatmul.bf16.gmra.mxu0 %v7352
    %v7473 = vpop.f32.mrf.mxu0
    %v7474 = vadd.f32 %v7461, %v7473
    %v7475 = vpop.f32.mrf.mxu0
    %7476 = vdwg.mxu0
    %v7477 = vadd.f32 %v7317, %v7474
    %s7478 = scalar_lea.vmem %s11, 896
    %v7479 = vld [vmem:[%s7478] sm:$0xf]
    %v7480 = vld [vmem:[%s7478 + $0x4] sm:$0xf]
    %v7481 = vld [vmem:[%s7478 + $0x8] sm:$0xf]
    %v7482 = vld [vmem:[%s7478 + $0xc] sm:$0xf]
    %v7483 = vld [vmem:[%s7478 + $0x10] sm:$0xf]
    %v7484 = vld [vmem:[%s7478 + $0x14] sm:$0xf]
    %v7485 = vld [vmem:[%s7478 + $0x18] sm:$0xf]
    %v7486 = vld [vmem:[%s7478 + $0x1c] sm:$0xf]
    %v7487 = vld [vmem:[%s7478 + $0x20] sm:$0xf]
    %v7488 = vld [vmem:[%s7478 + $0x24] sm:$0xf]
    %v7489 = vld [vmem:[%s7478 + $0x28] sm:$0xf]
    %v7490 = vld [vmem:[%s7478 + $0x2c] sm:$0xf]
    %v7491 = vld [vmem:[%s7478 + $0x30] sm:$0xf]
    %v7492 = vld [vmem:[%s7478 + $0x34] sm:$0xf]
    %v7493 = vld [vmem:[%s7478 + $0x38] sm:$0xf]
    %v7494 = vld [vmem:[%s7478 + $0x3c] sm:$0xf]
    %v7495 = vld [vmem:[%s7478 + $0x40] sm:$0xf]
    %v7496 = vld [vmem:[%s7478 + $0x44] sm:$0xf]
    %v7497 = vld [vmem:[%s7478 + $0x48] sm:$0xf]
    %v7498 = vld [vmem:[%s7478 + $0x4c] sm:$0xf]
    %v7499 = vld [vmem:[%s7478 + $0x50] sm:$0xf]
    %v7500 = vld [vmem:[%s7478 + $0x54] sm:$0xf]
    %v7501 = vld [vmem:[%s7478 + $0x58] sm:$0xf]
    %v7502 = vld [vmem:[%s7478 + $0x5c] sm:$0xf]
    %v7503 = vld [vmem:[%s7478 + $0x60] sm:$0xf]
    %v7504 = vld [vmem:[%s7478 + $0x64] sm:$0xf]
    %v7505 = vld [vmem:[%s7478 + $0x68] sm:$0xf]
    %v7506 = vld [vmem:[%s7478 + $0x6c] sm:$0xf]
    %v7507 = vld [vmem:[%s7478 + $0x70] sm:$0xf]
    %v7508 = vld [vmem:[%s7478 + $0x74] sm:$0xf]
    %v7509 = vld [vmem:[%s7478 + $0x78] sm:$0xf]
    %v7510 = vld [vmem:[%s7478 + $0x7c] sm:$0xf]
    %v7511 = vrot.slane %v6425, 3
    %v7512 = vrot.slane %v6428, 3
    %v7547 = vunpack.c.l.b16 %v7479
    %v7548 = vunpack.c.l.b16 %v7480
    %v7549 = vunpack.c.l.b16 %v7481
    %v7550 = vunpack.c.l.b16 %v7482
    %v7551 = vunpack.c.l.b16 %v7483
    %v7552 = vunpack.c.l.b16 %v7484
    %v7553 = vunpack.c.l.b16 %v7485
    %v7554 = vunpack.c.l.b16 %v7486
    %v7555 = vunpack.c.l.b16 %v7487
    %v7556 = vunpack.c.l.b16 %v7488
    %v7557 = vunpack.c.l.b16 %v7489
    %v7558 = vunpack.c.l.b16 %v7490
    %v7559 = vunpack.c.l.b16 %v7491
    %v7560 = vunpack.c.l.b16 %v7492
    %v7561 = vunpack.c.l.b16 %v7493
    %v7562 = vunpack.c.l.b16 %v7494
    %v7563 = vunpack.c.l.b16 %v7495
    %v7564 = vunpack.c.l.b16 %v7496
    %v7565 = vunpack.c.l.b16 %v7497
    %v7566 = vunpack.c.l.b16 %v7498
    %v7567 = vunpack.c.l.b16 %v7499
    %v7568 = vunpack.c.l.b16 %v7500
    %v7569 = vunpack.c.l.b16 %v7501
    %v7570 = vunpack.c.l.b16 %v7502
    %v7571 = vunpack.c.l.b16 %v7503
    %v7572 = vunpack.c.l.b16 %v7504
    %v7573 = vunpack.c.l.b16 %v7505
    %v7574 = vunpack.c.l.b16 %v7506
    %v7575 = vunpack.c.l.b16 %v7507
    %v7576 = vunpack.c.l.b16 %v7508
    %v7577 = vunpack.c.l.b16 %v7509
    %v7578 = vunpack.c.l.b16 %v7510
    %v7579 = vpack.c.b16 %v7548, %v7547
    %v7580 = vpack.c.b16 %v7550, %v7549
    %v7581 = vpack.c.b16 %v7552, %v7551
    %v7582 = vpack.c.b16 %v7554, %v7553
    %v7583 = vpack.c.b16 %v7556, %v7555
    %v7584 = vpack.c.b16 %v7558, %v7557
    %v7585 = vpack.c.b16 %v7560, %v7559
    %v7586 = vpack.c.b16 %v7562, %v7561
    %v7587 = vpack.c.b16 %v7564, %v7563
    %v7588 = vpack.c.b16 %v7566, %v7565
    %v7589 = vpack.c.b16 %v7568, %v7567
    %v7590 = vpack.c.b16 %v7570, %v7569
    %v7591 = vpack.c.b16 %v7572, %v7571
    %v7592 = vpack.c.b16 %v7574, %v7573
    %v7593 = vpack.c.b16 %v7576, %v7575
    %v7594 = vpack.c.b16 %v7578, %v7577
    %7611 = vmatpush.bf16.msra.mxu0 %v7586
    %7612 = vmatpush.bf16.msra.mxu0 %v7585
    %7613 = vmatpush.bf16.msra.mxu0 %v7584
    %7614 = vmatpush.bf16.msra.mxu0 %v7583
    %7615 = vmatpush.bf16.msra.mxu0 %v7582
    %7616 = vmatpush.bf16.msra.mxu0 %v7581
    %7617 = vmatpush.bf16.msra.mxu0 %v7580
    %7618 = vmatpush.bf16.msra.mxu0 %v7579
    %7619 = vmatmul.bf16.gmra.mxu0 %v7511
    %v7620 = vpop.f32.mrf.mxu0
    %v7621 = vadd.f32 0.0, %v7620
    %v7622 = vpop.f32.mrf.mxu0
    %7623 = vdwg.mxu0
    %7624 = vmatpush.bf16.msra.mxu0 %v7594
    %7625 = vmatpush.bf16.msra.mxu0 %v7593
    %7626 = vmatpush.bf16.msra.mxu0 %v7592
    %7627 = vmatpush.bf16.msra.mxu0 %v7591
    %7628 = vmatpush.bf16.msra.mxu0 %v7590
    %7629 = vmatpush.bf16.msra.mxu0 %v7589
    %7630 = vmatpush.bf16.msra.mxu0 %v7588
    %7631 = vmatpush.bf16.msra.mxu0 %v7587
    %7632 = vmatmul.bf16.gmra.mxu0 %v7512
    %v7633 = vpop.f32.mrf.mxu0
    %v7634 = vadd.f32 %v7621, %v7633
    %v7635 = vpop.f32.mrf.mxu0
    %7636 = vdwg.mxu0
    %v7637 = vadd.f32 %v7477, %v7634
    %s7638 = scalar_lea.vmem %s11, 1024
    %v7639 = vld [vmem:[%s7638] sm:$0xf]
    %v7640 = vld [vmem:[%s7638 + $0x4] sm:$0xf]
    %v7641 = vld [vmem:[%s7638 + $0x8] sm:$0xf]
    %v7642 = vld [vmem:[%s7638 + $0xc] sm:$0xf]
    %v7643 = vld [vmem:[%s7638 + $0x10] sm:$0xf]
    %v7644 = vld [vmem:[%s7638 + $0x14] sm:$0xf]
    %v7645 = vld [vmem:[%s7638 + $0x18] sm:$0xf]
    %v7646 = vld [vmem:[%s7638 + $0x1c] sm:$0xf]
    %v7647 = vld [vmem:[%s7638 + $0x20] sm:$0xf]
    %v7648 = vld [vmem:[%s7638 + $0x24] sm:$0xf]
    %v7649 = vld [vmem:[%s7638 + $0x28] sm:$0xf]
    %v7650 = vld [vmem:[%s7638 + $0x2c] sm:$0xf]
    %v7651 = vld [vmem:[%s7638 + $0x30] sm:$0xf]
    %v7652 = vld [vmem:[%s7638 + $0x34] sm:$0xf]
    %v7653 = vld [vmem:[%s7638 + $0x38] sm:$0xf]
    %v7654 = vld [vmem:[%s7638 + $0x3c] sm:$0xf]
    %v7655 = vld [vmem:[%s7638 + $0x40] sm:$0xf]
    %v7656 = vld [vmem:[%s7638 + $0x44] sm:$0xf]
    %v7657 = vld [vmem:[%s7638 + $0x48] sm:$0xf]
    %v7658 = vld [vmem:[%s7638 + $0x4c] sm:$0xf]
    %v7659 = vld [vmem:[%s7638 + $0x50] sm:$0xf]
    %v7660 = vld [vmem:[%s7638 + $0x54] sm:$0xf]
    %v7661 = vld [vmem:[%s7638 + $0x58] sm:$0xf]
    %v7662 = vld [vmem:[%s7638 + $0x5c] sm:$0xf]
    %v7663 = vld [vmem:[%s7638 + $0x60] sm:$0xf]
    %v7664 = vld [vmem:[%s7638 + $0x64] sm:$0xf]
    %v7665 = vld [vmem:[%s7638 + $0x68] sm:$0xf]
    %v7666 = vld [vmem:[%s7638 + $0x6c] sm:$0xf]
    %v7667 = vld [vmem:[%s7638 + $0x70] sm:$0xf]
    %v7668 = vld [vmem:[%s7638 + $0x74] sm:$0xf]
    %v7669 = vld [vmem:[%s7638 + $0x78] sm:$0xf]
    %v7670 = vld [vmem:[%s7638 + $0x7c] sm:$0xf]
    %v7672 = vunpack.c.l.b16 %v6353
    %v7673 = vunpack.c.h.b16 %v6353
    %v7674 = vpack.c.b16 %v7672, %v7672
    %v7675 = vpack.c.b16 %v7673, %v7673
    %v7710 = vunpack.c.l.b16 %v7639
    %v7711 = vunpack.c.l.b16 %v7640
    %v7712 = vunpack.c.l.b16 %v7641
    %v7713 = vunpack.c.l.b16 %v7642
    %v7714 = vunpack.c.l.b16 %v7643
    %v7715 = vunpack.c.l.b16 %v7644
    %v7716 = vunpack.c.l.b16 %v7645
    %v7717 = vunpack.c.l.b16 %v7646
    %v7718 = vunpack.c.l.b16 %v7647
    %v7719 = vunpack.c.l.b16 %v7648
    %v7720 = vunpack.c.l.b16 %v7649
    %v7721 = vunpack.c.l.b16 %v7650
    %v7722 = vunpack.c.l.b16 %v7651
    %v7723 = vunpack.c.l.b16 %v7652
    %v7724 = vunpack.c.l.b16 %v7653
    %v7725 = vunpack.c.l.b16 %v7654
    %v7726 = vunpack.c.l.b16 %v7655
    %v7727 = vunpack.c.l.b16 %v7656
    %v7728 = vunpack.c.l.b16 %v7657
    %v7729 = vunpack.c.l.b16 %v7658
    %v7730 = vunpack.c.l.b16 %v7659
    %v7731 = vunpack.c.l.b16 %v7660
    %v7732 = vunpack.c.l.b16 %v7661
    %v7733 = vunpack.c.l.b16 %v7662
    %v7734 = vunpack.c.l.b16 %v7663
    %v7735 = vunpack.c.l.b16 %v7664
    %v7736 = vunpack.c.l.b16 %v7665
    %v7737 = vunpack.c.l.b16 %v7666
    %v7738 = vunpack.c.l.b16 %v7667
    %v7739 = vunpack.c.l.b16 %v7668
    %v7740 = vunpack.c.l.b16 %v7669
    %v7741 = vunpack.c.l.b16 %v7670
    %v7742 = vpack.c.b16 %v7711, %v7710
    %v7743 = vpack.c.b16 %v7713, %v7712
    %v7744 = vpack.c.b16 %v7715, %v7714
    %v7745 = vpack.c.b16 %v7717, %v7716
    %v7746 = vpack.c.b16 %v7719, %v7718
    %v7747 = vpack.c.b16 %v7721, %v7720
    %v7748 = vpack.c.b16 %v7723, %v7722
    %v7749 = vpack.c.b16 %v7725, %v7724
    %v7750 = vpack.c.b16 %v7727, %v7726
    %v7751 = vpack.c.b16 %v7729, %v7728
    %v7752 = vpack.c.b16 %v7731, %v7730
    %v7753 = vpack.c.b16 %v7733, %v7732
    %v7754 = vpack.c.b16 %v7735, %v7734
    %v7755 = vpack.c.b16 %v7737, %v7736
    %v7756 = vpack.c.b16 %v7739, %v7738
    %v7757 = vpack.c.b16 %v7741, %v7740
    %7774 = vmatpush.bf16.msra.mxu0 %v7749
    %7775 = vmatpush.bf16.msra.mxu0 %v7748
    %7776 = vmatpush.bf16.msra.mxu0 %v7747
    %7777 = vmatpush.bf16.msra.mxu0 %v7746
    %7778 = vmatpush.bf16.msra.mxu0 %v7745
    %7779 = vmatpush.bf16.msra.mxu0 %v7744
    %7780 = vmatpush.bf16.msra.mxu0 %v7743
    %7781 = vmatpush.bf16.msra.mxu0 %v7742
    %7782 = vmatmul.bf16.gmra.mxu0 %v7674
    %v7783 = vpop.f32.mrf.mxu0
    %v7784 = vadd.f32 0.0, %v7783
    %v7785 = vpop.f32.mrf.mxu0
    %7786 = vdwg.mxu0
    %7787 = vmatpush.bf16.msra.mxu0 %v7757
    %7788 = vmatpush.bf16.msra.mxu0 %v7756
    %7789 = vmatpush.bf16.msra.mxu0 %v7755
    %7790 = vmatpush.bf16.msra.mxu0 %v7754
    %7791 = vmatpush.bf16.msra.mxu0 %v7753
    %7792 = vmatpush.bf16.msra.mxu0 %v7752
    %7793 = vmatpush.bf16.msra.mxu0 %v7751
    %7794 = vmatpush.bf16.msra.mxu0 %v7750
    %7795 = vmatmul.bf16.gmra.mxu0 %v7675
    %v7796 = vpop.f32.mrf.mxu0
    %v7797 = vadd.f32 %v7784, %v7796
    %v7798 = vpop.f32.mrf.mxu0
    %7799 = vdwg.mxu0
    %v7800 = vadd.f32 %v7637, %v7797
    %s7801 = scalar_lea.vmem %s11, 1152
    %v7802 = vld [vmem:[%s7801] sm:$0xf]
    %v7803 = vld [vmem:[%s7801 + $0x4] sm:$0xf]
    %v7804 = vld [vmem:[%s7801 + $0x8] sm:$0xf]
    %v7805 = vld [vmem:[%s7801 + $0xc] sm:$0xf]
    %v7806 = vld [vmem:[%s7801 + $0x10] sm:$0xf]
    %v7807 = vld [vmem:[%s7801 + $0x14] sm:$0xf]
    %v7808 = vld [vmem:[%s7801 + $0x18] sm:$0xf]
    %v7809 = vld [vmem:[%s7801 + $0x1c] sm:$0xf]
    %v7810 = vld [vmem:[%s7801 + $0x20] sm:$0xf]
    %v7811 = vld [vmem:[%s7801 + $0x24] sm:$0xf]
    %v7812 = vld [vmem:[%s7801 + $0x28] sm:$0xf]
    %v7813 = vld [vmem:[%s7801 + $0x2c] sm:$0xf]
    %v7814 = vld [vmem:[%s7801 + $0x30] sm:$0xf]
    %v7815 = vld [vmem:[%s7801 + $0x34] sm:$0xf]
    %v7816 = vld [vmem:[%s7801 + $0x38] sm:$0xf]
    %v7817 = vld [vmem:[%s7801 + $0x3c] sm:$0xf]
    %v7818 = vld [vmem:[%s7801 + $0x40] sm:$0xf]
    %v7819 = vld [vmem:[%s7801 + $0x44] sm:$0xf]
    %v7820 = vld [vmem:[%s7801 + $0x48] sm:$0xf]
    %v7821 = vld [vmem:[%s7801 + $0x4c] sm:$0xf]
    %v7822 = vld [vmem:[%s7801 + $0x50] sm:$0xf]
    %v7823 = vld [vmem:[%s7801 + $0x54] sm:$0xf]
    %v7824 = vld [vmem:[%s7801 + $0x58] sm:$0xf]
    %v7825 = vld [vmem:[%s7801 + $0x5c] sm:$0xf]
    %v7826 = vld [vmem:[%s7801 + $0x60] sm:$0xf]
    %v7827 = vld [vmem:[%s7801 + $0x64] sm:$0xf]
    %v7828 = vld [vmem:[%s7801 + $0x68] sm:$0xf]
    %v7829 = vld [vmem:[%s7801 + $0x6c] sm:$0xf]
    %v7830 = vld [vmem:[%s7801 + $0x70] sm:$0xf]
    %v7831 = vld [vmem:[%s7801 + $0x74] sm:$0xf]
    %v7832 = vld [vmem:[%s7801 + $0x78] sm:$0xf]
    %v7833 = vld [vmem:[%s7801 + $0x7c] sm:$0xf]
    %v7835 = vshrl.u32 %v7674, 16
    %v7838 = vshrl.u32 %v7675, 16
    %v7874 = vunpack.c.l.b16 %v7802
    %v7875 = vunpack.c.l.b16 %v7803
    %v7876 = vunpack.c.l.b16 %v7804
    %v7877 = vunpack.c.l.b16 %v7805
    %v7878 = vunpack.c.l.b16 %v7806
    %v7879 = vunpack.c.l.b16 %v7807
    %v7880 = vunpack.c.l.b16 %v7808
    %v7881 = vunpack.c.l.b16 %v7809
    %v7882 = vunpack.c.l.b16 %v7810
    %v7883 = vunpack.c.l.b16 %v7811
    %v7884 = vunpack.c.l.b16 %v7812
    %v7885 = vunpack.c.l.b16 %v7813
    %v7886 = vunpack.c.l.b16 %v7814
    %v7887 = vunpack.c.l.b16 %v7815
    %v7888 = vunpack.c.l.b16 %v7816
    %v7889 = vunpack.c.l.b16 %v7817
    %v7890 = vunpack.c.l.b16 %v7818
    %v7891 = vunpack.c.l.b16 %v7819
    %v7892 = vunpack.c.l.b16 %v7820
    %v7893 = vunpack.c.l.b16 %v7821
    %v7894 = vunpack.c.l.b16 %v7822
    %v7895 = vunpack.c.l.b16 %v7823
    %v7896 = vunpack.c.l.b16 %v7824
    %v7897 = vunpack.c.l.b16 %v7825
    %v7898 = vunpack.c.l.b16 %v7826
    %v7899 = vunpack.c.l.b16 %v7827
    %v7900 = vunpack.c.l.b16 %v7828
    %v7901 = vunpack.c.l.b16 %v7829
    %v7902 = vunpack.c.l.b16 %v7830
    %v7903 = vunpack.c.l.b16 %v7831
    %v7904 = vunpack.c.l.b16 %v7832
    %v7905 = vunpack.c.l.b16 %v7833
    %v7906 = vpack.c.b16 %v7875, %v7874
    %v7907 = vpack.c.b16 %v7877, %v7876
    %v7908 = vpack.c.b16 %v7879, %v7878
    %v7909 = vpack.c.b16 %v7881, %v7880
    %v7910 = vpack.c.b16 %v7883, %v7882
    %v7911 = vpack.c.b16 %v7885, %v7884
    %v7912 = vpack.c.b16 %v7887, %v7886
    %v7913 = vpack.c.b16 %v7889, %v7888
    %v7914 = vpack.c.b16 %v7891, %v7890
    %v7915 = vpack.c.b16 %v7893, %v7892
    %v7916 = vpack.c.b16 %v7895, %v7894
    %v7917 = vpack.c.b16 %v7897, %v7896
    %v7918 = vpack.c.b16 %v7899, %v7898
    %v7919 = vpack.c.b16 %v7901, %v7900
    %v7920 = vpack.c.b16 %v7903, %v7902
    %v7921 = vpack.c.b16 %v7905, %v7904
    %7938 = vmatpush.bf16.msra.mxu0 %v7913
    %7939 = vmatpush.bf16.msra.mxu0 %v7912
    %7940 = vmatpush.bf16.msra.mxu0 %v7911
    %7941 = vmatpush.bf16.msra.mxu0 %v7910
    %7942 = vmatpush.bf16.msra.mxu0 %v7909
    %7943 = vmatpush.bf16.msra.mxu0 %v7908
    %7944 = vmatpush.bf16.msra.mxu0 %v7907
    %7945 = vmatpush.bf16.msra.mxu0 %v7906
    %7946 = vmatmul.bf16.gmra.mxu0 %v7835
    %v7947 = vpop.f32.mrf.mxu0
    %v7948 = vadd.f32 0.0, %v7947
    %v7949 = vpop.f32.mrf.mxu0
    %7950 = vdwg.mxu0
    %7951 = vmatpush.bf16.msra.mxu0 %v7921
    %7952 = vmatpush.bf16.msra.mxu0 %v7920
    %7953 = vmatpush.bf16.msra.mxu0 %v7919
    %7954 = vmatpush.bf16.msra.mxu0 %v7918
    %7955 = vmatpush.bf16.msra.mxu0 %v7917
    %7956 = vmatpush.bf16.msra.mxu0 %v7916
    %7957 = vmatpush.bf16.msra.mxu0 %v7915
    %7958 = vmatpush.bf16.msra.mxu0 %v7914
    %7959 = vmatmul.bf16.gmra.mxu0 %v7838
    %v7960 = vpop.f32.mrf.mxu0
    %v7961 = vadd.f32 %v7948, %v7960
    %v7962 = vpop.f32.mrf.mxu0
    %7963 = vdwg.mxu0
    %v7964 = vadd.f32 %v7800, %v7961
    %s7965 = scalar_lea.vmem %s11, 1280
    %v7966 = vld [vmem:[%s7965] sm:$0xf]
    %v7967 = vld [vmem:[%s7965 + $0x4] sm:$0xf]
    %v7968 = vld [vmem:[%s7965 + $0x8] sm:$0xf]
    %v7969 = vld [vmem:[%s7965 + $0xc] sm:$0xf]
    %v7970 = vld [vmem:[%s7965 + $0x10] sm:$0xf]
    %v7971 = vld [vmem:[%s7965 + $0x14] sm:$0xf]
    %v7972 = vld [vmem:[%s7965 + $0x18] sm:$0xf]
    %v7973 = vld [vmem:[%s7965 + $0x1c] sm:$0xf]
    %v7974 = vld [vmem:[%s7965 + $0x20] sm:$0xf]
    %v7975 = vld [vmem:[%s7965 + $0x24] sm:$0xf]
    %v7976 = vld [vmem:[%s7965 + $0x28] sm:$0xf]
    %v7977 = vld [vmem:[%s7965 + $0x2c] sm:$0xf]
    %v7978 = vld [vmem:[%s7965 + $0x30] sm:$0xf]
    %v7979 = vld [vmem:[%s7965 + $0x34] sm:$0xf]
    %v7980 = vld [vmem:[%s7965 + $0x38] sm:$0xf]
    %v7981 = vld [vmem:[%s7965 + $0x3c] sm:$0xf]
    %v7982 = vld [vmem:[%s7965 + $0x40] sm:$0xf]
    %v7983 = vld [vmem:[%s7965 + $0x44] sm:$0xf]
    %v7984 = vld [vmem:[%s7965 + $0x48] sm:$0xf]
    %v7985 = vld [vmem:[%s7965 + $0x4c] sm:$0xf]
    %v7986 = vld [vmem:[%s7965 + $0x50] sm:$0xf]
    %v7987 = vld [vmem:[%s7965 + $0x54] sm:$0xf]
    %v7988 = vld [vmem:[%s7965 + $0x58] sm:$0xf]
    %v7989 = vld [vmem:[%s7965 + $0x5c] sm:$0xf]
    %v7990 = vld [vmem:[%s7965 + $0x60] sm:$0xf]
    %v7991 = vld [vmem:[%s7965 + $0x64] sm:$0xf]
    %v7992 = vld [vmem:[%s7965 + $0x68] sm:$0xf]
    %v7993 = vld [vmem:[%s7965 + $0x6c] sm:$0xf]
    %v7994 = vld [vmem:[%s7965 + $0x70] sm:$0xf]
    %v7995 = vld [vmem:[%s7965 + $0x74] sm:$0xf]
    %v7996 = vld [vmem:[%s7965 + $0x78] sm:$0xf]
    %v7997 = vld [vmem:[%s7965 + $0x7c] sm:$0xf]
    %v7998 = vrot.slane %v7674, 1
    %v7999 = vrot.slane %v7675, 1
    %v8034 = vunpack.c.l.b16 %v7966
    %v8035 = vunpack.c.l.b16 %v7967
    %v8036 = vunpack.c.l.b16 %v7968
    %v8037 = vunpack.c.l.b16 %v7969
    %v8038 = vunpack.c.l.b16 %v7970
    %v8039 = vunpack.c.l.b16 %v7971
    %v8040 = vunpack.c.l.b16 %v7972
    %v8041 = vunpack.c.l.b16 %v7973
    %v8042 = vunpack.c.l.b16 %v7974
    %v8043 = vunpack.c.l.b16 %v7975
    %v8044 = vunpack.c.l.b16 %v7976
    %v8045 = vunpack.c.l.b16 %v7977
    %v8046 = vunpack.c.l.b16 %v7978
    %v8047 = vunpack.c.l.b16 %v7979
    %v8048 = vunpack.c.l.b16 %v7980
    %v8049 = vunpack.c.l.b16 %v7981
    %v8050 = vunpack.c.l.b16 %v7982
    %v8051 = vunpack.c.l.b16 %v7983
    %v8052 = vunpack.c.l.b16 %v7984
    %v8053 = vunpack.c.l.b16 %v7985
    %v8054 = vunpack.c.l.b16 %v7986
    %v8055 = vunpack.c.l.b16 %v7987
    %v8056 = vunpack.c.l.b16 %v7988
    %v8057 = vunpack.c.l.b16 %v7989
    %v8058 = vunpack.c.l.b16 %v7990
    %v8059 = vunpack.c.l.b16 %v7991
    %v8060 = vunpack.c.l.b16 %v7992
    %v8061 = vunpack.c.l.b16 %v7993
    %v8062 = vunpack.c.l.b16 %v7994
    %v8063 = vunpack.c.l.b16 %v7995
    %v8064 = vunpack.c.l.b16 %v7996
    %v8065 = vunpack.c.l.b16 %v7997
    %v8066 = vpack.c.b16 %v8035, %v8034
    %v8067 = vpack.c.b16 %v8037, %v8036
    %v8068 = vpack.c.b16 %v8039, %v8038
    %v8069 = vpack.c.b16 %v8041, %v8040
    %v8070 = vpack.c.b16 %v8043, %v8042
    %v8071 = vpack.c.b16 %v8045, %v8044
    %v8072 = vpack.c.b16 %v8047, %v8046
    %v8073 = vpack.c.b16 %v8049, %v8048
    %v8074 = vpack.c.b16 %v8051, %v8050
    %v8075 = vpack.c.b16 %v8053, %v8052
    %v8076 = vpack.c.b16 %v8055, %v8054
    %v8077 = vpack.c.b16 %v8057, %v8056
    %v8078 = vpack.c.b16 %v8059, %v8058
    %v8079 = vpack.c.b16 %v8061, %v8060
    %v8080 = vpack.c.b16 %v8063, %v8062
    %v8081 = vpack.c.b16 %v8065, %v8064
    %8098 = vmatpush.bf16.msra.mxu0 %v8073
    %8099 = vmatpush.bf16.msra.mxu0 %v8072
    %8100 = vmatpush.bf16.msra.mxu0 %v8071
    %8101 = vmatpush.bf16.msra.mxu0 %v8070
    %8102 = vmatpush.bf16.msra.mxu0 %v8069
    %8103 = vmatpush.bf16.msra.mxu0 %v8068
    %8104 = vmatpush.bf16.msra.mxu0 %v8067
    %8105 = vmatpush.bf16.msra.mxu0 %v8066
    %8106 = vmatmul.bf16.gmra.mxu0 %v7998
    %v8107 = vpop.f32.mrf.mxu0
    %v8108 = vadd.f32 0.0, %v8107
    %v8109 = vpop.f32.mrf.mxu0
    %8110 = vdwg.mxu0
    %8111 = vmatpush.bf16.msra.mxu0 %v8081
    %8112 = vmatpush.bf16.msra.mxu0 %v8080
    %8113 = vmatpush.bf16.msra.mxu0 %v8079
    %8114 = vmatpush.bf16.msra.mxu0 %v8078
    %8115 = vmatpush.bf16.msra.mxu0 %v8077
    %8116 = vmatpush.bf16.msra.mxu0 %v8076
    %8117 = vmatpush.bf16.msra.mxu0 %v8075
    %8118 = vmatpush.bf16.msra.mxu0 %v8074
    %8119 = vmatmul.bf16.gmra.mxu0 %v7999
    %v8120 = vpop.f32.mrf.mxu0
    %v8121 = vadd.f32 %v8108, %v8120
    %v8122 = vpop.f32.mrf.mxu0
    %8123 = vdwg.mxu0
    %v8124 = vadd.f32 %v7964, %v8121
    %v8125 = vmul.f32 %v6176, %v6321
    %v8126 = vmul.f32 %v6177, %v6322
    %v8127 = vmul.f32 %v6178, %v6321
    %v8128 = vmul.f32 %v6179, %v6322
    %v8129 = vadd.f32 %v8125, %v6328
    %v8130 = vadd.f32 %v8126, %v6329
    %v8131 = vadd.f32 %v8127, %v6328
    %v8132 = vadd.f32 %v8128, %v6329
    %vm8133 = vcmp.ge.f32.partialorder %v8129, 0.0
    %vm8134 = vcmp.ge.f32.partialorder %v8130, 0.0
    %vm8135 = vcmp.ge.f32.partialorder %v8131, 0.0
    %vm8136 = vcmp.ge.f32.partialorder %v8132, 0.0
    %v8137 = vmul.f32 %v8129, 0.2
    %v8138 = vmul.f32 %v8130, 0.2
    %v8139 = vmul.f32 %v8131, 0.2
    %v8140 = vmul.f32 %v8132, 0.2
    %v8141 = vsel %vm8133, %v8129, %v8137
    %v8142 = vsel %vm8134, %v8130, %v8138
    %v8143 = vsel %vm8135, %v8131, %v8139
    %v8144 = vsel %vm8136, %v8132, %v8140
    %s8145 = scalar_lea.vmem %s13, 32
    %8146 = vst [vmem:[%s8145] sm:$0xff] %v8141
    %8147 = vst [vmem:[%s8145 + $0x8] sm:$0xff] %v8142
    %8148 = vst [vmem:[%s8145 + $0x10] sm:$0x7] %v8143
    %8149 = vst [vmem:[%s8145 + $0x18] sm:$0x7] %v8144
    %v8150 = vpack.c.bf16 %v8142, %v8141
    %v8151 = vpack.c.bf16 %v8144, %v8143
    %v8152 = vld [vmem:[%s11] sm:$0xf]
    %v8153 = vld [vmem:[%s11 + $0x4] sm:$0xf]
    %v8154 = vld [vmem:[%s11 + $0x8] sm:$0xf]
    %v8155 = vld [vmem:[%s11 + $0xc] sm:$0xf]
    %v8156 = vld [vmem:[%s11 + $0x10] sm:$0xf]
    %v8157 = vld [vmem:[%s11 + $0x14] sm:$0xf]
    %v8158 = vld [vmem:[%s11 + $0x18] sm:$0xf]
    %v8159 = vld [vmem:[%s11 + $0x1c] sm:$0xf]
    %v8160 = vld [vmem:[%s11 + $0x20] sm:$0xf]
    %v8161 = vld [vmem:[%s11 + $0x24] sm:$0xf]
    %v8162 = vld [vmem:[%s11 + $0x28] sm:$0xf]
    %v8163 = vld [vmem:[%s11 + $0x2c] sm:$0xf]
    %v8164 = vld [vmem:[%s11 + $0x30] sm:$0xf]
    %v8165 = vld [vmem:[%s11 + $0x34] sm:$0xf]
    %v8166 = vld [vmem:[%s11 + $0x38] sm:$0xf]
    %v8167 = vld [vmem:[%s11 + $0x3c] sm:$0xf]
    %v8168 = vld [vmem:[%s11 + $0x40] sm:$0xf]
    %v8169 = vld [vmem:[%s11 + $0x44] sm:$0xf]
    %v8170 = vld [vmem:[%s11 + $0x48] sm:$0xf]
    %v8171 = vld [vmem:[%s11 + $0x4c] sm:$0xf]
    %v8172 = vld [vmem:[%s11 + $0x50] sm:$0xf]
    %v8173 = vld [vmem:[%s11 + $0x54] sm:$0xf]
    %v8174 = vld [vmem:[%s11 + $0x58] sm:$0xf]
    %v8175 = vld [vmem:[%s11 + $0x5c] sm:$0xf]
    %v8176 = vld [vmem:[%s11 + $0x60] sm:$0xf]
    %v8177 = vld [vmem:[%s11 + $0x64] sm:$0xf]
    %v8178 = vld [vmem:[%s11 + $0x68] sm:$0xf]
    %v8179 = vld [vmem:[%s11 + $0x6c] sm:$0xf]
    %v8180 = vld [vmem:[%s11 + $0x70] sm:$0xf]
    %v8181 = vld [vmem:[%s11 + $0x74] sm:$0xf]
    %v8182 = vld [vmem:[%s11 + $0x78] sm:$0xf]
    %v8183 = vld [vmem:[%s11 + $0x7c] sm:$0xf]
    %v8184 = vld [vmem:[%s6386] sm:$0xf]
    %v8185 = vld [vmem:[%s6386 + $0x4] sm:$0xf]
    %v8186 = vld [vmem:[%s6386 + $0x8] sm:$0xf]
    %v8187 = vld [vmem:[%s6386 + $0xc] sm:$0xf]
    %v8188 = vld [vmem:[%s6386 + $0x10] sm:$0xf]
    %v8189 = vld [vmem:[%s6386 + $0x14] sm:$0xf]
    %v8190 = vld [vmem:[%s6386 + $0x18] sm:$0xf]
    %v8191 = vld [vmem:[%s6386 + $0x1c] sm:$0xf]
    %v8192 = vld [vmem:[%s6386 + $0x20] sm:$0xf]
    %v8193 = vld [vmem:[%s6386 + $0x24] sm:$0xf]
    %v8194 = vld [vmem:[%s6386 + $0x28] sm:$0xf]
    %v8195 = vld [vmem:[%s6386 + $0x2c] sm:$0xf]
    %v8196 = vld [vmem:[%s6386 + $0x30] sm:$0xf]
    %v8197 = vld [vmem:[%s6386 + $0x34] sm:$0xf]
    %v8198 = vld [vmem:[%s6386 + $0x38] sm:$0xf]
    %v8199 = vld [vmem:[%s6386 + $0x3c] sm:$0xf]
    %v8200 = vld [vmem:[%s6386 + $0x40] sm:$0xf]
    %v8201 = vld [vmem:[%s6386 + $0x44] sm:$0xf]
    %v8202 = vld [vmem:[%s6386 + $0x48] sm:$0xf]
    %v8203 = vld [vmem:[%s6386 + $0x4c] sm:$0xf]
    %v8204 = vld [vmem:[%s6386 + $0x50] sm:$0xf]
    %v8205 = vld [vmem:[%s6386 + $0x54] sm:$0xf]
    %v8206 = vld [vmem:[%s6386 + $0x58] sm:$0xf]
    %v8207 = vld [vmem:[%s6386 + $0x5c] sm:$0xf]
    %v8208 = vld [vmem:[%s6386 + $0x60] sm:$0xf]
    %v8209 = vld [vmem:[%s6386 + $0x64] sm:$0xf]
    %v8210 = vld [vmem:[%s6386 + $0x68] sm:$0xf]
    %v8211 = vld [vmem:[%s6386 + $0x6c] sm:$0xf]
    %v8212 = vld [vmem:[%s6386 + $0x70] sm:$0xf]
    %v8213 = vld [vmem:[%s6386 + $0x74] sm:$0xf]
    %v8214 = vld [vmem:[%s6386 + $0x78] sm:$0xf]
    %v8215 = vld [vmem:[%s6386 + $0x7c] sm:$0xf]
    %v8217 = vunpack.c.l.b16 %v8150
    %v8218 = vunpack.c.h.b16 %v8150
    %v8219 = vpack.c.b16 %v8217, %v8217
    %v8220 = vpack.c.b16 %v8218, %v8218
    %v8222 = vshrl.u32 %v8219, 16
    %v8225 = vshrl.u32 %v8220, 16
    %v8261 = vunpack.c.l.b16 %v8184
    %v8262 = vunpack.c.l.b16 %v8185
    %v8263 = vunpack.c.l.b16 %v8186
    %v8264 = vunpack.c.l.b16 %v8187
    %v8265 = vunpack.c.l.b16 %v8188
    %v8266 = vunpack.c.l.b16 %v8189
    %v8267 = vunpack.c.l.b16 %v8190
    %v8268 = vunpack.c.l.b16 %v8191
    %v8269 = vunpack.c.l.b16 %v8192
    %v8270 = vunpack.c.l.b16 %v8193
    %v8271 = vunpack.c.l.b16 %v8194
    %v8272 = vunpack.c.l.b16 %v8195
    %v8273 = vunpack.c.l.b16 %v8196
    %v8274 = vunpack.c.l.b16 %v8197
    %v8275 = vunpack.c.l.b16 %v8198
    %v8276 = vunpack.c.l.b16 %v8199
    %v8277 = vunpack.c.l.b16 %v8200
    %v8278 = vunpack.c.l.b16 %v8201
    %v8279 = vunpack.c.l.b16 %v8202
    %v8280 = vunpack.c.l.b16 %v8203
    %v8281 = vunpack.c.l.b16 %v8204
    %v8282 = vunpack.c.l.b16 %v8205
    %v8283 = vunpack.c.l.b16 %v8206
    %v8284 = vunpack.c.l.b16 %v8207
    %v8285 = vunpack.c.l.b16 %v8208
    %v8286 = vunpack.c.l.b16 %v8209
    %v8287 = vunpack.c.l.b16 %v8210
    %v8288 = vunpack.c.l.b16 %v8211
    %v8289 = vunpack.c.l.b16 %v8212
    %v8290 = vunpack.c.l.b16 %v8213
    %v8291 = vunpack.c.l.b16 %v8214
    %v8292 = vunpack.c.l.b16 %v8215
    %v8293 = vpack.c.b16 %v8262, %v8261
    %v8294 = vpack.c.b16 %v8264, %v8263
    %v8295 = vpack.c.b16 %v8266, %v8265
    %v8296 = vpack.c.b16 %v8268, %v8267
    %v8297 = vpack.c.b16 %v8270, %v8269
    %v8298 = vpack.c.b16 %v8272, %v8271
    %v8299 = vpack.c.b16 %v8274, %v8273
    %v8300 = vpack.c.b16 %v8276, %v8275
    %v8301 = vpack.c.b16 %v8278, %v8277
    %v8302 = vpack.c.b16 %v8280, %v8279
    %v8303 = vpack.c.b16 %v8282, %v8281
    %v8304 = vpack.c.b16 %v8284, %v8283
    %v8305 = vpack.c.b16 %v8286, %v8285
    %v8306 = vpack.c.b16 %v8288, %v8287
    %v8307 = vpack.c.b16 %v8290, %v8289
    %v8308 = vpack.c.b16 %v8292, %v8291
    %8325 = vmatpush.bf16.msra.mxu0 %v8300
    %8326 = vmatpush.bf16.msra.mxu0 %v8299
    %8327 = vmatpush.bf16.msra.mxu0 %v8298
    %8328 = vmatpush.bf16.msra.mxu0 %v8297
    %8329 = vmatpush.bf16.msra.mxu0 %v8296
    %8330 = vmatpush.bf16.msra.mxu0 %v8295
    %8331 = vmatpush.bf16.msra.mxu0 %v8294
    %8332 = vmatpush.bf16.msra.mxu0 %v8293
    %8333 = vmatmul.bf16.gmra.mxu0 %v8222
    %v8334 = vpop.f32.mrf.mxu0
    %v8335 = vadd.f32 0.0, %v8334
    %v8336 = vpop.f32.mrf.mxu0
    %8337 = vdwg.mxu0
    %8338 = vmatpush.bf16.msra.mxu0 %v8308
    %8339 = vmatpush.bf16.msra.mxu0 %v8307
    %8340 = vmatpush.bf16.msra.mxu0 %v8306
    %8341 = vmatpush.bf16.msra.mxu0 %v8305
    %8342 = vmatpush.bf16.msra.mxu0 %v8304
    %8343 = vmatpush.bf16.msra.mxu0 %v8303
    %8344 = vmatpush.bf16.msra.mxu0 %v8302
    %8345 = vmatpush.bf16.msra.mxu0 %v8301
    %8346 = vmatmul.bf16.gmra.mxu0 %v8225
    %v8347 = vpop.f32.mrf.mxu0
    %v8348 = vadd.f32 %v8335, %v8347
    %v8349 = vpop.f32.mrf.mxu0
    %8350 = vdwg.mxu0
    %v8385 = vunpack.c.l.b16 %v8152
    %v8386 = vunpack.c.l.b16 %v8153
    %v8387 = vunpack.c.l.b16 %v8154
    %v8388 = vunpack.c.l.b16 %v8155
    %v8389 = vunpack.c.l.b16 %v8156
    %v8390 = vunpack.c.l.b16 %v8157
    %v8391 = vunpack.c.l.b16 %v8158
    %v8392 = vunpack.c.l.b16 %v8159
    %v8393 = vunpack.c.l.b16 %v8160
    %v8394 = vunpack.c.l.b16 %v8161
    %v8395 = vunpack.c.l.b16 %v8162
    %v8396 = vunpack.c.l.b16 %v8163
    %v8397 = vunpack.c.l.b16 %v8164
    %v8398 = vunpack.c.l.b16 %v8165
    %v8399 = vunpack.c.l.b16 %v8166
    %v8400 = vunpack.c.l.b16 %v8167
    %v8401 = vunpack.c.l.b16 %v8168
    %v8402 = vunpack.c.l.b16 %v8169
    %v8403 = vunpack.c.l.b16 %v8170
    %v8404 = vunpack.c.l.b16 %v8171
    %v8405 = vunpack.c.l.b16 %v8172
    %v8406 = vunpack.c.l.b16 %v8173
    %v8407 = vunpack.c.l.b16 %v8174
    %v8408 = vunpack.c.l.b16 %v8175
    %v8409 = vunpack.c.l.b16 %v8176
    %v8410 = vunpack.c.l.b16 %v8177
    %v8411 = vunpack.c.l.b16 %v8178
    %v8412 = vunpack.c.l.b16 %v8179
    %v8413 = vunpack.c.l.b16 %v8180
    %v8414 = vunpack.c.l.b16 %v8181
    %v8415 = vunpack.c.l.b16 %v8182
    %v8416 = vunpack.c.l.b16 %v8183
    %v8417 = vpack.c.b16 %v8386, %v8385
    %v8418 = vpack.c.b16 %v8388, %v8387
    %v8419 = vpack.c.b16 %v8390, %v8389
    %v8420 = vpack.c.b16 %v8392, %v8391
    %v8421 = vpack.c.b16 %v8394, %v8393
    %v8422 = vpack.c.b16 %v8396, %v8395
    %v8423 = vpack.c.b16 %v8398, %v8397
    %v8424 = vpack.c.b16 %v8400, %v8399
    %v8425 = vpack.c.b16 %v8402, %v8401
    %v8426 = vpack.c.b16 %v8404, %v8403
    %v8427 = vpack.c.b16 %v8406, %v8405
    %v8428 = vpack.c.b16 %v8408, %v8407
    %v8429 = vpack.c.b16 %v8410, %v8409
    %v8430 = vpack.c.b16 %v8412, %v8411
    %v8431 = vpack.c.b16 %v8414, %v8413
    %v8432 = vpack.c.b16 %v8416, %v8415
    %8449 = vmatpush.bf16.msra.mxu0 %v8424
    %8450 = vmatpush.bf16.msra.mxu0 %v8423
    %8451 = vmatpush.bf16.msra.mxu0 %v8422
    %8452 = vmatpush.bf16.msra.mxu0 %v8421
    %8453 = vmatpush.bf16.msra.mxu0 %v8420
    %8454 = vmatpush.bf16.msra.mxu0 %v8419
    %8455 = vmatpush.bf16.msra.mxu0 %v8418
    %8456 = vmatpush.bf16.msra.mxu0 %v8417
    %8457 = vmatmul.bf16.gmra.mxu0 %v8219
    %v8458 = vpop.f32.mrf.mxu0
    %v8459 = vadd.f32 %v8348, %v8458
    %v8460 = vpop.f32.mrf.mxu0
    %8461 = vdwg.mxu0
    %8462 = vmatpush.bf16.msra.mxu0 %v8432
    %8463 = vmatpush.bf16.msra.mxu0 %v8431
    %8464 = vmatpush.bf16.msra.mxu0 %v8430
    %8465 = vmatpush.bf16.msra.mxu0 %v8429
    %8466 = vmatpush.bf16.msra.mxu0 %v8428
    %8467 = vmatpush.bf16.msra.mxu0 %v8427
    %8468 = vmatpush.bf16.msra.mxu0 %v8426
    %8469 = vmatpush.bf16.msra.mxu0 %v8425
    %8470 = vmatmul.bf16.gmra.mxu0 %v8220
    %v8471 = vpop.f32.mrf.mxu0
    %v8472 = vadd.f32 %v8459, %v8471
    %v8473 = vpop.f32.mrf.mxu0
    %8474 = vdwg.mxu0
    %v8475 = vld [vmem:[%s6678] sm:$0xf]
    %v8476 = vld [vmem:[%s6678 + $0x4] sm:$0xf]
    %v8477 = vld [vmem:[%s6678 + $0x8] sm:$0xf]
    %v8478 = vld [vmem:[%s6678 + $0xc] sm:$0xf]
    %v8479 = vld [vmem:[%s6678 + $0x10] sm:$0xf]
    %v8480 = vld [vmem:[%s6678 + $0x14] sm:$0xf]
    %v8481 = vld [vmem:[%s6678 + $0x18] sm:$0xf]
    %v8482 = vld [vmem:[%s6678 + $0x1c] sm:$0xf]
    %v8483 = vld [vmem:[%s6678 + $0x20] sm:$0xf]
    %v8484 = vld [vmem:[%s6678 + $0x24] sm:$0xf]
    %v8485 = vld [vmem:[%s6678 + $0x28] sm:$0xf]
    %v8486 = vld [vmem:[%s6678 + $0x2c] sm:$0xf]
    %v8487 = vld [vmem:[%s6678 + $0x30] sm:$0xf]
    %v8488 = vld [vmem:[%s6678 + $0x34] sm:$0xf]
    %v8489 = vld [vmem:[%s6678 + $0x38] sm:$0xf]
    %v8490 = vld [vmem:[%s6678 + $0x3c] sm:$0xf]
    %v8491 = vld [vmem:[%s6678 + $0x40] sm:$0xf]
    %v8492 = vld [vmem:[%s6678 + $0x44] sm:$0xf]
    %v8493 = vld [vmem:[%s6678 + $0x48] sm:$0xf]
    %v8494 = vld [vmem:[%s6678 + $0x4c] sm:$0xf]
    %v8495 = vld [vmem:[%s6678 + $0x50] sm:$0xf]
    %v8496 = vld [vmem:[%s6678 + $0x54] sm:$0xf]
    %v8497 = vld [vmem:[%s6678 + $0x58] sm:$0xf]
    %v8498 = vld [vmem:[%s6678 + $0x5c] sm:$0xf]
    %v8499 = vld [vmem:[%s6678 + $0x60] sm:$0xf]
    %v8500 = vld [vmem:[%s6678 + $0x64] sm:$0xf]
    %v8501 = vld [vmem:[%s6678 + $0x68] sm:$0xf]
    %v8502 = vld [vmem:[%s6678 + $0x6c] sm:$0xf]
    %v8503 = vld [vmem:[%s6678 + $0x70] sm:$0xf]
    %v8504 = vld [vmem:[%s6678 + $0x74] sm:$0xf]
    %v8505 = vld [vmem:[%s6678 + $0x78] sm:$0xf]
    %v8506 = vld [vmem:[%s6678 + $0x7c] sm:$0xf]
    %v8507 = vrot.slane %v8219, 1
    %v8508 = vrot.slane %v8220, 1
    %v8543 = vunpack.c.l.b16 %v8475
    %v8544 = vunpack.c.l.b16 %v8476
    %v8545 = vunpack.c.l.b16 %v8477
    %v8546 = vunpack.c.l.b16 %v8478
    %v8547 = vunpack.c.l.b16 %v8479
    %v8548 = vunpack.c.l.b16 %v8480
    %v8549 = vunpack.c.l.b16 %v8481
    %v8550 = vunpack.c.l.b16 %v8482
    %v8551 = vunpack.c.l.b16 %v8483
    %v8552 = vunpack.c.l.b16 %v8484
    %v8553 = vunpack.c.l.b16 %v8485
    %v8554 = vunpack.c.l.b16 %v8486
    %v8555 = vunpack.c.l.b16 %v8487
    %v8556 = vunpack.c.l.b16 %v8488
    %v8557 = vunpack.c.l.b16 %v8489
    %v8558 = vunpack.c.l.b16 %v8490
    %v8559 = vunpack.c.l.b16 %v8491
    %v8560 = vunpack.c.l.b16 %v8492
    %v8561 = vunpack.c.l.b16 %v8493
    %v8562 = vunpack.c.l.b16 %v8494
    %v8563 = vunpack.c.l.b16 %v8495
    %v8564 = vunpack.c.l.b16 %v8496
    %v8565 = vunpack.c.l.b16 %v8497
    %v8566 = vunpack.c.l.b16 %v8498
    %v8567 = vunpack.c.l.b16 %v8499
    %v8568 = vunpack.c.l.b16 %v8500
    %v8569 = vunpack.c.l.b16 %v8501
    %v8570 = vunpack.c.l.b16 %v8502
    %v8571 = vunpack.c.l.b16 %v8503
    %v8572 = vunpack.c.l.b16 %v8504
    %v8573 = vunpack.c.l.b16 %v8505
    %v8574 = vunpack.c.l.b16 %v8506
    %v8575 = vpack.c.b16 %v8544, %v8543
    %v8576 = vpack.c.b16 %v8546, %v8545
    %v8577 = vpack.c.b16 %v8548, %v8547
    %v8578 = vpack.c.b16 %v8550, %v8549
    %v8579 = vpack.c.b16 %v8552, %v8551
    %v8580 = vpack.c.b16 %v8554, %v8553
    %v8581 = vpack.c.b16 %v8556, %v8555
    %v8582 = vpack.c.b16 %v8558, %v8557
    %v8583 = vpack.c.b16 %v8560, %v8559
    %v8584 = vpack.c.b16 %v8562, %v8561
    %v8585 = vpack.c.b16 %v8564, %v8563
    %v8586 = vpack.c.b16 %v8566, %v8565
    %v8587 = vpack.c.b16 %v8568, %v8567
    %v8588 = vpack.c.b16 %v8570, %v8569
    %v8589 = vpack.c.b16 %v8572, %v8571
    %v8590 = vpack.c.b16 %v8574, %v8573
    %8607 = vmatpush.bf16.msra.mxu0 %v8582
    %8608 = vmatpush.bf16.msra.mxu0 %v8581
    %8609 = vmatpush.bf16.msra.mxu0 %v8580
    %8610 = vmatpush.bf16.msra.mxu0 %v8579
    %8611 = vmatpush.bf16.msra.mxu0 %v8578
    %8612 = vmatpush.bf16.msra.mxu0 %v8577
    %8613 = vmatpush.bf16.msra.mxu0 %v8576
    %8614 = vmatpush.bf16.msra.mxu0 %v8575
    %8615 = vmatmul.bf16.gmra.mxu0 %v8507
    %v8616 = vpop.f32.mrf.mxu0
    %v8617 = vadd.f32 0.0, %v8616
    %v8618 = vpop.f32.mrf.mxu0
    %8619 = vdwg.mxu0
    %8620 = vmatpush.bf16.msra.mxu0 %v8590
    %8621 = vmatpush.bf16.msra.mxu0 %v8589
    %8622 = vmatpush.bf16.msra.mxu0 %v8588
    %8623 = vmatpush.bf16.msra.mxu0 %v8587
    %8624 = vmatpush.bf16.msra.mxu0 %v8586
    %8625 = vmatpush.bf16.msra.mxu0 %v8585
    %8626 = vmatpush.bf16.msra.mxu0 %v8584
    %8627 = vmatpush.bf16.msra.mxu0 %v8583
    %8628 = vmatmul.bf16.gmra.mxu0 %v8508
    %v8629 = vpop.f32.mrf.mxu0
    %v8630 = vadd.f32 %v8617, %v8629
    %v8631 = vpop.f32.mrf.mxu0
    %8632 = vdwg.mxu0
    %v8633 = vadd.f32 %v8472, %v8630
    %v8634 = vld [vmem:[%s6838] sm:$0xf]
    %v8635 = vld [vmem:[%s6838 + $0x4] sm:$0xf]
    %v8636 = vld [vmem:[%s6838 + $0x8] sm:$0xf]
    %v8637 = vld [vmem:[%s6838 + $0xc] sm:$0xf]
    %v8638 = vld [vmem:[%s6838 + $0x10] sm:$0xf]
    %v8639 = vld [vmem:[%s6838 + $0x14] sm:$0xf]
    %v8640 = vld [vmem:[%s6838 + $0x18] sm:$0xf]
    %v8641 = vld [vmem:[%s6838 + $0x1c] sm:$0xf]
    %v8642 = vld [vmem:[%s6838 + $0x20] sm:$0xf]
    %v8643 = vld [vmem:[%s6838 + $0x24] sm:$0xf]
    %v8644 = vld [vmem:[%s6838 + $0x28] sm:$0xf]
    %v8645 = vld [vmem:[%s6838 + $0x2c] sm:$0xf]
    %v8646 = vld [vmem:[%s6838 + $0x30] sm:$0xf]
    %v8647 = vld [vmem:[%s6838 + $0x34] sm:$0xf]
    %v8648 = vld [vmem:[%s6838 + $0x38] sm:$0xf]
    %v8649 = vld [vmem:[%s6838 + $0x3c] sm:$0xf]
    %v8650 = vld [vmem:[%s6838 + $0x40] sm:$0xf]
    %v8651 = vld [vmem:[%s6838 + $0x44] sm:$0xf]
    %v8652 = vld [vmem:[%s6838 + $0x48] sm:$0xf]
    %v8653 = vld [vmem:[%s6838 + $0x4c] sm:$0xf]
    %v8654 = vld [vmem:[%s6838 + $0x50] sm:$0xf]
    %v8655 = vld [vmem:[%s6838 + $0x54] sm:$0xf]
    %v8656 = vld [vmem:[%s6838 + $0x58] sm:$0xf]
    %v8657 = vld [vmem:[%s6838 + $0x5c] sm:$0xf]
    %v8658 = vld [vmem:[%s6838 + $0x60] sm:$0xf]
    %v8659 = vld [vmem:[%s6838 + $0x64] sm:$0xf]
    %v8660 = vld [vmem:[%s6838 + $0x68] sm:$0xf]
    %v8661 = vld [vmem:[%s6838 + $0x6c] sm:$0xf]
    %v8662 = vld [vmem:[%s6838 + $0x70] sm:$0xf]
    %v8663 = vld [vmem:[%s6838 + $0x74] sm:$0xf]
    %v8664 = vld [vmem:[%s6838 + $0x78] sm:$0xf]
    %v8665 = vld [vmem:[%s6838 + $0x7c] sm:$0xf]
    %v8666 = vrot.slane %v8222, 1
    %v8667 = vrot.slane %v8225, 1
    %v8702 = vunpack.c.l.b16 %v8634
    %v8703 = vunpack.c.l.b16 %v8635
    %v8704 = vunpack.c.l.b16 %v8636
    %v8705 = vunpack.c.l.b16 %v8637
    %v8706 = vunpack.c.l.b16 %v8638
    %v8707 = vunpack.c.l.b16 %v8639
    %v8708 = vunpack.c.l.b16 %v8640
    %v8709 = vunpack.c.l.b16 %v8641
    %v8710 = vunpack.c.l.b16 %v8642
    %v8711 = vunpack.c.l.b16 %v8643
    %v8712 = vunpack.c.l.b16 %v8644
    %v8713 = vunpack.c.l.b16 %v8645
    %v8714 = vunpack.c.l.b16 %v8646
    %v8715 = vunpack.c.l.b16 %v8647
    %v8716 = vunpack.c.l.b16 %v8648
    %v8717 = vunpack.c.l.b16 %v8649
    %v8718 = vunpack.c.l.b16 %v8650
    %v8719 = vunpack.c.l.b16 %v8651
    %v8720 = vunpack.c.l.b16 %v8652
    %v8721 = vunpack.c.l.b16 %v8653
    %v8722 = vunpack.c.l.b16 %v8654
    %v8723 = vunpack.c.l.b16 %v8655
    %v8724 = vunpack.c.l.b16 %v8656
    %v8725 = vunpack.c.l.b16 %v8657
    %v8726 = vunpack.c.l.b16 %v8658
    %v8727 = vunpack.c.l.b16 %v8659
    %v8728 = vunpack.c.l.b16 %v8660
    %v8729 = vunpack.c.l.b16 %v8661
    %v8730 = vunpack.c.l.b16 %v8662
    %v8731 = vunpack.c.l.b16 %v8663
    %v8732 = vunpack.c.l.b16 %v8664
    %v8733 = vunpack.c.l.b16 %v8665
    %v8734 = vpack.c.b16 %v8703, %v8702
    %v8735 = vpack.c.b16 %v8705, %v8704
    %v8736 = vpack.c.b16 %v8707, %v8706
    %v8737 = vpack.c.b16 %v8709, %v8708
    %v8738 = vpack.c.b16 %v8711, %v8710
    %v8739 = vpack.c.b16 %v8713, %v8712
    %v8740 = vpack.c.b16 %v8715, %v8714
    %v8741 = vpack.c.b16 %v8717, %v8716
    %v8742 = vpack.c.b16 %v8719, %v8718
    %v8743 = vpack.c.b16 %v8721, %v8720
    %v8744 = vpack.c.b16 %v8723, %v8722
    %v8745 = vpack.c.b16 %v8725, %v8724
    %v8746 = vpack.c.b16 %v8727, %v8726
    %v8747 = vpack.c.b16 %v8729, %v8728
    %v8748 = vpack.c.b16 %v8731, %v8730
    %v8749 = vpack.c.b16 %v8733, %v8732
    %8766 = vmatpush.bf16.msra.mxu0 %v8741
    %8767 = vmatpush.bf16.msra.mxu0 %v8740
    %8768 = vmatpush.bf16.msra.mxu0 %v8739
    %8769 = vmatpush.bf16.msra.mxu0 %v8738
    %8770 = vmatpush.bf16.msra.mxu0 %v8737
    %8771 = vmatpush.bf16.msra.mxu0 %v8736
    %8772 = vmatpush.bf16.msra.mxu0 %v8735
    %8773 = vmatpush.bf16.msra.mxu0 %v8734
    %8774 = vmatmul.bf16.gmra.mxu0 %v8666
    %v8775 = vpop.f32.mrf.mxu0
    %v8776 = vadd.f32 0.0, %v8775
    %v8777 = vpop.f32.mrf.mxu0
    %8778 = vdwg.mxu0
    %8779 = vmatpush.bf16.msra.mxu0 %v8749
    %8780 = vmatpush.bf16.msra.mxu0 %v8748
    %8781 = vmatpush.bf16.msra.mxu0 %v8747
    %8782 = vmatpush.bf16.msra.mxu0 %v8746
    %8783 = vmatpush.bf16.msra.mxu0 %v8745
    %8784 = vmatpush.bf16.msra.mxu0 %v8744
    %8785 = vmatpush.bf16.msra.mxu0 %v8743
    %8786 = vmatpush.bf16.msra.mxu0 %v8742
    %8787 = vmatmul.bf16.gmra.mxu0 %v8667
    %v8788 = vpop.f32.mrf.mxu0
    %v8789 = vadd.f32 %v8776, %v8788
    %v8790 = vpop.f32.mrf.mxu0
    %8791 = vdwg.mxu0
    %v8792 = vadd.f32 %v8633, %v8789
    %v8793 = vld [vmem:[%s6998] sm:$0xf]
    %v8794 = vld [vmem:[%s6998 + $0x4] sm:$0xf]
    %v8795 = vld [vmem:[%s6998 + $0x8] sm:$0xf]
    %v8796 = vld [vmem:[%s6998 + $0xc] sm:$0xf]
    %v8797 = vld [vmem:[%s6998 + $0x10] sm:$0xf]
    %v8798 = vld [vmem:[%s6998 + $0x14] sm:$0xf]
    %v8799 = vld [vmem:[%s6998 + $0x18] sm:$0xf]
    %v8800 = vld [vmem:[%s6998 + $0x1c] sm:$0xf]
    %v8801 = vld [vmem:[%s6998 + $0x20] sm:$0xf]
    %v8802 = vld [vmem:[%s6998 + $0x24] sm:$0xf]
    %v8803 = vld [vmem:[%s6998 + $0x28] sm:$0xf]
    %v8804 = vld [vmem:[%s6998 + $0x2c] sm:$0xf]
    %v8805 = vld [vmem:[%s6998 + $0x30] sm:$0xf]
    %v8806 = vld [vmem:[%s6998 + $0x34] sm:$0xf]
    %v8807 = vld [vmem:[%s6998 + $0x38] sm:$0xf]
    %v8808 = vld [vmem:[%s6998 + $0x3c] sm:$0xf]
    %v8809 = vld [vmem:[%s6998 + $0x40] sm:$0xf]
    %v8810 = vld [vmem:[%s6998 + $0x44] sm:$0xf]
    %v8811 = vld [vmem:[%s6998 + $0x48] sm:$0xf]
    %v8812 = vld [vmem:[%s6998 + $0x4c] sm:$0xf]
    %v8813 = vld [vmem:[%s6998 + $0x50] sm:$0xf]
    %v8814 = vld [vmem:[%s6998 + $0x54] sm:$0xf]
    %v8815 = vld [vmem:[%s6998 + $0x58] sm:$0xf]
    %v8816 = vld [vmem:[%s6998 + $0x5c] sm:$0xf]
    %v8817 = vld [vmem:[%s6998 + $0x60] sm:$0xf]
    %v8818 = vld [vmem:[%s6998 + $0x64] sm:$0xf]
    %v8819 = vld [vmem:[%s6998 + $0x68] sm:$0xf]
    %v8820 = vld [vmem:[%s6998 + $0x6c] sm:$0xf]
    %v8821 = vld [vmem:[%s6998 + $0x70] sm:$0xf]
    %v8822 = vld [vmem:[%s6998 + $0x74] sm:$0xf]
    %v8823 = vld [vmem:[%s6998 + $0x78] sm:$0xf]
    %v8824 = vld [vmem:[%s6998 + $0x7c] sm:$0xf]
    %v8825 = vrot.slane %v8219, 2
    %v8826 = vrot.slane %v8220, 2
    %v8861 = vunpack.c.l.b16 %v8793
    %v8862 = vunpack.c.l.b16 %v8794
    %v8863 = vunpack.c.l.b16 %v8795
    %v8864 = vunpack.c.l.b16 %v8796
    %v8865 = vunpack.c.l.b16 %v8797
    %v8866 = vunpack.c.l.b16 %v8798
    %v8867 = vunpack.c.l.b16 %v8799
    %v8868 = vunpack.c.l.b16 %v8800
    %v8869 = vunpack.c.l.b16 %v8801
    %v8870 = vunpack.c.l.b16 %v8802
    %v8871 = vunpack.c.l.b16 %v8803
    %v8872 = vunpack.c.l.b16 %v8804
    %v8873 = vunpack.c.l.b16 %v8805
    %v8874 = vunpack.c.l.b16 %v8806
    %v8875 = vunpack.c.l.b16 %v8807
    %v8876 = vunpack.c.l.b16 %v8808
    %v8877 = vunpack.c.l.b16 %v8809
    %v8878 = vunpack.c.l.b16 %v8810
    %v8879 = vunpack.c.l.b16 %v8811
    %v8880 = vunpack.c.l.b16 %v8812
    %v8881 = vunpack.c.l.b16 %v8813
    %v8882 = vunpack.c.l.b16 %v8814
    %v8883 = vunpack.c.l.b16 %v8815
    %v8884 = vunpack.c.l.b16 %v8816
    %v8885 = vunpack.c.l.b16 %v8817
    %v8886 = vunpack.c.l.b16 %v8818
    %v8887 = vunpack.c.l.b16 %v8819
    %v8888 = vunpack.c.l.b16 %v8820
    %v8889 = vunpack.c.l.b16 %v8821
    %v8890 = vunpack.c.l.b16 %v8822
    %v8891 = vunpack.c.l.b16 %v8823
    %v8892 = vunpack.c.l.b16 %v8824
    %v8893 = vpack.c.b16 %v8862, %v8861
    %v8894 = vpack.c.b16 %v8864, %v8863
    %v8895 = vpack.c.b16 %v8866, %v8865
    %v8896 = vpack.c.b16 %v8868, %v8867
    %v8897 = vpack.c.b16 %v8870, %v8869
    %v8898 = vpack.c.b16 %v8872, %v8871
    %v8899 = vpack.c.b16 %v8874, %v8873
    %v8900 = vpack.c.b16 %v8876, %v8875
    %v8901 = vpack.c.b16 %v8878, %v8877
    %v8902 = vpack.c.b16 %v8880, %v8879
    %v8903 = vpack.c.b16 %v8882, %v8881
    %v8904 = vpack.c.b16 %v8884, %v8883
    %v8905 = vpack.c.b16 %v8886, %v8885
    %v8906 = vpack.c.b16 %v8888, %v8887
    %v8907 = vpack.c.b16 %v8890, %v8889
    %v8908 = vpack.c.b16 %v8892, %v8891
    %8925 = vmatpush.bf16.msra.mxu0 %v8900
    %8926 = vmatpush.bf16.msra.mxu0 %v8899
    %8927 = vmatpush.bf16.msra.mxu0 %v8898
    %8928 = vmatpush.bf16.msra.mxu0 %v8897
    %8929 = vmatpush.bf16.msra.mxu0 %v8896
    %8930 = vmatpush.bf16.msra.mxu0 %v8895
    %8931 = vmatpush.bf16.msra.mxu0 %v8894
    %8932 = vmatpush.bf16.msra.mxu0 %v8893
    %8933 = vmatmul.bf16.gmra.mxu0 %v8825
    %v8934 = vpop.f32.mrf.mxu0
    %v8935 = vadd.f32 0.0, %v8934
    %v8936 = vpop.f32.mrf.mxu0
    %8937 = vdwg.mxu0
    %8938 = vmatpush.bf16.msra.mxu0 %v8908
    %8939 = vmatpush.bf16.msra.mxu0 %v8907
    %8940 = vmatpush.bf16.msra.mxu0 %v8906
    %8941 = vmatpush.bf16.msra.mxu0 %v8905
    %8942 = vmatpush.bf16.msra.mxu0 %v8904
    %8943 = vmatpush.bf16.msra.mxu0 %v8903
    %8944 = vmatpush.bf16.msra.mxu0 %v8902
    %8945 = vmatpush.bf16.msra.mxu0 %v8901
    %8946 = vmatmul.bf16.gmra.mxu0 %v8826
    %v8947 = vpop.f32.mrf.mxu0
    %v8948 = vadd.f32 %v8935, %v8947
    %v8949 = vpop.f32.mrf.mxu0
    %8950 = vdwg.mxu0
    %v8951 = vadd.f32 %v8792, %v8948
    %v8952 = vld [vmem:[%s7158] sm:$0xf]
    %v8953 = vld [vmem:[%s7158 + $0x4] sm:$0xf]
    %v8954 = vld [vmem:[%s7158 + $0x8] sm:$0xf]
    %v8955 = vld [vmem:[%s7158 + $0xc] sm:$0xf]
    %v8956 = vld [vmem:[%s7158 + $0x10] sm:$0xf]
    %v8957 = vld [vmem:[%s7158 + $0x14] sm:$0xf]
    %v8958 = vld [vmem:[%s7158 + $0x18] sm:$0xf]
    %v8959 = vld [vmem:[%s7158 + $0x1c] sm:$0xf]
    %v8960 = vld [vmem:[%s7158 + $0x20] sm:$0xf]
    %v8961 = vld [vmem:[%s7158 + $0x24] sm:$0xf]
    %v8962 = vld [vmem:[%s7158 + $0x28] sm:$0xf]
    %v8963 = vld [vmem:[%s7158 + $0x2c] sm:$0xf]
    %v8964 = vld [vmem:[%s7158 + $0x30] sm:$0xf]
    %v8965 = vld [vmem:[%s7158 + $0x34] sm:$0xf]
    %v8966 = vld [vmem:[%s7158 + $0x38] sm:$0xf]
    %v8967 = vld [vmem:[%s7158 + $0x3c] sm:$0xf]
    %v8968 = vld [vmem:[%s7158 + $0x40] sm:$0xf]
    %v8969 = vld [vmem:[%s7158 + $0x44] sm:$0xf]
    %v8970 = vld [vmem:[%s7158 + $0x48] sm:$0xf]
    %v8971 = vld [vmem:[%s7158 + $0x4c] sm:$0xf]
    %v8972 = vld [vmem:[%s7158 + $0x50] sm:$0xf]
    %v8973 = vld [vmem:[%s7158 + $0x54] sm:$0xf]
    %v8974 = vld [vmem:[%s7158 + $0x58] sm:$0xf]
    %v8975 = vld [vmem:[%s7158 + $0x5c] sm:$0xf]
    %v8976 = vld [vmem:[%s7158 + $0x60] sm:$0xf]
    %v8977 = vld [vmem:[%s7158 + $0x64] sm:$0xf]
    %v8978 = vld [vmem:[%s7158 + $0x68] sm:$0xf]
    %v8979 = vld [vmem:[%s7158 + $0x6c] sm:$0xf]
    %v8980 = vld [vmem:[%s7158 + $0x70] sm:$0xf]
    %v8981 = vld [vmem:[%s7158 + $0x74] sm:$0xf]
    %v8982 = vld [vmem:[%s7158 + $0x78] sm:$0xf]
    %v8983 = vld [vmem:[%s7158 + $0x7c] sm:$0xf]
    %v8984 = vrot.slane %v8222, 2
    %v8985 = vrot.slane %v8225, 2
    %v9020 = vunpack.c.l.b16 %v8952
    %v9021 = vunpack.c.l.b16 %v8953
    %v9022 = vunpack.c.l.b16 %v8954
    %v9023 = vunpack.c.l.b16 %v8955
    %v9024 = vunpack.c.l.b16 %v8956
    %v9025 = vunpack.c.l.b16 %v8957
    %v9026 = vunpack.c.l.b16 %v8958
    %v9027 = vunpack.c.l.b16 %v8959
    %v9028 = vunpack.c.l.b16 %v8960
    %v9029 = vunpack.c.l.b16 %v8961
    %v9030 = vunpack.c.l.b16 %v8962
    %v9031 = vunpack.c.l.b16 %v8963
    %v9032 = vunpack.c.l.b16 %v8964
    %v9033 = vunpack.c.l.b16 %v8965
    %v9034 = vunpack.c.l.b16 %v8966
    %v9035 = vunpack.c.l.b16 %v8967
    %v9036 = vunpack.c.l.b16 %v8968
    %v9037 = vunpack.c.l.b16 %v8969
    %v9038 = vunpack.c.l.b16 %v8970
    %v9039 = vunpack.c.l.b16 %v8971
    %v9040 = vunpack.c.l.b16 %v8972
    %v9041 = vunpack.c.l.b16 %v8973
    %v9042 = vunpack.c.l.b16 %v8974
    %v9043 = vunpack.c.l.b16 %v8975
    %v9044 = vunpack.c.l.b16 %v8976
    %v9045 = vunpack.c.l.b16 %v8977
    %v9046 = vunpack.c.l.b16 %v8978
    %v9047 = vunpack.c.l.b16 %v8979
    %v9048 = vunpack.c.l.b16 %v8980
    %v9049 = vunpack.c.l.b16 %v8981
    %v9050 = vunpack.c.l.b16 %v8982
    %v9051 = vunpack.c.l.b16 %v8983
    %v9052 = vpack.c.b16 %v9021, %v9020
    %v9053 = vpack.c.b16 %v9023, %v9022
    %v9054 = vpack.c.b16 %v9025, %v9024
    %v9055 = vpack.c.b16 %v9027, %v9026
    %v9056 = vpack.c.b16 %v9029, %v9028
    %v9057 = vpack.c.b16 %v9031, %v9030
    %v9058 = vpack.c.b16 %v9033, %v9032
    %v9059 = vpack.c.b16 %v9035, %v9034
    %v9060 = vpack.c.b16 %v9037, %v9036
    %v9061 = vpack.c.b16 %v9039, %v9038
    %v9062 = vpack.c.b16 %v9041, %v9040
    %v9063 = vpack.c.b16 %v9043, %v9042
    %v9064 = vpack.c.b16 %v9045, %v9044
    %v9065 = vpack.c.b16 %v9047, %v9046
    %v9066 = vpack.c.b16 %v9049, %v9048
    %v9067 = vpack.c.b16 %v9051, %v9050
    %9084 = vmatpush.bf16.msra.mxu0 %v9059
    %9085 = vmatpush.bf16.msra.mxu0 %v9058
    %9086 = vmatpush.bf16.msra.mxu0 %v9057
    %9087 = vmatpush.bf16.msra.mxu0 %v9056
    %9088 = vmatpush.bf16.msra.mxu0 %v9055
    %9089 = vmatpush.bf16.msra.mxu0 %v9054
    %9090 = vmatpush.bf16.msra.mxu0 %v9053
    %9091 = vmatpush.bf16.msra.mxu0 %v9052
    %9092 = vmatmul.bf16.gmra.mxu0 %v8984
    %v9093 = vpop.f32.mrf.mxu0
    %v9094 = vadd.f32 0.0, %v9093
    %v9095 = vpop.f32.mrf.mxu0
    %9096 = vdwg.mxu0
    %9097 = vmatpush.bf16.msra.mxu0 %v9067
    %9098 = vmatpush.bf16.msra.mxu0 %v9066
    %9099 = vmatpush.bf16.msra.mxu0 %v9065
    %9100 = vmatpush.bf16.msra.mxu0 %v9064
    %9101 = vmatpush.bf16.msra.mxu0 %v9063
    %9102 = vmatpush.bf16.msra.mxu0 %v9062
    %9103 = vmatpush.bf16.msra.mxu0 %v9061
    %9104 = vmatpush.bf16.msra.mxu0 %v9060
    %9105 = vmatmul.bf16.gmra.mxu0 %v8985
    %v9106 = vpop.f32.mrf.mxu0
    %v9107 = vadd.f32 %v9094, %v9106
    %v9108 = vpop.f32.mrf.mxu0
    %9109 = vdwg.mxu0
    %v9110 = vadd.f32 %v8951, %v9107
    %v9111 = vld [vmem:[%s7318] sm:$0xf]
    %v9112 = vld [vmem:[%s7318 + $0x4] sm:$0xf]
    %v9113 = vld [vmem:[%s7318 + $0x8] sm:$0xf]
    %v9114 = vld [vmem:[%s7318 + $0xc] sm:$0xf]
    %v9115 = vld [vmem:[%s7318 + $0x10] sm:$0xf]
    %v9116 = vld [vmem:[%s7318 + $0x14] sm:$0xf]
    %v9117 = vld [vmem:[%s7318 + $0x18] sm:$0xf]
    %v9118 = vld [vmem:[%s7318 + $0x1c] sm:$0xf]
    %v9119 = vld [vmem:[%s7318 + $0x20] sm:$0xf]
    %v9120 = vld [vmem:[%s7318 + $0x24] sm:$0xf]
    %v9121 = vld [vmem:[%s7318 + $0x28] sm:$0xf]
    %v9122 = vld [vmem:[%s7318 + $0x2c] sm:$0xf]
    %v9123 = vld [vmem:[%s7318 + $0x30] sm:$0xf]
    %v9124 = vld [vmem:[%s7318 + $0x34] sm:$0xf]
    %v9125 = vld [vmem:[%s7318 + $0x38] sm:$0xf]
    %v9126 = vld [vmem:[%s7318 + $0x3c] sm:$0xf]
    %v9127 = vld [vmem:[%s7318 + $0x40] sm:$0xf]
    %v9128 = vld [vmem:[%s7318 + $0x44] sm:$0xf]
    %v9129 = vld [vmem:[%s7318 + $0x48] sm:$0xf]
    %v9130 = vld [vmem:[%s7318 + $0x4c] sm:$0xf]
    %v9131 = vld [vmem:[%s7318 + $0x50] sm:$0xf]
    %v9132 = vld [vmem:[%s7318 + $0x54] sm:$0xf]
    %v9133 = vld [vmem:[%s7318 + $0x58] sm:$0xf]
    %v9134 = vld [vmem:[%s7318 + $0x5c] sm:$0xf]
    %v9135 = vld [vmem:[%s7318 + $0x60] sm:$0xf]
    %v9136 = vld [vmem:[%s7318 + $0x64] sm:$0xf]
    %v9137 = vld [vmem:[%s7318 + $0x68] sm:$0xf]
    %v9138 = vld [vmem:[%s7318 + $0x6c] sm:$0xf]
    %v9139 = vld [vmem:[%s7318 + $0x70] sm:$0xf]
    %v9140 = vld [vmem:[%s7318 + $0x74] sm:$0xf]
    %v9141 = vld [vmem:[%s7318 + $0x78] sm:$0xf]
    %v9142 = vld [vmem:[%s7318 + $0x7c] sm:$0xf]
    %v9143 = vrot.slane %v8219, 3
    %v9144 = vrot.slane %v8220, 3
    %v9179 = vunpack.c.l.b16 %v9111
    %v9180 = vunpack.c.l.b16 %v9112
    %v9181 = vunpack.c.l.b16 %v9113
    %v9182 = vunpack.c.l.b16 %v9114
    %v9183 = vunpack.c.l.b16 %v9115
    %v9184 = vunpack.c.l.b16 %v9116
    %v9185 = vunpack.c.l.b16 %v9117
    %v9186 = vunpack.c.l.b16 %v9118
    %v9187 = vunpack.c.l.b16 %v9119
    %v9188 = vunpack.c.l.b16 %v9120
    %v9189 = vunpack.c.l.b16 %v9121
    %v9190 = vunpack.c.l.b16 %v9122
    %v9191 = vunpack.c.l.b16 %v9123
    %v9192 = vunpack.c.l.b16 %v9124
    %v9193 = vunpack.c.l.b16 %v9125
    %v9194 = vunpack.c.l.b16 %v9126
    %v9195 = vunpack.c.l.b16 %v9127
    %v9196 = vunpack.c.l.b16 %v9128
    %v9197 = vunpack.c.l.b16 %v9129
    %v9198 = vunpack.c.l.b16 %v9130
    %v9199 = vunpack.c.l.b16 %v9131
    %v9200 = vunpack.c.l.b16 %v9132
    %v9201 = vunpack.c.l.b16 %v9133
    %v9202 = vunpack.c.l.b16 %v9134
    %v9203 = vunpack.c.l.b16 %v9135
    %v9204 = vunpack.c.l.b16 %v9136
    %v9205 = vunpack.c.l.b16 %v9137
    %v9206 = vunpack.c.l.b16 %v9138
    %v9207 = vunpack.c.l.b16 %v9139
    %v9208 = vunpack.c.l.b16 %v9140
    %v9209 = vunpack.c.l.b16 %v9141
    %v9210 = vunpack.c.l.b16 %v9142
    %v9211 = vpack.c.b16 %v9180, %v9179
    %v9212 = vpack.c.b16 %v9182, %v9181
    %v9213 = vpack.c.b16 %v9184, %v9183
    %v9214 = vpack.c.b16 %v9186, %v9185
    %v9215 = vpack.c.b16 %v9188, %v9187
    %v9216 = vpack.c.b16 %v9190, %v9189
    %v9217 = vpack.c.b16 %v9192, %v9191
    %v9218 = vpack.c.b16 %v9194, %v9193
    %v9219 = vpack.c.b16 %v9196, %v9195
    %v9220 = vpack.c.b16 %v9198, %v9197
    %v9221 = vpack.c.b16 %v9200, %v9199
    %v9222 = vpack.c.b16 %v9202, %v9201
    %v9223 = vpack.c.b16 %v9204, %v9203
    %v9224 = vpack.c.b16 %v9206, %v9205
    %v9225 = vpack.c.b16 %v9208, %v9207
    %v9226 = vpack.c.b16 %v9210, %v9209
    %9243 = vmatpush.bf16.msra.mxu0 %v9218
    %9244 = vmatpush.bf16.msra.mxu0 %v9217
    %9245 = vmatpush.bf16.msra.mxu0 %v9216
    %9246 = vmatpush.bf16.msra.mxu0 %v9215
    %9247 = vmatpush.bf16.msra.mxu0 %v9214
    %9248 = vmatpush.bf16.msra.mxu0 %v9213
    %9249 = vmatpush.bf16.msra.mxu0 %v9212
    %9250 = vmatpush.bf16.msra.mxu0 %v9211
    %9251 = vmatmul.bf16.gmra.mxu0 %v9143
    %v9252 = vpop.f32.mrf.mxu0
    %v9253 = vadd.f32 0.0, %v9252
    %v9254 = vpop.f32.mrf.mxu0
    %9255 = vdwg.mxu0
    %9256 = vmatpush.bf16.msra.mxu0 %v9226
    %9257 = vmatpush.bf16.msra.mxu0 %v9225
    %9258 = vmatpush.bf16.msra.mxu0 %v9224
    %9259 = vmatpush.bf16.msra.mxu0 %v9223
    %9260 = vmatpush.bf16.msra.mxu0 %v9222
    %9261 = vmatpush.bf16.msra.mxu0 %v9221
    %9262 = vmatpush.bf16.msra.mxu0 %v9220
    %9263 = vmatpush.bf16.msra.mxu0 %v9219
    %9264 = vmatmul.bf16.gmra.mxu0 %v9144
    %v9265 = vpop.f32.mrf.mxu0
    %v9266 = vadd.f32 %v9253, %v9265
    %v9267 = vpop.f32.mrf.mxu0
    %9268 = vdwg.mxu0
    %v9269 = vadd.f32 %v9110, %v9266
    %v9270 = vld [vmem:[%s7478] sm:$0xf]
    %v9271 = vld [vmem:[%s7478 + $0x4] sm:$0xf]
    %v9272 = vld [vmem:[%s7478 + $0x8] sm:$0xf]
    %v9273 = vld [vmem:[%s7478 + $0xc] sm:$0xf]
    %v9274 = vld [vmem:[%s7478 + $0x10] sm:$0xf]
    %v9275 = vld [vmem:[%s7478 + $0x14] sm:$0xf]
    %v9276 = vld [vmem:[%s7478 + $0x18] sm:$0xf]
    %v9277 = vld [vmem:[%s7478 + $0x1c] sm:$0xf]
    %v9278 = vld [vmem:[%s7478 + $0x20] sm:$0xf]
    %v9279 = vld [vmem:[%s7478 + $0x24] sm:$0xf]
    %v9280 = vld [vmem:[%s7478 + $0x28] sm:$0xf]
    %v9281 = vld [vmem:[%s7478 + $0x2c] sm:$0xf]
    %v9282 = vld [vmem:[%s7478 + $0x30] sm:$0xf]
    %v9283 = vld [vmem:[%s7478 + $0x34] sm:$0xf]
    %v9284 = vld [vmem:[%s7478 + $0x38] sm:$0xf]
    %v9285 = vld [vmem:[%s7478 + $0x3c] sm:$0xf]
    %v9286 = vld [vmem:[%s7478 + $0x40] sm:$0xf]
    %v9287 = vld [vmem:[%s7478 + $0x44] sm:$0xf]
    %v9288 = vld [vmem:[%s7478 + $0x48] sm:$0xf]
    %v9289 = vld [vmem:[%s7478 + $0x4c] sm:$0xf]
    %v9290 = vld [vmem:[%s7478 + $0x50] sm:$0xf]
    %v9291 = vld [vmem:[%s7478 + $0x54] sm:$0xf]
    %v9292 = vld [vmem:[%s7478 + $0x58] sm:$0xf]
    %v9293 = vld [vmem:[%s7478 + $0x5c] sm:$0xf]
    %v9294 = vld [vmem:[%s7478 + $0x60] sm:$0xf]
    %v9295 = vld [vmem:[%s7478 + $0x64] sm:$0xf]
    %v9296 = vld [vmem:[%s7478 + $0x68] sm:$0xf]
    %v9297 = vld [vmem:[%s7478 + $0x6c] sm:$0xf]
    %v9298 = vld [vmem:[%s7478 + $0x70] sm:$0xf]
    %v9299 = vld [vmem:[%s7478 + $0x74] sm:$0xf]
    %v9300 = vld [vmem:[%s7478 + $0x78] sm:$0xf]
    %v9301 = vld [vmem:[%s7478 + $0x7c] sm:$0xf]
    %v9302 = vrot.slane %v8222, 3
    %v9303 = vrot.slane %v8225, 3
    %v9338 = vunpack.c.l.b16 %v9270
    %v9339 = vunpack.c.l.b16 %v9271
    %v9340 = vunpack.c.l.b16 %v9272
    %v9341 = vunpack.c.l.b16 %v9273
    %v9342 = vunpack.c.l.b16 %v9274
    %v9343 = vunpack.c.l.b16 %v9275
    %v9344 = vunpack.c.l.b16 %v9276
    %v9345 = vunpack.c.l.b16 %v9277
    %v9346 = vunpack.c.l.b16 %v9278
    %v9347 = vunpack.c.l.b16 %v9279
    %v9348 = vunpack.c.l.b16 %v9280
    %v9349 = vunpack.c.l.b16 %v9281
    %v9350 = vunpack.c.l.b16 %v9282
    %v9351 = vunpack.c.l.b16 %v9283
    %v9352 = vunpack.c.l.b16 %v9284
    %v9353 = vunpack.c.l.b16 %v9285
    %v9354 = vunpack.c.l.b16 %v9286
    %v9355 = vunpack.c.l.b16 %v9287
    %v9356 = vunpack.c.l.b16 %v9288
    %v9357 = vunpack.c.l.b16 %v9289
    %v9358 = vunpack.c.l.b16 %v9290
    %v9359 = vunpack.c.l.b16 %v9291
    %v9360 = vunpack.c.l.b16 %v9292
    %v9361 = vunpack.c.l.b16 %v9293
    %v9362 = vunpack.c.l.b16 %v9294
    %v9363 = vunpack.c.l.b16 %v9295
    %v9364 = vunpack.c.l.b16 %v9296
    %v9365 = vunpack.c.l.b16 %v9297
    %v9366 = vunpack.c.l.b16 %v9298
    %v9367 = vunpack.c.l.b16 %v9299
    %v9368 = vunpack.c.l.b16 %v9300
    %v9369 = vunpack.c.l.b16 %v9301
    %v9370 = vpack.c.b16 %v9339, %v9338
    %v9371 = vpack.c.b16 %v9341, %v9340
    %v9372 = vpack.c.b16 %v9343, %v9342
    %v9373 = vpack.c.b16 %v9345, %v9344
    %v9374 = vpack.c.b16 %v9347, %v9346
    %v9375 = vpack.c.b16 %v9349, %v9348
    %v9376 = vpack.c.b16 %v9351, %v9350
    %v9377 = vpack.c.b16 %v9353, %v9352
    %v9378 = vpack.c.b16 %v9355, %v9354
    %v9379 = vpack.c.b16 %v9357, %v9356
    %v9380 = vpack.c.b16 %v9359, %v9358
    %v9381 = vpack.c.b16 %v9361, %v9360
    %v9382 = vpack.c.b16 %v9363, %v9362
    %v9383 = vpack.c.b16 %v9365, %v9364
    %v9384 = vpack.c.b16 %v9367, %v9366
    %v9385 = vpack.c.b16 %v9369, %v9368
    %9402 = vmatpush.bf16.msra.mxu0 %v9377
    %9403 = vmatpush.bf16.msra.mxu0 %v9376
    %9404 = vmatpush.bf16.msra.mxu0 %v9375
    %9405 = vmatpush.bf16.msra.mxu0 %v9374
    %9406 = vmatpush.bf16.msra.mxu0 %v9373
    %9407 = vmatpush.bf16.msra.mxu0 %v9372
    %9408 = vmatpush.bf16.msra.mxu0 %v9371
    %9409 = vmatpush.bf16.msra.mxu0 %v9370
    %9410 = vmatmul.bf16.gmra.mxu0 %v9302
    %v9411 = vpop.f32.mrf.mxu0
    %v9412 = vadd.f32 0.0, %v9411
    %v9413 = vpop.f32.mrf.mxu0
    %9414 = vdwg.mxu0
    %9415 = vmatpush.bf16.msra.mxu0 %v9385
    %9416 = vmatpush.bf16.msra.mxu0 %v9384
    %9417 = vmatpush.bf16.msra.mxu0 %v9383
    %9418 = vmatpush.bf16.msra.mxu0 %v9382
    %9419 = vmatpush.bf16.msra.mxu0 %v9381
    %9420 = vmatpush.bf16.msra.mxu0 %v9380
    %9421 = vmatpush.bf16.msra.mxu0 %v9379
    %9422 = vmatpush.bf16.msra.mxu0 %v9378
    %9423 = vmatmul.bf16.gmra.mxu0 %v9303
    %v9424 = vpop.f32.mrf.mxu0
    %v9425 = vadd.f32 %v9412, %v9424
    %v9426 = vpop.f32.mrf.mxu0
    %9427 = vdwg.mxu0
    %v9428 = vadd.f32 %v9269, %v9425
    %v9429 = vld [vmem:[%s7638] sm:$0xf]
    %v9430 = vld [vmem:[%s7638 + $0x4] sm:$0xf]
    %v9431 = vld [vmem:[%s7638 + $0x8] sm:$0xf]
    %v9432 = vld [vmem:[%s7638 + $0xc] sm:$0xf]
    %v9433 = vld [vmem:[%s7638 + $0x10] sm:$0xf]
    %v9434 = vld [vmem:[%s7638 + $0x14] sm:$0xf]
    %v9435 = vld [vmem:[%s7638 + $0x18] sm:$0xf]
    %v9436 = vld [vmem:[%s7638 + $0x1c] sm:$0xf]
    %v9437 = vld [vmem:[%s7638 + $0x20] sm:$0xf]
    %v9438 = vld [vmem:[%s7638 + $0x24] sm:$0xf]
    %v9439 = vld [vmem:[%s7638 + $0x28] sm:$0xf]
    %v9440 = vld [vmem:[%s7638 + $0x2c] sm:$0xf]
    %v9441 = vld [vmem:[%s7638 + $0x30] sm:$0xf]
    %v9442 = vld [vmem:[%s7638 + $0x34] sm:$0xf]
    %v9443 = vld [vmem:[%s7638 + $0x38] sm:$0xf]
    %v9444 = vld [vmem:[%s7638 + $0x3c] sm:$0xf]
    %v9445 = vld [vmem:[%s7638 + $0x40] sm:$0xf]
    %v9446 = vld [vmem:[%s7638 + $0x44] sm:$0xf]
    %v9447 = vld [vmem:[%s7638 + $0x48] sm:$0xf]
    %v9448 = vld [vmem:[%s7638 + $0x4c] sm:$0xf]
    %v9449 = vld [vmem:[%s7638 + $0x50] sm:$0xf]
    %v9450 = vld [vmem:[%s7638 + $0x54] sm:$0xf]
    %v9451 = vld [vmem:[%s7638 + $0x58] sm:$0xf]
    %v9452 = vld [vmem:[%s7638 + $0x5c] sm:$0xf]
    %v9453 = vld [vmem:[%s7638 + $0x60] sm:$0xf]
    %v9454 = vld [vmem:[%s7638 + $0x64] sm:$0xf]
    %v9455 = vld [vmem:[%s7638 + $0x68] sm:$0xf]
    %v9456 = vld [vmem:[%s7638 + $0x6c] sm:$0xf]
    %v9457 = vld [vmem:[%s7638 + $0x70] sm:$0xf]
    %v9458 = vld [vmem:[%s7638 + $0x74] sm:$0xf]
    %v9459 = vld [vmem:[%s7638 + $0x78] sm:$0xf]
    %v9460 = vld [vmem:[%s7638 + $0x7c] sm:$0xf]
    %v9462 = vunpack.c.l.b16 %v8151
    %v9463 = vunpack.c.h.b16 %v8151
    %v9464 = vpack.c.b16 %v9462, %v9462
    %v9465 = vpack.c.b16 %v9463, %v9463
    %v9500 = vunpack.c.l.b16 %v9429
    %v9501 = vunpack.c.l.b16 %v9430
    %v9502 = vunpack.c.l.b16 %v9431
    %v9503 = vunpack.c.l.b16 %v9432
    %v9504 = vunpack.c.l.b16 %v9433
    %v9505 = vunpack.c.l.b16 %v9434
    %v9506 = vunpack.c.l.b16 %v9435
    %v9507 = vunpack.c.l.b16 %v9436
    %v9508 = vunpack.c.l.b16 %v9437
    %v9509 = vunpack.c.l.b16 %v9438
    %v9510 = vunpack.c.l.b16 %v9439
    %v9511 = vunpack.c.l.b16 %v9440
    %v9512 = vunpack.c.l.b16 %v9441
    %v9513 = vunpack.c.l.b16 %v9442
    %v9514 = vunpack.c.l.b16 %v9443
    %v9515 = vunpack.c.l.b16 %v9444
    %v9516 = vunpack.c.l.b16 %v9445
    %v9517 = vunpack.c.l.b16 %v9446
    %v9518 = vunpack.c.l.b16 %v9447
    %v9519 = vunpack.c.l.b16 %v9448
    %v9520 = vunpack.c.l.b16 %v9449
    %v9521 = vunpack.c.l.b16 %v9450
    %v9522 = vunpack.c.l.b16 %v9451
    %v9523 = vunpack.c.l.b16 %v9452
    %v9524 = vunpack.c.l.b16 %v9453
    %v9525 = vunpack.c.l.b16 %v9454
    %v9526 = vunpack.c.l.b16 %v9455
    %v9527 = vunpack.c.l.b16 %v9456
    %v9528 = vunpack.c.l.b16 %v9457
    %v9529 = vunpack.c.l.b16 %v9458
    %v9530 = vunpack.c.l.b16 %v9459
    %v9531 = vunpack.c.l.b16 %v9460
    %v9532 = vpack.c.b16 %v9501, %v9500
    %v9533 = vpack.c.b16 %v9503, %v9502
    %v9534 = vpack.c.b16 %v9505, %v9504
    %v9535 = vpack.c.b16 %v9507, %v9506
    %v9536 = vpack.c.b16 %v9509, %v9508
    %v9537 = vpack.c.b16 %v9511, %v9510
    %v9538 = vpack.c.b16 %v9513, %v9512
    %v9539 = vpack.c.b16 %v9515, %v9514
    %v9540 = vpack.c.b16 %v9517, %v9516
    %v9541 = vpack.c.b16 %v9519, %v9518
    %v9542 = vpack.c.b16 %v9521, %v9520
    %v9543 = vpack.c.b16 %v9523, %v9522
    %v9544 = vpack.c.b16 %v9525, %v9524
    %v9545 = vpack.c.b16 %v9527, %v9526
    %v9546 = vpack.c.b16 %v9529, %v9528
    %v9547 = vpack.c.b16 %v9531, %v9530
    %9564 = vmatpush.bf16.msra.mxu0 %v9539
    %9565 = vmatpush.bf16.msra.mxu0 %v9538
    %9566 = vmatpush.bf16.msra.mxu0 %v9537
    %9567 = vmatpush.bf16.msra.mxu0 %v9536
    %9568 = vmatpush.bf16.msra.mxu0 %v9535
    %9569 = vmatpush.bf16.msra.mxu0 %v9534
    %9570 = vmatpush.bf16.msra.mxu0 %v9533
    %9571 = vmatpush.bf16.msra.mxu0 %v9532
    %9572 = vmatmul.bf16.gmra.mxu0 %v9464
    %v9573 = vpop.f32.mrf.mxu0
    %v9574 = vadd.f32 0.0, %v9573
    %v9575 = vpop.f32.mrf.mxu0
    %9576 = vdwg.mxu0
    %9577 = vmatpush.bf16.msra.mxu0 %v9547
    %9578 = vmatpush.bf16.msra.mxu0 %v9546
    %9579 = vmatpush.bf16.msra.mxu0 %v9545
    %9580 = vmatpush.bf16.msra.mxu0 %v9544
    %9581 = vmatpush.bf16.msra.mxu0 %v9543
    %9582 = vmatpush.bf16.msra.mxu0 %v9542
    %9583 = vmatpush.bf16.msra.mxu0 %v9541
    %9584 = vmatpush.bf16.msra.mxu0 %v9540
    %9585 = vmatmul.bf16.gmra.mxu0 %v9465
    %v9586 = vpop.f32.mrf.mxu0
    %v9587 = vadd.f32 %v9574, %v9586
    %v9588 = vpop.f32.mrf.mxu0
    %9589 = vdwg.mxu0
    %v9590 = vadd.f32 %v9428, %v9587
    %v9591 = vld [vmem:[%s7801] sm:$0xf]
    %v9592 = vld [vmem:[%s7801 + $0x4] sm:$0xf]
    %v9593 = vld [vmem:[%s7801 + $0x8] sm:$0xf]
    %v9594 = vld [vmem:[%s7801 + $0xc] sm:$0xf]
    %v9595 = vld [vmem:[%s7801 + $0x10] sm:$0xf]
    %v9596 = vld [vmem:[%s7801 + $0x14] sm:$0xf]
    %v9597 = vld [vmem:[%s7801 + $0x18] sm:$0xf]
    %v9598 = vld [vmem:[%s7801 + $0x1c] sm:$0xf]
    %v9599 = vld [vmem:[%s7801 + $0x20] sm:$0xf]
    %v9600 = vld [vmem:[%s7801 + $0x24] sm:$0xf]
    %v9601 = vld [vmem:[%s7801 + $0x28] sm:$0xf]
    %v9602 = vld [vmem:[%s7801 + $0x2c] sm:$0xf]
    %v9603 = vld [vmem:[%s7801 + $0x30] sm:$0xf]
    %v9604 = vld [vmem:[%s7801 + $0x34] sm:$0xf]
    %v9605 = vld [vmem:[%s7801 + $0x38] sm:$0xf]
    %v9606 = vld [vmem:[%s7801 + $0x3c] sm:$0xf]
    %v9607 = vld [vmem:[%s7801 + $0x40] sm:$0xf]
    %v9608 = vld [vmem:[%s7801 + $0x44] sm:$0xf]
    %v9609 = vld [vmem:[%s7801 + $0x48] sm:$0xf]
    %v9610 = vld [vmem:[%s7801 + $0x4c] sm:$0xf]
    %v9611 = vld [vmem:[%s7801 + $0x50] sm:$0xf]
    %v9612 = vld [vmem:[%s7801 + $0x54] sm:$0xf]
    %v9613 = vld [vmem:[%s7801 + $0x58] sm:$0xf]
    %v9614 = vld [vmem:[%s7801 + $0x5c] sm:$0xf]
    %v9615 = vld [vmem:[%s7801 + $0x60] sm:$0xf]
    %v9616 = vld [vmem:[%s7801 + $0x64] sm:$0xf]
    %v9617 = vld [vmem:[%s7801 + $0x68] sm:$0xf]
    %v9618 = vld [vmem:[%s7801 + $0x6c] sm:$0xf]
    %v9619 = vld [vmem:[%s7801 + $0x70] sm:$0xf]
    %v9620 = vld [vmem:[%s7801 + $0x74] sm:$0xf]
    %v9621 = vld [vmem:[%s7801 + $0x78] sm:$0xf]
    %v9622 = vld [vmem:[%s7801 + $0x7c] sm:$0xf]
    %v9624 = vshrl.u32 %v9464, 16
    %v9627 = vshrl.u32 %v9465, 16
    %v9663 = vunpack.c.l.b16 %v9591
    %v9664 = vunpack.c.l.b16 %v9592
    %v9665 = vunpack.c.l.b16 %v9593
    %v9666 = vunpack.c.l.b16 %v9594
    %v9667 = vunpack.c.l.b16 %v9595
    %v9668 = vunpack.c.l.b16 %v9596
    %v9669 = vunpack.c.l.b16 %v9597
    %v9670 = vunpack.c.l.b16 %v9598
    %v9671 = vunpack.c.l.b16 %v9599
    %v9672 = vunpack.c.l.b16 %v9600
    %v9673 = vunpack.c.l.b16 %v9601
    %v9674 = vunpack.c.l.b16 %v9602
    %v9675 = vunpack.c.l.b16 %v9603
    %v9676 = vunpack.c.l.b16 %v9604
    %v9677 = vunpack.c.l.b16 %v9605
    %v9678 = vunpack.c.l.b16 %v9606
    %v9679 = vunpack.c.l.b16 %v9607
    %v9680 = vunpack.c.l.b16 %v9608
    %v9681 = vunpack.c.l.b16 %v9609
    %v9682 = vunpack.c.l.b16 %v9610
    %v9683 = vunpack.c.l.b16 %v9611
    %v9684 = vunpack.c.l.b16 %v9612
    %v9685 = vunpack.c.l.b16 %v9613
    %v9686 = vunpack.c.l.b16 %v9614
    %v9687 = vunpack.c.l.b16 %v9615
    %v9688 = vunpack.c.l.b16 %v9616
    %v9689 = vunpack.c.l.b16 %v9617
    %v9690 = vunpack.c.l.b16 %v9618
    %v9691 = vunpack.c.l.b16 %v9619
    %v9692 = vunpack.c.l.b16 %v9620
    %v9693 = vunpack.c.l.b16 %v9621
    %v9694 = vunpack.c.l.b16 %v9622
    %v9695 = vpack.c.b16 %v9664, %v9663
    %v9696 = vpack.c.b16 %v9666, %v9665
    %v9697 = vpack.c.b16 %v9668, %v9667
    %v9698 = vpack.c.b16 %v9670, %v9669
    %v9699 = vpack.c.b16 %v9672, %v9671
    %v9700 = vpack.c.b16 %v9674, %v9673
    %v9701 = vpack.c.b16 %v9676, %v9675
    %v9702 = vpack.c.b16 %v9678, %v9677
    %v9703 = vpack.c.b16 %v9680, %v9679
    %v9704 = vpack.c.b16 %v9682, %v9681
    %v9705 = vpack.c.b16 %v9684, %v9683
    %v9706 = vpack.c.b16 %v9686, %v9685
    %v9707 = vpack.c.b16 %v9688, %v9687
    %v9708 = vpack.c.b16 %v9690, %v9689
    %v9709 = vpack.c.b16 %v9692, %v9691
    %v9710 = vpack.c.b16 %v9694, %v9693
    %9727 = vmatpush.bf16.msra.mxu0 %v9702
    %9728 = vmatpush.bf16.msra.mxu0 %v9701
    %9729 = vmatpush.bf16.msra.mxu0 %v9700
    %9730 = vmatpush.bf16.msra.mxu0 %v9699
    %9731 = vmatpush.bf16.msra.mxu0 %v9698
    %9732 = vmatpush.bf16.msra.mxu0 %v9697
    %9733 = vmatpush.bf16.msra.mxu0 %v9696
    %9734 = vmatpush.bf16.msra.mxu0 %v9695
    %9735 = vmatmul.bf16.gmra.mxu0 %v9624
    %v9736 = vpop.f32.mrf.mxu0
    %v9737 = vadd.f32 0.0, %v9736
    %v9738 = vpop.f32.mrf.mxu0
    %9739 = vdwg.mxu0
    %9740 = vmatpush.bf16.msra.mxu0 %v9710
    %9741 = vmatpush.bf16.msra.mxu0 %v9709
    %9742 = vmatpush.bf16.msra.mxu0 %v9708
    %9743 = vmatpush.bf16.msra.mxu0 %v9707
    %9744 = vmatpush.bf16.msra.mxu0 %v9706
    %9745 = vmatpush.bf16.msra.mxu0 %v9705
    %9746 = vmatpush.bf16.msra.mxu0 %v9704
    %9747 = vmatpush.bf16.msra.mxu0 %v9703
    %9748 = vmatmul.bf16.gmra.mxu0 %v9627
    %v9749 = vpop.f32.mrf.mxu0
    %v9750 = vadd.f32 %v9737, %v9749
    %v9751 = vpop.f32.mrf.mxu0
    %9752 = vdwg.mxu0
    %v9753 = vadd.f32 %v9590, %v9750
    %v9754 = vld [vmem:[%s7965] sm:$0xf]
    %v9755 = vld [vmem:[%s7965 + $0x4] sm:$0xf]
    %v9756 = vld [vmem:[%s7965 + $0x8] sm:$0xf]
    %v9757 = vld [vmem:[%s7965 + $0xc] sm:$0xf]
    %v9758 = vld [vmem:[%s7965 + $0x10] sm:$0xf]
    %v9759 = vld [vmem:[%s7965 + $0x14] sm:$0xf]
    %v9760 = vld [vmem:[%s7965 + $0x18] sm:$0xf]
    %v9761 = vld [vmem:[%s7965 + $0x1c] sm:$0xf]
    %v9762 = vld [vmem:[%s7965 + $0x20] sm:$0xf]
    %v9763 = vld [vmem:[%s7965 + $0x24] sm:$0xf]
    %v9764 = vld [vmem:[%s7965 + $0x28] sm:$0xf]
    %v9765 = vld [vmem:[%s7965 + $0x2c] sm:$0xf]
    %v9766 = vld [vmem:[%s7965 + $0x30] sm:$0xf]
    %v9767 = vld [vmem:[%s7965 + $0x34] sm:$0xf]
    %v9768 = vld [vmem:[%s7965 + $0x38] sm:$0xf]
    %v9769 = vld [vmem:[%s7965 + $0x3c] sm:$0xf]
    %v9770 = vld [vmem:[%s7965 + $0x40] sm:$0xf]
    %v9771 = vld [vmem:[%s7965 + $0x44] sm:$0xf]
    %v9772 = vld [vmem:[%s7965 + $0x48] sm:$0xf]
    %v9773 = vld [vmem:[%s7965 + $0x4c] sm:$0xf]
    %v9774 = vld [vmem:[%s7965 + $0x50] sm:$0xf]
    %v9775 = vld [vmem:[%s7965 + $0x54] sm:$0xf]
    %v9776 = vld [vmem:[%s7965 + $0x58] sm:$0xf]
    %v9777 = vld [vmem:[%s7965 + $0x5c] sm:$0xf]
    %v9778 = vld [vmem:[%s7965 + $0x60] sm:$0xf]
    %v9779 = vld [vmem:[%s7965 + $0x64] sm:$0xf]
    %v9780 = vld [vmem:[%s7965 + $0x68] sm:$0xf]
    %v9781 = vld [vmem:[%s7965 + $0x6c] sm:$0xf]
    %v9782 = vld [vmem:[%s7965 + $0x70] sm:$0xf]
    %v9783 = vld [vmem:[%s7965 + $0x74] sm:$0xf]
    %v9784 = vld [vmem:[%s7965 + $0x78] sm:$0xf]
    %v9785 = vld [vmem:[%s7965 + $0x7c] sm:$0xf]
    %v9786 = vrot.slane %v9464, 1
    %v9787 = vrot.slane %v9465, 1
    %v9822 = vunpack.c.l.b16 %v9754
    %v9823 = vunpack.c.l.b16 %v9755
    %v9824 = vunpack.c.l.b16 %v9756
    %v9825 = vunpack.c.l.b16 %v9757
    %v9826 = vunpack.c.l.b16 %v9758
    %v9827 = vunpack.c.l.b16 %v9759
    %v9828 = vunpack.c.l.b16 %v9760
    %v9829 = vunpack.c.l.b16 %v9761
    %v9830 = vunpack.c.l.b16 %v9762
    %v9831 = vunpack.c.l.b16 %v9763
    %v9832 = vunpack.c.l.b16 %v9764
    %v9833 = vunpack.c.l.b16 %v9765
    %v9834 = vunpack.c.l.b16 %v9766
    %v9835 = vunpack.c.l.b16 %v9767
    %v9836 = vunpack.c.l.b16 %v9768
    %v9837 = vunpack.c.l.b16 %v9769
    %v9838 = vunpack.c.l.b16 %v9770
    %v9839 = vunpack.c.l.b16 %v9771
    %v9840 = vunpack.c.l.b16 %v9772
    %v9841 = vunpack.c.l.b16 %v9773
    %v9842 = vunpack.c.l.b16 %v9774
    %v9843 = vunpack.c.l.b16 %v9775
    %v9844 = vunpack.c.l.b16 %v9776
    %v9845 = vunpack.c.l.b16 %v9777
    %v9846 = vunpack.c.l.b16 %v9778
    %v9847 = vunpack.c.l.b16 %v9779
    %v9848 = vunpack.c.l.b16 %v9780
    %v9849 = vunpack.c.l.b16 %v9781
    %v9850 = vunpack.c.l.b16 %v9782
    %v9851 = vunpack.c.l.b16 %v9783
    %v9852 = vunpack.c.l.b16 %v9784
    %v9853 = vunpack.c.l.b16 %v9785
    %v9854 = vpack.c.b16 %v9823, %v9822
    %v9855 = vpack.c.b16 %v9825, %v9824
    %v9856 = vpack.c.b16 %v9827, %v9826
    %v9857 = vpack.c.b16 %v9829, %v9828
    %v9858 = vpack.c.b16 %v9831, %v9830
    %v9859 = vpack.c.b16 %v9833, %v9832
    %v9860 = vpack.c.b16 %v9835, %v9834
    %v9861 = vpack.c.b16 %v9837, %v9836
    %v9862 = vpack.c.b16 %v9839, %v9838
    %v9863 = vpack.c.b16 %v9841, %v9840
    %v9864 = vpack.c.b16 %v9843, %v9842
    %v9865 = vpack.c.b16 %v9845, %v9844
    %v9866 = vpack.c.b16 %v9847, %v9846
    %v9867 = vpack.c.b16 %v9849, %v9848
    %v9868 = vpack.c.b16 %v9851, %v9850
    %v9869 = vpack.c.b16 %v9853, %v9852
    %9886 = vmatpush.bf16.msra.mxu0 %v9861
    %9887 = vmatpush.bf16.msra.mxu0 %v9860
    %9888 = vmatpush.bf16.msra.mxu0 %v9859
    %9889 = vmatpush.bf16.msra.mxu0 %v9858
    %9890 = vmatpush.bf16.msra.mxu0 %v9857
    %9891 = vmatpush.bf16.msra.mxu0 %v9856
    %9892 = vmatpush.bf16.msra.mxu0 %v9855
    %9893 = vmatpush.bf16.msra.mxu0 %v9854
    %9894 = vmatmul.bf16.gmra.mxu0 %v9786
    %v9895 = vpop.f32.mrf.mxu0
    %v9896 = vadd.f32 0.0, %v9895
    %v9897 = vpop.f32.mrf.mxu0
    %9898 = vdwg.mxu0
    %9899 = vmatpush.bf16.msra.mxu0 %v9869
    %9900 = vmatpush.bf16.msra.mxu0 %v9868
    %9901 = vmatpush.bf16.msra.mxu0 %v9867
    %9902 = vmatpush.bf16.msra.mxu0 %v9866
    %9903 = vmatpush.bf16.msra.mxu0 %v9865
    %9904 = vmatpush.bf16.msra.mxu0 %v9864
    %9905 = vmatpush.bf16.msra.mxu0 %v9863
    %9906 = vmatpush.bf16.msra.mxu0 %v9862
    %9907 = vmatmul.bf16.gmra.mxu0 %v9787
    %v9908 = vpop.f32.mrf.mxu0
    %v9909 = vadd.f32 %v9896, %v9908
    %v9910 = vpop.f32.mrf.mxu0
    %9911 = vdwg.mxu0
    %v9912 = vadd.f32 %v9753, %v9909
    %v9914 = vrot.slane %v9912, 7
    %v9916 = vsel %vm2944, %v8124, %v9914
    %v9917 = vld [vmem:[%s12] sm:$0x1]
    %v9919 = vperm.slane %v9917, 0
    %v9921 = vadd.f32 %v9916, %v9919
    %vm9922 = vcmask 33792
    %9923 = vst.msk [vmem:[#allocation10] sm:$0x3] %vm9922, %v9921
    %v9924 = vsub.f32 0.0, %v9921
    %v9925 = vmul.f32 %v9924, 1.442695
    %v9926 = vpow.pop %v9925
    %v9927 = vadd.f32 %v9926, 1.0
    %v9928 = vrcp.pop %v9927
    %v9929 = vmul.f32 %v9927, %v9928
    %v9930 = vsub.f32 1.0, %v9929
    %v9931 = vmul.f32 %v9928, %v9930
    %v9932 = vadd.f32 %v9928, %v9931
    %vm9933 = vweird.f32 %v9927
    %vm9934 = vweird.f32 %v9928
    %vm9935 = vmor %vm9933, %vm9934
    %v9936 = vsel %vm9935, %v9928, %v9932
    %v9937 = vand.u32 2147483647, %v9927
    %vm9938 = vcmp.eq.f32.partialorder %v9937, 8.507059e+37
    %v9939 = vand.u32 %v9927, 2147483648
    %v9940 = vor.u32 1.1754944e-38, %v9939
    %v9941 = vsel %vm9938, %v9940, %v9936
    %v9942 = vmul.f32 1.0, %v9941
    %9944 = vrot.lane.b32.xlu0 %v9942, 123
    %v9945 = vpop.permute.xlu0 %9944
    %vm9947 = vcmask 1024
    %9948 = vst.msk [vmem:[%s15] sm:$0x3] %vm9947, %v9945
    // Predicated region
    $region62: #{discriminator_forward.1} parent=1 // pred_check
      _
    $region63: #{discriminator_forward.1} parent=1 // pred_check_branch
      %9950 = sbr.rel (0) target = $region65
    $region64: #{discriminator_forward.1} parent=1 // pred_region
      _
    $region65: #{discriminator_forward.1} parent=1 // pred_fallthru
      _
    // Predicated region
    $region66: #{discriminator_forward.1} parent=1 // pred_check
      _
    $region67: #{discriminator_forward.1} parent=1 // pred_check_branch
      %9952 = sbr.rel (0) target = $region69
    $region68: #{discriminator_forward.1} parent=1 // pred_region
      %9954 = vsyncadd [#allocation7], 0
      %s9956 = sshll.u32 [#allocation10], 4
      %s9957 = int_to_ptr.vmem [resolvable:$true] %s9956
      %s9958 = sshll.u32 %s14, 4
      %s9959 = int_to_ptr.hbm [resolvable:$true] %s9958
      %9961 = dma.vmem_to_hbm [thread:$0]  %s9957, 32, %s9959, [#allocation7]
    $region69: #{discriminator_forward.1} parent=1 // pred_fallthru
      _
    // Predicated region
    $region70: #{discriminator_forward.1} parent=1 // pred_check
      _
    $region71: #{discriminator_forward.1} parent=1 // pred_check_branch
      %9963 = sbr.rel (0) target = $region73
    $region72: #{discriminator_forward.1} parent=1 // pred_region
      _
    $region73: #{discriminator_forward.1} parent=1 // pred_fallthru
      _
    // Predicated region
    $region74: #{discriminator_forward.1} parent=1 // pred_check
      _
    $region75: #{discriminator_forward.1} parent=1 // pred_check_branch
      %9965 = sbr.rel (0) target = $region77
    $region76: #{discriminator_forward.1} parent=1 // pred_region
      _
    $region77: #{discriminator_forward.1} parent=1 // pred_fallthru
      _
    // Predicated region
    $region78: #{discriminator_forward.1} parent=1 // pred_check
      _
    $region79: #{discriminator_forward.1} parent=1 // pred_check_branch
      %9967 = sbr.rel (0) target = $region81
    $region80: #{discriminator_forward.1} parent=1 // pred_region
      %9969 = dma.done [#allocation7], 32
    $region81: #{discriminator_forward.1} parent=1 // pred_fallthru
      _
    // Predicated region
    $region82: #{discriminator_forward.1} parent=1 // pred_check
      _
    $region83: #{discriminator_forward.1} parent=1 // pred_check_branch
      %9971 = sbr.rel (0) target = $region85
    $region84: #{discriminator_forward.1} parent=1 // pred_region
      _
    $region85: #{discriminator_forward.1} parent=1 // pred_fallthru
      _
    %9972 = vsyncpa [#allocation6], 1
    %9973 = vsyncpa [#allocation9], 1
    %9974 = vsyncpa [#allocation7], 1

</llo_original>
